<compile_context>
chip_gen: v6e
topology: v6e:2x2x1
jax: 0.10.0
libtpu: 0.0.40
codegen_flags: <defaults>
</compile_context>

<pallas_src>
import functools

import jax
import jax.numpy as jnp
import numpy as np
from jax.experimental import pallas as pl
from jax.experimental.pallas import tpu as pltpu

N_ACTIONS = 6
IN_CHANNELS = 4
LANE = 128
VMEM_LIMIT = 32 * 1024 * 1024


def _round_up(x, m):
    return ((x + m - 1) // m) * m


# ---------------------------------------------------------------------------
# Kernel 1: conv1 as matmul   out = relu(patches @ w + b)
# ---------------------------------------------------------------------------
def _matmul_bias_relu_kernel(x_ref, w_ref, b_ref, o_ref):
    acc = jnp.dot(x_ref[...], w_ref[...], preferred_element_type=jnp.float32)
    acc = jnp.maximum(acc + b_ref[...], 0.0)
    o_ref[...] = acc.astype(o_ref.dtype)


def conv1_matmul(patches, w_pad, b_pad):
    """patches: (M, 256) bf16, w_pad: (256, 128) bf16, b_pad: (1, 128) f32.
    Returns (M, 128) bf16 (output channels 32..127 are exactly zero)."""
    M, K = patches.shape
    # >=2 M-tiles whenever possible so both v7x TensorCores get work; cap the
    # tile at 256 rows (raise toward 512 on v6e/v5e for very large batches).
    tm = min(256, _round_up(-(-M // 2), 8))
    grid = (pl.cdiv(M, tm),)

    return pl.pallas_call(
        _matmul_bias_relu_kernel,
        out_shape=jax.ShapeDtypeStruct((M, LANE), jnp.bfloat16),
        grid=grid,
        in_specs=[
            pl.BlockSpec((tm, K), lambda i: (i, 0)),
            pl.BlockSpec((K, LANE), lambda i: (0, 0)),
            pl.BlockSpec((1, LANE), lambda i: (0, 0)),
        ],
        out_specs=pl.BlockSpec((tm, LANE), lambda i: (i, 0)),
        compiler_params=pltpu.CompilerParams(
            dimension_semantics=("parallel",),
            vmem_limit_bytes=VMEM_LIMIT,
        ),
        cost_estimate=pl.CostEstimate(
            flops=int(2 * M * K * LANE),
            transcendentals=0,
            bytes_accessed=int((M * K + K * LANE + M * LANE) * 2 + LANE * 4),
        ),
    )(patches, w_pad, b_pad)


# ---------------------------------------------------------------------------
# Kernel 2: fused conv2 (4x4, s2) + conv3 (3x3, s1), grid over batch samples.
# The im2col for both convs happens in-kernel via aligned VMEM copies.
# ---------------------------------------------------------------------------
def _conv23_fused_kernel(x_ref, w2_ref, b2_ref, w3_ref, b3_ref, o_ref,
                         p2_ref, h2_ref, p3_ref):
    # x_ref: (1, 20, 8, 512) bf16. Space-to-depth(2) conv1 output with the two
    # column phases stacked: row index = aj*10 + si, cols t = oj (0..7),
    # channel = (pi*2 + pj)*128 + c,  value = y1[2*si + pi, 2*(t + aj) + pj, c].

    # ---- conv2: assemble (64, 2048) im2col patches (row = oi*8 + oj).
    for ai in range(2):
        for aj in range(2):
            tap = ai * 2 + aj
            for oi in range(8):
                vals = x_ref[0, aj * 10 + oi + ai, :, :]            # (8, 512)
                p2_ref[pl.ds(oi * 8, 8), pl.ds(tap * 512, 512)] = (
                    vals.astype(jnp.float32))
    h2 = jnp.dot(p2_ref[...].astype(jnp.bfloat16), w2_ref[...],
                 preferred_element_type=jnp.float32)
    h2 = jnp.maximum(h2 + b2_ref[...], 0.0)                         # (64, 128)
    h2_ref[...] = h2

    # ---- conv3: assemble (48, 1152) patches from the 8x8x128 conv2 output.
    # Output row = ui*8 + uj (uj < 6); rows ui*8+6, ui*8+7 are padding rows
    # (kept so every scratch store is 8-row aligned) and are dropped in XLA.
    p3_ref[...] = jnp.zeros_like(p3_ref)
    for ki in range(3):
        for kj in range(3):
            tap = ki * 3 + kj
            for ui in range(6):
                rows = h2_ref[pl.ds((ui + ki) * 8 + kj, 6), :]      # (6, 128)
                p3_ref[pl.ds(ui * 8, 6), pl.ds(tap * 128, 128)] = rows
    h3 = jnp.dot(p3_ref[...].astype(jnp.bfloat16), w3_ref[...],
                 preferred_element_type=jnp.float32)
    h3 = jnp.maximum(h3 + b3_ref[...], 0.0)                         # (48, 128)
    o_ref[0] = h3.astype(o_ref.dtype)


def conv23_fused(xsh, w2, b2, w3, b3):
    """xsh: (B, 20, 8, 512) bf16 -> (B, 48, 128) bf16 conv3 output
    (rows r%8<6 and channels <64 are real, rest padding)."""
    B = xsh.shape[0]
    return pl.pallas_call(
        _conv23_fused_kernel,
        out_shape=jax.ShapeDtypeStruct((B, 48, LANE), jnp.bfloat16),
        grid=(B,),
        in_specs=[
            pl.BlockSpec((1, 20, 8, 512), lambda b: (b, 0, 0, 0)),
            pl.BlockSpec((2048, LANE), lambda b: (0, 0)),
            pl.BlockSpec((1, LANE), lambda b: (0, 0)),
            pl.BlockSpec((1152, LANE), lambda b: (0, 0)),
            pl.BlockSpec((1, LANE), lambda b: (0, 0)),
        ],
        out_specs=pl.BlockSpec((1, 48, LANE), lambda b: (b, 0, 0)),
        scratch_shapes=[
            pltpu.VMEM((64, 2048), jnp.float32),   # conv2 im2col patches
            pltpu.VMEM((64, LANE), jnp.float32),   # conv2 output (8x8x128)
            pltpu.VMEM((48, 1152), jnp.float32),   # conv3 im2col patches
        ],
        compiler_params=pltpu.CompilerParams(
            dimension_semantics=("parallel",),
            vmem_limit_bytes=VMEM_LIMIT,
        ),
        cost_estimate=pl.CostEstimate(
            flops=int(2 * B * (64 * 2048 * LANE + 48 * 1152 * LANE)),
            transcendentals=0,
            bytes_accessed=int(B * (20 * 8 * 512 + 48 * LANE) * 2
                               + (2048 + 1152) * LANE * 2),
        ),
    )(xsh, w2, b2, w3, b3)


# ---------------------------------------------------------------------------
# Kernel 3: fused fc4 + head   out = relu(x @ w4 + b4) @ wh + bh
# ---------------------------------------------------------------------------
def _mlp_head_kernel(x_ref, w4_ref, b4_ref, wh_ref, bh_ref, o_ref):
    h = jnp.dot(x_ref[...], w4_ref[...], preferred_element_type=jnp.float32)
    h = jnp.maximum(h + b4_ref[...], 0.0)
    o = jnp.dot(h.astype(jnp.bfloat16), wh_ref[...],
                preferred_element_type=jnp.float32)
    o_ref[...] = o + bh_ref[...]


def mlp_head(flat, w4, b4, wh, bh, *, n_actions):
    """flat: (B, 2304) bf16 -> (B, n_actions) f32."""
    B, K = flat.shape
    H = w4.shape[1]
    Bp = _round_up(B, 8)
    if Bp != B:                       # tiny (<=7 rows of 2304) pad, negligible
        flat = jnp.pad(flat, ((0, Bp - B), (0, 0)))
    tb = min(64, Bp)                  # small tb keeps the f32 (tb,512) hidden
    grid = (pl.cdiv(Bp, tb),)         # state out of spill territory

    out = pl.pallas_call(
        _mlp_head_kernel,
        out_shape=jax.ShapeDtypeStruct((Bp, LANE), jnp.float32),
        grid=grid,
        in_specs=[
            pl.BlockSpec((tb, K), lambda i: (i, 0)),
            pl.BlockSpec((K, H), lambda i: (0, 0)),
            pl.BlockSpec((1, H), lambda i: (0, 0)),
            pl.BlockSpec((H, LANE), lambda i: (0, 0)),
            pl.BlockSpec((1, LANE), lambda i: (0, 0)),
        ],
        out_specs=pl.BlockSpec((tb, LANE), lambda i: (i, 0)),
        compiler_params=pltpu.CompilerParams(
            dimension_semantics=("parallel",),
            vmem_limit_bytes=VMEM_LIMIT,
        ),
        cost_estimate=pl.CostEstimate(
            flops=int(2 * Bp * (K * H + H * LANE)),
            transcendentals=0,
            bytes_accessed=int((Bp * K + K * H + H * LANE) * 2
                               + (H + LANE) * 4 + Bp * LANE * 4),
        ),
    )(flat, w4, b4, wh, bh)
    return out[:B, :n_actions]


# ---------------------------------------------------------------------------
# XLA-side layout helpers (pure data movement on small activations)
# ---------------------------------------------------------------------------
def _im2col_conv1(x_bf16):
    """(B, 80, 80, 4) -> (B*361, 256) patches, feature order (kh, kw, c)."""
    # TODO(synk): fold this strided gather into the conv1 kernel via manual DMA.
    B = x_bf16.shape[0]
    cols = []
    for i in range(8):
        for j in range(8):
            cols.append(x_bf16[:, i:i + 4 * 19:4, j:j + 4 * 19:4, :])
    patches = jnp.concatenate(cols, axis=-1)            # (B, 19, 19, 256)
    return patches.reshape(B * 19 * 19, 8 * 8 * IN_CHANNELS)


def _space_to_depth_conv1_out(y1):
    """(B, 19, 19, 128) -> (B, 20, 8, 512) space-to-depth(2) layout with the
    two column phases stacked along dim 1 (row = aj*10 + si)."""
    B = y1.shape[0]
    y1p = jnp.pad(y1, ((0, 0), (0, 1), (0, 1), (0, 0)))          # 20 x 20
    s2d = y1p.reshape(B, 10, 2, 10, 2, LANE)
    s2d = jnp.transpose(s2d, (0, 1, 3, 2, 4, 5)).reshape(B, 10, 10, 4 * LANE)
    return jnp.concatenate([s2d[:, :, 0:8, :], s2d[:, :, 1:9, :]], axis=1)


# ---------------------------------------------------------------------------
# Parameters: synthetic torch-layout init + one-time kernel-layout preparation
# ---------------------------------------------------------------------------
def init_params(key, in_channels=IN_CHANNELS, n_actions=N_ACTIONS):
    ks = jax.random.split(key, 10)
    p = {}
    p["conv1_w"] = 0.05 * jax.random.normal(ks[0], (32, in_channels, 8, 8), jnp.float32)
    p["conv1_b"] = 0.01 * jax.random.normal(ks[1], (32,), jnp.float32)
    p["conv2_w"] = 0.05 * jax.random.normal(ks[2], (64, 32, 4, 4), jnp.float32)
    p["conv2_b"] = 0.01 * jax.random.normal(ks[3], (64,), jnp.float32)
    p["conv3_w"] = 0.05 * jax.random.normal(ks[4], (64, 64, 3, 3), jnp.float32)
    p["conv3_b"] = 0.01 * jax.random.normal(ks[5], (64,), jnp.float32)
    p["fc4_w"] = 0.02 * jax.random.normal(ks[6], (512, 6 * 6 * 64), jnp.float32)
    p["fc4_b"] = 0.01 * jax.random.normal(ks[7], (512,), jnp.float32)
    p["head_w"] = 0.02 * jax.random.normal(ks[8], (n_actions, 512), jnp.float32)
    p["head_b"] = 0.01 * jax.random.normal(ks[9], (n_actions,), jnp.float32)
    return p


def prepare_params(p):
    """One-time layout prep: transpose / permute / zero-pad / cast to bf16."""
    prep = {}

    # conv1: (32, 4, 8, 8) -> rows ordered (kh, kw, c), cols padded 32 -> 128.
    w1 = jnp.transpose(p["conv1_w"], (2, 3, 1, 0)).reshape(8 * 8 * IN_CHANNELS, 32)
    prep["conv1_wm"] = jnp.pad(w1, ((0, 0), (0, LANE - 32))).astype(jnp.bfloat16)
    prep["conv1_b"] = jnp.pad(p["conv1_b"], (0, LANE - 32)).reshape(1, LANE).astype(jnp.float32)

    # conv2: (64, 32, 4, 4); rows ordered to match the in-kernel s2d patches:
    #   row = (ai*2+aj)*512 + (pi*2+pj)*128 + c   with ki = 2ai+pi, kj = 2aj+pj,
    #   input channels c padded 32 -> 128 (zeros), output 64 -> 128 (zeros).
    w2 = jnp.transpose(p["conv2_w"], (2, 3, 1, 0))          # (ki, kj, c, d)
    w2 = w2.reshape(2, 2, 2, 2, 32, 64)                     # (ai, pi, aj, pj, c, d)
    w2 = jnp.transpose(w2, (0, 2, 1, 3, 4, 5))              # (ai, aj, pi, pj, c, d)
    w2 = jnp.pad(w2, ((0, 0), (0, 0), (0, 0), (0, 0), (0, LANE - 32), (0, LANE - 64)))
    prep["conv2_wm"] = w2.reshape(4 * 4 * LANE, LANE).astype(jnp.bfloat16)   # (2048, 128)
    prep["conv2_b"] = jnp.pad(p["conv2_b"], (0, LANE - 64)).reshape(1, LANE).astype(jnp.float32)

    # conv3: (64, 64, 3, 3); rows = (ki*3+kj)*128 + c, c padded 64 -> 128.
    w3 = jnp.transpose(p["conv3_w"], (2, 3, 1, 0))          # (ki, kj, c, d)
    w3 = jnp.pad(w3, ((0, 0), (0, 0), (0, LANE - 64), (0, LANE - 64)))
    prep["conv3_wm"] = w3.reshape(9 * LANE, LANE).astype(jnp.bfloat16)       # (1152, 128)
    prep["conv3_b"] = jnp.pad(p["conv3_b"], (0, LANE - 64)).reshape(1, LANE).astype(jnp.float32)

    # fc4: torch (512, 2304) with torch (c, h, w) flatten; our flat order is
    # (ui*6+uj)*64 + c, so permute rows accordingly.
    w4 = p["fc4_w"].reshape(512, 64, 6, 6)                  # (f, c, ui, uj)
    w4 = jnp.transpose(w4, (2, 3, 1, 0)).reshape(6 * 6 * 64, 512)
    prep["fc4_wm"] = w4.astype(jnp.bfloat16)                # (2304, 512)
    prep["fc4_b"] = p["fc4_b"].reshape(1, 512).astype(jnp.float32)

    n_act = p["head_w"].shape[0]
    wh = jnp.pad(p["head_w"].T, ((0, 0), (0, LANE - n_act)))
    prep["head_wm"] = wh.astype(jnp.bfloat16)               # (512, 128)
    prep["head_b"] = jnp.pad(p["head_b"], (0, LANE - n_act)).reshape(1, LANE).astype(jnp.float32)
    return prep


# ---------------------------------------------------------------------------
# DQN forward (matches the PyTorch module's forward on an NHWC input)
# ---------------------------------------------------------------------------
@jax.jit
def dqn_forward(prep, x):
    """x: (B, H, W, C) float — what the PyTorch forward receives (its internal
    NCHW permute is folded into the prepared weight layouts)."""
    x = x.astype(jnp.bfloat16)
    B = x.shape[0]

    # conv1 (8x8, stride 4): XLA im2col + Pallas matmul, 128-lane-dense output.
    p1 = _im2col_conv1(x)                                       # (B*361, 256)
    y1 = conv1_matmul(p1, prep["conv1_wm"], prep["conv1_b"])    # (B*361, 128)
    y1 = y1.reshape(B, 19, 19, LANE)

    # conv2 + conv3 fused in one kernel; im2col happens in-kernel.
    xsh = _space_to_depth_conv1_out(y1)                         # (B, 20, 8, 512)
    y3 = conv23_fused(xsh, prep["conv2_wm"], prep["conv2_b"],
                      prep["conv3_wm"], prep["conv3_b"])        # (B, 48, 128)

    # Flatten to fc4's input order, dropping padded rows / channels (tiny op).
    flat = y3.reshape(B, 6, 8, LANE)[:, :, :6, :64].reshape(B, 6 * 6 * 64)

    return mlp_head(flat, prep["fc4_wm"], prep["fc4_b"],
                    prep["head_wm"], prep["head_b"], n_actions=N_ACTIONS)


# ---------------------------------------------------------------------------
# Pure-JAX f32 reference (sanity check)
# ---------------------------------------------------------------------------
def dqn_forward_ref(params, x):
    x = x.astype(jnp.float32)
    dn = ("NHWC", "OIHW", "NHWC")

    def conv(x, w, b, s):
        y = jax.lax.conv_general_dilated(
            x, w, window_strides=(s, s), padding="VALID",
            dimension_numbers=dn, precision=jax.lax.Precision.HIGHEST)
        return jax.nn.relu(y + b[None, None, None, :])

    x = conv(x, params["conv1_w"], params["conv1_b"], 4)
    x = conv(x, params["conv2_w"], params["conv2_b"], 2)
    x = conv(x, params["conv3_w"], params["conv3_b"], 1)
    B = x.shape[0]
    flat = jnp.transpose(x, (0, 3, 1, 2)).reshape(B, -1)   # torch NCHW flatten
    h = jax.nn.relu(flat @ params["fc4_w"].T + params["fc4_b"])
    return h @ params["head_w"].T + params["head_b"]


if __name__ == "__main__":
    key = jax.random.PRNGKey(0)
    pkey, xkey = jax.random.split(key)
    params = init_params(pkey)
    prep = prepare_params(params)

    # fc4 expects 6*6*64 features => the conv stack implies an 80x80 input.
    batch = 2
    x = jax.random.normal(xkey, (batch, 80, 80, IN_CHANNELS), jnp.float32)

    out = jax.block_until_ready(dqn_forward(prep, x))
    assert out.shape == (batch, N_ACTIONS), out.shape

    ref = jax.block_until_ready(dqn_forward_ref(params, x))
    # bf16 MXU operands vs f32 HIGHEST reference => tolerance-based check.
    np.testing.assert_allclose(np.asarray(out), np.asarray(ref), rtol=3e-2, atol=3e-2)

    print("KERNEL_OK")
</pallas_src>

<mosaic_0001>
module attributes {stable_mosaic.version = 11 : i64} {
  func.func @_matmul_bias_relu_kernel(%arg0: i32, %arg1: memref<256x256xbf16, #tpu.memory_space<vmem>>, %arg2: memref<256x128xbf16, #tpu.memory_space<vmem>>, %arg3: memref<1x128xf32, #tpu.memory_space<vmem>>, %arg4: memref<256x128xbf16, #tpu.memory_space<vmem>>) attributes {dimension_semantics = [#tpu.dimension_semantics<parallel>], iteration_bounds = array<i64: 3>, scalar_prefetch = 0 : i64, scratch_operands = 0 : i64, tpu.core_type = #tpu.core_type<tc>, window_params = [{transform_indices = @transform_0, window_bounds = array<i64: 256, 256>}, {pipeline_mode = #tpu.pipeline_mode<synchronous>, transform_indices = @transform_1, window_bounds = array<i64: 256, 128>}, {pipeline_mode = #tpu.pipeline_mode<synchronous>, transform_indices = @transform_2, window_bounds = array<i64: 1, 128>}, {transform_indices = @transform_3, window_bounds = array<i64: 256, 128>}]} {
    %c0 = arith.constant 0 : index
    %c0_0 = arith.constant 0 : index
    %0 = vector.load %arg1[%c0, %c0_0] : memref<256x256xbf16, #tpu.memory_space<vmem>>, vector<256x256xbf16>
    %c0_1 = arith.constant 0 : index
    %c0_2 = arith.constant 0 : index
    %1 = vector.load %arg2[%c0_1, %c0_2] : memref<256x128xbf16, #tpu.memory_space<vmem>>, vector<256x128xbf16>
    %cst = arith.constant dense<0.000000e+00> : vector<256x128xf32>
    %2 = tpu.matmul %0, %1, %cst {dimension_numbers = #tpu.dot_dimension_numbers<[1], [0], [0], [1], [0, 0, 1, 1], [], []>} : vector<256x256xbf16>, vector<256x128xbf16>, vector<256x128xf32> -> vector<256x128xf32>
    %c0_3 = arith.constant 0 : index
    %c0_4 = arith.constant 0 : index
    %3 = vector.load %arg3[%c0_3, %c0_4] : memref<1x128xf32, #tpu.memory_space<vmem>>, vector<1x128xf32>
    %4 = vector.broadcast %3 : vector<1x128xf32> to vector<256x128xf32>
    %5 = arith.addf %2, %4 : vector<256x128xf32>
    %cst_5 = arith.constant 0.000000e+00 : f32
    %6 = vector.broadcast %cst_5 : f32 to vector<256x128xf32>
    %7 = arith.maximumf %5, %6 : vector<256x128xf32>
    %8 = arith.truncf %7 : vector<256x128xf32> to vector<256x128xbf16>
    %c0_6 = arith.constant 0 : index
    %c0_7 = arith.constant 0 : index
    %9 = vector.load %arg4[%c0_6, %c0_7] : memref<256x128xbf16, #tpu.memory_space<vmem>>, vector<256x128xbf16>
    tpu.vector_store %arg4[%c0_6, %c0_7], %8 {strides = array<i32>} : memref<256x128xbf16, #tpu.memory_space<vmem>>, vector<256x128xbf16>,
    return
  }
  func.func @transform_0(%arg0: i32) -> (i32, i32) {
    %c0_i32 = arith.constant 0 : i32
    %c0_i32_0 = arith.constant 0 : i32
    return %arg0, %c0_i32 : i32, i32
  }
  func.func @transform_1(%arg0: i32) -> (i32, i32) {
    %c0_i32 = arith.constant 0 : i32
    %c0_i32_0 = arith.constant 0 : i32
    %c0_i32_1 = arith.constant 0 : i32
    return %c0_i32, %c0_i32_0 : i32, i32
  }
  func.func @transform_2(%arg0: i32) -> (i32, i32) {
    %c0_i32 = arith.constant 0 : i32
    %c0_i32_0 = arith.constant 0 : i32
    %c0_i32_1 = arith.constant 0 : i32
    return %c0_i32, %c0_i32_0 : i32, i32
  }
  func.func @transform_3(%arg0: i32) -> (i32, i32) {
    %c0_i32 = arith.constant 0 : i32
    %c0_i32_0 = arith.constant 0 : i32
    return %arg0, %c0_i32 : i32, i32
  }
}

module attributes {stable_mosaic.version = 11 : i64} {
  func.func @_conv23_fused_kernel(%arg0: i32, %arg1: memref<1x20x8x512xbf16, #tpu.memory_space<vmem>>, %arg2: memref<2048x128xbf16, #tpu.memory_space<vmem>>, %arg3: memref<1x128xf32, #tpu.memory_space<vmem>>, %arg4: memref<1152x128xbf16, #tpu.memory_space<vmem>>, %arg5: memref<1x128xf32, #tpu.memory_space<vmem>>, %arg6: memref<1x48x128xbf16, #tpu.memory_space<vmem>>, %arg7: memref<64x2048xf32, #tpu.memory_space<vmem>>, %arg8: memref<64x128xf32, #tpu.memory_space<vmem>>, %arg9: memref<48x1152xf32, #tpu.memory_space<vmem>>) attributes {dimension_semantics = [#tpu.dimension_semantics<parallel>], iteration_bounds = array<i64: 2>, scalar_prefetch = 0 : i64, scratch_operands = 3 : i64, tpu.core_type = #tpu.core_type<tc>, window_params = [{transform_indices = @transform_0, window_bounds = array<i64: 1, 20, 8, 512>}, {pipeline_mode = #tpu.pipeline_mode<synchronous>, transform_indices = @transform_1, window_bounds = array<i64: 2048, 128>}, {pipeline_mode = #tpu.pipeline_mode<synchronous>, transform_indices = @transform_2, window_bounds = array<i64: 1, 128>}, {pipeline_mode = #tpu.pipeline_mode<synchronous>, transform_indices = @transform_3, window_bounds = array<i64: 1152, 128>}, {pipeline_mode = #tpu.pipeline_mode<synchronous>, transform_indices = @transform_4, window_bounds = array<i64: 1, 128>}, {transform_indices = @transform_5, window_bounds = array<i64: 1, 48, 128>}]} {
    %c0 = arith.constant 0 : index
    %c0_0 = arith.constant 0 : index
    %c0_1 = arith.constant 0 : index
    %c0_2 = arith.constant 0 : index
    %0 = vector.load %arg1[%c0, %c0_0, %c0_1, %c0_2] : memref<1x20x8x512xbf16, #tpu.memory_space<vmem>>, vector<1x1x8x512xbf16>
    %1 = vector.shape_cast %0 : vector<1x1x8x512xbf16> to vector<8x512xbf16>
    %2 = arith.extf %1 : vector<8x512xbf16> to vector<8x512xf32>
    %c0_3 = arith.constant 0 : index
    %c0_4 = arith.constant 0 : index
    %3 = vector.load %arg7[%c0_3, %c0_4] : memref<64x2048xf32, #tpu.memory_space<vmem>>, vector<8x512xf32>
    tpu.vector_store %arg7[%c0_3, %c0_4], %2 {strides = array<i32>} : memref<64x2048xf32, #tpu.memory_space<vmem>>, vector<8x512xf32>,
    %c0_5 = arith.constant 0 : index
    %c1 = arith.constant 1 : index
    %c0_6 = arith.constant 0 : index
    %c0_7 = arith.constant 0 : index
    %4 = vector.load %arg1[%c0_5, %c1, %c0_6, %c0_7] : memref<1x20x8x512xbf16, #tpu.memory_space<vmem>>, vector<1x1x8x512xbf16>
    %5 = vector.shape_cast %4 : vector<1x1x8x512xbf16> to vector<8x512xbf16>
    %6 = arith.extf %5 : vector<8x512xbf16> to vector<8x512xf32>
    %c8 = arith.constant 8 : index
    %c0_8 = arith.constant 0 : index
    %7 = vector.load %arg7[%c8, %c0_8] : memref<64x2048xf32, #tpu.memory_space<vmem>>, vector<8x512xf32>
    tpu.vector_store %arg7[%c8, %c0_8], %6 {strides = array<i32>} : memref<64x2048xf32, #tpu.memory_space<vmem>>, vector<8x512xf32>,
    %c0_9 = arith.constant 0 : index
    %c2 = arith.constant 2 : index
    %c0_10 = arith.constant 0 : index
    %c0_11 = arith.constant 0 : index
    %8 = vector.load %arg1[%c0_9, %c2, %c0_10, %c0_11] : memref<1x20x8x512xbf16, #tpu.memory_space<vmem>>, vector<1x1x8x512xbf16>
    %9 = vector.shape_cast %8 : vector<1x1x8x512xbf16> to vector<8x512xbf16>
    %10 = arith.extf %9 : vector<8x512xbf16> to vector<8x512xf32>
    %c16 = arith.constant 16 : index
    %c0_12 = arith.constant 0 : index
    %11 = vector.load %arg7[%c16, %c0_12] : memref<64x2048xf32, #tpu.memory_space<vmem>>, vector<8x512xf32>
    tpu.vector_store %arg7[%c16, %c0_12], %10 {strides = array<i32>} : memref<64x2048xf32, #tpu.memory_space<vmem>>, vector<8x512xf32>,
    %c0_13 = arith.constant 0 : index
    %c3 = arith.constant 3 : index
    %c0_14 = arith.constant 0 : index
    %c0_15 = arith.constant 0 : index
    %12 = vector.load %arg1[%c0_13, %c3, %c0_14, %c0_15] : memref<1x20x8x512xbf16, #tpu.memory_space<vmem>>, vector<1x1x8x512xbf16>
    %13 = vector.shape_cast %12 : vector<1x1x8x512xbf16> to vector<8x512xbf16>
    %14 = arith.extf %13 : vector<8x512xbf16> to vector<8x512xf32>
    %c24 = arith.constant 24 : index
    %c0_16 = arith.constant 0 : index
    %15 = vector.load %arg7[%c24, %c0_16] : memref<64x2048xf32, #tpu.memory_space<vmem>>, vector<8x512xf32>
    tpu.vector_store %arg7[%c24, %c0_16], %14 {strides = array<i32>} : memref<64x2048xf32, #tpu.memory_space<vmem>>, vector<8x512xf32>,
    %c0_17 = arith.constant 0 : index
    %c4 = arith.constant 4 : index
    %c0_18 = arith.constant 0 : index
    %c0_19 = arith.constant 0 : index
    %16 = vector.load %arg1[%c0_17, %c4, %c0_18, %c0_19] : memref<1x20x8x512xbf16, #tpu.memory_space<vmem>>, vector<1x1x8x512xbf16>
    %17 = vector.shape_cast %16 : vector<1x1x8x512xbf16> to vector<8x512xbf16>
    %18 = arith.extf %17 : vector<8x512xbf16> to vector<8x512xf32>
    %c32 = arith.constant 32 : index
    %c0_20 = arith.constant 0 : index
    %19 = vector.load %arg7[%c32, %c0_20] : memref<64x2048xf32, #tpu.memory_space<vmem>>, vector<8x512xf32>
    tpu.vector_store %arg7[%c32, %c0_20], %18 {strides = array<i32>} : memref<64x2048xf32, #tpu.memory_space<vmem>>, vector<8x512xf32>,
    %c0_21 = arith.constant 0 : index
    %c5 = arith.constant 5 : index
    %c0_22 = arith.constant 0 : index
    %c0_23 = arith.constant 0 : index
    %20 = vector.load %arg1[%c0_21, %c5, %c0_22, %c0_23] : memref<1x20x8x512xbf16, #tpu.memory_space<vmem>>, vector<1x1x8x512xbf16>
    %21 = vector.shape_cast %20 : vector<1x1x8x512xbf16> to vector<8x512xbf16>
    %22 = arith.extf %21 : vector<8x512xbf16> to vector<8x512xf32>
    %c40 = arith.constant 40 : index
    %c0_24 = arith.constant 0 : index
    %23 = vector.load %arg7[%c40, %c0_24] : memref<64x2048xf32, #tpu.memory_space<vmem>>, vector<8x512xf32>
    tpu.vector_store %arg7[%c40, %c0_24], %22 {strides = array<i32>} : memref<64x2048xf32, #tpu.memory_space<vmem>>, vector<8x512xf32>,
    %c0_25 = arith.constant 0 : index
    %c6 = arith.constant 6 : index
    %c0_26 = arith.constant 0 : index
    %c0_27 = arith.constant 0 : index
    %24 = vector.load %arg1[%c0_25, %c6, %c0_26, %c0_27] : memref<1x20x8x512xbf16, #tpu.memory_space<vmem>>, vector<1x1x8x512xbf16>
    %25 = vector.shape_cast %24 : vector<1x1x8x512xbf16> to vector<8x512xbf16>
    %26 = arith.extf %25 : vector<8x512xbf16> to vector<8x512xf32>
    %c48 = arith.constant 48 : index
    %c0_28 = arith.constant 0 : index
    %27 = vector.load %arg7[%c48, %c0_28] : memref<64x2048xf32, #tpu.memory_space<vmem>>, vector<8x512xf32>
    tpu.vector_store %arg7[%c48, %c0_28], %26 {strides = array<i32>} : memref<64x2048xf32, #tpu.memory_space<vmem>>, vector<8x512xf32>,
    %c0_29 = arith.constant 0 : index
    %c7 = arith.constant 7 : index
    %c0_30 = arith.constant 0 : index
    %c0_31 = arith.constant 0 : index
    %28 = vector.load %arg1[%c0_29, %c7, %c0_30, %c0_31] : memref<1x20x8x512xbf16, #tpu.memory_space<vmem>>, vector<1x1x8x512xbf16>
    %29 = vector.shape_cast %28 : vector<1x1x8x512xbf16> to vector<8x512xbf16>
    %30 = arith.extf %29 : vector<8x512xbf16> to vector<8x512xf32>
    %c56 = arith.constant 56 : index
    %c0_32 = arith.constant 0 : index
    %31 = vector.load %arg7[%c56, %c0_32] : memref<64x2048xf32, #tpu.memory_space<vmem>>, vector<8x512xf32>
    tpu.vector_store %arg7[%c56, %c0_32], %30 {strides = array<i32>} : memref<64x2048xf32, #tpu.memory_space<vmem>>, vector<8x512xf32>,
    %c0_33 = arith.constant 0 : index
    %c10 = arith.constant 10 : index
    %c0_34 = arith.constant 0 : index
    %c0_35 = arith.constant 0 : index
    %32 = vector.load %arg1[%c0_33, %c10, %c0_34, %c0_35] : memref<1x20x8x512xbf16, #tpu.memory_space<vmem>>, vector<1x1x8x512xbf16>
    %33 = vector.shape_cast %32 : vector<1x1x8x512xbf16> to vector<8x512xbf16>
    %34 = arith.extf %33 : vector<8x512xbf16> to vector<8x512xf32>
    %c0_36 = arith.constant 0 : index
    %c512 = arith.constant 512 : index
    %35 = vector.load %arg7[%c0_36, %c512] : memref<64x2048xf32, #tpu.memory_space<vmem>>, vector<8x512xf32>
    tpu.vector_store %arg7[%c0_36, %c512], %34 {strides = array<i32>} : memref<64x2048xf32, #tpu.memory_space<vmem>>, vector<8x512xf32>,
    %c0_37 = arith.constant 0 : index
    %c11 = arith.constant 11 : index
    %c0_38 = arith.constant 0 : index
    %c0_39 = arith.constant 0 : index
    %36 = vector.load %arg1[%c0_37, %c11, %c0_38, %c0_39] : memref<1x20x8x512xbf16, #tpu.memory_space<vmem>>, vector<1x1x8x512xbf16>
    %37 = vector.shape_cast %36 : vector<1x1x8x512xbf16> to vector<8x512xbf16>
    %38 = arith.extf %37 : vector<8x512xbf16> to vector<8x512xf32>
    %c8_40 = arith.constant 8 : index
    %c512_41 = arith.constant 512 : index
    %39 = vector.load %arg7[%c8_40, %c512_41] : memref<64x2048xf32, #tpu.memory_space<vmem>>, vector<8x512xf32>
    tpu.vector_store %arg7[%c8_40, %c512_41], %38 {strides = array<i32>} : memref<64x2048xf32, #tpu.memory_space<vmem>>, vector<8x512xf32>,
    %c0_42 = arith.constant 0 : index
    %c12 = arith.constant 12 : index
    %c0_43 = arith.constant 0 : index
    %c0_44 = arith.constant 0 : index
    %40 = vector.load %arg1[%c0_42, %c12, %c0_43, %c0_44] : memref<1x20x8x512xbf16, #tpu.memory_space<vmem>>, vector<1x1x8x512xbf16>
    %41 = vector.shape_cast %40 : vector<1x1x8x512xbf16> to vector<8x512xbf16>
    %42 = arith.extf %41 : vector<8x512xbf16> to vector<8x512xf32>
    %c16_45 = arith.constant 16 : index
    %c512_46 = arith.constant 512 : index
    %43 = vector.load %arg7[%c16_45, %c512_46] : memref<64x2048xf32, #tpu.memory_space<vmem>>, vector<8x512xf32>
    tpu.vector_store %arg7[%c16_45, %c512_46], %42 {strides = array<i32>} : memref<64x2048xf32, #tpu.memory_space<vmem>>, vector<8x512xf32>,
    %c0_47 = arith.constant 0 : index
    %c13 = arith.constant 13 : index
    %c0_48 = arith.constant 0 : index
    %c0_49 = arith.constant 0 : index
    %44 = vector.load %arg1[%c0_47, %c13, %c0_48, %c0_49] : memref<1x20x8x512xbf16, #tpu.memory_space<vmem>>, vector<1x1x8x512xbf16>
    %45 = vector.shape_cast %44 : vector<1x1x8x512xbf16> to vector<8x512xbf16>
    %46 = arith.extf %45 : vector<8x512xbf16> to vector<8x512xf32>
    %c24_50 = arith.constant 24 : index
    %c512_51 = arith.constant 512 : index
    %47 = vector.load %arg7[%c24_50, %c512_51] : memref<64x2048xf32, #tpu.memory_space<vmem>>, vector<8x512xf32>
    tpu.vector_store %arg7[%c24_50, %c512_51], %46 {strides = array<i32>} : memref<64x2048xf32, #tpu.memory_space<vmem>>, vector<8x512xf32>,
    %c0_52 = arith.constant 0 : index
    %c14 = arith.constant 14 : index
    %c0_53 = arith.constant 0 : index
    %c0_54 = arith.constant 0 : index
    %48 = vector.load %arg1[%c0_52, %c14, %c0_53, %c0_54] : memref<1x20x8x512xbf16, #tpu.memory_space<vmem>>, vector<1x1x8x512xbf16>
    %49 = vector.shape_cast %48 : vector<1x1x8x512xbf16> to vector<8x512xbf16>
    %50 = arith.extf %49 : vector<8x512xbf16> to vector<8x512xf32>
    %c32_55 = arith.constant 32 : index
    %c512_56 = arith.constant 512 : index
    %51 = vector.load %arg7[%c32_55, %c512_56] : memref<64x2048xf32, #tpu.memory_space<vmem>>, vector<8x512xf32>
    tpu.vector_store %arg7[%c32_55, %c512_56], %50 {strides = array<i32>} : memref<64x2048xf32, #tpu.memory_space<vmem>>, vector<8x512xf32>,
    %c0_57 = arith.constant 0 : index
    %c15 = arith.constant 15 : index
    %c0_58 = arith.constant 0 : index
    %c0_59 = arith.constant 0 : index
    %52 = vector.load %arg1[%c0_57, %c15, %c0_58, %c0_59] : memref<1x20x8x512xbf16, #tpu.memory_space<vmem>>, vector<1x1x8x512xbf16>
    %53 = vector.shape_cast %52 : vector<1x1x8x512xbf16> to vector<8x512xbf16>
    %54 = arith.extf %53 : vector<8x512xbf16> to vector<8x512xf32>
    %c40_60 = arith.constant 40 : index
    %c512_61 = arith.constant 512 : index
    %55 = vector.load %arg7[%c40_60, %c512_61] : memref<64x2048xf32, #tpu.memory_space<vmem>>, vector<8x512xf32>
    tpu.vector_store %arg7[%c40_60, %c512_61], %54 {strides = array<i32>} : memref<64x2048xf32, #tpu.memory_space<vmem>>, vector<8x512xf32>,
    %c0_62 = arith.constant 0 : index
    %c16_63 = arith.constant 16 : index
    %c0_64 = arith.constant 0 : index
    %c0_65 = arith.constant 0 : index
    %56 = vector.load %arg1[%c0_62, %c16_63, %c0_64, %c0_65] : memref<1x20x8x512xbf16, #tpu.memory_space<vmem>>, vector<1x1x8x512xbf16>
    %57 = vector.shape_cast %56 : vector<1x1x8x512xbf16> to vector<8x512xbf16>
    %58 = arith.extf %57 : vector<8x512xbf16> to vector<8x512xf32>
    %c48_66 = arith.constant 48 : index
    %c512_67 = arith.constant 512 : index
    %59 = vector.load %arg7[%c48_66, %c512_67] : memref<64x2048xf32, #tpu.memory_space<vmem>>, vector<8x512xf32>
    tpu.vector_store %arg7[%c48_66, %c512_67], %58 {strides = array<i32>} : memref<64x2048xf32, #tpu.memory_space<vmem>>, vector<8x512xf32>,
    %c0_68 = arith.constant 0 : index
    %c17 = arith.constant 17 : index
    %c0_69 = arith.constant 0 : index
    %c0_70 = arith.constant 0 : index
    %60 = vector.load %arg1[%c0_68, %c17, %c0_69, %c0_70] : memref<1x20x8x512xbf16, #tpu.memory_space<vmem>>, vector<1x1x8x512xbf16>
    %61 = vector.shape_cast %60 : vector<1x1x8x512xbf16> to vector<8x512xbf16>
    %62 = arith.extf %61 : vector<8x512xbf16> to vector<8x512xf32>
    %c56_71 = arith.constant 56 : index
    %c512_72 = arith.constant 512 : index
    %63 = vector.load %arg7[%c56_71, %c512_72] : memref<64x2048xf32, #tpu.memory_space<vmem>>, vector<8x512xf32>
    tpu.vector_store %arg7[%c56_71, %c512_72], %62 {strides = array<i32>} : memref<64x2048xf32, #tpu.memory_space<vmem>>, vector<8x512xf32>,
    %c0_73 = arith.constant 0 : index
    %c1_74 = arith.constant 1 : index
    %c0_75 = arith.constant 0 : index
    %c0_76 = arith.constant 0 : index
    %64 = vector.load %arg1[%c0_73, %c1_74, %c0_75, %c0_76] : memref<1x20x8x512xbf16, #tpu.memory_space<vmem>>, vector<1x1x8x512xbf16>
    %65 = vector.shape_cast %64 : vector<1x1x8x512xbf16> to vector<8x512xbf16>
    %66 = arith.extf %65 : vector<8x512xbf16> to vector<8x512xf32>
    %c0_77 = arith.constant 0 : index
    %c1024 = arith.constant 1024 : index
    %67 = vector.load %arg7[%c0_77, %c1024] : memref<64x2048xf32, #tpu.memory_space<vmem>>, vector<8x512xf32>
    tpu.vector_store %arg7[%c0_77, %c1024], %66 {strides = array<i32>} : memref<64x2048xf32, #tpu.memory_space<vmem>>, vector<8x512xf32>,
    %c0_78 = arith.constant 0 : index
    %c2_79 = arith.constant 2 : index
    %c0_80 = arith.constant 0 : index
    %c0_81 = arith.constant 0 : index
    %68 = vector.load %arg1[%c0_78, %c2_79, %c0_80, %c0_81] : memref<1x20x8x512xbf16, #tpu.memory_space<vmem>>, vector<1x1x8x512xbf16>
    %69 = vector.shape_cast %68 : vector<1x1x8x512xbf16> to vector<8x512xbf16>
    %70 = arith.extf %69 : vector<8x512xbf16> to vector<8x512xf32>
    %c8_82 = arith.constant 8 : index
    %c1024_83 = arith.constant 1024 : index
    %71 = vector.load %arg7[%c8_82, %c1024_83] : memref<64x2048xf32, #tpu.memory_space<vmem>>, vector<8x512xf32>
    tpu.vector_store %arg7[%c8_82, %c1024_83], %70 {strides = array<i32>} : memref<64x2048xf32, #tpu.memory_space<vmem>>, vector<8x512xf32>,
    %c0_84 = arith.constant 0 : index
    %c3_85 = arith.constant 3 : index
    %c0_86 = arith.constant 0 : index
    %c0_87 = arith.constant 0 : index
    %72 = vector.load %arg1[%c0_84, %c3_85, %c0_86, %c0_87] : memref<1x20x8x512xbf16, #tpu.memory_space<vmem>>, vector<1x1x8x512xbf16>
    %73 = vector.shape_cast %72 : vector<1x1x8x512xbf16> to vector<8x512xbf16>
    %74 = arith.extf %73 : vector<8x512xbf16> to vector<8x512xf32>
    %c16_88 = arith.constant 16 : index
    %c1024_89 = arith.constant 1024 : index
    %75 = vector.load %arg7[%c16_88, %c1024_89] : memref<64x2048xf32, #tpu.memory_space<vmem>>, vector<8x512xf32>
    tpu.vector_store %arg7[%c16_88, %c1024_89], %74 {strides = array<i32>} : memref<64x2048xf32, #tpu.memory_space<vmem>>, vector<8x512xf32>,
    %c0_90 = arith.constant 0 : index
    %c4_91 = arith.constant 4 : index
    %c0_92 = arith.constant 0 : index
    %c0_93 = arith.constant 0 : index
    %76 = vector.load %arg1[%c0_90, %c4_91, %c0_92, %c0_93] : memref<1x20x8x512xbf16, #tpu.memory_space<vmem>>, vector<1x1x8x512xbf16>
    %77 = vector.shape_cast %76 : vector<1x1x8x512xbf16> to vector<8x512xbf16>
    %78 = arith.extf %77 : vector<8x512xbf16> to vector<8x512xf32>
    %c24_94 = arith.constant 24 : index
    %c1024_95 = arith.constant 1024 : index
    %79 = vector.load %arg7[%c24_94, %c1024_95] : memref<64x2048xf32, #tpu.memory_space<vmem>>, vector<8x512xf32>
    tpu.vector_store %arg7[%c24_94, %c1024_95], %78 {strides = array<i32>} : memref<64x2048xf32, #tpu.memory_space<vmem>>, vector<8x512xf32>,
    %c0_96 = arith.constant 0 : index
    %c5_97 = arith.constant 5 : index
    %c0_98 = arith.constant 0 : index
    %c0_99 = arith.constant 0 : index
    %80 = vector.load %arg1[%c0_96, %c5_97, %c0_98, %c0_99] : memref<1x20x8x512xbf16, #tpu.memory_space<vmem>>, vector<1x1x8x512xbf16>
    %81 = vector.shape_cast %80 : vector<1x1x8x512xbf16> to vector<8x512xbf16>
    %82 = arith.extf %81 : vector<8x512xbf16> to vector<8x512xf32>
    %c32_100 = arith.constant 32 : index
    %c1024_101 = arith.constant 1024 : index
    %83 = vector.load %arg7[%c32_100, %c1024_101] : memref<64x2048xf32, #tpu.memory_space<vmem>>, vector<8x512xf32>
    tpu.vector_store %arg7[%c32_100, %c1024_101], %82 {strides = array<i32>} : memref<64x2048xf32, #tpu.memory_space<vmem>>, vector<8x512xf32>,
    %c0_102 = arith.constant 0 : index
    %c6_103 = arith.constant 6 : index
    %c0_104 = arith.constant 0 : index
    %c0_105 = arith.constant 0 : index
    %84 = vector.load %arg1[%c0_102, %c6_103, %c0_104, %c0_105] : memref<1x20x8x512xbf16, #tpu.memory_space<vmem>>, vector<1x1x8x512xbf16>
    %85 = vector.shape_cast %84 : vector<1x1x8x512xbf16> to vector<8x512xbf16>
    %86 = arith.extf %85 : vector<8x512xbf16> to vector<8x512xf32>
    %c40_106 = arith.constant 40 : index
    %c1024_107 = arith.constant 1024 : index
    %87 = vector.load %arg7[%c40_106, %c1024_107] : memref<64x2048xf32, #tpu.memory_space<vmem>>, vector<8x512xf32>
    tpu.vector_store %arg7[%c40_106, %c1024_107], %86 {strides = array<i32>} : memref<64x2048xf32, #tpu.memory_space<vmem>>, vector<8x512xf32>,
    %c0_108 = arith.constant 0 : index
    %c7_109 = arith.constant 7 : index
    %c0_110 = arith.constant 0 : index
    %c0_111 = arith.constant 0 : index
    %88 = vector.load %arg1[%c0_108, %c7_109, %c0_110, %c0_111] : memref<1x20x8x512xbf16, #tpu.memory_space<vmem>>, vector<1x1x8x512xbf16>
    %89 = vector.shape_cast %88 : vector<1x1x8x512xbf16> to vector<8x512xbf16>
    %90 = arith.extf %89 : vector<8x512xbf16> to vector<8x512xf32>
    %c48_112 = arith.constant 48 : index
    %c1024_113 = arith.constant 1024 : index
    %91 = vector.load %arg7[%c48_112, %c1024_113] : memref<64x2048xf32, #tpu.memory_space<vmem>>, vector<8x512xf32>
    tpu.vector_store %arg7[%c48_112, %c1024_113], %90 {strides = array<i32>} : memref<64x2048xf32, #tpu.memory_space<vmem>>, vector<8x512xf32>,
    %c0_114 = arith.constant 0 : index
    %c8_115 = arith.constant 8 : index
    %c0_116 = arith.constant 0 : index
    %c0_117 = arith.constant 0 : index
    %92 = vector.load %arg1[%c0_114, %c8_115, %c0_116, %c0_117] : memref<1x20x8x512xbf16, #tpu.memory_space<vmem>>, vector<1x1x8x512xbf16>
    %93 = vector.shape_cast %92 : vector<1x1x8x512xbf16> to vector<8x512xbf16>
    %94 = arith.extf %93 : vector<8x512xbf16> to vector<8x512xf32>
    %c56_118 = arith.constant 56 : index
    %c1024_119 = arith.constant 1024 : index
    %95 = vector.load %arg7[%c56_118, %c1024_119] : memref<64x2048xf32, #tpu.memory_space<vmem>>, vector<8x512xf32>
    tpu.vector_store %arg7[%c56_118, %c1024_119], %94 {strides = array<i32>} : memref<64x2048xf32, #tpu.memory_space<vmem>>, vector<8x512xf32>,
    %c0_120 = arith.constant 0 : index
    %c11_121 = arith.constant 11 : index
    %c0_122 = arith.constant 0 : index
    %c0_123 = arith.constant 0 : index
    %96 = vector.load %arg1[%c0_120, %c11_121, %c0_122, %c0_123] : memref<1x20x8x512xbf16, #tpu.memory_space<vmem>>, vector<1x1x8x512xbf16>
    %97 = vector.shape_cast %96 : vector<1x1x8x512xbf16> to vector<8x512xbf16>
    %98 = arith.extf %97 : vector<8x512xbf16> to vector<8x512xf32>
    %c0_124 = arith.constant 0 : index
    %c1536 = arith.constant 1536 : index
    %99 = vector.load %arg7[%c0_124, %c1536] : memref<64x2048xf32, #tpu.memory_space<vmem>>, vector<8x512xf32>
    tpu.vector_store %arg7[%c0_124, %c1536], %98 {strides = array<i32>} : memref<64x2048xf32, #tpu.memory_space<vmem>>, vector<8x512xf32>,
    %c0_125 = arith.constant 0 : index
    %c12_126 = arith.constant 12 : index
    %c0_127 = arith.constant 0 : index
    %c0_128 = arith.constant 0 : index
    %100 = vector.load %arg1[%c0_125, %c12_126, %c0_127, %c0_128] : memref<1x20x8x512xbf16, #tpu.memory_space<vmem>>, vector<1x1x8x512xbf16>
    %101 = vector.shape_cast %100 : vector<1x1x8x512xbf16> to vector<8x512xbf16>
    %102 = arith.extf %101 : vector<8x512xbf16> to vector<8x512xf32>
    %c8_129 = arith.constant 8 : index
    %c1536_130 = arith.constant 1536 : index
    %103 = vector.load %arg7[%c8_129, %c1536_130] : memref<64x2048xf32, #tpu.memory_space<vmem>>, vector<8x512xf32>
    tpu.vector_store %arg7[%c8_129, %c1536_130], %102 {strides = array<i32>} : memref<64x2048xf32, #tpu.memory_space<vmem>>, vector<8x512xf32>,
    %c0_131 = arith.constant 0 : index
    %c13_132 = arith.constant 13 : index
    %c0_133 = arith.constant 0 : index
    %c0_134 = arith.constant 0 : index
    %104 = vector.load %arg1[%c0_131, %c13_132, %c0_133, %c0_134] : memref<1x20x8x512xbf16, #tpu.memory_space<vmem>>, vector<1x1x8x512xbf16>
    %105 = vector.shape_cast %104 : vector<1x1x8x512xbf16> to vector<8x512xbf16>
    %106 = arith.extf %105 : vector<8x512xbf16> to vector<8x512xf32>
    %c16_135 = arith.constant 16 : index
    %c1536_136 = arith.constant 1536 : index
    %107 = vector.load %arg7[%c16_135, %c1536_136] : memref<64x2048xf32, #tpu.memory_space<vmem>>, vector<8x512xf32>
    tpu.vector_store %arg7[%c16_135, %c1536_136], %106 {strides = array<i32>} : memref<64x2048xf32, #tpu.memory_space<vmem>>, vector<8x512xf32>,
    %c0_137 = arith.constant 0 : index
    %c14_138 = arith.constant 14 : index
    %c0_139 = arith.constant 0 : index
    %c0_140 = arith.constant 0 : index
    %108 = vector.load %arg1[%c0_137, %c14_138, %c0_139, %c0_140] : memref<1x20x8x512xbf16, #tpu.memory_space<vmem>>, vector<1x1x8x512xbf16>
    %109 = vector.shape_cast %108 : vector<1x1x8x512xbf16> to vector<8x512xbf16>
    %110 = arith.extf %109 : vector<8x512xbf16> to vector<8x512xf32>
    %c24_141 = arith.constant 24 : index
    %c1536_142 = arith.constant 1536 : index
    %111 = vector.load %arg7[%c24_141, %c1536_142] : memref<64x2048xf32, #tpu.memory_space<vmem>>, vector<8x512xf32>
    tpu.vector_store %arg7[%c24_141, %c1536_142], %110 {strides = array<i32>} : memref<64x2048xf32, #tpu.memory_space<vmem>>, vector<8x512xf32>,
    %c0_143 = arith.constant 0 : index
    %c15_144 = arith.constant 15 : index
    %c0_145 = arith.constant 0 : index
    %c0_146 = arith.constant 0 : index
    %112 = vector.load %arg1[%c0_143, %c15_144, %c0_145, %c0_146] : memref<1x20x8x512xbf16, #tpu.memory_space<vmem>>, vector<1x1x8x512xbf16>
    %113 = vector.shape_cast %112 : vector<1x1x8x512xbf16> to vector<8x512xbf16>
    %114 = arith.extf %113 : vector<8x512xbf16> to vector<8x512xf32>
    %c32_147 = arith.constant 32 : index
    %c1536_148 = arith.constant 1536 : index
    %115 = vector.load %arg7[%c32_147, %c1536_148] : memref<64x2048xf32, #tpu.memory_space<vmem>>, vector<8x512xf32>
    tpu.vector_store %arg7[%c32_147, %c1536_148], %114 {strides = array<i32>} : memref<64x2048xf32, #tpu.memory_space<vmem>>, vector<8x512xf32>,
    %c0_149 = arith.constant 0 : index
    %c16_150 = arith.constant 16 : index
    %c0_151 = arith.constant 0 : index
    %c0_152 = arith.constant 0 : index
    %116 = vector.load %arg1[%c0_149, %c16_150, %c0_151, %c0_152] : memref<1x20x8x512xbf16, #tpu.memory_space<vmem>>, vector<1x1x8x512xbf16>
    %117 = vector.shape_cast %116 : vector<1x1x8x512xbf16> to vector<8x512xbf16>
    %118 = arith.extf %117 : vector<8x512xbf16> to vector<8x512xf32>
    %c40_153 = arith.constant 40 : index
    %c1536_154 = arith.constant 1536 : index
    %119 = vector.load %arg7[%c40_153, %c1536_154] : memref<64x2048xf32, #tpu.memory_space<vmem>>, vector<8x512xf32>
    tpu.vector_store %arg7[%c40_153, %c1536_154], %118 {strides = array<i32>} : memref<64x2048xf32, #tpu.memory_space<vmem>>, vector<8x512xf32>,
    %c0_155 = arith.constant 0 : index
    %c17_156 = arith.constant 17 : index
    %c0_157 = arith.constant 0 : index
    %c0_158 = arith.constant 0 : index
    %120 = vector.load %arg1[%c0_155, %c17_156, %c0_157, %c0_158] : memref<1x20x8x512xbf16, #tpu.memory_space<vmem>>, vector<1x1x8x512xbf16>
    %121 = vector.shape_cast %120 : vector<1x1x8x512xbf16> to vector<8x512xbf16>
    %122 = arith.extf %121 : vector<8x512xbf16> to vector<8x512xf32>
    %c48_159 = arith.constant 48 : index
    %c1536_160 = arith.constant 1536 : index
    %123 = vector.load %arg7[%c48_159, %c1536_160] : memref<64x2048xf32, #tpu.memory_space<vmem>>, vector<8x512xf32>
    tpu.vector_store %arg7[%c48_159, %c1536_160], %122 {strides = array<i32>} : memref<64x2048xf32, #tpu.memory_space<vmem>>, vector<8x512xf32>,
    %c0_161 = arith.constant 0 : index
    %c18 = arith.constant 18 : index
    %c0_162 = arith.constant 0 : index
    %c0_163 = arith.constant 0 : index
    %124 = vector.load %arg1[%c0_161, %c18, %c0_162, %c0_163] : memref<1x20x8x512xbf16, #tpu.memory_space<vmem>>, vector<1x1x8x512xbf16>
    %125 = vector.shape_cast %124 : vector<1x1x8x512xbf16> to vector<8x512xbf16>
    %126 = arith.extf %125 : vector<8x512xbf16> to vector<8x512xf32>
    %c56_164 = arith.constant 56 : index
    %c1536_165 = arith.constant 1536 : index
    %127 = vector.load %arg7[%c56_164, %c1536_165] : memref<64x2048xf32, #tpu.memory_space<vmem>>, vector<8x512xf32>
    tpu.vector_store %arg7[%c56_164, %c1536_165], %126 {strides = array<i32>} : memref<64x2048xf32, #tpu.memory_space<vmem>>, vector<8x512xf32>,
    %c0_166 = arith.constant 0 : index
    %c0_167 = arith.constant 0 : index
    %128 = vector.load %arg7[%c0_166, %c0_167] : memref<64x2048xf32, #tpu.memory_space<vmem>>, vector<64x2048xf32>
    %129 = arith.truncf %128 : vector<64x2048xf32> to vector<64x2048xbf16>
    %c0_168 = arith.constant 0 : index
    %c0_169 = arith.constant 0 : index
    %130 = vector.load %arg2[%c0_168, %c0_169] : memref<2048x128xbf16, #tpu.memory_space<vmem>>, vector<2048x128xbf16>
    %cst = arith.constant dense<0.000000e+00> : vector<64x128xf32>
    %131 = tpu.matmul %129, %130, %cst {dimension_numbers = #tpu.dot_dimension_numbers<[1], [0], [0], [1], [0, 0, 1, 1], [], []>} : vector<64x2048xbf16>, vector<2048x128xbf16>, vector<64x128xf32> -> vector<64x128xf32>
    %c0_170 = arith.constant 0 : index
    %c0_171 = arith.constant 0 : index
    %132 = vector.load %arg3[%c0_170, %c0_171] : memref<1x128xf32, #tpu.memory_space<vmem>>, vector<1x128xf32>
    %133 = vector.broadcast %132 : vector<1x128xf32> to vector<64x128xf32>
    %134 = arith.addf %131, %133 : vector<64x128xf32>
    %cst_172 = arith.constant 0.000000e+00 : f32
    %135 = vector.broadcast %cst_172 : f32 to vector<64x128xf32>
    %136 = arith.maximumf %134, %135 : vector<64x128xf32>
    %c0_173 = arith.constant 0 : index
    %c0_174 = arith.constant 0 : index
    %137 = vector.load %arg8[%c0_173, %c0_174] : memref<64x128xf32, #tpu.memory_space<vmem>>, vector<64x128xf32>
    tpu.vector_store %arg8[%c0_173, %c0_174], %136 {strides = array<i32>} : memref<64x128xf32, #tpu.memory_space<vmem>>, vector<64x128xf32>,
    %cst_175 = arith.constant 0.000000e+00 : f32
    %138 = vector.broadcast %cst_175 : f32 to vector<48x1152xf32>
    %c0_176 = arith.constant 0 : index
    %c0_177 = arith.constant 0 : index
    %139 = vector.load %arg9[%c0_176, %c0_177] : memref<48x1152xf32, #tpu.memory_space<vmem>>, vector<48x1152xf32>
    tpu.vector_store %arg9[%c0_176, %c0_177], %138 {strides = array<i32>} : memref<48x1152xf32, #tpu.memory_space<vmem>>, vector<48x1152xf32>,
    %c0_178 = arith.constant 0 : index
    %c0_179 = arith.constant 0 : index
    %140 = vector.load %arg8[%c0_178, %c0_179] : memref<64x128xf32, #tpu.memory_space<vmem>>, vector<6x128xf32>
    %c0_180 = arith.constant 0 : index
    %c0_181 = arith.constant 0 : index
    %141 = vector.load %arg9[%c0_180, %c0_181] : memref<48x1152xf32, #tpu.memory_space<vmem>>, vector<6x128xf32>
    tpu.vector_store %arg9[%c0_180, %c0_181], %140 {strides = array<i32>} : memref<48x1152xf32, #tpu.memory_space<vmem>>, vector<6x128xf32>,
    %c8_182 = arith.constant 8 : index
    %c0_183 = arith.constant 0 : index
    %142 = vector.load %arg8[%c8_182, %c0_183] : memref<64x128xf32, #tpu.memory_space<vmem>>, vector<6x128xf32>
    %c8_184 = arith.constant 8 : index
    %c0_185 = arith.constant 0 : index
    %143 = vector.load %arg9[%c8_184, %c0_185] : memref<48x1152xf32, #tpu.memory_space<vmem>>, vector<6x128xf32>
    tpu.vector_store %arg9[%c8_184, %c0_185], %142 {strides = array<i32>} : memref<48x1152xf32, #tpu.memory_space<vmem>>, vector<6x128xf32>,
    %c16_186 = arith.constant 16 : index
    %c0_187 = arith.constant 0 : index
    %144 = vector.load %arg8[%c16_186, %c0_187] : memref<64x128xf32, #tpu.memory_space<vmem>>, vector<6x128xf32>
    %c16_188 = arith.constant 16 : index
    %c0_189 = arith.constant 0 : index
    %145 = vector.load %arg9[%c16_188, %c0_189] : memref<48x1152xf32, #tpu.memory_space<vmem>>, vector<6x128xf32>
    tpu.vector_store %arg9[%c16_188, %c0_189], %144 {strides = array<i32>} : memref<48x1152xf32, #tpu.memory_space<vmem>>, vector<6x128xf32>,
    %c24_190 = arith.constant 24 : index
    %c0_191 = arith.constant 0 : index
    %146 = vector.load %arg8[%c24_190, %c0_191] : memref<64x128xf32, #tpu.memory_space<vmem>>, vector<6x128xf32>
    %c24_192 = arith.constant 24 : index
    %c0_193 = arith.constant 0 : index
    %147 = vector.load %arg9[%c24_192, %c0_193] : memref<48x1152xf32, #tpu.memory_space<vmem>>, vector<6x128xf32>
    tpu.vector_store %arg9[%c24_192, %c0_193], %146 {strides = array<i32>} : memref<48x1152xf32, #tpu.memory_space<vmem>>, vector<6x128xf32>,
    %c32_194 = arith.constant 32 : index
    %c0_195 = arith.constant 0 : index
    %148 = vector.load %arg8[%c32_194, %c0_195] : memref<64x128xf32, #tpu.memory_space<vmem>>, vector<6x128xf32>
    %c32_196 = arith.constant 32 : index
    %c0_197 = arith.constant 0 : index
    %149 = vector.load %arg9[%c32_196, %c0_197] : memref<48x1152xf32, #tpu.memory_space<vmem>>, vector<6x128xf32>
    tpu.vector_store %arg9[%c32_196, %c0_197], %148 {strides = array<i32>} : memref<48x1152xf32, #tpu.memory_space<vmem>>, vector<6x128xf32>,
    %c40_198 = arith.constant 40 : index
    %c0_199 = arith.constant 0 : index
    %150 = vector.load %arg8[%c40_198, %c0_199] : memref<64x128xf32, #tpu.memory_space<vmem>>, vector<6x128xf32>
    %c40_200 = arith.constant 40 : index
    %c0_201 = arith.constant 0 : index
    %151 = vector.load %arg9[%c40_200, %c0_201] : memref<48x1152xf32, #tpu.memory_space<vmem>>, vector<6x128xf32>
    tpu.vector_store %arg9[%c40_200, %c0_201], %150 {strides = array<i32>} : memref<48x1152xf32, #tpu.memory_space<vmem>>, vector<6x128xf32>,
    %c1_202 = arith.constant 1 : index
    %c0_203 = arith.constant 0 : index
    %152 = vector.load %arg8[%c1_202, %c0_203] : memref<64x128xf32, #tpu.memory_space<vmem>>, vector<6x128xf32>
    %c0_204 = arith.constant 0 : index
    %c128 = arith.constant 128 : index
    %153 = vector.load %arg9[%c0_204, %c128] : memref<48x1152xf32, #tpu.memory_space<vmem>>, vector<6x128xf32>
    tpu.vector_store %arg9[%c0_204, %c128], %152 {strides = array<i32>} : memref<48x1152xf32, #tpu.memory_space<vmem>>, vector<6x128xf32>,
    %c9 = arith.constant 9 : index
    %c0_205 = arith.constant 0 : index
    %154 = vector.load %arg8[%c9, %c0_205] : memref<64x128xf32, #tpu.memory_space<vmem>>, vector<6x128xf32>
    %c8_206 = arith.constant 8 : index
    %c128_207 = arith.constant 128 : index
    %155 = vector.load %arg9[%c8_206, %c128_207] : memref<48x1152xf32, #tpu.memory_space<vmem>>, vector<6x128xf32>
    tpu.vector_store %arg9[%c8_206, %c128_207], %154 {strides = array<i32>} : memref<48x1152xf32, #tpu.memory_space<vmem>>, vector<6x128xf32>,
    %c17_208 = arith.constant 17 : index
    %c0_209 = arith.constant 0 : index
    %156 = vector.load %arg8[%c17_208, %c0_209] : memref<64x128xf32, #tpu.memory_space<vmem>>, vector<6x128xf32>
    %c16_210 = arith.constant 16 : index
    %c128_211 = arith.constant 128 : index
    %157 = vector.load %arg9[%c16_210, %c128_211] : memref<48x1152xf32, #tpu.memory_space<vmem>>, vector<6x128xf32>
    tpu.vector_store %arg9[%c16_210, %c128_211], %156 {strides = array<i32>} : memref<48x1152xf32, #tpu.memory_space<vmem>>, vector<6x128xf32>,
    %c25 = arith.constant 25 : index
    %c0_212 = arith.constant 0 : index
    %158 = vector.load %arg8[%c25, %c0_212] : memref<64x128xf32, #tpu.memory_space<vmem>>, vector<6x128xf32>
    %c24_213 = arith.constant 24 : index
    %c128_214 = arith.constant 128 : index
    %159 = vector.load %arg9[%c24_213, %c128_214] : memref<48x1152xf32, #tpu.memory_space<vmem>>, vector<6x128xf32>
    tpu.vector_store %arg9[%c24_213, %c128_214], %158 {strides = array<i32>} : memref<48x1152xf32, #tpu.memory_space<vmem>>, vector<6x128xf32>,
    %c33 = arith.constant 33 : index
    %c0_215 = arith.constant 0 : index
    %160 = vector.load %arg8[%c33, %c0_215] : memref<64x128xf32, #tpu.memory_space<vmem>>, vector<6x128xf32>
    %c32_216 = arith.constant 32 : index
    %c128_217 = arith.constant 128 : index
    %161 = vector.load %arg9[%c32_216, %c128_217] : memref<48x1152xf32, #tpu.memory_space<vmem>>, vector<6x128xf32>
    tpu.vector_store %arg9[%c32_216, %c128_217], %160 {strides = array<i32>} : memref<48x1152xf32, #tpu.memory_space<vmem>>, vector<6x128xf32>,
    %c41 = arith.constant 41 : index
    %c0_218 = arith.constant 0 : index
    %162 = vector.load %arg8[%c41, %c0_218] : memref<64x128xf32, #tpu.memory_space<vmem>>, vector<6x128xf32>
    %c40_219 = arith.constant 40 : index
    %c128_220 = arith.constant 128 : index
    %163 = vector.load %arg9[%c40_219, %c128_220] : memref<48x1152xf32, #tpu.memory_space<vmem>>, vector<6x128xf32>
    tpu.vector_store %arg9[%c40_219, %c128_220], %162 {strides = array<i32>} : memref<48x1152xf32, #tpu.memory_space<vmem>>, vector<6x128xf32>,
    %c2_221 = arith.constant 2 : index
    %c0_222 = arith.constant 0 : index
    %164 = vector.load %arg8[%c2_221, %c0_222] : memref<64x128xf32, #tpu.memory_space<vmem>>, vector<6x128xf32>
    %c0_223 = arith.constant 0 : index
    %c256 = arith.constant 256 : index
    %165 = vector.load %arg9[%c0_223, %c256] : memref<48x1152xf32, #tpu.memory_space<vmem>>, vector<6x128xf32>
    tpu.vector_store %arg9[%c0_223, %c256], %164 {strides = array<i32>} : memref<48x1152xf32, #tpu.memory_space<vmem>>, vector<6x128xf32>,
    %c10_224 = arith.constant 10 : index
    %c0_225 = arith.constant 0 : index
    %166 = vector.load %arg8[%c10_224, %c0_225] : memref<64x128xf32, #tpu.memory_space<vmem>>, vector<6x128xf32>
    %c8_226 = arith.constant 8 : index
    %c256_227 = arith.constant 256 : index
    %167 = vector.load %arg9[%c8_226, %c256_227] : memref<48x1152xf32, #tpu.memory_space<vmem>>, vector<6x128xf32>
    tpu.vector_store %arg9[%c8_226, %c256_227], %166 {strides = array<i32>} : memref<48x1152xf32, #tpu.memory_space<vmem>>, vector<6x128xf32>,
    %c18_228 = arith.constant 18 : index
    %c0_229 = arith.constant 0 : index
    %168 = vector.load %arg8[%c18_228, %c0_229] : memref<64x128xf32, #tpu.memory_space<vmem>>, vector<6x128xf32>
    %c16_230 = arith.constant 16 : index
    %c256_231 = arith.constant 256 : index
    %169 = vector.load %arg9[%c16_230, %c256_231] : memref<48x1152xf32, #tpu.memory_space<vmem>>, vector<6x128xf32>
    tpu.vector_store %arg9[%c16_230, %c256_231], %168 {strides = array<i32>} : memref<48x1152xf32, #tpu.memory_space<vmem>>, vector<6x128xf32>,
    %c26 = arith.constant 26 : index
    %c0_232 = arith.constant 0 : index
    %170 = vector.load %arg8[%c26, %c0_232] : memref<64x128xf32, #tpu.memory_space<vmem>>, vector<6x128xf32>
    %c24_233 = arith.constant 24 : index
    %c256_234 = arith.constant 256 : index
    %171 = vector.load %arg9[%c24_233, %c256_234] : memref<48x1152xf32, #tpu.memory_space<vmem>>, vector<6x128xf32>
    tpu.vector_store %arg9[%c24_233, %c256_234], %170 {strides = array<i32>} : memref<48x1152xf32, #tpu.memory_space<vmem>>, vector<6x128xf32>,
    %c34 = arith.constant 34 : index
    %c0_235 = arith.constant 0 : index
    %172 = vector.load %arg8[%c34, %c0_235] : memref<64x128xf32, #tpu.memory_space<vmem>>, vector<6x128xf32>
    %c32_236 = arith.constant 32 : index
    %c256_237 = arith.constant 256 : index
    %173 = vector.load %arg9[%c32_236, %c256_237] : memref<48x1152xf32, #tpu.memory_space<vmem>>, vector<6x128xf32>
    tpu.vector_store %arg9[%c32_236, %c256_237], %172 {strides = array<i32>} : memref<48x1152xf32, #tpu.memory_space<vmem>>, vector<6x128xf32>,
    %c42 = arith.constant 42 : index
    %c0_238 = arith.constant 0 : index
    %174 = vector.load %arg8[%c42, %c0_238] : memref<64x128xf32, #tpu.memory_space<vmem>>, vector<6x128xf32>
    %c40_239 = arith.constant 40 : index
    %c256_240 = arith.constant 256 : index
    %175 = vector.load %arg9[%c40_239, %c256_240] : memref<48x1152xf32, #tpu.memory_space<vmem>>, vector<6x128xf32>
    tpu.vector_store %arg9[%c40_239, %c256_240], %174 {strides = array<i32>} : memref<48x1152xf32, #tpu.memory_space<vmem>>, vector<6x128xf32>,
    %c8_241 = arith.constant 8 : index
    %c0_242 = arith.constant 0 : index
    %176 = vector.load %arg8[%c8_241, %c0_242] : memref<64x128xf32, #tpu.memory_space<vmem>>, vector<6x128xf32>
    %c0_243 = arith.constant 0 : index
    %c384 = arith.constant 384 : index
    %177 = vector.load %arg9[%c0_243, %c384] : memref<48x1152xf32, #tpu.memory_space<vmem>>, vector<6x128xf32>
    tpu.vector_store %arg9[%c0_243, %c384], %176 {strides = array<i32>} : memref<48x1152xf32, #tpu.memory_space<vmem>>, vector<6x128xf32>,
    %c16_244 = arith.constant 16 : index
    %c0_245 = arith.constant 0 : index
    %178 = vector.load %arg8[%c16_244, %c0_245] : memref<64x128xf32, #tpu.memory_space<vmem>>, vector<6x128xf32>
    %c8_246 = arith.constant 8 : index
    %c384_247 = arith.constant 384 : index
    %179 = vector.load %arg9[%c8_246, %c384_247] : memref<48x1152xf32, #tpu.memory_space<vmem>>, vector<6x128xf32>
    tpu.vector_store %arg9[%c8_246, %c384_247], %178 {strides = array<i32>} : memref<48x1152xf32, #tpu.memory_space<vmem>>, vector<6x128xf32>,
    %c24_248 = arith.constant 24 : index
    %c0_249 = arith.constant 0 : index
    %180 = vector.load %arg8[%c24_248, %c0_249] : memref<64x128xf32, #tpu.memory_space<vmem>>, vector<6x128xf32>
    %c16_250 = arith.constant 16 : index
    %c384_251 = arith.constant 384 : index
    %181 = vector.load %arg9[%c16_250, %c384_251] : memref<48x1152xf32, #tpu.memory_space<vmem>>, vector<6x128xf32>
    tpu.vector_store %arg9[%c16_250, %c384_251], %180 {strides = array<i32>} : memref<48x1152xf32, #tpu.memory_space<vmem>>, vector<6x128xf32>,
    %c32_252 = arith.constant 32 : index
    %c0_253 = arith.constant 0 : index
    %182 = vector.load %arg8[%c32_252, %c0_253] : memref<64x128xf32, #tpu.memory_space<vmem>>, vector<6x128xf32>
    %c24_254 = arith.constant 24 : index
    %c384_255 = arith.constant 384 : index
    %183 = vector.load %arg9[%c24_254, %c384_255] : memref<48x1152xf32, #tpu.memory_space<vmem>>, vector<6x128xf32>
    tpu.vector_store %arg9[%c24_254, %c384_255], %182 {strides = array<i32>} : memref<48x1152xf32, #tpu.memory_space<vmem>>, vector<6x128xf32>,
    %c40_256 = arith.constant 40 : index
    %c0_257 = arith.constant 0 : index
    %184 = vector.load %arg8[%c40_256, %c0_257] : memref<64x128xf32, #tpu.memory_space<vmem>>, vector<6x128xf32>
    %c32_258 = arith.constant 32 : index
    %c384_259 = arith.constant 384 : index
    %185 = vector.load %arg9[%c32_258, %c384_259] : memref<48x1152xf32, #tpu.memory_space<vmem>>, vector<6x128xf32>
    tpu.vector_store %arg9[%c32_258, %c384_259], %184 {strides = array<i32>} : memref<48x1152xf32, #tpu.memory_space<vmem>>, vector<6x128xf32>,
    %c48_260 = arith.constant 48 : index
    %c0_261 = arith.constant 0 : index
    %186 = vector.load %arg8[%c48_260, %c0_261] : memref<64x128xf32, #tpu.memory_space<vmem>>, vector<6x128xf32>
    %c40_262 = arith.constant 40 : index
    %c384_263 = arith.constant 384 : index
    %187 = vector.load %arg9[%c40_262, %c384_263] : memref<48x1152xf32, #tpu.memory_space<vmem>>, vector<6x128xf32>
    tpu.vector_store %arg9[%c40_262, %c384_263], %186 {strides = array<i32>} : memref<48x1152xf32, #tpu.memory_space<vmem>>, vector<6x128xf32>,
    %c9_264 = arith.constant 9 : index
    %c0_265 = arith.constant 0 : index
    %188 = vector.load %arg8[%c9_264, %c0_265] : memref<64x128xf32, #tpu.memory_space<vmem>>, vector<6x128xf32>
    %c0_266 = arith.constant 0 : index
    %c512_267 = arith.constant 512 : index
    %189 = vector.load %arg9[%c0_266, %c512_267] : memref<48x1152xf32, #tpu.memory_space<vmem>>, vector<6x128xf32>
    tpu.vector_store %arg9[%c0_266, %c512_267], %188 {strides = array<i32>} : memref<48x1152xf32, #tpu.memory_space<vmem>>, vector<6x128xf32>,
    %c17_268 = arith.constant 17 : index
    %c0_269 = arith.constant 0 : index
    %190 = vector.load %arg8[%c17_268, %c0_269] : memref<64x128xf32, #tpu.memory_space<vmem>>, vector<6x128xf32>
    %c8_270 = arith.constant 8 : index
    %c512_271 = arith.constant 512 : index
    %191 = vector.load %arg9[%c8_270, %c512_271] : memref<48x1152xf32, #tpu.memory_space<vmem>>, vector<6x128xf32>
    tpu.vector_store %arg9[%c8_270, %c512_271], %190 {strides = array<i32>} : memref<48x1152xf32, #tpu.memory_space<vmem>>, vector<6x128xf32>,
    %c25_272 = arith.constant 25 : index
    %c0_273 = arith.constant 0 : index
    %192 = vector.load %arg8[%c25_272, %c0_273] : memref<64x128xf32, #tpu.memory_space<vmem>>, vector<6x128xf32>
    %c16_274 = arith.constant 16 : index
    %c512_275 = arith.constant 512 : index
    %193 = vector.load %arg9[%c16_274, %c512_275] : memref<48x1152xf32, #tpu.memory_space<vmem>>, vector<6x128xf32>
    tpu.vector_store %arg9[%c16_274, %c512_275], %192 {strides = array<i32>} : memref<48x1152xf32, #tpu.memory_space<vmem>>, vector<6x128xf32>,
    %c33_276 = arith.constant 33 : index
    %c0_277 = arith.constant 0 : index
    %194 = vector.load %arg8[%c33_276, %c0_277] : memref<64x128xf32, #tpu.memory_space<vmem>>, vector<6x128xf32>
    %c24_278 = arith.constant 24 : index
    %c512_279 = arith.constant 512 : index
    %195 = vector.load %arg9[%c24_278, %c512_279] : memref<48x1152xf32, #tpu.memory_space<vmem>>, vector<6x128xf32>
    tpu.vector_store %arg9[%c24_278, %c512_279], %194 {strides = array<i32>} : memref<48x1152xf32, #tpu.memory_space<vmem>>, vector<6x128xf32>,
    %c41_280 = arith.constant 41 : index
    %c0_281 = arith.constant 0 : index
    %196 = vector.load %arg8[%c41_280, %c0_281] : memref<64x128xf32, #tpu.memory_space<vmem>>, vector<6x128xf32>
    %c32_282 = arith.constant 32 : index
    %c512_283 = arith.constant 512 : index
    %197 = vector.load %arg9[%c32_282, %c512_283] : memref<48x1152xf32, #tpu.memory_space<vmem>>, vector<6x128xf32>
    tpu.vector_store %arg9[%c32_282, %c512_283], %196 {strides = array<i32>} : memref<48x1152xf32, #tpu.memory_space<vmem>>, vector<6x128xf32>,
    %c49 = arith.constant 49 : index
    %c0_284 = arith.constant 0 : index
    %198 = vector.load %arg8[%c49, %c0_284] : memref<64x128xf32, #tpu.memory_space<vmem>>, vector<6x128xf32>
    %c40_285 = arith.constant 40 : index
    %c512_286 = arith.constant 512 : index
    %199 = vector.load %arg9[%c40_285, %c512_286] : memref<48x1152xf32, #tpu.memory_space<vmem>>, vector<6x128xf32>
    tpu.vector_store %arg9[%c40_285, %c512_286], %198 {strides = array<i32>} : memref<48x1152xf32, #tpu.memory_space<vmem>>, vector<6x128xf32>,
    %c10_287 = arith.constant 10 : index
    %c0_288 = arith.constant 0 : index
    %200 = vector.load %arg8[%c10_287, %c0_288] : memref<64x128xf32, #tpu.memory_space<vmem>>, vector<6x128xf32>
    %c0_289 = arith.constant 0 : index
    %c640 = arith.constant 640 : index
    %201 = vector.load %arg9[%c0_289, %c640] : memref<48x1152xf32, #tpu.memory_space<vmem>>, vector<6x128xf32>
    tpu.vector_store %arg9[%c0_289, %c640], %200 {strides = array<i32>} : memref<48x1152xf32, #tpu.memory_space<vmem>>, vector<6x128xf32>,
    %c18_290 = arith.constant 18 : index
    %c0_291 = arith.constant 0 : index
    %202 = vector.load %arg8[%c18_290, %c0_291] : memref<64x128xf32, #tpu.memory_space<vmem>>, vector<6x128xf32>
    %c8_292 = arith.constant 8 : index
    %c640_293 = arith.constant 640 : index
    %203 = vector.load %arg9[%c8_292, %c640_293] : memref<48x1152xf32, #tpu.memory_space<vmem>>, vector<6x128xf32>
    tpu.vector_store %arg9[%c8_292, %c640_293], %202 {strides = array<i32>} : memref<48x1152xf32, #tpu.memory_space<vmem>>, vector<6x128xf32>,
    %c26_294 = arith.constant 26 : index
    %c0_295 = arith.constant 0 : index
    %204 = vector.load %arg8[%c26_294, %c0_295] : memref<64x128xf32, #tpu.memory_space<vmem>>, vector<6x128xf32>
    %c16_296 = arith.constant 16 : index
    %c640_297 = arith.constant 640 : index
    %205 = vector.load %arg9[%c16_296, %c640_297] : memref<48x1152xf32, #tpu.memory_space<vmem>>, vector<6x128xf32>
    tpu.vector_store %arg9[%c16_296, %c640_297], %204 {strides = array<i32>} : memref<48x1152xf32, #tpu.memory_space<vmem>>, vector<6x128xf32>,
    %c34_298 = arith.constant 34 : index
    %c0_299 = arith.constant 0 : index
    %206 = vector.load %arg8[%c34_298, %c0_299] : memref<64x128xf32, #tpu.memory_space<vmem>>, vector<6x128xf32>
    %c24_300 = arith.constant 24 : index
    %c640_301 = arith.constant 640 : index
    %207 = vector.load %arg9[%c24_300, %c640_301] : memref<48x1152xf32, #tpu.memory_space<vmem>>, vector<6x128xf32>
    tpu.vector_store %arg9[%c24_300, %c640_301], %206 {strides = array<i32>} : memref<48x1152xf32, #tpu.memory_space<vmem>>, vector<6x128xf32>,
    %c42_302 = arith.constant 42 : index
    %c0_303 = arith.constant 0 : index
    %208 = vector.load %arg8[%c42_302, %c0_303] : memref<64x128xf32, #tpu.memory_space<vmem>>, vector<6x128xf32>
    %c32_304 = arith.constant 32 : index
    %c640_305 = arith.constant 640 : index
    %209 = vector.load %arg9[%c32_304, %c640_305] : memref<48x1152xf32, #tpu.memory_space<vmem>>, vector<6x128xf32>
    tpu.vector_store %arg9[%c32_304, %c640_305], %208 {strides = array<i32>} : memref<48x1152xf32, #tpu.memory_space<vmem>>, vector<6x128xf32>,
    %c50 = arith.constant 50 : index
    %c0_306 = arith.constant 0 : index
    %210 = vector.load %arg8[%c50, %c0_306] : memref<64x128xf32, #tpu.memory_space<vmem>>, vector<6x128xf32>
    %c40_307 = arith.constant 40 : index
    %c640_308 = arith.constant 640 : index
    %211 = vector.load %arg9[%c40_307, %c640_308] : memref<48x1152xf32, #tpu.memory_space<vmem>>, vector<6x128xf32>
    tpu.vector_store %arg9[%c40_307, %c640_308], %210 {strides = array<i32>} : memref<48x1152xf32, #tpu.memory_space<vmem>>, vector<6x128xf32>,
    %c16_309 = arith.constant 16 : index
    %c0_310 = arith.constant 0 : index
    %212 = vector.load %arg8[%c16_309, %c0_310] : memref<64x128xf32, #tpu.memory_space<vmem>>, vector<6x128xf32>
    %c0_311 = arith.constant 0 : index
    %c768 = arith.constant 768 : index
    %213 = vector.load %arg9[%c0_311, %c768] : memref<48x1152xf32, #tpu.memory_space<vmem>>, vector<6x128xf32>
    tpu.vector_store %arg9[%c0_311, %c768], %212 {strides = array<i32>} : memref<48x1152xf32, #tpu.memory_space<vmem>>, vector<6x128xf32>,
    %c24_312 = arith.constant 24 : index
    %c0_313 = arith.constant 0 : index
    %214 = vector.load %arg8[%c24_312, %c0_313] : memref<64x128xf32, #tpu.memory_space<vmem>>, vector<6x128xf32>
    %c8_314 = arith.constant 8 : index
    %c768_315 = arith.constant 768 : index
    %215 = vector.load %arg9[%c8_314, %c768_315] : memref<48x1152xf32, #tpu.memory_space<vmem>>, vector<6x128xf32>
    tpu.vector_store %arg9[%c8_314, %c768_315], %214 {strides = array<i32>} : memref<48x1152xf32, #tpu.memory_space<vmem>>, vector<6x128xf32>,
    %c32_316 = arith.constant 32 : index
    %c0_317 = arith.constant 0 : index
    %216 = vector.load %arg8[%c32_316, %c0_317] : memref<64x128xf32, #tpu.memory_space<vmem>>, vector<6x128xf32>
    %c16_318 = arith.constant 16 : index
    %c768_319 = arith.constant 768 : index
    %217 = vector.load %arg9[%c16_318, %c768_319] : memref<48x1152xf32, #tpu.memory_space<vmem>>, vector<6x128xf32>
    tpu.vector_store %arg9[%c16_318, %c768_319], %216 {strides = array<i32>} : memref<48x1152xf32, #tpu.memory_space<vmem>>, vector<6x128xf32>,
    %c40_320 = arith.constant 40 : index
    %c0_321 = arith.constant 0 : index
    %218 = vector.load %arg8[%c40_320, %c0_321] : memref<64x128xf32, #tpu.memory_space<vmem>>, vector<6x128xf32>
    %c24_322 = arith.constant 24 : index
    %c768_323 = arith.constant 768 : index
    %219 = vector.load %arg9[%c24_322, %c768_323] : memref<48x1152xf32, #tpu.memory_space<vmem>>, vector<6x128xf32>
    tpu.vector_store %arg9[%c24_322, %c768_323], %218 {strides = array<i32>} : memref<48x1152xf32, #tpu.memory_space<vmem>>, vector<6x128xf32>,
    %c48_324 = arith.constant 48 : index
    %c0_325 = arith.constant 0 : index
    %220 = vector.load %arg8[%c48_324, %c0_325] : memref<64x128xf32, #tpu.memory_space<vmem>>, vector<6x128xf32>
    %c32_326 = arith.constant 32 : index
    %c768_327 = arith.constant 768 : index
    %221 = vector.load %arg9[%c32_326, %c768_327] : memref<48x1152xf32, #tpu.memory_space<vmem>>, vector<6x128xf32>
    tpu.vector_store %arg9[%c32_326, %c768_327], %220 {strides = array<i32>} : memref<48x1152xf32, #tpu.memory_space<vmem>>, vector<6x128xf32>,
    %c56_328 = arith.constant 56 : index
    %c0_329 = arith.constant 0 : index
    %222 = vector.load %arg8[%c56_328, %c0_329] : memref<64x128xf32, #tpu.memory_space<vmem>>, vector<6x128xf32>
    %c40_330 = arith.constant 40 : index
    %c768_331 = arith.constant 768 : index
    %223 = vector.load %arg9[%c40_330, %c768_331] : memref<48x1152xf32, #tpu.memory_space<vmem>>, vector<6x128xf32>
    tpu.vector_store %arg9[%c40_330, %c768_331], %222 {strides = array<i32>} : memref<48x1152xf32, #tpu.memory_space<vmem>>, vector<6x128xf32>,
    %c17_332 = arith.constant 17 : index
    %c0_333 = arith.constant 0 : index
    %224 = vector.load %arg8[%c17_332, %c0_333] : memref<64x128xf32, #tpu.memory_space<vmem>>, vector<6x128xf32>
    %c0_334 = arith.constant 0 : index
    %c896 = arith.constant 896 : index
    %225 = vector.load %arg9[%c0_334, %c896] : memref<48x1152xf32, #tpu.memory_space<vmem>>, vector<6x128xf32>
    tpu.vector_store %arg9[%c0_334, %c896], %224 {strides = array<i32>} : memref<48x1152xf32, #tpu.memory_space<vmem>>, vector<6x128xf32>,
    %c25_335 = arith.constant 25 : index
    %c0_336 = arith.constant 0 : index
    %226 = vector.load %arg8[%c25_335, %c0_336] : memref<64x128xf32, #tpu.memory_space<vmem>>, vector<6x128xf32>
    %c8_337 = arith.constant 8 : index
    %c896_338 = arith.constant 896 : index
    %227 = vector.load %arg9[%c8_337, %c896_338] : memref<48x1152xf32, #tpu.memory_space<vmem>>, vector<6x128xf32>
    tpu.vector_store %arg9[%c8_337, %c896_338], %226 {strides = array<i32>} : memref<48x1152xf32, #tpu.memory_space<vmem>>, vector<6x128xf32>,
    %c33_339 = arith.constant 33 : index
    %c0_340 = arith.constant 0 : index
    %228 = vector.load %arg8[%c33_339, %c0_340] : memref<64x128xf32, #tpu.memory_space<vmem>>, vector<6x128xf32>
    %c16_341 = arith.constant 16 : index
    %c896_342 = arith.constant 896 : index
    %229 = vector.load %arg9[%c16_341, %c896_342] : memref<48x1152xf32, #tpu.memory_space<vmem>>, vector<6x128xf32>
    tpu.vector_store %arg9[%c16_341, %c896_342], %228 {strides = array<i32>} : memref<48x1152xf32, #tpu.memory_space<vmem>>, vector<6x128xf32>,
    %c41_343 = arith.constant 41 : index
    %c0_344 = arith.constant 0 : index
    %230 = vector.load %arg8[%c41_343, %c0_344] : memref<64x128xf32, #tpu.memory_space<vmem>>, vector<6x128xf32>
    %c24_345 = arith.constant 24 : index
    %c896_346 = arith.constant 896 : index
    %231 = vector.load %arg9[%c24_345, %c896_346] : memref<48x1152xf32, #tpu.memory_space<vmem>>, vector<6x128xf32>
    tpu.vector_store %arg9[%c24_345, %c896_346], %230 {strides = array<i32>} : memref<48x1152xf32, #tpu.memory_space<vmem>>, vector<6x128xf32>,
    %c49_347 = arith.constant 49 : index
    %c0_348 = arith.constant 0 : index
    %232 = vector.load %arg8[%c49_347, %c0_348] : memref<64x128xf32, #tpu.memory_space<vmem>>, vector<6x128xf32>
    %c32_349 = arith.constant 32 : index
    %c896_350 = arith.constant 896 : index
    %233 = vector.load %arg9[%c32_349, %c896_350] : memref<48x1152xf32, #tpu.memory_space<vmem>>, vector<6x128xf32>
    tpu.vector_store %arg9[%c32_349, %c896_350], %232 {strides = array<i32>} : memref<48x1152xf32, #tpu.memory_space<vmem>>, vector<6x128xf32>,
    %c57 = arith.constant 57 : index
    %c0_351 = arith.constant 0 : index
    %234 = vector.load %arg8[%c57, %c0_351] : memref<64x128xf32, #tpu.memory_space<vmem>>, vector<6x128xf32>
    %c40_352 = arith.constant 40 : index
    %c896_353 = arith.constant 896 : index
    %235 = vector.load %arg9[%c40_352, %c896_353] : memref<48x1152xf32, #tpu.memory_space<vmem>>, vector<6x128xf32>
    tpu.vector_store %arg9[%c40_352, %c896_353], %234 {strides = array<i32>} : memref<48x1152xf32, #tpu.memory_space<vmem>>, vector<6x128xf32>,
    %c18_354 = arith.constant 18 : index
    %c0_355 = arith.constant 0 : index
    %236 = vector.load %arg8[%c18_354, %c0_355] : memref<64x128xf32, #tpu.memory_space<vmem>>, vector<6x128xf32>
    %c0_356 = arith.constant 0 : index
    %c1024_357 = arith.constant 1024 : index
    %237 = vector.load %arg9[%c0_356, %c1024_357] : memref<48x1152xf32, #tpu.memory_space<vmem>>, vector<6x128xf32>
    tpu.vector_store %arg9[%c0_356, %c1024_357], %236 {strides = array<i32>} : memref<48x1152xf32, #tpu.memory_space<vmem>>, vector<6x128xf32>,
    %c26_358 = arith.constant 26 : index
    %c0_359 = arith.constant 0 : index
    %238 = vector.load %arg8[%c26_358, %c0_359] : memref<64x128xf32, #tpu.memory_space<vmem>>, vector<6x128xf32>
    %c8_360 = arith.constant 8 : index
    %c1024_361 = arith.constant 1024 : index
    %239 = vector.load %arg9[%c8_360, %c1024_361] : memref<48x1152xf32, #tpu.memory_space<vmem>>, vector<6x128xf32>
    tpu.vector_store %arg9[%c8_360, %c1024_361], %238 {strides = array<i32>} : memref<48x1152xf32, #tpu.memory_space<vmem>>, vector<6x128xf32>,
    %c34_362 = arith.constant 34 : index
    %c0_363 = arith.constant 0 : index
    %240 = vector.load %arg8[%c34_362, %c0_363] : memref<64x128xf32, #tpu.memory_space<vmem>>, vector<6x128xf32>
    %c16_364 = arith.constant 16 : index
    %c1024_365 = arith.constant 1024 : index
    %241 = vector.load %arg9[%c16_364, %c1024_365] : memref<48x1152xf32, #tpu.memory_space<vmem>>, vector<6x128xf32>
    tpu.vector_store %arg9[%c16_364, %c1024_365], %240 {strides = array<i32>} : memref<48x1152xf32, #tpu.memory_space<vmem>>, vector<6x128xf32>,
    %c42_366 = arith.constant 42 : index
    %c0_367 = arith.constant 0 : index
    %242 = vector.load %arg8[%c42_366, %c0_367] : memref<64x128xf32, #tpu.memory_space<vmem>>, vector<6x128xf32>
    %c24_368 = arith.constant 24 : index
    %c1024_369 = arith.constant 1024 : index
    %243 = vector.load %arg9[%c24_368, %c1024_369] : memref<48x1152xf32, #tpu.memory_space<vmem>>, vector<6x128xf32>
    tpu.vector_store %arg9[%c24_368, %c1024_369], %242 {strides = array<i32>} : memref<48x1152xf32, #tpu.memory_space<vmem>>, vector<6x128xf32>,
    %c50_370 = arith.constant 50 : index
    %c0_371 = arith.constant 0 : index
    %244 = vector.load %arg8[%c50_370, %c0_371] : memref<64x128xf32, #tpu.memory_space<vmem>>, vector<6x128xf32>
    %c32_372 = arith.constant 32 : index
    %c1024_373 = arith.constant 1024 : index
    %245 = vector.load %arg9[%c32_372, %c1024_373] : memref<48x1152xf32, #tpu.memory_space<vmem>>, vector<6x128xf32>
    tpu.vector_store %arg9[%c32_372, %c1024_373], %244 {strides = array<i32>} : memref<48x1152xf32, #tpu.memory_space<vmem>>, vector<6x128xf32>,
    %c58 = arith.constant 58 : index
    %c0_374 = arith.constant 0 : index
    %246 = vector.load %arg8[%c58, %c0_374] : memref<64x128xf32, #tpu.memory_space<vmem>>, vector<6x128xf32>
    %c40_375 = arith.constant 40 : index
    %c1024_376 = arith.constant 1024 : index
    %247 = vector.load %arg9[%c40_375, %c1024_376] : memref<48x1152xf32, #tpu.memory_space<vmem>>, vector<6x128xf32>
    tpu.vector_store %arg9[%c40_375, %c1024_376], %246 {strides = array<i32>} : memref<48x1152xf32, #tpu.memory_space<vmem>>, vector<6x128xf32>,
    %c0_377 = arith.constant 0 : index
    %c0_378 = arith.constant 0 : index
    %248 = vector.load %arg9[%c0_377, %c0_378] : memref<48x1152xf32, #tpu.memory_space<vmem>>, vector<48x1152xf32>
    %249 = arith.truncf %248 : vector<48x1152xf32> to vector<48x1152xbf16>
    %c0_379 = arith.constant 0 : index
    %c0_380 = arith.constant 0 : index
    %250 = vector.load %arg4[%c0_379, %c0_380] : memref<1152x128xbf16, #tpu.memory_space<vmem>>, vector<1152x128xbf16>
    %cst_381 = arith.constant dense<0.000000e+00> : vector<48x128xf32>
    %251 = tpu.matmul %249, %250, %cst_381 {dimension_numbers = #tpu.dot_dimension_numbers<[1], [0], [0], [1], [0, 0, 1, 1], [], []>} : vector<48x1152xbf16>, vector<1152x128xbf16>, vector<48x128xf32> -> vector<48x128xf32>
    %c0_382 = arith.constant 0 : index
    %c0_383 = arith.constant 0 : index
    %252 = vector.load %arg5[%c0_382, %c0_383] : memref<1x128xf32, #tpu.memory_space<vmem>>, vector<1x128xf32>
    %253 = vector.broadcast %252 : vector<1x128xf32> to vector<48x128xf32>
    %254 = arith.addf %251, %253 : vector<48x128xf32>
    %cst_384 = arith.constant 0.000000e+00 : f32
    %255 = vector.broadcast %cst_384 : f32 to vector<48x128xf32>
    %256 = arith.maximumf %254, %255 : vector<48x128xf32>
    %257 = arith.truncf %256 : vector<48x128xf32> to vector<48x128xbf16>
    %c0_385 = arith.constant 0 : index
    %c0_386 = arith.constant 0 : index
    %c0_387 = arith.constant 0 : index
    %258 = vector.load %arg6[%c0_385, %c0_386, %c0_387] : memref<1x48x128xbf16, #tpu.memory_space<vmem>>, vector<1x48x128xbf16>
    %259 = vector.shape_cast %258 : vector<1x48x128xbf16> to vector<48x128xbf16>
    %260 = vector.shape_cast %257 : vector<48x128xbf16> to vector<1x48x128xbf16>
    tpu.vector_store %arg6[%c0_385, %c0_386, %c0_387], %260 {strides = array<i32>} : memref<1x48x128xbf16, #tpu.memory_space<vmem>>, vector<1x48x128xbf16>,
    return
  }
  func.func @transform_0(%arg0: i32) -> (i32, i32, i32, i32) {
    %c0_i32 = arith.constant 0 : i32
    %c0_i32_0 = arith.constant 0 : i32
    %c0_i32_1 = arith.constant 0 : i32
    %c0_i32_2 = arith.constant 0 : i32
    return %arg0, %c0_i32, %c0_i32_0, %c0_i32_1 : i32, i32, i32, i32
  }
  func.func @transform_1(%arg0: i32) -> (i32, i32) {
    %c0_i32 = arith.constant 0 : i32
    %c0_i32_0 = arith.constant 0 : i32
    %c0_i32_1 = arith.constant 0 : i32
    return %c0_i32, %c0_i32_0 : i32, i32
  }
  func.func @transform_2(%arg0: i32) -> (i32, i32) {
    %c0_i32 = arith.constant 0 : i32
    %c0_i32_0 = arith.constant 0 : i32
    %c0_i32_1 = arith.constant 0 : i32
    return %c0_i32, %c0_i32_0 : i32, i32
  }
  func.func @transform_3(%arg0: i32) -> (i32, i32) {
    %c0_i32 = arith.constant 0 : i32
    %c0_i32_0 = arith.constant 0 : i32
    %c0_i32_1 = arith.constant 0 : i32
    return %c0_i32, %c0_i32_0 : i32, i32
  }
  func.func @transform_4(%arg0: i32) -> (i32, i32) {
    %c0_i32 = arith.constant 0 : i32
    %c0_i32_0 = arith.constant 0 : i32
    %c0_i32_1 = arith.constant 0 : i32
    return %c0_i32, %c0_i32_0 : i32, i32
  }
  func.func @transform_5(%arg0: i32) -> (i32, i32, i32) {
    %c0_i32 = arith.constant 0 : i32
    %c0_i32_0 = arith.constant 0 : i32
    %c0_i32_1 = arith.constant 0 : i32
    return %arg0, %c0_i32, %c0_i32_0 : i32, i32, i32
  }
}

module attributes {stable_mosaic.version = 11 : i64} {
  func.func @_mlp_head_kernel(%arg0: i32, %arg1: memref<8x2304xbf16, #tpu.memory_space<vmem>>, %arg2: memref<2304x512xbf16, #tpu.memory_space<vmem>>, %arg3: memref<1x512xf32, #tpu.memory_space<vmem>>, %arg4: memref<512x128xbf16, #tpu.memory_space<vmem>>, %arg5: memref<1x128xf32, #tpu.memory_space<vmem>>, %arg6: memref<8x128xf32, #tpu.memory_space<vmem>>) attributes {dimension_semantics = [#tpu.dimension_semantics<parallel>], iteration_bounds = array<i64: 1>, scalar_prefetch = 0 : i64, scratch_operands = 0 : i64, tpu.core_type = #tpu.core_type<tc>, window_params = [{transform_indices = @transform_0, window_bounds = array<i64: 8, 2304>}, {pipeline_mode = #tpu.pipeline_mode<synchronous>, transform_indices = @transform_1, window_bounds = array<i64: 2304, 512>}, {pipeline_mode = #tpu.pipeline_mode<synchronous>, transform_indices = @transform_2, window_bounds = array<i64: 1, 512>}, {pipeline_mode = #tpu.pipeline_mode<synchronous>, transform_indices = @transform_3, window_bounds = array<i64: 512, 128>}, {pipeline_mode = #tpu.pipeline_mode<synchronous>, transform_indices = @transform_4, window_bounds = array<i64: 1, 128>}, {transform_indices = @transform_5, window_bounds = array<i64: 8, 128>}]} {
    %c0 = arith.constant 0 : index
    %c0_0 = arith.constant 0 : index
    %0 = vector.load %arg1[%c0, %c0_0] : memref<8x2304xbf16, #tpu.memory_space<vmem>>, vector<8x2304xbf16>
    %c0_1 = arith.constant 0 : index
    %c0_2 = arith.constant 0 : index
    %1 = vector.load %arg2[%c0_1, %c0_2] : memref<2304x512xbf16, #tpu.memory_space<vmem>>, vector<2304x512xbf16>
    %cst = arith.constant dense<0.000000e+00> : vector<8x512xf32>
    %2 = tpu.matmul %0, %1, %cst {dimension_numbers = #tpu.dot_dimension_numbers<[1], [0], [0], [1], [0, 0, 1, 1], [], []>} : vector<8x2304xbf16>, vector<2304x512xbf16>, vector<8x512xf32> -> vector<8x512xf32>
    %c0_3 = arith.constant 0 : index
    %c0_4 = arith.constant 0 : index
    %3 = vector.load %arg3[%c0_3, %c0_4] : memref<1x512xf32, #tpu.memory_space<vmem>>, vector<1x512xf32>
    %4 = vector.broadcast %3 : vector<1x512xf32> to vector<8x512xf32>
    %5 = arith.addf %2, %4 : vector<8x512xf32>
    %cst_5 = arith.constant 0.000000e+00 : f32
    %6 = vector.broadcast %cst_5 : f32 to vector<8x512xf32>
    %7 = arith.maximumf %5, %6 : vector<8x512xf32>
    %8 = arith.truncf %7 : vector<8x512xf32> to vector<8x512xbf16>
    %c0_6 = arith.constant 0 : index
    %c0_7 = arith.constant 0 : index
    %9 = vector.load %arg4[%c0_6, %c0_7] : memref<512x128xbf16, #tpu.memory_space<vmem>>, vector<512x128xbf16>
    %cst_8 = arith.constant dense<0.000000e+00> : vector<8x128xf32>
    %10 = tpu.matmul %8, %9, %cst_8 {dimension_numbers = #tpu.dot_dimension_numbers<[1], [0], [0], [1], [0, 0, 1, 1], [], []>} : vector<8x512xbf16>, vector<512x128xbf16>, vector<8x128xf32> -> vector<8x128xf32>
    %c0_9 = arith.constant 0 : index
    %c0_10 = arith.constant 0 : index
    %11 = vector.load %arg5[%c0_9, %c0_10] : memref<1x128xf32, #tpu.memory_space<vmem>>, vector<1x128xf32>
    %12 = vector.broadcast %11 : vector<1x128xf32> to vector<8x128xf32>
    %13 = arith.addf %10, %12 : vector<8x128xf32>
    %c0_11 = arith.constant 0 : index
    %c0_12 = arith.constant 0 : index
    %14 = vector.load %arg6[%c0_11, %c0_12] : memref<8x128xf32, #tpu.memory_space<vmem>>, vector<8x128xf32>
    tpu.vector_store %arg6[%c0_11, %c0_12], %13 {strides = array<i32>} : memref<8x128xf32, #tpu.memory_space<vmem>>, vector<8x128xf32>,
    return
  }
  func.func @transform_0(%arg0: i32) -> (i32, i32) {
    %c0_i32 = arith.constant 0 : i32
    %c0_i32_0 = arith.constant 0 : i32
    return %arg0, %c0_i32 : i32, i32
  }
  func.func @transform_1(%arg0: i32) -> (i32, i32) {
    %c0_i32 = arith.constant 0 : i32
    %c0_i32_0 = arith.constant 0 : i32
    %c0_i32_1 = arith.constant 0 : i32
    return %c0_i32, %c0_i32_0 : i32, i32
  }
  func.func @transform_2(%arg0: i32) -> (i32, i32) {
    %c0_i32 = arith.constant 0 : i32
    %c0_i32_0 = arith.constant 0 : i32
    %c0_i32_1 = arith.constant 0 : i32
    return %c0_i32, %c0_i32_0 : i32, i32
  }
  func.func @transform_3(%arg0: i32) -> (i32, i32) {
    %c0_i32 = arith.constant 0 : i32
    %c0_i32_0 = arith.constant 0 : i32
    %c0_i32_1 = arith.constant 0 : i32
    return %c0_i32, %c0_i32_0 : i32, i32
  }
  func.func @transform_4(%arg0: i32) -> (i32, i32) {
    %c0_i32 = arith.constant 0 : i32
    %c0_i32_0 = arith.constant 0 : i32
    %c0_i32_1 = arith.constant 0 : i32
    return %c0_i32, %c0_i32_0 : i32, i32
  }
  func.func @transform_5(%arg0: i32) -> (i32, i32) {
    %c0_i32 = arith.constant 0 : i32
    %c0_i32_0 = arith.constant 0 : i32
    return %arg0, %c0_i32 : i32, i32
  }
}

</mosaic_0001>

<llo_original>
// kernel: dqn_forward.3
$region0: #{dqn_forward.3}
  #allocation0 [shape = 'u32[]', space=smem, size = 0x4, offset = 0x4, fixed_abs, tag = 'smem constant byte address 0x4 - core index']
  #allocation1 [shape = 'u32[144,128]{1,0:T(1,128)}', space=vmem, size = 0x12000, scoped, tag = 'internal scratch']
  %s0 = inlined_call_operand.vmem [shape: bf16[722,256], index: 0, kind: input, shape index: {}]
  %s1 = inlined_call_operand.vmem [shape: bf16[256,128], index: 1, kind: input, shape index: {}]
  %s2 = inlined_call_operand.vmem [shape: f32[1,128], index: 2, kind: input, shape index: {}]
  %s3 = inlined_call_operand.vmem [shape: bf16[722,128], index: 3, kind: output, shape index: {}]
  %s4 = sld [smem:[#allocation0]]
  $region89: #{dqn_forward.3} parent=0
    _
  %s6 = ssub.s32 1, %s4
  %s7 = scalar_select 0, %s6, %s4
  $region1: #{dqn_forward.3} parent=0
    #allocation2 [shape = 'u8[131072]{0}', space=vmem, size = 0x20000, scoped, tag = 'output window, operand 0']
    loop: start=0, step=1, limit=5
    $region2: #{dqn_forward.3} parent=1 // loop_pre_header
      _
    $region3: #{dqn_forward.3} parent=1 // loop_header
      %s9 = sphi 0, %s13
      %p10 = scmp.ge.s32.totalorder %s9, 5
      %s19 = sphi 0, %s21
      %s22 = sphi 0, %s19
      %s23 = sphi 0, %s22
      %s39 = sphi 0, %s23
      %s43 = sphi 0, %s43
      %s45 = sphi 0, %s43
      %s46 = sphi 0, %s45
      %s60 = sphi 0, %s46
      %s64 = sphi 0, %s64
      %s66 = sphi 0, %s64
      %s67 = sphi 0, %s66
      %s81 = sphi 0, %s67
      %s87 = sphi 0, %s89
      %s90 = sphi 0, %s87
      %s91 = sphi 0, %s90
      %s107 = sphi 0, %s91
    $region4: #{dqn_forward.3} parent=1 // loop_header_branch
      %12 = sbr.rel (%p10) target = $region8
    $region5: #{dqn_forward.3} parent=1 // loop_body
      %s14 = ssub.s32 %s9, 1
      %s15 = ssub.s32 %s9, 2
      %s16 = sadd.s32 %s9, 1
      %s17 = ssub.s32 %s9, %s16
      %p18 = scmp.eq.s32.totalorder %s17, 0
      %s20 = sadd.s32 %s19, 1
      %s21 = scalar_select %p18, %s19, %s20
      %p24 = pneg %p18
      %p25 = scmp.eq.s32.totalorder %s9, 2
      %p26 = por %p24, %p25
      %p27 = scmp.ne.s32.totalorder %s19, %s22
      %p28 = scmp.eq.s32.totalorder %s9, 0
      %p29 = por %p27, %p28
      %p30 = scmp.ne.s32.totalorder %s19, %s22
      %p31 = scmp.eq.s32.totalorder %s14, 2
      %p32 = por %p30, %p31
      %p33 = scmp.ne.s32.totalorder %s22, %s23
      %p34 = scmp.eq.s32.totalorder %s14, 0
      %p35 = por %p33, %p34
      %p36 = scmp.ne.s32.totalorder %s22, %s23
      %p37 = scmp.eq.s32.totalorder %s15, 2
      %p38 = por %p36, %p37
      %p40 = scmp.ne.s32.totalorder %s23, %s39
      %p41 = scmp.eq.s32.totalorder %s15, 0
      %p42 = por %p40, %p41
      %s44 = sadd.s32 %s43, 1
      %p47 = scmp.eq.s32.totalorder %s9, 2
      %p48 = scmp.ne.s32.totalorder %s43, %s45
      %p49 = scmp.eq.s32.totalorder %s9, 0
      %p50 = por %p48, %p49
      %p51 = scmp.ne.s32.totalorder %s43, %s45
      %p52 = scmp.eq.s32.totalorder %s14, 2
      %p53 = por %p51, %p52
      %p54 = scmp.ne.s32.totalorder %s45, %s46
      %p55 = scmp.eq.s32.totalorder %s14, 0
      %p56 = por %p54, %p55
      %p57 = scmp.ne.s32.totalorder %s45, %s46
      %p58 = scmp.eq.s32.totalorder %s15, 2
      %p59 = por %p57, %p58
      %p61 = scmp.ne.s32.totalorder %s46, %s60
      %p62 = scmp.eq.s32.totalorder %s15, 0
      %p63 = por %p61, %p62
      %s65 = sadd.s32 %s64, 1
      %p68 = scmp.eq.s32.totalorder %s9, 2
      %p69 = scmp.ne.s32.totalorder %s64, %s66
      %p70 = scmp.eq.s32.totalorder %s9, 0
      %p71 = por %p69, %p70
      %p72 = scmp.ne.s32.totalorder %s64, %s66
      %p73 = scmp.eq.s32.totalorder %s14, 2
      %p74 = por %p72, %p73
      %p75 = scmp.ne.s32.totalorder %s66, %s67
      %p76 = scmp.eq.s32.totalorder %s14, 0
      %p77 = por %p75, %p76
      %p78 = scmp.ne.s32.totalorder %s66, %s67
      %p79 = scmp.eq.s32.totalorder %s15, 2
      %p80 = por %p78, %p79
      %p82 = scmp.ne.s32.totalorder %s67, %s81
      %p83 = scmp.eq.s32.totalorder %s15, 0
      %p84 = por %p82, %p83
      %s85 = ssub.s32 %s9, %s16
      %p86 = scmp.eq.s32.totalorder %s85, 0
      %s88 = sadd.s32 %s87, 1
      %s89 = scalar_select %p86, %s87, %s88
      %p92 = pneg %p86
      %p93 = scmp.eq.s32.totalorder %s9, 2
      %p94 = por %p92, %p93
      %p95 = scmp.ne.s32.totalorder %s87, %s90
      %p96 = scmp.eq.s32.totalorder %s9, 0
      %p97 = por %p95, %p96
      %p98 = scmp.ne.s32.totalorder %s87, %s90
      %p99 = scmp.eq.s32.totalorder %s14, 2
      %p100 = por %p98, %p99
      %p101 = scmp.ne.s32.totalorder %s90, %s91
      %p102 = scmp.eq.s32.totalorder %s14, 0
      %p103 = por %p101, %p102
      %p104 = scmp.ne.s32.totalorder %s90, %s91
      %p105 = scmp.eq.s32.totalorder %s15, 2
      %p106 = por %p104, %p105
      %p108 = scmp.ne.s32.totalorder %s91, %s107
      %p109 = scmp.eq.s32.totalorder %s15, 0
      %p110 = por %p108, %p109
      %p111 = scmp.le.s32.totalorder 1, %s9
      %p112 = scmp.lt.s32.totalorder %s9, 4
      %p113 = pnand %p111, %p112
      %p114 = pneg %p113
      // Predicated region
      $region9: #{dqn_forward.3} parent=5 // pred_check
        _
      $region10: #{dqn_forward.3} parent=5 // pred_check_branch
        %116 = sbr.rel (%p113) target = $region12
      $region11: #{dqn_forward.3} parent=5 // pred_region
        %s117 = ssub.s32 %s9, 1
        // Predicated region
        $region13: #{dqn_forward.3} parent=11 // pred_check
          %p118 = pneg %p56
        $region14: #{dqn_forward.3} parent=11 // pred_check_branch
          %120 = sbr.rel (%p118) target = $region16
        $region15: #{dqn_forward.3} parent=11 // pred_region
          _
        $region16: #{dqn_forward.3} parent=11 // pred_fallthru
          _
        // Predicated region
        $region17: #{dqn_forward.3} parent=11 // pred_check
          %p121 = pneg %p77
        $region18: #{dqn_forward.3} parent=11 // pred_check_branch
          %123 = sbr.rel (%p121) target = $region20
        $region19: #{dqn_forward.3} parent=11 // pred_region
          _
        $region20: #{dqn_forward.3} parent=11 // pred_fallthru
          _
      $region12: #{dqn_forward.3} parent=5 // pred_fallthru
        _
      %p124 = scmp.lt.s32.totalorder %s9, 3
      // Predicated region
      $region21: #{dqn_forward.3} parent=5 // pred_check
        %p125 = pneg %p124
      $region22: #{dqn_forward.3} parent=5 // pred_check_branch
        %127 = sbr.rel (%p125) target = $region24
      $region23: #{dqn_forward.3} parent=5 // pred_region
        // Predicated region
        $region25: #{dqn_forward.3} parent=23 // pred_check
          %p128 = pneg %p29
        $region26: #{dqn_forward.3} parent=23 // pred_check_branch
          %130 = sbr.rel (%p128) target = $region28
        $region27: #{dqn_forward.3} parent=23 // pred_region
          %s131 = smul.u32 32, %s9
          %s132 = ssub.s32 91, %s131
          %p133 = scmp.lt.s32.totalorder %s132, 32
          %s134 = scalar_select %p133, %s132, 32
          %s135 = smul.u32 64, %s134
          %s136 = smul.u32 %s135, 2
          %p137 = scmp.lt.s32.totalorder %s131, 90
          %s138 = scalar_select %p137, %s131, 90
          %s139 = smul.addr %s138, 2
          %s140 = smul.addr %s139, 4
          %s141 = scalar_lea.vmem %s0, %s140
          %s142 = smul.u32 32, %s9
          %s143 = ssub.s32 91, %s142
          %p144 = scmp.lt.s32.totalorder %s143, 32
          %s145 = scalar_select %p144, %s143, 32
          %s146 = smul.u32 64, %s145
          %s147 = smul.u32 %s146, 2
        $region28: #{dqn_forward.3} parent=23 // pred_fallthru
          _
      $region24: #{dqn_forward.3} parent=5 // pred_fallthru
        _
      %p148 = scmp.le.s32.totalorder 1, %s9
      %p149 = scmp.lt.s32.totalorder %s9, 4
      %p150 = pnand %p148, %p149
      %p151 = pneg %p150
      // Predicated region
      $region29: #{dqn_forward.3} parent=5 // pred_check
        _
      $region30: #{dqn_forward.3} parent=5 // pred_check_branch
        %153 = sbr.rel (%p150) target = $region32
      $region31: #{dqn_forward.3} parent=5 // pred_region
        %s154 = ssub.s32 %s9, 1
        %s155 = smul.u32 32, %s14
        %s156 = ssub.s32 91, %s155
        %p157 = scmp.lt.s32.totalorder %s156, 32
        %s158 = scalar_select %p157, %s156, 32
        %s159 = smul.u32 64, %s158
        %s160 = smul.u32 %s159, 2
        %p161 = scmp.lt.s32.totalorder %s155, 90
        %s162 = scalar_select %p161, %s155, 90
        %s163 = smul.addr %s162, 2
        %s164 = smul.addr %s163, 4
        %s165 = scalar_lea.vmem %s0, %s164
        %p166 = pneg %p35
        %p167 = pneg %p32
        %p168 = pneg %p56
        %p169 = pneg %p53
        %p170 = pneg %p77
        %p171 = pneg %p74
        %p172 = pneg %p103
        %p173 = pneg %p100
        %s174 = sand.u32 %s90, 1
        %s175 = sand.u32 %s90, 1
        %s176 = smul.addr %s175, 128
        %s177 = scalar_lea.vmem [#allocation2], %s176
        %s178 = smul.u32 32, %s14
        %s179 = ssub.s32 91, %s178
        %p180 = scmp.lt.s32.totalorder %s179, 32
        %s181 = scalar_select %p180, %s179, 32
        %s182 = smul.u32 64, %s181
        %s183 = smul.u32 %s182, 2
        %p184 = scmp.lt.s32.totalorder %s178, 90
        %s185 = scalar_select %p184, %s178, 90
        %s186 = smul.addr %s185, 2
        %s187 = smul.addr %s186, 4
        %s188 = scalar_lea.vmem %s0, %s187
        %s189 = smul.u32 32, %s14
        %s190 = ssub.s32 91, %s189
        %p191 = scmp.lt.s32.totalorder %s190, 32
        %s192 = scalar_select %p191, %s190, 32
        %s193 = smul.u32 64, %s192
        %s194 = smul.u32 %s193, 2
        %s195 = smul.u32 32, %s14
        %s196 = ssub.s32 91, %s195
        %p197 = scmp.lt.s32.totalorder %s196, 32
        %s198 = scalar_select %p197, %s196, 32
        %s199 = smul.u32 64, %s198
        %v201 = vld [vmem:[%s188] sm:$0xff]
        %v202 = vld [vmem:[%s188 + $0x8] sm:$0xff]
        %v203 = vld [vmem:[%s188 + $0x10] sm:$0xff]
        %v204 = vld [vmem:[%s188 + $0x18] sm:$0xff]
        %v205 = vld [vmem:[%s188 + $0x20] sm:$0xff]
        %v206 = vld [vmem:[%s188 + $0x28] sm:$0xff]
        %v207 = vld [vmem:[%s188 + $0x30] sm:$0xff]
        %v208 = vld [vmem:[%s188 + $0x38] sm:$0xff]
        %v209 = vld [vmem:[%s188 + $0x40] sm:$0xff]
        %v210 = vld [vmem:[%s188 + $0x48] sm:$0xff]
        %v211 = vld [vmem:[%s188 + $0x50] sm:$0xff]
        %v212 = vld [vmem:[%s188 + $0x58] sm:$0xff]
        %v213 = vld [vmem:[%s188 + $0x60] sm:$0xff]
        %v214 = vld [vmem:[%s188 + $0x68] sm:$0xff]
        %v215 = vld [vmem:[%s188 + $0x70] sm:$0xff]
        %v216 = vld [vmem:[%s188 + $0x78] sm:$0xff]
        %v217 = vld [vmem:[%s188 + $0x80] sm:$0xff]
        %v218 = vld [vmem:[%s188 + $0x88] sm:$0xff]
        %v219 = vld [vmem:[%s188 + $0x90] sm:$0xff]
        %v220 = vld [vmem:[%s188 + $0x98] sm:$0xff]
        %v221 = vld [vmem:[%s188 + $0xa0] sm:$0xff]
        %v222 = vld [vmem:[%s188 + $0xa8] sm:$0xff]
        %v223 = vld [vmem:[%s188 + $0xb0] sm:$0xff]
        %v224 = vld [vmem:[%s188 + $0xb8] sm:$0xff]
        %v225 = vld [vmem:[%s188 + $0xc0] sm:$0xff]
        %v226 = vld [vmem:[%s188 + $0xc8] sm:$0xff]
        %v227 = vld [vmem:[%s188 + $0xd0] sm:$0xff]
        %v228 = vld [vmem:[%s188 + $0xd8] sm:$0xff]
        %v229 = vld [vmem:[%s188 + $0xe0] sm:$0xff]
        %v230 = vld [vmem:[%s188 + $0xe8] sm:$0xff]
        %v231 = vld [vmem:[%s188 + $0xf0] sm:$0xff]
        %v232 = vld [vmem:[%s188 + $0xf8] sm:$0xff]
        %v233 = vld [vmem:[%s1] sm:$0xf]
        %v234 = vld [vmem:[%s1 + $0x4] sm:$0xf]
        %v235 = vld [vmem:[%s1 + $0x8] sm:$0xf]
        %v236 = vld [vmem:[%s1 + $0xc] sm:$0xf]
        %v237 = vld [vmem:[%s1 + $0x10] sm:$0xf]
        %v238 = vld [vmem:[%s1 + $0x14] sm:$0xf]
        %v239 = vld [vmem:[%s1 + $0x18] sm:$0xf]
        %v240 = vld [vmem:[%s1 + $0x1c] sm:$0xf]
        %v241 = vld [vmem:[%s1 + $0x20] sm:$0xf]
        %v242 = vld [vmem:[%s1 + $0x24] sm:$0xf]
        %v243 = vld [vmem:[%s1 + $0x28] sm:$0xf]
        %v244 = vld [vmem:[%s1 + $0x2c] sm:$0xf]
        %v245 = vld [vmem:[%s1 + $0x30] sm:$0xf]
        %v246 = vld [vmem:[%s1 + $0x34] sm:$0xf]
        %v247 = vld [vmem:[%s1 + $0x38] sm:$0xf]
        %v248 = vld [vmem:[%s1 + $0x3c] sm:$0xf]
        %v249 = vld [vmem:[%s1 + $0x40] sm:$0xf]
        %v250 = vld [vmem:[%s1 + $0x44] sm:$0xf]
        %v251 = vld [vmem:[%s1 + $0x48] sm:$0xf]
        %v252 = vld [vmem:[%s1 + $0x4c] sm:$0xf]
        %v253 = vld [vmem:[%s1 + $0x50] sm:$0xf]
        %v254 = vld [vmem:[%s1 + $0x54] sm:$0xf]
        %v255 = vld [vmem:[%s1 + $0x58] sm:$0xf]
        %v256 = vld [vmem:[%s1 + $0x5c] sm:$0xf]
        %v257 = vld [vmem:[%s1 + $0x60] sm:$0xf]
        %v258 = vld [vmem:[%s1 + $0x64] sm:$0xf]
        %v259 = vld [vmem:[%s1 + $0x68] sm:$0xf]
        %v260 = vld [vmem:[%s1 + $0x6c] sm:$0xf]
        %v261 = vld [vmem:[%s1 + $0x70] sm:$0xf]
        %v262 = vld [vmem:[%s1 + $0x74] sm:$0xf]
        %v263 = vld [vmem:[%s1 + $0x78] sm:$0xf]
        %v264 = vld [vmem:[%s1 + $0x7c] sm:$0xf]
        %v265 = vld [vmem:[%s2] sm:$0x1]
        %v267 = vlaneseq
        %v268 = vshrl.u32 %v267, 7
        %v269 = vsub.s32 0, %v268
        %v270 = vrot.slane %v265, %v269
        %v304 = vunpack.c.l.b16 %v201
        %v305 = vunpack.c.h.b16 %v201
        %v306 = vunpack.c.l.b16 %v202
        %v307 = vunpack.c.h.b16 %v202
        %v308 = vunpack.c.l.b16 %v203
        %v309 = vunpack.c.h.b16 %v203
        %v310 = vunpack.c.l.b16 %v204
        %v311 = vunpack.c.h.b16 %v204
        %v312 = vunpack.c.l.b16 %v205
        %v313 = vunpack.c.h.b16 %v205
        %v314 = vunpack.c.l.b16 %v206
        %v315 = vunpack.c.h.b16 %v206
        %v316 = vunpack.c.l.b16 %v207
        %v317 = vunpack.c.h.b16 %v207
        %v318 = vunpack.c.l.b16 %v208
        %v319 = vunpack.c.h.b16 %v208
        %v320 = vunpack.c.l.b16 %v209
        %v321 = vunpack.c.h.b16 %v209
        %v322 = vunpack.c.l.b16 %v210
        %v323 = vunpack.c.h.b16 %v210
        %v324 = vunpack.c.l.b16 %v211
        %v325 = vunpack.c.h.b16 %v211
        %v326 = vunpack.c.l.b16 %v212
        %v327 = vunpack.c.h.b16 %v212
        %v328 = vunpack.c.l.b16 %v213
        %v329 = vunpack.c.h.b16 %v213
        %v330 = vunpack.c.l.b16 %v214
        %v331 = vunpack.c.h.b16 %v214
        %v332 = vunpack.c.l.b16 %v215
        %v333 = vunpack.c.h.b16 %v215
        %v334 = vunpack.c.l.b16 %v216
        %v335 = vunpack.c.h.b16 %v216
        %v336 = vunpack.c.l.b16 %v217
        %v337 = vunpack.c.h.b16 %v217
        %v338 = vunpack.c.l.b16 %v218
        %v339 = vunpack.c.h.b16 %v218
        %v340 = vunpack.c.l.b16 %v219
        %v341 = vunpack.c.h.b16 %v219
        %v342 = vunpack.c.l.b16 %v220
        %v343 = vunpack.c.h.b16 %v220
        %v344 = vunpack.c.l.b16 %v221
        %v345 = vunpack.c.h.b16 %v221
        %v346 = vunpack.c.l.b16 %v222
        %v347 = vunpack.c.h.b16 %v222
        %v348 = vunpack.c.l.b16 %v223
        %v349 = vunpack.c.h.b16 %v223
        %v350 = vunpack.c.l.b16 %v224
        %v351 = vunpack.c.h.b16 %v224
        %v352 = vunpack.c.l.b16 %v225
        %v353 = vunpack.c.h.b16 %v225
        %v354 = vunpack.c.l.b16 %v226
        %v355 = vunpack.c.h.b16 %v226
        %v356 = vunpack.c.l.b16 %v227
        %v357 = vunpack.c.h.b16 %v227
        %v358 = vunpack.c.l.b16 %v228
        %v359 = vunpack.c.h.b16 %v228
        %v360 = vunpack.c.l.b16 %v229
        %v361 = vunpack.c.h.b16 %v229
        %v362 = vunpack.c.l.b16 %v230
        %v363 = vunpack.c.h.b16 %v230
        %v364 = vunpack.c.l.b16 %v231
        %v365 = vunpack.c.h.b16 %v231
        %v366 = vunpack.c.l.b16 %v232
        %v367 = vunpack.c.h.b16 %v232
        %v368 = vpack.c.b16 %v306, %v304
        %v369 = vpack.c.b16 %v307, %v305
        %v370 = vpack.c.b16 %v310, %v308
        %v371 = vpack.c.b16 %v311, %v309
        %v372 = vpack.c.b16 %v314, %v312
        %v373 = vpack.c.b16 %v315, %v313
        %v374 = vpack.c.b16 %v318, %v316
        %v375 = vpack.c.b16 %v319, %v317
        %v376 = vpack.c.b16 %v322, %v320
        %v377 = vpack.c.b16 %v323, %v321
        %v378 = vpack.c.b16 %v326, %v324
        %v379 = vpack.c.b16 %v327, %v325
        %v380 = vpack.c.b16 %v330, %v328
        %v381 = vpack.c.b16 %v331, %v329
        %v382 = vpack.c.b16 %v334, %v332
        %v383 = vpack.c.b16 %v335, %v333
        %v384 = vpack.c.b16 %v338, %v336
        %v385 = vpack.c.b16 %v339, %v337
        %v386 = vpack.c.b16 %v342, %v340
        %v387 = vpack.c.b16 %v343, %v341
        %v388 = vpack.c.b16 %v346, %v344
        %v389 = vpack.c.b16 %v347, %v345
        %v390 = vpack.c.b16 %v350, %v348
        %v391 = vpack.c.b16 %v351, %v349
        %v392 = vpack.c.b16 %v354, %v352
        %v393 = vpack.c.b16 %v355, %v353
        %v394 = vpack.c.b16 %v358, %v356
        %v395 = vpack.c.b16 %v359, %v357
        %v396 = vpack.c.b16 %v362, %v360
        %v397 = vpack.c.b16 %v363, %v361
        %v398 = vpack.c.b16 %v366, %v364
        %v399 = vpack.c.b16 %v367, %v365
        %v464 = vunpack.c.l.b16 %v233
        %v465 = vunpack.c.l.b16 %v234
        %v466 = vunpack.c.l.b16 %v235
        %v467 = vunpack.c.l.b16 %v236
        %v468 = vunpack.c.l.b16 %v237
        %v469 = vunpack.c.l.b16 %v238
        %v470 = vunpack.c.l.b16 %v239
        %v471 = vunpack.c.l.b16 %v240
        %v472 = vunpack.c.l.b16 %v241
        %v473 = vunpack.c.l.b16 %v242
        %v474 = vunpack.c.l.b16 %v243
        %v475 = vunpack.c.l.b16 %v244
        %v476 = vunpack.c.l.b16 %v245
        %v477 = vunpack.c.l.b16 %v246
        %v478 = vunpack.c.l.b16 %v247
        %v479 = vunpack.c.l.b16 %v248
        %v480 = vunpack.c.l.b16 %v249
        %v481 = vunpack.c.l.b16 %v250
        %v482 = vunpack.c.l.b16 %v251
        %v483 = vunpack.c.l.b16 %v252
        %v484 = vunpack.c.l.b16 %v253
        %v485 = vunpack.c.l.b16 %v254
        %v486 = vunpack.c.l.b16 %v255
        %v487 = vunpack.c.l.b16 %v256
        %v488 = vunpack.c.l.b16 %v257
        %v489 = vunpack.c.l.b16 %v258
        %v490 = vunpack.c.l.b16 %v259
        %v491 = vunpack.c.l.b16 %v260
        %v492 = vunpack.c.l.b16 %v261
        %v493 = vunpack.c.l.b16 %v262
        %v494 = vunpack.c.l.b16 %v263
        %v495 = vunpack.c.l.b16 %v264
        %v496 = vpack.c.b16 %v465, %v464
        %v497 = vpack.c.b16 %v467, %v466
        %v498 = vpack.c.b16 %v469, %v468
        %v499 = vpack.c.b16 %v471, %v470
        %v500 = vpack.c.b16 %v473, %v472
        %v501 = vpack.c.b16 %v475, %v474
        %v502 = vpack.c.b16 %v477, %v476
        %v503 = vpack.c.b16 %v479, %v478
        %v504 = vpack.c.b16 %v481, %v480
        %v505 = vpack.c.b16 %v483, %v482
        %v506 = vpack.c.b16 %v485, %v484
        %v507 = vpack.c.b16 %v487, %v486
        %v508 = vpack.c.b16 %v489, %v488
        %v509 = vpack.c.b16 %v491, %v490
        %v510 = vpack.c.b16 %v493, %v492
        %v511 = vpack.c.b16 %v495, %v494
        %528 = vmatprep.subr.bf16.mxu0 0
        %529 = vmatpush1.bf16.msra.mxu0 %v503
        %530 = vmatprep.subr.bf16.mxu0 0
        %531 = vmatpush1.bf16.msra.mxu0 %v502
        %532 = vmatprep.subr.bf16.mxu0 0
        %533 = vmatpush1.bf16.msra.mxu0 %v501
        %534 = vmatprep.subr.bf16.mxu0 0
        %535 = vmatpush1.bf16.msra.mxu0 %v500
        %536 = vmatprep.subr.bf16.mxu0 0
        %537 = vmatpush1.bf16.msra.mxu0 %v499
        %538 = vmatprep.subr.bf16.mxu0 0
        %539 = vmatpush1.bf16.msra.mxu0 %v498
        %540 = vmatprep.subr.bf16.mxu0 0
        %541 = vmatpush1.bf16.msra.mxu0 %v497
        %542 = vmatprep.subr.bf16.mxu0 0
        %543 = vmatpush1.bf16.msra.mxu0 %v496
        %544 = vmatprep.subr.bf16.mxu0 0
        %545 = vmatpush2.bf16.msra.mxu0 %v511
        %546 = vmatprep.subr.bf16.mxu0 0
        %547 = vmatpush2.bf16.msra.mxu0 %v510
        %548 = vmatprep.subr.bf16.mxu0 0
        %549 = vmatpush2.bf16.msra.mxu0 %v509
        %550 = vmatprep.subr.bf16.mxu0 0
        %551 = vmatpush2.bf16.msra.mxu0 %v508
        %552 = vmatprep.subr.bf16.mxu0 0
        %553 = vmatpush2.bf16.msra.mxu0 %v507
        %554 = vmatprep.subr.bf16.mxu0 0
        %555 = vmatpush2.bf16.msra.mxu0 %v506
        %556 = vmatprep.subr.bf16.mxu0 0
        %557 = vmatpush2.bf16.msra.mxu0 %v505
        %558 = vmatprep.subr.bf16.mxu0 0
        %559 = vmatpush2.bf16.msra.mxu0 %v504
        %560 = vmatprep.mubr.bf16.mxu0 %v369
        %561 = vmatmul.mubr.bf16.gmra.mxu0 %v368
        %v562 = vpop.f32.mrf.mxu0
        %v563 = vadd.f32 %v270, %v562
        %v564 = vpop.f32.mrf.mxu0
        %v565 = vpop.f32.mrf.mxu0
        %v566 = vadd.f32 %v270, %v565
        %v567 = vpop.f32.mrf.mxu0
        %568 = vmatprep.mubr.bf16.mxu0 %v371
        %569 = vmatmul.mubr.bf16.gmra.mxu0 %v370
        %v570 = vpop.f32.mrf.mxu0
        %v571 = vadd.f32 %v270, %v570
        %v572 = vpop.f32.mrf.mxu0
        %v573 = vpop.f32.mrf.mxu0
        %v574 = vadd.f32 %v270, %v573
        %v575 = vpop.f32.mrf.mxu0
        %576 = vmatprep.mubr.bf16.mxu0 %v373
        %577 = vmatmul.mubr.bf16.gmra.mxu0 %v372
        %v578 = vpop.f32.mrf.mxu0
        %v579 = vadd.f32 %v270, %v578
        %v580 = vpop.f32.mrf.mxu0
        %v581 = vpop.f32.mrf.mxu0
        %v582 = vadd.f32 %v270, %v581
        %v583 = vpop.f32.mrf.mxu0
        %584 = vmatprep.mubr.bf16.mxu0 %v375
        %585 = vmatmul.mubr.bf16.gmra.mxu0 %v374
        %v586 = vpop.f32.mrf.mxu0
        %v587 = vadd.f32 %v270, %v586
        %v588 = vpop.f32.mrf.mxu0
        %v589 = vpop.f32.mrf.mxu0
        %v590 = vadd.f32 %v270, %v589
        %v591 = vpop.f32.mrf.mxu0
        %592 = vmatprep.mubr.bf16.mxu0 %v377
        %593 = vmatmul.mubr.bf16.gmra.mxu0 %v376
        %v594 = vpop.f32.mrf.mxu0
        %v595 = vadd.f32 %v270, %v594
        %v596 = vpop.f32.mrf.mxu0
        %v597 = vpop.f32.mrf.mxu0
        %v598 = vadd.f32 %v270, %v597
        %v599 = vpop.f32.mrf.mxu0
        %600 = vmatprep.mubr.bf16.mxu0 %v379
        %601 = vmatmul.mubr.bf16.gmra.mxu0 %v378
        %v602 = vpop.f32.mrf.mxu0
        %v603 = vadd.f32 %v270, %v602
        %v604 = vpop.f32.mrf.mxu0
        %v605 = vpop.f32.mrf.mxu0
        %v606 = vadd.f32 %v270, %v605
        %v607 = vpop.f32.mrf.mxu0
        %608 = vmatprep.mubr.bf16.mxu0 %v381
        %609 = vmatmul.mubr.bf16.gmra.mxu0 %v380
        %v610 = vpop.f32.mrf.mxu0
        %v611 = vadd.f32 %v270, %v610
        %v612 = vpop.f32.mrf.mxu0
        %v613 = vpop.f32.mrf.mxu0
        %v614 = vadd.f32 %v270, %v613
        %v615 = vpop.f32.mrf.mxu0
        %616 = vmatprep.mubr.bf16.mxu0 %v383
        %617 = vmatmul.mubr.bf16.gmra.mxu0 %v382
        %v618 = vpop.f32.mrf.mxu0
        %v619 = vadd.f32 %v270, %v618
        %v620 = vpop.f32.mrf.mxu0
        %v621 = vpop.f32.mrf.mxu0
        %v622 = vadd.f32 %v270, %v621
        %v623 = vpop.f32.mrf.mxu0
        %624 = vmatprep.mubr.bf16.mxu0 %v385
        %625 = vmatmul.mubr.bf16.gmra.mxu0 %v384
        %v626 = vpop.f32.mrf.mxu0
        %v627 = vadd.f32 %v270, %v626
        %v628 = vpop.f32.mrf.mxu0
        %v629 = vpop.f32.mrf.mxu0
        %v630 = vadd.f32 %v270, %v629
        %v631 = vpop.f32.mrf.mxu0
        %632 = vmatprep.mubr.bf16.mxu0 %v387
        %633 = vmatmul.mubr.bf16.gmra.mxu0 %v386
        %v634 = vpop.f32.mrf.mxu0
        %v635 = vadd.f32 %v270, %v634
        %v636 = vpop.f32.mrf.mxu0
        %v637 = vpop.f32.mrf.mxu0
        %v638 = vadd.f32 %v270, %v637
        %v639 = vpop.f32.mrf.mxu0
        %640 = vmatprep.mubr.bf16.mxu0 %v389
        %641 = vmatmul.mubr.bf16.gmra.mxu0 %v388
        %v642 = vpop.f32.mrf.mxu0
        %v643 = vadd.f32 %v270, %v642
        %v644 = vpop.f32.mrf.mxu0
        %v645 = vpop.f32.mrf.mxu0
        %v646 = vadd.f32 %v270, %v645
        %v647 = vpop.f32.mrf.mxu0
        %648 = vmatprep.mubr.bf16.mxu0 %v391
        %649 = vmatmul.mubr.bf16.gmra.mxu0 %v390
        %v650 = vpop.f32.mrf.mxu0
        %v651 = vadd.f32 %v270, %v650
        %v652 = vpop.f32.mrf.mxu0
        %v653 = vpop.f32.mrf.mxu0
        %v654 = vadd.f32 %v270, %v653
        %v655 = vpop.f32.mrf.mxu0
        %656 = vmatprep.mubr.bf16.mxu0 %v393
        %657 = vmatmul.mubr.bf16.gmra.mxu0 %v392
        %v658 = vpop.f32.mrf.mxu0
        %v659 = vadd.f32 %v270, %v658
        %v660 = vpop.f32.mrf.mxu0
        %v661 = vpop.f32.mrf.mxu0
        %v662 = vadd.f32 %v270, %v661
        %v663 = vpop.f32.mrf.mxu0
        %664 = vmatprep.mubr.bf16.mxu0 %v395
        %665 = vmatmul.mubr.bf16.gmra.mxu0 %v394
        %v666 = vpop.f32.mrf.mxu0
        %v667 = vadd.f32 %v270, %v666
        %v668 = vpop.f32.mrf.mxu0
        %v669 = vpop.f32.mrf.mxu0
        %v670 = vadd.f32 %v270, %v669
        %v671 = vpop.f32.mrf.mxu0
        %672 = vmatprep.mubr.bf16.mxu0 %v397
        %673 = vmatmul.mubr.bf16.gmra.mxu0 %v396
        %v674 = vpop.f32.mrf.mxu0
        %v675 = vadd.f32 %v270, %v674
        %v676 = vpop.f32.mrf.mxu0
        %v677 = vpop.f32.mrf.mxu0
        %v678 = vadd.f32 %v270, %v677
        %v679 = vpop.f32.mrf.mxu0
        %680 = vmatprep.mubr.bf16.mxu0 %v399
        %681 = vmatmul.mubr.bf16.gmra.mxu0 %v398
        %v682 = vpop.f32.mrf.mxu0
        %v683 = vadd.f32 %v270, %v682
        %v684 = vpop.f32.mrf.mxu0
        %v685 = vpop.f32.mrf.mxu0
        %v686 = vadd.f32 %v270, %v685
        %v687 = vpop.f32.mrf.mxu0
        %688 = vdwg.mxu0
        %v689 = vmax.f32 %v563, 0.0
        %v690 = vmax.f32 %v566, 0.0
        %v691 = vmax.f32 %v571, 0.0
        %v692 = vmax.f32 %v574, 0.0
        %v693 = vmax.f32 %v579, 0.0
        %v694 = vmax.f32 %v582, 0.0
        %v695 = vmax.f32 %v587, 0.0
        %v696 = vmax.f32 %v590, 0.0
        %v697 = vmax.f32 %v595, 0.0
        %v698 = vmax.f32 %v598, 0.0
        %v699 = vmax.f32 %v603, 0.0
        %v700 = vmax.f32 %v606, 0.0
        %v701 = vmax.f32 %v611, 0.0
        %v702 = vmax.f32 %v614, 0.0
        %v703 = vmax.f32 %v619, 0.0
        %v704 = vmax.f32 %v622, 0.0
        %v705 = vmax.f32 %v627, 0.0
        %v706 = vmax.f32 %v630, 0.0
        %v707 = vmax.f32 %v635, 0.0
        %v708 = vmax.f32 %v638, 0.0
        %v709 = vmax.f32 %v643, 0.0
        %v710 = vmax.f32 %v646, 0.0
        %v711 = vmax.f32 %v651, 0.0
        %v712 = vmax.f32 %v654, 0.0
        %v713 = vmax.f32 %v659, 0.0
        %v714 = vmax.f32 %v662, 0.0
        %v715 = vmax.f32 %v667, 0.0
        %v716 = vmax.f32 %v670, 0.0
        %v717 = vmax.f32 %v675, 0.0
        %v718 = vmax.f32 %v678, 0.0
        %v719 = vmax.f32 %v683, 0.0
        %v720 = vmax.f32 %v686, 0.0
        %v721 = vpack.c.bf16 %v690, %v689
        %v722 = vpack.c.bf16 %v692, %v691
        %v723 = vpack.c.bf16 %v694, %v693
        %v724 = vpack.c.bf16 %v696, %v695
        %v725 = vpack.c.bf16 %v698, %v697
        %v726 = vpack.c.bf16 %v700, %v699
        %v727 = vpack.c.bf16 %v702, %v701
        %v728 = vpack.c.bf16 %v704, %v703
        %v729 = vpack.c.bf16 %v706, %v705
        %v730 = vpack.c.bf16 %v708, %v707
        %v731 = vpack.c.bf16 %v710, %v709
        %v732 = vpack.c.bf16 %v712, %v711
        %v733 = vpack.c.bf16 %v714, %v713
        %v734 = vpack.c.bf16 %v716, %v715
        %v735 = vpack.c.bf16 %v718, %v717
        %v736 = vpack.c.bf16 %v720, %v719
        %v753 = vunpack.c.l.b16 %v721
        %v754 = vunpack.c.h.b16 %v721
        %v755 = vunpack.c.l.b16 %v722
        %v756 = vunpack.c.h.b16 %v722
        %v757 = vunpack.c.l.b16 %v723
        %v758 = vunpack.c.h.b16 %v723
        %v759 = vunpack.c.l.b16 %v724
        %v760 = vunpack.c.h.b16 %v724
        %v761 = vunpack.c.l.b16 %v725
        %v762 = vunpack.c.h.b16 %v725
        %v763 = vunpack.c.l.b16 %v726
        %v764 = vunpack.c.h.b16 %v726
        %v765 = vunpack.c.l.b16 %v727
        %v766 = vunpack.c.h.b16 %v727
        %v767 = vunpack.c.l.b16 %v728
        %v768 = vunpack.c.h.b16 %v728
        %v769 = vunpack.c.l.b16 %v729
        %v770 = vunpack.c.h.b16 %v729
        %v771 = vunpack.c.l.b16 %v730
        %v772 = vunpack.c.h.b16 %v730
        %v773 = vunpack.c.l.b16 %v731
        %v774 = vunpack.c.h.b16 %v731
        %v775 = vunpack.c.l.b16 %v732
        %v776 = vunpack.c.h.b16 %v732
        %v777 = vunpack.c.l.b16 %v733
        %v778 = vunpack.c.h.b16 %v733
        %v779 = vunpack.c.l.b16 %v734
        %v780 = vunpack.c.h.b16 %v734
        %v781 = vunpack.c.l.b16 %v735
        %v782 = vunpack.c.h.b16 %v735
        %v783 = vunpack.c.l.b16 %v736
        %v784 = vunpack.c.h.b16 %v736
        %v785 = vpack.c.b16 %v753, %v753
        %v786 = vpack.c.b16 %v754, %v754
        %v787 = vpack.c.b16 %v755, %v755
        %v788 = vpack.c.b16 %v756, %v756
        %v789 = vpack.c.b16 %v757, %v757
        %v790 = vpack.c.b16 %v758, %v758
        %v791 = vpack.c.b16 %v759, %v759
        %v792 = vpack.c.b16 %v760, %v760
        %v793 = vpack.c.b16 %v761, %v761
        %v794 = vpack.c.b16 %v762, %v762
        %v795 = vpack.c.b16 %v763, %v763
        %v796 = vpack.c.b16 %v764, %v764
        %v797 = vpack.c.b16 %v765, %v765
        %v798 = vpack.c.b16 %v766, %v766
        %v799 = vpack.c.b16 %v767, %v767
        %v800 = vpack.c.b16 %v768, %v768
        %v801 = vpack.c.b16 %v769, %v769
        %v802 = vpack.c.b16 %v770, %v770
        %v803 = vpack.c.b16 %v771, %v771
        %v804 = vpack.c.b16 %v772, %v772
        %v805 = vpack.c.b16 %v773, %v773
        %v806 = vpack.c.b16 %v774, %v774
        %v807 = vpack.c.b16 %v775, %v775
        %v808 = vpack.c.b16 %v776, %v776
        %v809 = vpack.c.b16 %v777, %v777
        %v810 = vpack.c.b16 %v778, %v778
        %v811 = vpack.c.b16 %v779, %v779
        %v812 = vpack.c.b16 %v780, %v780
        %v813 = vpack.c.b16 %v781, %v781
        %v814 = vpack.c.b16 %v782, %v782
        %v815 = vpack.c.b16 %v783, %v783
        %v816 = vpack.c.b16 %v784, %v784
        %849 = vst [vmem:[%s177] sm:$0xf] %v785
        %850 = vst [vmem:[%s177 + $0x4] sm:$0xf] %v786
        %851 = vst [vmem:[%s177 + $0x8] sm:$0xf] %v787
        %852 = vst [vmem:[%s177 + $0xc] sm:$0xf] %v788
        %853 = vst [vmem:[%s177 + $0x10] sm:$0xf] %v789
        %854 = vst [vmem:[%s177 + $0x14] sm:$0xf] %v790
        %855 = vst [vmem:[%s177 + $0x18] sm:$0xf] %v791
        %856 = vst [vmem:[%s177 + $0x1c] sm:$0xf] %v792
        %857 = vst [vmem:[%s177 + $0x20] sm:$0xf] %v793
        %858 = vst [vmem:[%s177 + $0x24] sm:$0xf] %v794
        %859 = vst [vmem:[%s177 + $0x28] sm:$0xf] %v795
        %860 = vst [vmem:[%s177 + $0x2c] sm:$0xf] %v796
        %861 = vst [vmem:[%s177 + $0x30] sm:$0xf] %v797
        %862 = vst [vmem:[%s177 + $0x34] sm:$0xf] %v798
        %863 = vst [vmem:[%s177 + $0x38] sm:$0xf] %v799
        %864 = vst [vmem:[%s177 + $0x3c] sm:$0xf] %v800
        %865 = vst [vmem:[%s177 + $0x40] sm:$0xf] %v801
        %866 = vst [vmem:[%s177 + $0x44] sm:$0xf] %v802
        %867 = vst [vmem:[%s177 + $0x48] sm:$0xf] %v803
        %868 = vst [vmem:[%s177 + $0x4c] sm:$0xf] %v804
        %869 = vst [vmem:[%s177 + $0x50] sm:$0xf] %v805
        %870 = vst [vmem:[%s177 + $0x54] sm:$0xf] %v806
        %871 = vst [vmem:[%s177 + $0x58] sm:$0xf] %v807
        %872 = vst [vmem:[%s177 + $0x5c] sm:$0xf] %v808
        %873 = vst [vmem:[%s177 + $0x60] sm:$0xf] %v809
        %874 = vst [vmem:[%s177 + $0x64] sm:$0xf] %v810
        %875 = vst [vmem:[%s177 + $0x68] sm:$0xf] %v811
        %876 = vst [vmem:[%s177 + $0x6c] sm:$0xf] %v812
        %877 = vst [vmem:[%s177 + $0x70] sm:$0xf] %v813
        %878 = vst [vmem:[%s177 + $0x74] sm:$0xf] %v814
        %879 = vst [vmem:[%s177 + $0x78] sm:$0xf] %v815
        %880 = vst [vmem:[%s177 + $0x7c] sm:$0xf] %v816
        %s881 = sand.u32 %s90, 1
        %s882 = sand.u32 %s90, 1
        %s883 = smul.addr %s882, 128
        %s884 = scalar_lea.vmem [#allocation2], %s883
        // Predicated region
        $region33: #{dqn_forward.3} parent=31 // pred_check
          %p885 = pneg %p100
        $region34: #{dqn_forward.3} parent=31 // pred_check_branch
          %887 = sbr.rel (%p885) target = $region36
        $region35: #{dqn_forward.3} parent=31 // pred_region
          %s888 = smul.u32 32, %s14
          %s889 = ssub.s32 91, %s888
          %p890 = scmp.lt.s32.totalorder %s889, 32
          %s891 = scalar_select %p890, %s889, 32
          %s892 = smul.u32 64, %s891
          %p893 = scmp.ne.s32.totalorder 0, %s892
          %s894 = smul.addr %s888, 4
          %s895 = scalar_lea.vmem %s3, %s894
          // Predicated region
          $region37: #{dqn_forward.3} parent=35 // pred_check
            %p896 = pneg %p893
          $region38: #{dqn_forward.3} parent=35 // pred_check_branch
            %898 = sbr.rel (%p896) target = $region40
          $region39: #{dqn_forward.3} parent=35 // pred_region
            // Predicated region
            $region41: #{dqn_forward.3} parent=39 // pred_check
              _
            $region42: #{dqn_forward.3} parent=39 // pred_check_branch
              %900 = sbr.rel target = $region44
            $region43: #{dqn_forward.3} parent=39 // pred_region
              // Predicated region
              $region63: #{dqn_forward.3} parent=43 // pred_check
                _
              $region64: #{dqn_forward.3} parent=43 // pred_check_branch
                %1012 = sbr.rel (0) target = $region66
              $region65: #{dqn_forward.3} parent=43 // pred_region
                %s1014 = ssub.s32 16, 1
                %s1015 = sshrl.u32 %s891, 5
                // While loop
                $region67: #{dqn_forward.3} parent=65 // loop_pre_header
                  _
                $region68: #{dqn_forward.3} parent=65 // loop_header
                  %s1017 = sphi 0, %s1019
                  %p1018 = scmp.ge.s32.totalorder %s1017, %s1015
                  %s1022 = sphi 0, %s1091
                  %s1023 = sphi %s884, %s1094
                  %s1024 = sphi %s895, %s1095
                $region69: #{dqn_forward.3} parent=65 // loop_header_branch
                  %1021 = sbr.rel (%p1018) target = $region73
                $region70: #{dqn_forward.3} parent=65 // loop_body
                  %v1025 = vld [vmem:[%s1023] sm:%s1014]
                  %1026 = vst [vmem:[%s1024] sm:%s1014] %v1025
                  %v1027 = vld [vmem:[%s1023 + $0x4] sm:%s1014]
                  %1028 = vst [vmem:[%s1024 + $0x4] sm:%s1014] %v1027
                  %v1029 = vld [vmem:[%s1023 + $0x8] sm:%s1014]
                  %1030 = vst [vmem:[%s1024 + $0x8] sm:%s1014] %v1029
                  %v1031 = vld [vmem:[%s1023 + $0xc] sm:%s1014]
                  %1032 = vst [vmem:[%s1024 + $0xc] sm:%s1014] %v1031
                  %v1033 = vld [vmem:[%s1023 + $0x10] sm:%s1014]
                  %1034 = vst [vmem:[%s1024 + $0x10] sm:%s1014] %v1033
                  %v1035 = vld [vmem:[%s1023 + $0x14] sm:%s1014]
                  %1036 = vst [vmem:[%s1024 + $0x14] sm:%s1014] %v1035
                  %v1037 = vld [vmem:[%s1023 + $0x18] sm:%s1014]
                  %1038 = vst [vmem:[%s1024 + $0x18] sm:%s1014] %v1037
                  %v1039 = vld [vmem:[%s1023 + $0x1c] sm:%s1014]
                  %1040 = vst [vmem:[%s1024 + $0x1c] sm:%s1014] %v1039
                  %v1041 = vld [vmem:[%s1023 + $0x20] sm:%s1014]
                  %1042 = vst [vmem:[%s1024 + $0x20] sm:%s1014] %v1041
                  %v1043 = vld [vmem:[%s1023 + $0x24] sm:%s1014]
                  %1044 = vst [vmem:[%s1024 + $0x24] sm:%s1014] %v1043
                  %v1045 = vld [vmem:[%s1023 + $0x28] sm:%s1014]
                  %1046 = vst [vmem:[%s1024 + $0x28] sm:%s1014] %v1045
                  %v1047 = vld [vmem:[%s1023 + $0x2c] sm:%s1014]
                  %1048 = vst [vmem:[%s1024 + $0x2c] sm:%s1014] %v1047
                  %v1049 = vld [vmem:[%s1023 + $0x30] sm:%s1014]
                  %1050 = vst [vmem:[%s1024 + $0x30] sm:%s1014] %v1049
                  %v1051 = vld [vmem:[%s1023 + $0x34] sm:%s1014]
                  %1052 = vst [vmem:[%s1024 + $0x34] sm:%s1014] %v1051
                  %v1053 = vld [vmem:[%s1023 + $0x38] sm:%s1014]
                  %1054 = vst [vmem:[%s1024 + $0x38] sm:%s1014] %v1053
                  %v1055 = vld [vmem:[%s1023 + $0x3c] sm:%s1014]
                  %1056 = vst [vmem:[%s1024 + $0x3c] sm:%s1014] %v1055
                  %v1057 = vld [vmem:[%s1023 + $0x40] sm:%s1014]
                  %1058 = vst [vmem:[%s1024 + $0x40] sm:%s1014] %v1057
                  %v1059 = vld [vmem:[%s1023 + $0x44] sm:%s1014]
                  %1060 = vst [vmem:[%s1024 + $0x44] sm:%s1014] %v1059
                  %v1061 = vld [vmem:[%s1023 + $0x48] sm:%s1014]
                  %1062 = vst [vmem:[%s1024 + $0x48] sm:%s1014] %v1061
                  %v1063 = vld [vmem:[%s1023 + $0x4c] sm:%s1014]
                  %1064 = vst [vmem:[%s1024 + $0x4c] sm:%s1014] %v1063
                  %v1065 = vld [vmem:[%s1023 + $0x50] sm:%s1014]
                  %1066 = vst [vmem:[%s1024 + $0x50] sm:%s1014] %v1065
                  %v1067 = vld [vmem:[%s1023 + $0x54] sm:%s1014]
                  %1068 = vst [vmem:[%s1024 + $0x54] sm:%s1014] %v1067
                  %v1069 = vld [vmem:[%s1023 + $0x58] sm:%s1014]
                  %1070 = vst [vmem:[%s1024 + $0x58] sm:%s1014] %v1069
                  %v1071 = vld [vmem:[%s1023 + $0x5c] sm:%s1014]
                  %1072 = vst [vmem:[%s1024 + $0x5c] sm:%s1014] %v1071
                  %v1073 = vld [vmem:[%s1023 + $0x60] sm:%s1014]
                  %1074 = vst [vmem:[%s1024 + $0x60] sm:%s1014] %v1073
                  %v1075 = vld [vmem:[%s1023 + $0x64] sm:%s1014]
                  %1076 = vst [vmem:[%s1024 + $0x64] sm:%s1014] %v1075
                  %v1077 = vld [vmem:[%s1023 + $0x68] sm:%s1014]
                  %1078 = vst [vmem:[%s1024 + $0x68] sm:%s1014] %v1077
                  %v1079 = vld [vmem:[%s1023 + $0x6c] sm:%s1014]
                  %1080 = vst [vmem:[%s1024 + $0x6c] sm:%s1014] %v1079
                  %v1081 = vld [vmem:[%s1023 + $0x70] sm:%s1014]
                  %1082 = vst [vmem:[%s1024 + $0x70] sm:%s1014] %v1081
                  %v1083 = vld [vmem:[%s1023 + $0x74] sm:%s1014]
                  %1084 = vst [vmem:[%s1024 + $0x74] sm:%s1014] %v1083
                  %v1085 = vld [vmem:[%s1023 + $0x78] sm:%s1014]
                  %1086 = vst [vmem:[%s1024 + $0x78] sm:%s1014] %v1085
                  %v1087 = vld [vmem:[%s1023 + $0x7c] sm:%s1014]
                  %1088 = vst [vmem:[%s1024 + $0x7c] sm:%s1014] %v1087
                  %s1089 = sadd.s32 1, %s1022
                  %p1090 = scmp.ge.s32.totalorder %s1089, %s1015
                  %s1091 = scalar_select %p1090, 0, %s1089
                  %s1092 = smul.u32 %s1091, 128
                  %s1093 = smul.u32 %s1091, 128
                  %s1094 = scalar_lea.vmem %s884, %s1092 [#allocation2]
                  %s1095 = scalar_lea.vmem %s895, %s1093
                $region71: #{dqn_forward.3} parent=65 // loop_footer
                  %s1019 = sadd.s32 %s1017, 1
                $region72: #{dqn_forward.3} parent=65 // loop_footer_branch
                  %1016 = sbr.rel target = $region68
                $region73: #{dqn_forward.3} parent=65 // loop_exit
                  _
                %s1096 = sshrl.u32 %s891, 5
                %s1097 = sand.u32 %s891, 31
                %s1098 = smul.u32 %s1096, 32
                %s1099 = smul.u32 4, %s1098
                %s1100 = scalar_lea.vmem %s884, %s1099 [#allocation2]
                %s1101 = smul.u32 4, %s1098
                %s1102 = scalar_lea.vmem %s895, %s1101
                // While loop
                $region74: #{dqn_forward.3} parent=65 // loop_pre_header
                  _
                $region75: #{dqn_forward.3} parent=65 // loop_header
                  %s1104 = sphi 0, %s1106
                  %p1105 = scmp.ge.s32.totalorder %s1104, %s1097
                  %s1109 = sphi 0, %s1116
                  %s1110 = sphi %s1100, %s1119
                  %s1111 = sphi %s1102, %s1120
                $region76: #{dqn_forward.3} parent=65 // loop_header_branch
                  %1108 = sbr.rel (%p1105) target = $region80
                $region77: #{dqn_forward.3} parent=65 // loop_body
                  %v1112 = vld [vmem:[%s1110] sm:%s1014]
                  %1113 = vst [vmem:[%s1111] sm:%s1014] %v1112
                  %s1114 = sadd.s32 1, %s1109
                  %p1115 = scmp.ge.s32.totalorder %s1114, %s1097
                  %s1116 = scalar_select %p1115, 0, %s1114
                  %s1117 = smul.u32 %s1116, 4
                  %s1118 = smul.u32 %s1116, 4
                  %s1119 = scalar_lea.vmem %s1100, %s1117 [#allocation2]
                  %s1120 = scalar_lea.vmem %s1102, %s1118
                $region78: #{dqn_forward.3} parent=65 // loop_footer
                  %s1106 = sadd.s32 %s1104, 1
                $region79: #{dqn_forward.3} parent=65 // loop_footer_branch
                  %1103 = sbr.rel target = $region75
                $region80: #{dqn_forward.3} parent=65 // loop_exit
                  _
              $region66: #{dqn_forward.3} parent=43 // pred_fallthru
                _
            $region44: #{dqn_forward.3} parent=39 // pred_fallthru
              _
            // Predicated region
            $region45: #{dqn_forward.3} parent=39 // pred_check
              _
            $region46: #{dqn_forward.3} parent=39 // pred_check_branch
              %902 = sbr.rel (0) target = $region48
            $region47: #{dqn_forward.3} parent=39 // pred_region
              %s904 = ssub.s32 16, 1
              %s905 = sshrl.u32 %s891, 5
              // While loop
              $region49: #{dqn_forward.3} parent=47 // loop_pre_header
                _
              $region50: #{dqn_forward.3} parent=47 // loop_header
                %s907 = sphi 0, %s909
                %p908 = scmp.ge.s32.totalorder %s907, %s905
                %s912 = sphi 0, %s981
                %s913 = sphi %s884, %s984
                %s914 = sphi %s895, %s985
              $region51: #{dqn_forward.3} parent=47 // loop_header_branch
                %911 = sbr.rel (%p908) target = $region55
              $region52: #{dqn_forward.3} parent=47 // loop_body
                %v915 = vld [vmem:[%s913] sm:%s904]
                %916 = vst [vmem:[%s914] sm:%s904] %v915
                %v917 = vld [vmem:[%s913 + $0x4] sm:%s904]
                %918 = vst [vmem:[%s914 + $0x4] sm:%s904] %v917
                %v919 = vld [vmem:[%s913 + $0x8] sm:%s904]
                %920 = vst [vmem:[%s914 + $0x8] sm:%s904] %v919
                %v921 = vld [vmem:[%s913 + $0xc] sm:%s904]
                %922 = vst [vmem:[%s914 + $0xc] sm:%s904] %v921
                %v923 = vld [vmem:[%s913 + $0x10] sm:%s904]
                %924 = vst [vmem:[%s914 + $0x10] sm:%s904] %v923
                %v925 = vld [vmem:[%s913 + $0x14] sm:%s904]
                %926 = vst [vmem:[%s914 + $0x14] sm:%s904] %v925
                %v927 = vld [vmem:[%s913 + $0x18] sm:%s904]
                %928 = vst [vmem:[%s914 + $0x18] sm:%s904] %v927
                %v929 = vld [vmem:[%s913 + $0x1c] sm:%s904]
                %930 = vst [vmem:[%s914 + $0x1c] sm:%s904] %v929
                %v931 = vld [vmem:[%s913 + $0x20] sm:%s904]
                %932 = vst [vmem:[%s914 + $0x20] sm:%s904] %v931
                %v933 = vld [vmem:[%s913 + $0x24] sm:%s904]
                %934 = vst [vmem:[%s914 + $0x24] sm:%s904] %v933
                %v935 = vld [vmem:[%s913 + $0x28] sm:%s904]
                %936 = vst [vmem:[%s914 + $0x28] sm:%s904] %v935
                %v937 = vld [vmem:[%s913 + $0x2c] sm:%s904]
                %938 = vst [vmem:[%s914 + $0x2c] sm:%s904] %v937
                %v939 = vld [vmem:[%s913 + $0x30] sm:%s904]
                %940 = vst [vmem:[%s914 + $0x30] sm:%s904] %v939
                %v941 = vld [vmem:[%s913 + $0x34] sm:%s904]
                %942 = vst [vmem:[%s914 + $0x34] sm:%s904] %v941
                %v943 = vld [vmem:[%s913 + $0x38] sm:%s904]
                %944 = vst [vmem:[%s914 + $0x38] sm:%s904] %v943
                %v945 = vld [vmem:[%s913 + $0x3c] sm:%s904]
                %946 = vst [vmem:[%s914 + $0x3c] sm:%s904] %v945
                %v947 = vld [vmem:[%s913 + $0x40] sm:%s904]
                %948 = vst [vmem:[%s914 + $0x40] sm:%s904] %v947
                %v949 = vld [vmem:[%s913 + $0x44] sm:%s904]
                %950 = vst [vmem:[%s914 + $0x44] sm:%s904] %v949
                %v951 = vld [vmem:[%s913 + $0x48] sm:%s904]
                %952 = vst [vmem:[%s914 + $0x48] sm:%s904] %v951
                %v953 = vld [vmem:[%s913 + $0x4c] sm:%s904]
                %954 = vst [vmem:[%s914 + $0x4c] sm:%s904] %v953
                %v955 = vld [vmem:[%s913 + $0x50] sm:%s904]
                %956 = vst [vmem:[%s914 + $0x50] sm:%s904] %v955
                %v957 = vld [vmem:[%s913 + $0x54] sm:%s904]
                %958 = vst [vmem:[%s914 + $0x54] sm:%s904] %v957
                %v959 = vld [vmem:[%s913 + $0x58] sm:%s904]
                %960 = vst [vmem:[%s914 + $0x58] sm:%s904] %v959
                %v961 = vld [vmem:[%s913 + $0x5c] sm:%s904]
                %962 = vst [vmem:[%s914 + $0x5c] sm:%s904] %v961
                %v963 = vld [vmem:[%s913 + $0x60] sm:%s904]
                %964 = vst [vmem:[%s914 + $0x60] sm:%s904] %v963
                %v965 = vld [vmem:[%s913 + $0x64] sm:%s904]
                %966 = vst [vmem:[%s914 + $0x64] sm:%s904] %v965
                %v967 = vld [vmem:[%s913 + $0x68] sm:%s904]
                %968 = vst [vmem:[%s914 + $0x68] sm:%s904] %v967
                %v969 = vld [vmem:[%s913 + $0x6c] sm:%s904]
                %970 = vst [vmem:[%s914 + $0x6c] sm:%s904] %v969
                %v971 = vld [vmem:[%s913 + $0x70] sm:%s904]
                %972 = vst [vmem:[%s914 + $0x70] sm:%s904] %v971
                %v973 = vld [vmem:[%s913 + $0x74] sm:%s904]
                %974 = vst [vmem:[%s914 + $0x74] sm:%s904] %v973
                %v975 = vld [vmem:[%s913 + $0x78] sm:%s904]
                %976 = vst [vmem:[%s914 + $0x78] sm:%s904] %v975
                %v977 = vld [vmem:[%s913 + $0x7c] sm:%s904]
                %978 = vst [vmem:[%s914 + $0x7c] sm:%s904] %v977
                %s979 = sadd.s32 1, %s912
                %p980 = scmp.ge.s32.totalorder %s979, %s905
                %s981 = scalar_select %p980, 0, %s979
                %s982 = smul.u32 %s981, 128
                %s983 = smul.u32 %s981, 128
                %s984 = scalar_lea.vmem %s884, %s982 [#allocation2]
                %s985 = scalar_lea.vmem %s895, %s983
              $region53: #{dqn_forward.3} parent=47 // loop_footer
                %s909 = sadd.s32 %s907, 1
              $region54: #{dqn_forward.3} parent=47 // loop_footer_branch
                %906 = sbr.rel target = $region50
              $region55: #{dqn_forward.3} parent=47 // loop_exit
                _
              %s986 = sshrl.u32 %s891, 5
              %s987 = sand.u32 %s891, 31
              %s988 = smul.u32 %s986, 32
              %s989 = smul.u32 4, %s988
              %s990 = scalar_lea.vmem %s884, %s989 [#allocation2]
              %s991 = smul.u32 4, %s988
              %s992 = scalar_lea.vmem %s895, %s991
              // While loop
              $region56: #{dqn_forward.3} parent=47 // loop_pre_header
                _
              $region57: #{dqn_forward.3} parent=47 // loop_header
                %s994 = sphi 0, %s996
                %p995 = scmp.ge.s32.totalorder %s994, %s987
                %s999 = sphi 0, %s1006
                %s1000 = sphi %s990, %s1009
                %s1001 = sphi %s992, %s1010
              $region58: #{dqn_forward.3} parent=47 // loop_header_branch
                %998 = sbr.rel (%p995) target = $region62
              $region59: #{dqn_forward.3} parent=47 // loop_body
                %v1002 = vld [vmem:[%s1000] sm:%s904]
                %1003 = vst [vmem:[%s1001] sm:%s904] %v1002
                %s1004 = sadd.s32 1, %s999
                %p1005 = scmp.ge.s32.totalorder %s1004, %s987
                %s1006 = scalar_select %p1005, 0, %s1004
                %s1007 = smul.u32 %s1006, 4
                %s1008 = smul.u32 %s1006, 4
                %s1009 = scalar_lea.vmem %s990, %s1007 [#allocation2]
                %s1010 = scalar_lea.vmem %s992, %s1008
              $region60: #{dqn_forward.3} parent=47 // loop_footer
                %s996 = sadd.s32 %s994, 1
              $region61: #{dqn_forward.3} parent=47 // loop_footer_branch
                %993 = sbr.rel target = $region57
              $region62: #{dqn_forward.3} parent=47 // loop_exit
                _
            $region48: #{dqn_forward.3} parent=39 // pred_fallthru
              _
          $region40: #{dqn_forward.3} parent=35 // pred_fallthru
            _
          %1121 = vnop
        $region36: #{dqn_forward.3} parent=31 // pred_fallthru
          _
      $region32: #{dqn_forward.3} parent=5 // pred_fallthru
        _
      %p1122 = scmp.le.s32.totalorder 2, %s9
      // Predicated region
      $region81: #{dqn_forward.3} parent=5 // pred_check
        %p1123 = pneg %p1122
      $region82: #{dqn_forward.3} parent=5 // pred_check_branch
        %1125 = sbr.rel (%p1123) target = $region84
      $region83: #{dqn_forward.3} parent=5 // pred_region
        %s1126 = ssub.s32 %s9, 2
        // Predicated region
        $region85: #{dqn_forward.3} parent=83 // pred_check
          %p1127 = pneg %p106
        $region86: #{dqn_forward.3} parent=83 // pred_check_branch
          %1129 = sbr.rel (%p1127) target = $region88
        $region87: #{dqn_forward.3} parent=83 // pred_region
          %s1130 = sand.u32 %s91, 1
          %s1131 = sand.u32 %s91, 1
          %s1132 = smul.addr %s1131, 128
          %s1133 = scalar_lea.vmem [#allocation2], %s1132
        $region88: #{dqn_forward.3} parent=83 // pred_fallthru
          _
      $region84: #{dqn_forward.3} parent=5 // pred_fallthru
        _
    $region6: #{dqn_forward.3} parent=1 // loop_footer
      %s13 = sadd.s32 1, %s9
    $region7: #{dqn_forward.3} parent=1 // loop_footer_branch
      %8 = sbr.rel target = $region3
    $region8: #{dqn_forward.3} parent=1 // loop_exit
      _

// kernel: dqn_forward.5
$region0: #{dqn_forward.5}
  #allocation0 [shape = 'u32[]', space=smem, size = 0x4, offset = 0x4, fixed_abs, tag = 'smem constant byte address 0x4 - core index']
  #allocation1 [shape = 'u32[144,128]{1,0:T(1,128)}', space=vmem, size = 0x12000, scoped, tag = 'internal scratch']
  %s0 = inlined_call_operand.vmem [shape: bf16[8,2304], index: 0, kind: input, shape index: {}]
  %s1 = inlined_call_operand.vmem [shape: bf16[2304,512], index: 1, kind: input, shape index: {}]
  %s2 = inlined_call_operand.vmem [shape: f32[1,512], index: 2, kind: input, shape index: {}]
  %s3 = inlined_call_operand.vmem [shape: bf16[512,128], index: 3, kind: input, shape index: {}]
  %s4 = inlined_call_operand.vmem [shape: f32[1,128], index: 4, kind: input, shape index: {}]
  %s5 = inlined_call_operand.vmem [shape: f32[8,128], index: 5, kind: output, shape index: {}]
  %s6 = sld [smem:[#allocation0]]
  $region30: #{dqn_forward.5} parent=0
    _
  %s8 = ssub.s32 1, %s6
  %s9 = scalar_select 0, %s8, %s6
  // Predicated region
  $region2: #{dqn_forward.5} parent=0 // pred_check
    _
  $region3: #{dqn_forward.5} parent=0 // pred_check_branch
    %11 = sbr.rel (0) target = $region5
  $region4: #{dqn_forward.5} parent=0 // pred_region
    _
  $region5: #{dqn_forward.5} parent=0 // pred_fallthru
    _
  // Predicated region
  $region6: #{dqn_forward.5} parent=0 // pred_check
    _
  $region7: #{dqn_forward.5} parent=0 // pred_check_branch
    %13 = sbr.rel (0) target = $region9
  $region8: #{dqn_forward.5} parent=0 // pred_region
    _
  $region9: #{dqn_forward.5} parent=0 // pred_fallthru
    _
  // Predicated region
  $region10: #{dqn_forward.5} parent=0 // pred_check
    _
  $region11: #{dqn_forward.5} parent=0 // pred_check_branch
    %15 = sbr.rel (0) target = $region13
  $region12: #{dqn_forward.5} parent=0 // pred_region
    _
  $region13: #{dqn_forward.5} parent=0 // pred_fallthru
    _
  // Predicated region
  $region14: #{dqn_forward.5} parent=0 // pred_check
    _
  $region15: #{dqn_forward.5} parent=0 // pred_check_branch
    %17 = sbr.rel (0) target = $region17
  $region16: #{dqn_forward.5} parent=0 // pred_region
    _
  $region17: #{dqn_forward.5} parent=0 // pred_fallthru
    _
  // Predicated region
  $region18: #{dqn_forward.5} parent=0 // pred_check
    _
  $region19: #{dqn_forward.5} parent=0 // pred_check_branch
    %19 = sbr.rel (0) target = $region21
  $region20: #{dqn_forward.5} parent=0 // pred_region
    _
  $region21: #{dqn_forward.5} parent=0 // pred_fallthru
    _
  %v21 = vld [vmem:[%s0] sm:$0xff]
  %v22 = vld [vmem:[%s0 + $0x8] sm:$0xff]
  %v23 = vld [vmem:[%s0 + $0x10] sm:$0xff]
  %v24 = vld [vmem:[%s0 + $0x18] sm:$0xff]
  %v25 = vld [vmem:[%s0 + $0x20] sm:$0xff]
  %v26 = vld [vmem:[%s0 + $0x28] sm:$0xff]
  %v27 = vld [vmem:[%s0 + $0x30] sm:$0xff]
  %v28 = vld [vmem:[%s0 + $0x38] sm:$0xff]
  %v29 = vld [vmem:[%s0 + $0x40] sm:$0xff]
  %v30 = vld [vmem:[%s1] sm:$0xff]
  %v31 = vld [vmem:[%s1 + $0x8] sm:$0xff]
  %v32 = vld [vmem:[%s1 + $0x10] sm:$0xff]
  %v33 = vld [vmem:[%s1 + $0x18] sm:$0xff]
  %v34 = vld [vmem:[%s1 + $0x20] sm:$0xff]
  %v35 = vld [vmem:[%s1 + $0x28] sm:$0xff]
  %v36 = vld [vmem:[%s1 + $0x30] sm:$0xff]
  %v37 = vld [vmem:[%s1 + $0x38] sm:$0xff]
  %v38 = vld [vmem:[%s1 + $0x40] sm:$0xff]
  %v39 = vld [vmem:[%s1 + $0x48] sm:$0xff]
  %v40 = vld [vmem:[%s1 + $0x50] sm:$0xff]
  %v41 = vld [vmem:[%s1 + $0x58] sm:$0xff]
  %v42 = vld [vmem:[%s1 + $0x60] sm:$0xff]
  %v43 = vld [vmem:[%s1 + $0x68] sm:$0xff]
  %v44 = vld [vmem:[%s1 + $0x70] sm:$0xff]
  %v45 = vld [vmem:[%s1 + $0x78] sm:$0xff]
  %v46 = vld [vmem:[%s1 + $0x80] sm:$0xff]
  %v47 = vld [vmem:[%s1 + $0x88] sm:$0xff]
  %v48 = vld [vmem:[%s1 + $0x90] sm:$0xff]
  %v49 = vld [vmem:[%s1 + $0x98] sm:$0xff]
  %v50 = vld [vmem:[%s1 + $0xa0] sm:$0xff]
  %v51 = vld [vmem:[%s1 + $0xa8] sm:$0xff]
  %v52 = vld [vmem:[%s1 + $0xb0] sm:$0xff]
  %v53 = vld [vmem:[%s1 + $0xb8] sm:$0xff]
  %v54 = vld [vmem:[%s1 + $0xc0] sm:$0xff]
  %v55 = vld [vmem:[%s1 + $0xc8] sm:$0xff]
  %v56 = vld [vmem:[%s1 + $0xd0] sm:$0xff]
  %v57 = vld [vmem:[%s1 + $0xd8] sm:$0xff]
  %v58 = vld [vmem:[%s1 + $0xe0] sm:$0xff]
  %v59 = vld [vmem:[%s1 + $0xe8] sm:$0xff]
  %v60 = vld [vmem:[%s1 + $0xf0] sm:$0xff]
  %v61 = vld [vmem:[%s1 + $0xf8] sm:$0xff]
  %v62 = vld [vmem:[%s1 + $0x100] sm:$0xff]
  %v63 = vld [vmem:[%s1 + $0x108] sm:$0xff]
  %v64 = vld [vmem:[%s1 + $0x110] sm:$0xff]
  %v65 = vld [vmem:[%s1 + $0x118] sm:$0xff]
  %v66 = vld [vmem:[%s1 + $0x120] sm:$0xff]
  %v67 = vld [vmem:[%s1 + $0x128] sm:$0xff]
  %v68 = vld [vmem:[%s1 + $0x130] sm:$0xff]
  %v69 = vld [vmem:[%s1 + $0x138] sm:$0xff]
  %v70 = vld [vmem:[%s1 + $0x140] sm:$0xff]
  %v71 = vld [vmem:[%s1 + $0x148] sm:$0xff]
  %v72 = vld [vmem:[%s1 + $0x150] sm:$0xff]
  %v73 = vld [vmem:[%s1 + $0x158] sm:$0xff]
  %v74 = vld [vmem:[%s1 + $0x160] sm:$0xff]
  %v75 = vld [vmem:[%s1 + $0x168] sm:$0xff]
  %v76 = vld [vmem:[%s1 + $0x170] sm:$0xff]
  %v77 = vld [vmem:[%s1 + $0x178] sm:$0xff]
  %v78 = vld [vmem:[%s1 + $0x180] sm:$0xff]
  %v79 = vld [vmem:[%s1 + $0x188] sm:$0xff]
  %v80 = vld [vmem:[%s1 + $0x190] sm:$0xff]
  %v81 = vld [vmem:[%s1 + $0x198] sm:$0xff]
  %v82 = vld [vmem:[%s1 + $0x1a0] sm:$0xff]
  %v83 = vld [vmem:[%s1 + $0x1a8] sm:$0xff]
  %v84 = vld [vmem:[%s1 + $0x1b0] sm:$0xff]
  %v85 = vld [vmem:[%s1 + $0x1b8] sm:$0xff]
  %v86 = vld [vmem:[%s1 + $0x1c0] sm:$0xff]
  %v87 = vld [vmem:[%s1 + $0x1c8] sm:$0xff]
  %v88 = vld [vmem:[%s1 + $0x1d0] sm:$0xff]
  %v89 = vld [vmem:[%s1 + $0x1d8] sm:$0xff]
  %v90 = vld [vmem:[%s1 + $0x1e0] sm:$0xff]
  %v91 = vld [vmem:[%s1 + $0x1e8] sm:$0xff]
  %v92 = vld [vmem:[%s1 + $0x1f0] sm:$0xff]
  %v93 = vld [vmem:[%s1 + $0x1f8] sm:$0xff]
  %v94 = vld [vmem:[%s1 + $0x200] sm:$0xff]
  %v95 = vld [vmem:[%s1 + $0x208] sm:$0xff]
  %v96 = vld [vmem:[%s1 + $0x210] sm:$0xff]
  %v97 = vld [vmem:[%s1 + $0x218] sm:$0xff]
  %v98 = vld [vmem:[%s1 + $0x220] sm:$0xff]
  %v99 = vld [vmem:[%s1 + $0x228] sm:$0xff]
  %v100 = vld [vmem:[%s1 + $0x230] sm:$0xff]
  %v101 = vld [vmem:[%s1 + $0x238] sm:$0xff]
  %v102 = vld [vmem:[%s1 + $0x240] sm:$0xff]
  %v103 = vld [vmem:[%s1 + $0x248] sm:$0xff]
  %v104 = vld [vmem:[%s1 + $0x250] sm:$0xff]
  %v105 = vld [vmem:[%s1 + $0x258] sm:$0xff]
  %v106 = vld [vmem:[%s1 + $0x260] sm:$0xff]
  %v107 = vld [vmem:[%s1 + $0x268] sm:$0xff]
  %v108 = vld [vmem:[%s1 + $0x270] sm:$0xff]
  %v109 = vld [vmem:[%s1 + $0x278] sm:$0xff]
  %v110 = vld [vmem:[%s1 + $0x280] sm:$0xff]
  %v111 = vld [vmem:[%s1 + $0x288] sm:$0xff]
  %v112 = vld [vmem:[%s1 + $0x290] sm:$0xff]
  %v113 = vld [vmem:[%s1 + $0x298] sm:$0xff]
  %v114 = vld [vmem:[%s1 + $0x2a0] sm:$0xff]
  %v115 = vld [vmem:[%s1 + $0x2a8] sm:$0xff]
  %v116 = vld [vmem:[%s1 + $0x2b0] sm:$0xff]
  %v117 = vld [vmem:[%s1 + $0x2b8] sm:$0xff]
  %v118 = vld [vmem:[%s1 + $0x2c0] sm:$0xff]
  %v119 = vld [vmem:[%s1 + $0x2c8] sm:$0xff]
  %v120 = vld [vmem:[%s1 + $0x2d0] sm:$0xff]
  %v121 = vld [vmem:[%s1 + $0x2d8] sm:$0xff]
  %v122 = vld [vmem:[%s1 + $0x2e0] sm:$0xff]
  %v123 = vld [vmem:[%s1 + $0x2e8] sm:$0xff]
  %v124 = vld [vmem:[%s1 + $0x2f0] sm:$0xff]
  %v125 = vld [vmem:[%s1 + $0x2f8] sm:$0xff]
  %v126 = vld [vmem:[%s1 + $0x300] sm:$0xff]
  %v127 = vld [vmem:[%s1 + $0x308] sm:$0xff]
  %v128 = vld [vmem:[%s1 + $0x310] sm:$0xff]
  %v129 = vld [vmem:[%s1 + $0x318] sm:$0xff]
  %v130 = vld [vmem:[%s1 + $0x320] sm:$0xff]
  %v131 = vld [vmem:[%s1 + $0x328] sm:$0xff]
  %v132 = vld [vmem:[%s1 + $0x330] sm:$0xff]
  %v133 = vld [vmem:[%s1 + $0x338] sm:$0xff]
  %v134 = vld [vmem:[%s1 + $0x340] sm:$0xff]
  %v135 = vld [vmem:[%s1 + $0x348] sm:$0xff]
  %v136 = vld [vmem:[%s1 + $0x350] sm:$0xff]
  %v137 = vld [vmem:[%s1 + $0x358] sm:$0xff]
  %v138 = vld [vmem:[%s1 + $0x360] sm:$0xff]
  %v139 = vld [vmem:[%s1 + $0x368] sm:$0xff]
  %v140 = vld [vmem:[%s1 + $0x370] sm:$0xff]
  %v141 = vld [vmem:[%s1 + $0x378] sm:$0xff]
  %v142 = vld [vmem:[%s1 + $0x380] sm:$0xff]
  %v143 = vld [vmem:[%s1 + $0x388] sm:$0xff]
  %v144 = vld [vmem:[%s1 + $0x390] sm:$0xff]
  %v145 = vld [vmem:[%s1 + $0x398] sm:$0xff]
  %v146 = vld [vmem:[%s1 + $0x3a0] sm:$0xff]
  %v147 = vld [vmem:[%s1 + $0x3a8] sm:$0xff]
  %v148 = vld [vmem:[%s1 + $0x3b0] sm:$0xff]
  %v149 = vld [vmem:[%s1 + $0x3b8] sm:$0xff]
  %v150 = vld [vmem:[%s1 + $0x3c0] sm:$0xff]
  %v151 = vld [vmem:[%s1 + $0x3c8] sm:$0xff]
  %v152 = vld [vmem:[%s1 + $0x3d0] sm:$0xff]
  %v153 = vld [vmem:[%s1 + $0x3d8] sm:$0xff]
  %v154 = vld [vmem:[%s1 + $0x3e0] sm:$0xff]
  %v155 = vld [vmem:[%s1 + $0x3e8] sm:$0xff]
  %v156 = vld [vmem:[%s1 + $0x3f0] sm:$0xff]
  %v157 = vld [vmem:[%s1 + $0x3f8] sm:$0xff]
  %v158 = vld [vmem:[%s1 + $0x400] sm:$0xff]
  %v159 = vld [vmem:[%s1 + $0x408] sm:$0xff]
  %v160 = vld [vmem:[%s1 + $0x410] sm:$0xff]
  %v161 = vld [vmem:[%s1 + $0x418] sm:$0xff]
  %v162 = vld [vmem:[%s1 + $0x420] sm:$0xff]
  %v163 = vld [vmem:[%s1 + $0x428] sm:$0xff]
  %v164 = vld [vmem:[%s1 + $0x430] sm:$0xff]
  %v165 = vld [vmem:[%s1 + $0x438] sm:$0xff]
  %v166 = vld [vmem:[%s1 + $0x440] sm:$0xff]
  %v167 = vld [vmem:[%s1 + $0x448] sm:$0xff]
  %v168 = vld [vmem:[%s1 + $0x450] sm:$0xff]
  %v169 = vld [vmem:[%s1 + $0x458] sm:$0xff]
  %v170 = vld [vmem:[%s1 + $0x460] sm:$0xff]
  %v171 = vld [vmem:[%s1 + $0x468] sm:$0xff]
  %v172 = vld [vmem:[%s1 + $0x470] sm:$0xff]
  %v173 = vld [vmem:[%s1 + $0x478] sm:$0xff]
  %v174 = vld [vmem:[%s1 + $0x480] sm:$0xff]
  %v175 = vld [vmem:[%s1 + $0x488] sm:$0xff]
  %v176 = vld [vmem:[%s1 + $0x490] sm:$0xff]
  %v177 = vld [vmem:[%s1 + $0x498] sm:$0xff]
  %v178 = vld [vmem:[%s1 + $0x4a0] sm:$0xff]
  %v179 = vld [vmem:[%s1 + $0x4a8] sm:$0xff]
  %v180 = vld [vmem:[%s1 + $0x4b0] sm:$0xff]
  %v181 = vld [vmem:[%s1 + $0x4b8] sm:$0xff]
  %v182 = vld [vmem:[%s1 + $0x4c0] sm:$0xff]
  %v183 = vld [vmem:[%s1 + $0x4c8] sm:$0xff]
  %v184 = vld [vmem:[%s1 + $0x4d0] sm:$0xff]
  %v185 = vld [vmem:[%s1 + $0x4d8] sm:$0xff]
  %v186 = vld [vmem:[%s1 + $0x4e0] sm:$0xff]
  %v187 = vld [vmem:[%s1 + $0x4e8] sm:$0xff]
  %v188 = vld [vmem:[%s1 + $0x4f0] sm:$0xff]
  %v189 = vld [vmem:[%s1 + $0x4f8] sm:$0xff]
  %v190 = vld [vmem:[%s1 + $0x500] sm:$0xff]
  %v191 = vld [vmem:[%s1 + $0x508] sm:$0xff]
  %v192 = vld [vmem:[%s1 + $0x510] sm:$0xff]
  %v193 = vld [vmem:[%s1 + $0x518] sm:$0xff]
  %v194 = vld [vmem:[%s1 + $0x520] sm:$0xff]
  %v195 = vld [vmem:[%s1 + $0x528] sm:$0xff]
  %v196 = vld [vmem:[%s1 + $0x530] sm:$0xff]
  %v197 = vld [vmem:[%s1 + $0x538] sm:$0xff]
  %v198 = vld [vmem:[%s1 + $0x540] sm:$0xff]
  %v199 = vld [vmem:[%s1 + $0x548] sm:$0xff]
  %v200 = vld [vmem:[%s1 + $0x550] sm:$0xff]
  %v201 = vld [vmem:[%s1 + $0x558] sm:$0xff]
  %v202 = vld [vmem:[%s1 + $0x560] sm:$0xff]
  %v203 = vld [vmem:[%s1 + $0x568] sm:$0xff]
  %v204 = vld [vmem:[%s1 + $0x570] sm:$0xff]
  %v205 = vld [vmem:[%s1 + $0x578] sm:$0xff]
  %v206 = vld [vmem:[%s1 + $0x580] sm:$0xff]
  %v207 = vld [vmem:[%s1 + $0x588] sm:$0xff]
  %v208 = vld [vmem:[%s1 + $0x590] sm:$0xff]
  %v209 = vld [vmem:[%s1 + $0x598] sm:$0xff]
  %v210 = vld [vmem:[%s1 + $0x5a0] sm:$0xff]
  %v211 = vld [vmem:[%s1 + $0x5a8] sm:$0xff]
  %v212 = vld [vmem:[%s1 + $0x5b0] sm:$0xff]
  %v213 = vld [vmem:[%s1 + $0x5b8] sm:$0xff]
  %v214 = vld [vmem:[%s1 + $0x5c0] sm:$0xff]
  %v215 = vld [vmem:[%s1 + $0x5c8] sm:$0xff]
  %v216 = vld [vmem:[%s1 + $0x5d0] sm:$0xff]
  %v217 = vld [vmem:[%s1 + $0x5d8] sm:$0xff]
  %v218 = vld [vmem:[%s1 + $0x5e0] sm:$0xff]
  %v219 = vld [vmem:[%s1 + $0x5e8] sm:$0xff]
  %v220 = vld [vmem:[%s1 + $0x5f0] sm:$0xff]
  %v221 = vld [vmem:[%s1 + $0x5f8] sm:$0xff]
  %v222 = vld [vmem:[%s1 + $0x600] sm:$0xff]
  %v223 = vld [vmem:[%s1 + $0x608] sm:$0xff]
  %v224 = vld [vmem:[%s1 + $0x610] sm:$0xff]
  %v225 = vld [vmem:[%s1 + $0x618] sm:$0xff]
  %v226 = vld [vmem:[%s1 + $0x620] sm:$0xff]
  %v227 = vld [vmem:[%s1 + $0x628] sm:$0xff]
  %v228 = vld [vmem:[%s1 + $0x630] sm:$0xff]
  %v229 = vld [vmem:[%s1 + $0x638] sm:$0xff]
  %v230 = vld [vmem:[%s1 + $0x640] sm:$0xff]
  %v231 = vld [vmem:[%s1 + $0x648] sm:$0xff]
  %v232 = vld [vmem:[%s1 + $0x650] sm:$0xff]
  %v233 = vld [vmem:[%s1 + $0x658] sm:$0xff]
  %v234 = vld [vmem:[%s1 + $0x660] sm:$0xff]
  %v235 = vld [vmem:[%s1 + $0x668] sm:$0xff]
  %v236 = vld [vmem:[%s1 + $0x670] sm:$0xff]
  %v237 = vld [vmem:[%s1 + $0x678] sm:$0xff]
  %v238 = vld [vmem:[%s1 + $0x680] sm:$0xff]
  %v239 = vld [vmem:[%s1 + $0x688] sm:$0xff]
  %v240 = vld [vmem:[%s1 + $0x690] sm:$0xff]
  %v241 = vld [vmem:[%s1 + $0x698] sm:$0xff]
  %v242 = vld [vmem:[%s1 + $0x6a0] sm:$0xff]
  %v243 = vld [vmem:[%s1 + $0x6a8] sm:$0xff]
  %v244 = vld [vmem:[%s1 + $0x6b0] sm:$0xff]
  %v245 = vld [vmem:[%s1 + $0x6b8] sm:$0xff]
  %v246 = vld [vmem:[%s1 + $0x6c0] sm:$0xff]
  %v247 = vld [vmem:[%s1 + $0x6c8] sm:$0xff]
  %v248 = vld [vmem:[%s1 + $0x6d0] sm:$0xff]
  %v249 = vld [vmem:[%s1 + $0x6d8] sm:$0xff]
  %v250 = vld [vmem:[%s1 + $0x6e0] sm:$0xff]
  %v251 = vld [vmem:[%s1 + $0x6e8] sm:$0xff]
  %v252 = vld [vmem:[%s1 + $0x6f0] sm:$0xff]
  %v253 = vld [vmem:[%s1 + $0x6f8] sm:$0xff]
  %v254 = vld [vmem:[%s1 + $0x700] sm:$0xff]
  %v255 = vld [vmem:[%s1 + $0x708] sm:$0xff]
  %v256 = vld [vmem:[%s1 + $0x710] sm:$0xff]
  %v257 = vld [vmem:[%s1 + $0x718] sm:$0xff]
  %v258 = vld [vmem:[%s1 + $0x720] sm:$0xff]
  %v259 = vld [vmem:[%s1 + $0x728] sm:$0xff]
  %v260 = vld [vmem:[%s1 + $0x730] sm:$0xff]
  %v261 = vld [vmem:[%s1 + $0x738] sm:$0xff]
  %v262 = vld [vmem:[%s1 + $0x740] sm:$0xff]
  %v263 = vld [vmem:[%s1 + $0x748] sm:$0xff]
  %v264 = vld [vmem:[%s1 + $0x750] sm:$0xff]
  %v265 = vld [vmem:[%s1 + $0x758] sm:$0xff]
  %v266 = vld [vmem:[%s1 + $0x760] sm:$0xff]
  %v267 = vld [vmem:[%s1 + $0x768] sm:$0xff]
  %v268 = vld [vmem:[%s1 + $0x770] sm:$0xff]
  %v269 = vld [vmem:[%s1 + $0x778] sm:$0xff]
  %v270 = vld [vmem:[%s1 + $0x780] sm:$0xff]
  %v271 = vld [vmem:[%s1 + $0x788] sm:$0xff]
  %v272 = vld [vmem:[%s1 + $0x790] sm:$0xff]
  %v273 = vld [vmem:[%s1 + $0x798] sm:$0xff]
  %v274 = vld [vmem:[%s1 + $0x7a0] sm:$0xff]
  %v275 = vld [vmem:[%s1 + $0x7a8] sm:$0xff]
  %v276 = vld [vmem:[%s1 + $0x7b0] sm:$0xff]
  %v277 = vld [vmem:[%s1 + $0x7b8] sm:$0xff]
  %v278 = vld [vmem:[%s1 + $0x7c0] sm:$0xff]
  %v279 = vld [vmem:[%s1 + $0x7c8] sm:$0xff]
  %v280 = vld [vmem:[%s1 + $0x7d0] sm:$0xff]
  %v281 = vld [vmem:[%s1 + $0x7d8] sm:$0xff]
  %v282 = vld [vmem:[%s1 + $0x7e0] sm:$0xff]
  %v283 = vld [vmem:[%s1 + $0x7e8] sm:$0xff]
  %v284 = vld [vmem:[%s1 + $0x7f0] sm:$0xff]
  %v285 = vld [vmem:[%s1 + $0x7f8] sm:$0xff]
  %v286 = vld [vmem:[%s1 + $0x800] sm:$0xff]
  %v287 = vld [vmem:[%s1 + $0x808] sm:$0xff]
  %v288 = vld [vmem:[%s1 + $0x810] sm:$0xff]
  %v289 = vld [vmem:[%s1 + $0x818] sm:$0xff]
  %v290 = vld [vmem:[%s1 + $0x820] sm:$0xff]
  %v291 = vld [vmem:[%s1 + $0x828] sm:$0xff]
  %v292 = vld [vmem:[%s1 + $0x830] sm:$0xff]
  %v293 = vld [vmem:[%s1 + $0x838] sm:$0xff]
  %v294 = vld [vmem:[%s1 + $0x840] sm:$0xff]
  %v295 = vld [vmem:[%s1 + $0x848] sm:$0xff]
  %v296 = vld [vmem:[%s1 + $0x850] sm:$0xff]
  %v297 = vld [vmem:[%s1 + $0x858] sm:$0xff]
  %v298 = vld [vmem:[%s1 + $0x860] sm:$0xff]
  %v299 = vld [vmem:[%s1 + $0x868] sm:$0xff]
  %v300 = vld [vmem:[%s1 + $0x870] sm:$0xff]
  %v301 = vld [vmem:[%s1 + $0x878] sm:$0xff]
  %v302 = vld [vmem:[%s1 + $0x880] sm:$0xff]
  %v303 = vld [vmem:[%s1 + $0x888] sm:$0xff]
  %v304 = vld [vmem:[%s1 + $0x890] sm:$0xff]
  %v305 = vld [vmem:[%s1 + $0x898] sm:$0xff]
  %v306 = vld [vmem:[%s1 + $0x8a0] sm:$0xff]
  %v307 = vld [vmem:[%s1 + $0x8a8] sm:$0xff]
  %v308 = vld [vmem:[%s1 + $0x8b0] sm:$0xff]
  %v309 = vld [vmem:[%s1 + $0x8b8] sm:$0xff]
  %v310 = vld [vmem:[%s1 + $0x8c0] sm:$0xff]
  %v311 = vld [vmem:[%s1 + $0x8c8] sm:$0xff]
  %v312 = vld [vmem:[%s1 + $0x8d0] sm:$0xff]
  %v313 = vld [vmem:[%s1 + $0x8d8] sm:$0xff]
  %v314 = vld [vmem:[%s1 + $0x8e0] sm:$0xff]
  %v315 = vld [vmem:[%s1 + $0x8e8] sm:$0xff]
  %v316 = vld [vmem:[%s1 + $0x8f0] sm:$0xff]
  %v317 = vld [vmem:[%s1 + $0x8f8] sm:$0xff]
  %v318 = vld [vmem:[%s1 + $0x900] sm:$0xff]
  %v319 = vld [vmem:[%s1 + $0x908] sm:$0xff]
  %v320 = vld [vmem:[%s1 + $0x910] sm:$0xff]
  %v321 = vld [vmem:[%s1 + $0x918] sm:$0xff]
  %v322 = vld [vmem:[%s1 + $0x920] sm:$0xff]
  %v323 = vld [vmem:[%s1 + $0x928] sm:$0xff]
  %v324 = vld [vmem:[%s1 + $0x930] sm:$0xff]
  %v325 = vld [vmem:[%s1 + $0x938] sm:$0xff]
  %v326 = vld [vmem:[%s1 + $0x940] sm:$0xff]
  %v327 = vld [vmem:[%s1 + $0x948] sm:$0xff]
  %v328 = vld [vmem:[%s1 + $0x950] sm:$0xff]
  %v329 = vld [vmem:[%s1 + $0x958] sm:$0xff]
  %v330 = vld [vmem:[%s1 + $0x960] sm:$0xff]
  %v331 = vld [vmem:[%s1 + $0x968] sm:$0xff]
  %v332 = vld [vmem:[%s1 + $0x970] sm:$0xff]
  %v333 = vld [vmem:[%s1 + $0x978] sm:$0xff]
  %v334 = vld [vmem:[%s1 + $0x980] sm:$0xff]
  %v335 = vld [vmem:[%s1 + $0x988] sm:$0xff]
  %v336 = vld [vmem:[%s1 + $0x990] sm:$0xff]
  %v337 = vld [vmem:[%s1 + $0x998] sm:$0xff]
  %v338 = vld [vmem:[%s1 + $0x9a0] sm:$0xff]
  %v339 = vld [vmem:[%s1 + $0x9a8] sm:$0xff]
  %v340 = vld [vmem:[%s1 + $0x9b0] sm:$0xff]
  %v341 = vld [vmem:[%s1 + $0x9b8] sm:$0xff]
  %v342 = vld [vmem:[%s1 + $0x9c0] sm:$0xff]
  %v343 = vld [vmem:[%s1 + $0x9c8] sm:$0xff]
  %v344 = vld [vmem:[%s1 + $0x9d0] sm:$0xff]
  %v345 = vld [vmem:[%s1 + $0x9d8] sm:$0xff]
  %v346 = vld [vmem:[%s1 + $0x9e0] sm:$0xff]
  %v347 = vld [vmem:[%s1 + $0x9e8] sm:$0xff]
  %v348 = vld [vmem:[%s1 + $0x9f0] sm:$0xff]
  %v349 = vld [vmem:[%s1 + $0x9f8] sm:$0xff]
  %v350 = vld [vmem:[%s1 + $0xa00] sm:$0xff]
  %v351 = vld [vmem:[%s1 + $0xa08] sm:$0xff]
  %v352 = vld [vmem:[%s1 + $0xa10] sm:$0xff]
  %v353 = vld [vmem:[%s1 + $0xa18] sm:$0xff]
  %v354 = vld [vmem:[%s1 + $0xa20] sm:$0xff]
  %v355 = vld [vmem:[%s1 + $0xa28] sm:$0xff]
  %v356 = vld [vmem:[%s1 + $0xa30] sm:$0xff]
  %v357 = vld [vmem:[%s1 + $0xa38] sm:$0xff]
  %v358 = vld [vmem:[%s1 + $0xa40] sm:$0xff]
  %v359 = vld [vmem:[%s1 + $0xa48] sm:$0xff]
  %v360 = vld [vmem:[%s1 + $0xa50] sm:$0xff]
  %v361 = vld [vmem:[%s1 + $0xa58] sm:$0xff]
  %v362 = vld [vmem:[%s1 + $0xa60] sm:$0xff]
  %v363 = vld [vmem:[%s1 + $0xa68] sm:$0xff]
  %v364 = vld [vmem:[%s1 + $0xa70] sm:$0xff]
  %v365 = vld [vmem:[%s1 + $0xa78] sm:$0xff]
  %v366 = vld [vmem:[%s1 + $0xa80] sm:$0xff]
  %v367 = vld [vmem:[%s1 + $0xa88] sm:$0xff]
  %v368 = vld [vmem:[%s1 + $0xa90] sm:$0xff]
  %v369 = vld [vmem:[%s1 + $0xa98] sm:$0xff]
  %v370 = vld [vmem:[%s1 + $0xaa0] sm:$0xff]
  %v371 = vld [vmem:[%s1 + $0xaa8] sm:$0xff]
  %v372 = vld [vmem:[%s1 + $0xab0] sm:$0xff]
  %v373 = vld [vmem:[%s1 + $0xab8] sm:$0xff]
  %v374 = vld [vmem:[%s1 + $0xac0] sm:$0xff]
  %v375 = vld [vmem:[%s1 + $0xac8] sm:$0xff]
  %v376 = vld [vmem:[%s1 + $0xad0] sm:$0xff]
  %v377 = vld [vmem:[%s1 + $0xad8] sm:$0xff]
  %v378 = vld [vmem:[%s1 + $0xae0] sm:$0xff]
  %v379 = vld [vmem:[%s1 + $0xae8] sm:$0xff]
  %v380 = vld [vmem:[%s1 + $0xaf0] sm:$0xff]
  %v381 = vld [vmem:[%s1 + $0xaf8] sm:$0xff]
  %v382 = vld [vmem:[%s1 + $0xb00] sm:$0xff]
  %v383 = vld [vmem:[%s1 + $0xb08] sm:$0xff]
  %v384 = vld [vmem:[%s1 + $0xb10] sm:$0xff]
  %v385 = vld [vmem:[%s1 + $0xb18] sm:$0xff]
  %v386 = vld [vmem:[%s1 + $0xb20] sm:$0xff]
  %v387 = vld [vmem:[%s1 + $0xb28] sm:$0xff]
  %v388 = vld [vmem:[%s1 + $0xb30] sm:$0xff]
  %v389 = vld [vmem:[%s1 + $0xb38] sm:$0xff]
  %v390 = vld [vmem:[%s1 + $0xb40] sm:$0xff]
  %v391 = vld [vmem:[%s1 + $0xb48] sm:$0xff]
  %v392 = vld [vmem:[%s1 + $0xb50] sm:$0xff]
  %v393 = vld [vmem:[%s1 + $0xb58] sm:$0xff]
  %v394 = vld [vmem:[%s1 + $0xb60] sm:$0xff]
  %v395 = vld [vmem:[%s1 + $0xb68] sm:$0xff]
  %v396 = vld [vmem:[%s1 + $0xb70] sm:$0xff]
  %v397 = vld [vmem:[%s1 + $0xb78] sm:$0xff]
  %v398 = vld [vmem:[%s1 + $0xb80] sm:$0xff]
  %v399 = vld [vmem:[%s1 + $0xb88] sm:$0xff]
  %v400 = vld [vmem:[%s1 + $0xb90] sm:$0xff]
  %v401 = vld [vmem:[%s1 + $0xb98] sm:$0xff]
  %v402 = vld [vmem:[%s1 + $0xba0] sm:$0xff]
  %v403 = vld [vmem:[%s1 + $0xba8] sm:$0xff]
  %v404 = vld [vmem:[%s1 + $0xbb0] sm:$0xff]
  %v405 = vld [vmem:[%s1 + $0xbb8] sm:$0xff]
  %v406 = vld [vmem:[%s1 + $0xbc0] sm:$0xff]
  %v407 = vld [vmem:[%s1 + $0xbc8] sm:$0xff]
  %v408 = vld [vmem:[%s1 + $0xbd0] sm:$0xff]
  %v409 = vld [vmem:[%s1 + $0xbd8] sm:$0xff]
  %v410 = vld [vmem:[%s1 + $0xbe0] sm:$0xff]
  %v411 = vld [vmem:[%s1 + $0xbe8] sm:$0xff]
  %v412 = vld [vmem:[%s1 + $0xbf0] sm:$0xff]
  %v413 = vld [vmem:[%s1 + $0xbf8] sm:$0xff]
  %v414 = vld [vmem:[%s1 + $0xc00] sm:$0xff]
  %v415 = vld [vmem:[%s1 + $0xc08] sm:$0xff]
  %v416 = vld [vmem:[%s1 + $0xc10] sm:$0xff]
  %v417 = vld [vmem:[%s1 + $0xc18] sm:$0xff]
  %v418 = vld [vmem:[%s1 + $0xc20] sm:$0xff]
  %v419 = vld [vmem:[%s1 + $0xc28] sm:$0xff]
  %v420 = vld [vmem:[%s1 + $0xc30] sm:$0xff]
  %v421 = vld [vmem:[%s1 + $0xc38] sm:$0xff]
  %v422 = vld [vmem:[%s1 + $0xc40] sm:$0xff]
  %v423 = vld [vmem:[%s1 + $0xc48] sm:$0xff]
  %v424 = vld [vmem:[%s1 + $0xc50] sm:$0xff]
  %v425 = vld [vmem:[%s1 + $0xc58] sm:$0xff]
  %v426 = vld [vmem:[%s1 + $0xc60] sm:$0xff]
  %v427 = vld [vmem:[%s1 + $0xc68] sm:$0xff]
  %v428 = vld [vmem:[%s1 + $0xc70] sm:$0xff]
  %v429 = vld [vmem:[%s1 + $0xc78] sm:$0xff]
  %v430 = vld [vmem:[%s1 + $0xc80] sm:$0xff]
  %v431 = vld [vmem:[%s1 + $0xc88] sm:$0xff]
  %v432 = vld [vmem:[%s1 + $0xc90] sm:$0xff]
  %v433 = vld [vmem:[%s1 + $0xc98] sm:$0xff]
  %v434 = vld [vmem:[%s1 + $0xca0] sm:$0xff]
  %v435 = vld [vmem:[%s1 + $0xca8] sm:$0xff]
  %v436 = vld [vmem:[%s1 + $0xcb0] sm:$0xff]
  %v437 = vld [vmem:[%s1 + $0xcb8] sm:$0xff]
  %v438 = vld [vmem:[%s1 + $0xcc0] sm:$0xff]
  %v439 = vld [vmem:[%s1 + $0xcc8] sm:$0xff]
  %v440 = vld [vmem:[%s1 + $0xcd0] sm:$0xff]
  %v441 = vld [vmem:[%s1 + $0xcd8] sm:$0xff]
  %v442 = vld [vmem:[%s1 + $0xce0] sm:$0xff]
  %v443 = vld [vmem:[%s1 + $0xce8] sm:$0xff]
  %v444 = vld [vmem:[%s1 + $0xcf0] sm:$0xff]
  %v445 = vld [vmem:[%s1 + $0xcf8] sm:$0xff]
  %v446 = vld [vmem:[%s1 + $0xd00] sm:$0xff]
  %v447 = vld [vmem:[%s1 + $0xd08] sm:$0xff]
  %v448 = vld [vmem:[%s1 + $0xd10] sm:$0xff]
  %v449 = vld [vmem:[%s1 + $0xd18] sm:$0xff]
  %v450 = vld [vmem:[%s1 + $0xd20] sm:$0xff]
  %v451 = vld [vmem:[%s1 + $0xd28] sm:$0xff]
  %v452 = vld [vmem:[%s1 + $0xd30] sm:$0xff]
  %v453 = vld [vmem:[%s1 + $0xd38] sm:$0xff]
  %v454 = vld [vmem:[%s1 + $0xd40] sm:$0xff]
  %v455 = vld [vmem:[%s1 + $0xd48] sm:$0xff]
  %v456 = vld [vmem:[%s1 + $0xd50] sm:$0xff]
  %v457 = vld [vmem:[%s1 + $0xd58] sm:$0xff]
  %v458 = vld [vmem:[%s1 + $0xd60] sm:$0xff]
  %v459 = vld [vmem:[%s1 + $0xd68] sm:$0xff]
  %v460 = vld [vmem:[%s1 + $0xd70] sm:$0xff]
  %v461 = vld [vmem:[%s1 + $0xd78] sm:$0xff]
  %v462 = vld [vmem:[%s1 + $0xd80] sm:$0xff]
  %v463 = vld [vmem:[%s1 + $0xd88] sm:$0xff]
  %v464 = vld [vmem:[%s1 + $0xd90] sm:$0xff]
  %v465 = vld [vmem:[%s1 + $0xd98] sm:$0xff]
  %v466 = vld [vmem:[%s1 + $0xda0] sm:$0xff]
  %v467 = vld [vmem:[%s1 + $0xda8] sm:$0xff]
  %v468 = vld [vmem:[%s1 + $0xdb0] sm:$0xff]
  %v469 = vld [vmem:[%s1 + $0xdb8] sm:$0xff]
  %v470 = vld [vmem:[%s1 + $0xdc0] sm:$0xff]
  %v471 = vld [vmem:[%s1 + $0xdc8] sm:$0xff]
  %v472 = vld [vmem:[%s1 + $0xdd0] sm:$0xff]
  %v473 = vld [vmem:[%s1 + $0xdd8] sm:$0xff]
  %v474 = vld [vmem:[%s1 + $0xde0] sm:$0xff]
  %v475 = vld [vmem:[%s1 + $0xde8] sm:$0xff]
  %v476 = vld [vmem:[%s1 + $0xdf0] sm:$0xff]
  %v477 = vld [vmem:[%s1 + $0xdf8] sm:$0xff]
  %v478 = vld [vmem:[%s1 + $0xe00] sm:$0xff]
  %v479 = vld [vmem:[%s1 + $0xe08] sm:$0xff]
  %v480 = vld [vmem:[%s1 + $0xe10] sm:$0xff]
  %v481 = vld [vmem:[%s1 + $0xe18] sm:$0xff]
  %v482 = vld [vmem:[%s1 + $0xe20] sm:$0xff]
  %v483 = vld [vmem:[%s1 + $0xe28] sm:$0xff]
  %v484 = vld [vmem:[%s1 + $0xe30] sm:$0xff]
  %v485 = vld [vmem:[%s1 + $0xe38] sm:$0xff]
  %v486 = vld [vmem:[%s1 + $0xe40] sm:$0xff]
  %v487 = vld [vmem:[%s1 + $0xe48] sm:$0xff]
  %v488 = vld [vmem:[%s1 + $0xe50] sm:$0xff]
  %v489 = vld [vmem:[%s1 + $0xe58] sm:$0xff]
  %v490 = vld [vmem:[%s1 + $0xe60] sm:$0xff]
  %v491 = vld [vmem:[%s1 + $0xe68] sm:$0xff]
  %v492 = vld [vmem:[%s1 + $0xe70] sm:$0xff]
  %v493 = vld [vmem:[%s1 + $0xe78] sm:$0xff]
  %v494 = vld [vmem:[%s1 + $0xe80] sm:$0xff]
  %v495 = vld [vmem:[%s1 + $0xe88] sm:$0xff]
  %v496 = vld [vmem:[%s1 + $0xe90] sm:$0xff]
  %v497 = vld [vmem:[%s1 + $0xe98] sm:$0xff]
  %v498 = vld [vmem:[%s1 + $0xea0] sm:$0xff]
  %v499 = vld [vmem:[%s1 + $0xea8] sm:$0xff]
  %v500 = vld [vmem:[%s1 + $0xeb0] sm:$0xff]
  %v501 = vld [vmem:[%s1 + $0xeb8] sm:$0xff]
  %v502 = vld [vmem:[%s1 + $0xec0] sm:$0xff]
  %v503 = vld [vmem:[%s1 + $0xec8] sm:$0xff]
  %v504 = vld [vmem:[%s1 + $0xed0] sm:$0xff]
  %v505 = vld [vmem:[%s1 + $0xed8] sm:$0xff]
  %v506 = vld [vmem:[%s1 + $0xee0] sm:$0xff]
  %v507 = vld [vmem:[%s1 + $0xee8] sm:$0xff]
  %v508 = vld [vmem:[%s1 + $0xef0] sm:$0xff]
  %v509 = vld [vmem:[%s1 + $0xef8] sm:$0xff]
  %v510 = vld [vmem:[%s1 + $0xf00] sm:$0xff]
  %v511 = vld [vmem:[%s1 + $0xf08] sm:$0xff]
  %v512 = vld [vmem:[%s1 + $0xf10] sm:$0xff]
  %v513 = vld [vmem:[%s1 + $0xf18] sm:$0xff]
  %v514 = vld [vmem:[%s1 + $0xf20] sm:$0xff]
  %v515 = vld [vmem:[%s1 + $0xf28] sm:$0xff]
  %v516 = vld [vmem:[%s1 + $0xf30] sm:$0xff]
  %v517 = vld [vmem:[%s1 + $0xf38] sm:$0xff]
  %v518 = vld [vmem:[%s1 + $0xf40] sm:$0xff]
  %v519 = vld [vmem:[%s1 + $0xf48] sm:$0xff]
  %v520 = vld [vmem:[%s1 + $0xf50] sm:$0xff]
  %v521 = vld [vmem:[%s1 + $0xf58] sm:$0xff]
  %v522 = vld [vmem:[%s1 + $0xf60] sm:$0xff]
  %v523 = vld [vmem:[%s1 + $0xf68] sm:$0xff]
  %v524 = vld [vmem:[%s1 + $0xf70] sm:$0xff]
  %v525 = vld [vmem:[%s1 + $0xf78] sm:$0xff]
  %v526 = vld [vmem:[%s1 + $0xf80] sm:$0xff]
  %v527 = vld [vmem:[%s1 + $0xf88] sm:$0xff]
  %v528 = vld [vmem:[%s1 + $0xf90] sm:$0xff]
  %v529 = vld [vmem:[%s1 + $0xf98] sm:$0xff]
  %v530 = vld [vmem:[%s1 + $0xfa0] sm:$0xff]
  %v531 = vld [vmem:[%s1 + $0xfa8] sm:$0xff]
  %v532 = vld [vmem:[%s1 + $0xfb0] sm:$0xff]
  %v533 = vld [vmem:[%s1 + $0xfb8] sm:$0xff]
  %v534 = vld [vmem:[%s1 + $0xfc0] sm:$0xff]
  %v535 = vld [vmem:[%s1 + $0xfc8] sm:$0xff]
  %v536 = vld [vmem:[%s1 + $0xfd0] sm:$0xff]
  %v537 = vld [vmem:[%s1 + $0xfd8] sm:$0xff]
  %v538 = vld [vmem:[%s1 + $0xfe0] sm:$0xff]
  %v539 = vld [vmem:[%s1 + $0xfe8] sm:$0xff]
  %v540 = vld [vmem:[%s1 + $0xff0] sm:$0xff]
  %v541 = vld [vmem:[%s1 + $0xff8] sm:$0xff]
  %v542 = vld [vmem:[%s1 + $0x1000] sm:$0xff]
  %v543 = vld [vmem:[%s1 + $0x1008] sm:$0xff]
  %v544 = vld [vmem:[%s1 + $0x1010] sm:$0xff]
  %v545 = vld [vmem:[%s1 + $0x1018] sm:$0xff]
  %v546 = vld [vmem:[%s1 + $0x1020] sm:$0xff]
  %v547 = vld [vmem:[%s1 + $0x1028] sm:$0xff]
  %v548 = vld [vmem:[%s1 + $0x1030] sm:$0xff]
  %v549 = vld [vmem:[%s1 + $0x1038] sm:$0xff]
  %v550 = vld [vmem:[%s1 + $0x1040] sm:$0xff]
  %v551 = vld [vmem:[%s1 + $0x1048] sm:$0xff]
  %v552 = vld [vmem:[%s1 + $0x1050] sm:$0xff]
  %v553 = vld [vmem:[%s1 + $0x1058] sm:$0xff]
  %v554 = vld [vmem:[%s1 + $0x1060] sm:$0xff]
  %v555 = vld [vmem:[%s1 + $0x1068] sm:$0xff]
  %v556 = vld [vmem:[%s1 + $0x1070] sm:$0xff]
  %v557 = vld [vmem:[%s1 + $0x1078] sm:$0xff]
  %v558 = vld [vmem:[%s1 + $0x1080] sm:$0xff]
  %v559 = vld [vmem:[%s1 + $0x1088] sm:$0xff]
  %v560 = vld [vmem:[%s1 + $0x1090] sm:$0xff]
  %v561 = vld [vmem:[%s1 + $0x1098] sm:$0xff]
  %v562 = vld [vmem:[%s1 + $0x10a0] sm:$0xff]
  %v563 = vld [vmem:[%s1 + $0x10a8] sm:$0xff]
  %v564 = vld [vmem:[%s1 + $0x10b0] sm:$0xff]
  %v565 = vld [vmem:[%s1 + $0x10b8] sm:$0xff]
  %v566 = vld [vmem:[%s1 + $0x10c0] sm:$0xff]
  %v567 = vld [vmem:[%s1 + $0x10c8] sm:$0xff]
  %v568 = vld [vmem:[%s1 + $0x10d0] sm:$0xff]
  %v569 = vld [vmem:[%s1 + $0x10d8] sm:$0xff]
  %v570 = vld [vmem:[%s1 + $0x10e0] sm:$0xff]
  %v571 = vld [vmem:[%s1 + $0x10e8] sm:$0xff]
  %v572 = vld [vmem:[%s1 + $0x10f0] sm:$0xff]
  %v573 = vld [vmem:[%s1 + $0x10f8] sm:$0xff]
  %v574 = vld [vmem:[%s1 + $0x1100] sm:$0xff]
  %v575 = vld [vmem:[%s1 + $0x1108] sm:$0xff]
  %v576 = vld [vmem:[%s1 + $0x1110] sm:$0xff]
  %v577 = vld [vmem:[%s1 + $0x1118] sm:$0xff]
  %v578 = vld [vmem:[%s1 + $0x1120] sm:$0xff]
  %v579 = vld [vmem:[%s1 + $0x1128] sm:$0xff]
  %v580 = vld [vmem:[%s1 + $0x1130] sm:$0xff]
  %v581 = vld [vmem:[%s1 + $0x1138] sm:$0xff]
  %v582 = vld [vmem:[%s1 + $0x1140] sm:$0xff]
  %v583 = vld [vmem:[%s1 + $0x1148] sm:$0xff]
  %v584 = vld [vmem:[%s1 + $0x1150] sm:$0xff]
  %v585 = vld [vmem:[%s1 + $0x1158] sm:$0xff]
  %v586 = vld [vmem:[%s1 + $0x1160] sm:$0xff]
  %v587 = vld [vmem:[%s1 + $0x1168] sm:$0xff]
  %v588 = vld [vmem:[%s1 + $0x1170] sm:$0xff]
  %v589 = vld [vmem:[%s1 + $0x1178] sm:$0xff]
  %v590 = vld [vmem:[%s1 + $0x1180] sm:$0xff]
  %v591 = vld [vmem:[%s1 + $0x1188] sm:$0xff]
  %v592 = vld [vmem:[%s1 + $0x1190] sm:$0xff]
  %v593 = vld [vmem:[%s1 + $0x1198] sm:$0xff]
  %v594 = vld [vmem:[%s1 + $0x11a0] sm:$0xff]
  %v595 = vld [vmem:[%s1 + $0x11a8] sm:$0xff]
  %v596 = vld [vmem:[%s1 + $0x11b0] sm:$0xff]
  %v597 = vld [vmem:[%s1 + $0x11b8] sm:$0xff]
  %v598 = vld [vmem:[%s1 + $0x11c0] sm:$0xff]
  %v599 = vld [vmem:[%s1 + $0x11c8] sm:$0xff]
  %v600 = vld [vmem:[%s1 + $0x11d0] sm:$0xff]
  %v601 = vld [vmem:[%s1 + $0x11d8] sm:$0xff]
  %v602 = vld [vmem:[%s1 + $0x11e0] sm:$0xff]
  %v603 = vld [vmem:[%s1 + $0x11e8] sm:$0xff]
  %v604 = vld [vmem:[%s1 + $0x11f0] sm:$0xff]
  %v605 = vld [vmem:[%s1 + $0x11f8] sm:$0xff]
  %v606 = vld [vmem:[%s2] sm:$0xf]
  %v608 = vlaneseq
  %v609 = vshrl.u32 %v608, 7
  %v610 = vsub.s32 0, %v609
  %v611 = vrot.slane %v606, %v610
  %v612 = vlaneseq
  %v613 = vshrl.u32 %v612, 7
  %v614 = vsub.s32 1, %v613
  %v615 = vrot.slane %v606, %v614
  %v616 = vlaneseq
  %v617 = vshrl.u32 %v616, 7
  %v618 = vsub.s32 2, %v617
  %v619 = vrot.slane %v606, %v618
  %v620 = vlaneseq
  %v621 = vshrl.u32 %v620, 7
  %v622 = vsub.s32 3, %v621
  %v623 = vrot.slane %v606, %v622
  %v637 = vunpack.c.l.b16 %v21
  %v638 = vunpack.c.h.b16 %v21
  %v639 = vunpack.c.l.b16 %v22
  %v640 = vunpack.c.h.b16 %v22
  %v641 = vunpack.c.l.b16 %v23
  %v642 = vunpack.c.h.b16 %v23
  %v643 = vunpack.c.l.b16 %v24
  %v644 = vunpack.c.h.b16 %v24
  %v645 = vunpack.c.l.b16 %v25
  %v646 = vunpack.c.h.b16 %v25
  %v647 = vunpack.c.l.b16 %v26
  %v648 = vunpack.c.h.b16 %v26
  %v649 = vunpack.c.l.b16 %v27
  %v650 = vunpack.c.h.b16 %v27
  %v651 = vunpack.c.l.b16 %v28
  %v652 = vunpack.c.h.b16 %v28
  %v653 = vunpack.c.l.b16 %v29
  %v654 = vunpack.c.h.b16 %v29
  %v655 = vpack.c.b16 %v637, %v637
  %v656 = vpack.c.b16 %v638, %v638
  %v657 = vpack.c.b16 %v639, %v639
  %v658 = vpack.c.b16 %v640, %v640
  %v659 = vpack.c.b16 %v641, %v641
  %v660 = vpack.c.b16 %v642, %v642
  %v661 = vpack.c.b16 %v643, %v643
  %v662 = vpack.c.b16 %v644, %v644
  %v663 = vpack.c.b16 %v645, %v645
  %v664 = vpack.c.b16 %v646, %v646
  %v665 = vpack.c.b16 %v647, %v647
  %v666 = vpack.c.b16 %v648, %v648
  %v667 = vpack.c.b16 %v649, %v649
  %v668 = vpack.c.b16 %v650, %v650
  %v669 = vpack.c.b16 %v651, %v651
  %v670 = vpack.c.b16 %v652, %v652
  %v671 = vpack.c.b16 %v653, %v653
  %v672 = vpack.c.b16 %v654, %v654
  %v1267 = vunpack.c.l.b16 %v30
  %v1268 = vunpack.c.h.b16 %v30
  %v1269 = vunpack.c.l.b16 %v31
  %v1270 = vunpack.c.h.b16 %v31
  %v1271 = vunpack.c.l.b16 %v32
  %v1272 = vunpack.c.h.b16 %v32
  %v1273 = vunpack.c.l.b16 %v33
  %v1274 = vunpack.c.h.b16 %v33
  %v1275 = vunpack.c.l.b16 %v34
  %v1276 = vunpack.c.h.b16 %v34
  %v1277 = vunpack.c.l.b16 %v35
  %v1278 = vunpack.c.h.b16 %v35
  %v1279 = vunpack.c.l.b16 %v36
  %v1280 = vunpack.c.h.b16 %v36
  %v1281 = vunpack.c.l.b16 %v37
  %v1282 = vunpack.c.h.b16 %v37
  %v1283 = vunpack.c.l.b16 %v38
  %v1284 = vunpack.c.h.b16 %v38
  %v1285 = vunpack.c.l.b16 %v39
  %v1286 = vunpack.c.h.b16 %v39
  %v1287 = vunpack.c.l.b16 %v40
  %v1288 = vunpack.c.h.b16 %v40
  %v1289 = vunpack.c.l.b16 %v41
  %v1290 = vunpack.c.h.b16 %v41
  %v1291 = vunpack.c.l.b16 %v42
  %v1292 = vunpack.c.h.b16 %v42
  %v1293 = vunpack.c.l.b16 %v43
  %v1294 = vunpack.c.h.b16 %v43
  %v1295 = vunpack.c.l.b16 %v44
  %v1296 = vunpack.c.h.b16 %v44
  %v1297 = vunpack.c.l.b16 %v45
  %v1298 = vunpack.c.h.b16 %v45
  %v1299 = vunpack.c.l.b16 %v46
  %v1300 = vunpack.c.h.b16 %v46
  %v1301 = vunpack.c.l.b16 %v47
  %v1302 = vunpack.c.h.b16 %v47
  %v1303 = vunpack.c.l.b16 %v48
  %v1304 = vunpack.c.h.b16 %v48
  %v1305 = vunpack.c.l.b16 %v49
  %v1306 = vunpack.c.h.b16 %v49
  %v1307 = vunpack.c.l.b16 %v50
  %v1308 = vunpack.c.h.b16 %v50
  %v1309 = vunpack.c.l.b16 %v51
  %v1310 = vunpack.c.h.b16 %v51
  %v1311 = vunpack.c.l.b16 %v52
  %v1312 = vunpack.c.h.b16 %v52
  %v1313 = vunpack.c.l.b16 %v53
  %v1314 = vunpack.c.h.b16 %v53
  %v1315 = vunpack.c.l.b16 %v54
  %v1316 = vunpack.c.h.b16 %v54
  %v1317 = vunpack.c.l.b16 %v55
  %v1318 = vunpack.c.h.b16 %v55
  %v1319 = vunpack.c.l.b16 %v56
  %v1320 = vunpack.c.h.b16 %v56
  %v1321 = vunpack.c.l.b16 %v57
  %v1322 = vunpack.c.h.b16 %v57
  %v1323 = vunpack.c.l.b16 %v58
  %v1324 = vunpack.c.h.b16 %v58
  %v1325 = vunpack.c.l.b16 %v59
  %v1326 = vunpack.c.h.b16 %v59
  %v1327 = vunpack.c.l.b16 %v60
  %v1328 = vunpack.c.h.b16 %v60
  %v1329 = vunpack.c.l.b16 %v61
  %v1330 = vunpack.c.h.b16 %v61
  %v1331 = vunpack.c.l.b16 %v62
  %v1332 = vunpack.c.h.b16 %v62
  %v1333 = vunpack.c.l.b16 %v63
  %v1334 = vunpack.c.h.b16 %v63
  %v1335 = vunpack.c.l.b16 %v64
  %v1336 = vunpack.c.h.b16 %v64
  %v1337 = vunpack.c.l.b16 %v65
  %v1338 = vunpack.c.h.b16 %v65
  %v1339 = vunpack.c.l.b16 %v66
  %v1340 = vunpack.c.h.b16 %v66
  %v1341 = vunpack.c.l.b16 %v67
  %v1342 = vunpack.c.h.b16 %v67
  %v1343 = vunpack.c.l.b16 %v68
  %v1344 = vunpack.c.h.b16 %v68
  %v1345 = vunpack.c.l.b16 %v69
  %v1346 = vunpack.c.h.b16 %v69
  %v1347 = vunpack.c.l.b16 %v70
  %v1348 = vunpack.c.h.b16 %v70
  %v1349 = vunpack.c.l.b16 %v71
  %v1350 = vunpack.c.h.b16 %v71
  %v1351 = vunpack.c.l.b16 %v72
  %v1352 = vunpack.c.h.b16 %v72
  %v1353 = vunpack.c.l.b16 %v73
  %v1354 = vunpack.c.h.b16 %v73
  %v1355 = vunpack.c.l.b16 %v74
  %v1356 = vunpack.c.h.b16 %v74
  %v1357 = vunpack.c.l.b16 %v75
  %v1358 = vunpack.c.h.b16 %v75
  %v1359 = vunpack.c.l.b16 %v76
  %v1360 = vunpack.c.h.b16 %v76
  %v1361 = vunpack.c.l.b16 %v77
  %v1362 = vunpack.c.h.b16 %v77
  %v1363 = vunpack.c.l.b16 %v78
  %v1364 = vunpack.c.h.b16 %v78
  %v1365 = vunpack.c.l.b16 %v79
  %v1366 = vunpack.c.h.b16 %v79
  %v1367 = vunpack.c.l.b16 %v80
  %v1368 = vunpack.c.h.b16 %v80
  %v1369 = vunpack.c.l.b16 %v81
  %v1370 = vunpack.c.h.b16 %v81
  %v1371 = vunpack.c.l.b16 %v82
  %v1372 = vunpack.c.h.b16 %v82
  %v1373 = vunpack.c.l.b16 %v83
  %v1374 = vunpack.c.h.b16 %v83
  %v1375 = vunpack.c.l.b16 %v84
  %v1376 = vunpack.c.h.b16 %v84
  %v1377 = vunpack.c.l.b16 %v85
  %v1378 = vunpack.c.h.b16 %v85
  %v1379 = vunpack.c.l.b16 %v86
  %v1380 = vunpack.c.h.b16 %v86
  %v1381 = vunpack.c.l.b16 %v87
  %v1382 = vunpack.c.h.b16 %v87
  %v1383 = vunpack.c.l.b16 %v88
  %v1384 = vunpack.c.h.b16 %v88
  %v1385 = vunpack.c.l.b16 %v89
  %v1386 = vunpack.c.h.b16 %v89
  %v1387 = vunpack.c.l.b16 %v90
  %v1388 = vunpack.c.h.b16 %v90
  %v1389 = vunpack.c.l.b16 %v91
  %v1390 = vunpack.c.h.b16 %v91
  %v1391 = vunpack.c.l.b16 %v92
  %v1392 = vunpack.c.h.b16 %v92
  %v1393 = vunpack.c.l.b16 %v93
  %v1394 = vunpack.c.h.b16 %v93
  %v1395 = vunpack.c.l.b16 %v94
  %v1396 = vunpack.c.h.b16 %v94
  %v1397 = vunpack.c.l.b16 %v95
  %v1398 = vunpack.c.h.b16 %v95
  %v1399 = vunpack.c.l.b16 %v96
  %v1400 = vunpack.c.h.b16 %v96
  %v1401 = vunpack.c.l.b16 %v97
  %v1402 = vunpack.c.h.b16 %v97
  %v1403 = vunpack.c.l.b16 %v98
  %v1404 = vunpack.c.h.b16 %v98
  %v1405 = vunpack.c.l.b16 %v99
  %v1406 = vunpack.c.h.b16 %v99
  %v1407 = vunpack.c.l.b16 %v100
  %v1408 = vunpack.c.h.b16 %v100
  %v1409 = vunpack.c.l.b16 %v101
  %v1410 = vunpack.c.h.b16 %v101
  %v1411 = vunpack.c.l.b16 %v102
  %v1412 = vunpack.c.h.b16 %v102
  %v1413 = vunpack.c.l.b16 %v103
  %v1414 = vunpack.c.h.b16 %v103
  %v1415 = vunpack.c.l.b16 %v104
  %v1416 = vunpack.c.h.b16 %v104
  %v1417 = vunpack.c.l.b16 %v105
  %v1418 = vunpack.c.h.b16 %v105
  %v1419 = vunpack.c.l.b16 %v106
  %v1420 = vunpack.c.h.b16 %v106
  %v1421 = vunpack.c.l.b16 %v107
  %v1422 = vunpack.c.h.b16 %v107
  %v1423 = vunpack.c.l.b16 %v108
  %v1424 = vunpack.c.h.b16 %v108
  %v1425 = vunpack.c.l.b16 %v109
  %v1426 = vunpack.c.h.b16 %v109
  %v1427 = vunpack.c.l.b16 %v110
  %v1428 = vunpack.c.h.b16 %v110
  %v1429 = vunpack.c.l.b16 %v111
  %v1430 = vunpack.c.h.b16 %v111
  %v1431 = vunpack.c.l.b16 %v112
  %v1432 = vunpack.c.h.b16 %v112
  %v1433 = vunpack.c.l.b16 %v113
  %v1434 = vunpack.c.h.b16 %v113
  %v1435 = vunpack.c.l.b16 %v114
  %v1436 = vunpack.c.h.b16 %v114
  %v1437 = vunpack.c.l.b16 %v115
  %v1438 = vunpack.c.h.b16 %v115
  %v1439 = vunpack.c.l.b16 %v116
  %v1440 = vunpack.c.h.b16 %v116
  %v1441 = vunpack.c.l.b16 %v117
  %v1442 = vunpack.c.h.b16 %v117
  %v1443 = vunpack.c.l.b16 %v118
  %v1444 = vunpack.c.h.b16 %v118
  %v1445 = vunpack.c.l.b16 %v119
  %v1446 = vunpack.c.h.b16 %v119
  %v1447 = vunpack.c.l.b16 %v120
  %v1448 = vunpack.c.h.b16 %v120
  %v1449 = vunpack.c.l.b16 %v121
  %v1450 = vunpack.c.h.b16 %v121
  %v1451 = vunpack.c.l.b16 %v122
  %v1452 = vunpack.c.h.b16 %v122
  %v1453 = vunpack.c.l.b16 %v123
  %v1454 = vunpack.c.h.b16 %v123
  %v1455 = vunpack.c.l.b16 %v124
  %v1456 = vunpack.c.h.b16 %v124
  %v1457 = vunpack.c.l.b16 %v125
  %v1458 = vunpack.c.h.b16 %v125
  %v1459 = vunpack.c.l.b16 %v126
  %v1460 = vunpack.c.h.b16 %v126
  %v1461 = vunpack.c.l.b16 %v127
  %v1462 = vunpack.c.h.b16 %v127
  %v1463 = vunpack.c.l.b16 %v128
  %v1464 = vunpack.c.h.b16 %v128
  %v1465 = vunpack.c.l.b16 %v129
  %v1466 = vunpack.c.h.b16 %v129
  %v1467 = vunpack.c.l.b16 %v130
  %v1468 = vunpack.c.h.b16 %v130
  %v1469 = vunpack.c.l.b16 %v131
  %v1470 = vunpack.c.h.b16 %v131
  %v1471 = vunpack.c.l.b16 %v132
  %v1472 = vunpack.c.h.b16 %v132
  %v1473 = vunpack.c.l.b16 %v133
  %v1474 = vunpack.c.h.b16 %v133
  %v1475 = vunpack.c.l.b16 %v134
  %v1476 = vunpack.c.h.b16 %v134
  %v1477 = vunpack.c.l.b16 %v135
  %v1478 = vunpack.c.h.b16 %v135
  %v1479 = vunpack.c.l.b16 %v136
  %v1480 = vunpack.c.h.b16 %v136
  %v1481 = vunpack.c.l.b16 %v137
  %v1482 = vunpack.c.h.b16 %v137
  %v1483 = vunpack.c.l.b16 %v138
  %v1484 = vunpack.c.h.b16 %v138
  %v1485 = vunpack.c.l.b16 %v139
  %v1486 = vunpack.c.h.b16 %v139
  %v1487 = vunpack.c.l.b16 %v140
  %v1488 = vunpack.c.h.b16 %v140
  %v1489 = vunpack.c.l.b16 %v141
  %v1490 = vunpack.c.h.b16 %v141
  %v1491 = vunpack.c.l.b16 %v142
  %v1492 = vunpack.c.h.b16 %v142
  %v1493 = vunpack.c.l.b16 %v143
  %v1494 = vunpack.c.h.b16 %v143
  %v1495 = vunpack.c.l.b16 %v144
  %v1496 = vunpack.c.h.b16 %v144
  %v1497 = vunpack.c.l.b16 %v145
  %v1498 = vunpack.c.h.b16 %v145
  %v1499 = vunpack.c.l.b16 %v146
  %v1500 = vunpack.c.h.b16 %v146
  %v1501 = vunpack.c.l.b16 %v147
  %v1502 = vunpack.c.h.b16 %v147
  %v1503 = vunpack.c.l.b16 %v148
  %v1504 = vunpack.c.h.b16 %v148
  %v1505 = vunpack.c.l.b16 %v149
  %v1506 = vunpack.c.h.b16 %v149
  %v1507 = vunpack.c.l.b16 %v150
  %v1508 = vunpack.c.h.b16 %v150
  %v1509 = vunpack.c.l.b16 %v151
  %v1510 = vunpack.c.h.b16 %v151
  %v1511 = vunpack.c.l.b16 %v152
  %v1512 = vunpack.c.h.b16 %v152
  %v1513 = vunpack.c.l.b16 %v153
  %v1514 = vunpack.c.h.b16 %v153
  %v1515 = vunpack.c.l.b16 %v154
  %v1516 = vunpack.c.h.b16 %v154
  %v1517 = vunpack.c.l.b16 %v155
  %v1518 = vunpack.c.h.b16 %v155
  %v1519 = vunpack.c.l.b16 %v156
  %v1520 = vunpack.c.h.b16 %v156
  %v1521 = vunpack.c.l.b16 %v157
  %v1522 = vunpack.c.h.b16 %v157
  %v1523 = vunpack.c.l.b16 %v158
  %v1524 = vunpack.c.h.b16 %v158
  %v1525 = vunpack.c.l.b16 %v159
  %v1526 = vunpack.c.h.b16 %v159
  %v1527 = vunpack.c.l.b16 %v160
  %v1528 = vunpack.c.h.b16 %v160
  %v1529 = vunpack.c.l.b16 %v161
  %v1530 = vunpack.c.h.b16 %v161
  %v1531 = vunpack.c.l.b16 %v162
  %v1532 = vunpack.c.h.b16 %v162
  %v1533 = vunpack.c.l.b16 %v163
  %v1534 = vunpack.c.h.b16 %v163
  %v1535 = vunpack.c.l.b16 %v164
  %v1536 = vunpack.c.h.b16 %v164
  %v1537 = vunpack.c.l.b16 %v165
  %v1538 = vunpack.c.h.b16 %v165
  %v1539 = vunpack.c.l.b16 %v166
  %v1540 = vunpack.c.h.b16 %v166
  %v1541 = vunpack.c.l.b16 %v167
  %v1542 = vunpack.c.h.b16 %v167
  %v1543 = vunpack.c.l.b16 %v168
  %v1544 = vunpack.c.h.b16 %v168
  %v1545 = vunpack.c.l.b16 %v169
  %v1546 = vunpack.c.h.b16 %v169
  %v1547 = vunpack.c.l.b16 %v170
  %v1548 = vunpack.c.h.b16 %v170
  %v1549 = vunpack.c.l.b16 %v171
  %v1550 = vunpack.c.h.b16 %v171
  %v1551 = vunpack.c.l.b16 %v172
  %v1552 = vunpack.c.h.b16 %v172
  %v1553 = vunpack.c.l.b16 %v173
  %v1554 = vunpack.c.h.b16 %v173
  %v1555 = vunpack.c.l.b16 %v174
  %v1556 = vunpack.c.h.b16 %v174
  %v1557 = vunpack.c.l.b16 %v175
  %v1558 = vunpack.c.h.b16 %v175
  %v1559 = vunpack.c.l.b16 %v176
  %v1560 = vunpack.c.h.b16 %v176
  %v1561 = vunpack.c.l.b16 %v177
  %v1562 = vunpack.c.h.b16 %v177
  %v1563 = vunpack.c.l.b16 %v178
  %v1564 = vunpack.c.h.b16 %v178
  %v1565 = vunpack.c.l.b16 %v179
  %v1566 = vunpack.c.h.b16 %v179
  %v1567 = vunpack.c.l.b16 %v180
  %v1568 = vunpack.c.h.b16 %v180
  %v1569 = vunpack.c.l.b16 %v181
  %v1570 = vunpack.c.h.b16 %v181
  %v1571 = vunpack.c.l.b16 %v182
  %v1572 = vunpack.c.h.b16 %v182
  %v1573 = vunpack.c.l.b16 %v183
  %v1574 = vunpack.c.h.b16 %v183
  %v1575 = vunpack.c.l.b16 %v184
  %v1576 = vunpack.c.h.b16 %v184
  %v1577 = vunpack.c.l.b16 %v185
  %v1578 = vunpack.c.h.b16 %v185
  %v1579 = vunpack.c.l.b16 %v186
  %v1580 = vunpack.c.h.b16 %v186
  %v1581 = vunpack.c.l.b16 %v187
  %v1582 = vunpack.c.h.b16 %v187
  %v1583 = vunpack.c.l.b16 %v188
  %v1584 = vunpack.c.h.b16 %v188
  %v1585 = vunpack.c.l.b16 %v189
  %v1586 = vunpack.c.h.b16 %v189
  %v1587 = vunpack.c.l.b16 %v190
  %v1588 = vunpack.c.h.b16 %v190
  %v1589 = vunpack.c.l.b16 %v191
  %v1590 = vunpack.c.h.b16 %v191
  %v1591 = vunpack.c.l.b16 %v192
  %v1592 = vunpack.c.h.b16 %v192
  %v1593 = vunpack.c.l.b16 %v193
  %v1594 = vunpack.c.h.b16 %v193
  %v1595 = vunpack.c.l.b16 %v194
  %v1596 = vunpack.c.h.b16 %v194
  %v1597 = vunpack.c.l.b16 %v195
  %v1598 = vunpack.c.h.b16 %v195
  %v1599 = vunpack.c.l.b16 %v196
  %v1600 = vunpack.c.h.b16 %v196
  %v1601 = vunpack.c.l.b16 %v197
  %v1602 = vunpack.c.h.b16 %v197
  %v1603 = vunpack.c.l.b16 %v198
  %v1604 = vunpack.c.h.b16 %v198
  %v1605 = vunpack.c.l.b16 %v199
  %v1606 = vunpack.c.h.b16 %v199
  %v1607 = vunpack.c.l.b16 %v200
  %v1608 = vunpack.c.h.b16 %v200
  %v1609 = vunpack.c.l.b16 %v201
  %v1610 = vunpack.c.h.b16 %v201
  %v1611 = vunpack.c.l.b16 %v202
  %v1612 = vunpack.c.h.b16 %v202
  %v1613 = vunpack.c.l.b16 %v203
  %v1614 = vunpack.c.h.b16 %v203
  %v1615 = vunpack.c.l.b16 %v204
  %v1616 = vunpack.c.h.b16 %v204
  %v1617 = vunpack.c.l.b16 %v205
  %v1618 = vunpack.c.h.b16 %v205
  %v1619 = vunpack.c.l.b16 %v206
  %v1620 = vunpack.c.h.b16 %v206
  %v1621 = vunpack.c.l.b16 %v207
  %v1622 = vunpack.c.h.b16 %v207
  %v1623 = vunpack.c.l.b16 %v208
  %v1624 = vunpack.c.h.b16 %v208
  %v1625 = vunpack.c.l.b16 %v209
  %v1626 = vunpack.c.h.b16 %v209
  %v1627 = vunpack.c.l.b16 %v210
  %v1628 = vunpack.c.h.b16 %v210
  %v1629 = vunpack.c.l.b16 %v211
  %v1630 = vunpack.c.h.b16 %v211
  %v1631 = vunpack.c.l.b16 %v212
  %v1632 = vunpack.c.h.b16 %v212
  %v1633 = vunpack.c.l.b16 %v213
  %v1634 = vunpack.c.h.b16 %v213
  %v1635 = vunpack.c.l.b16 %v214
  %v1636 = vunpack.c.h.b16 %v214
  %v1637 = vunpack.c.l.b16 %v215
  %v1638 = vunpack.c.h.b16 %v215
  %v1639 = vunpack.c.l.b16 %v216
  %v1640 = vunpack.c.h.b16 %v216
  %v1641 = vunpack.c.l.b16 %v217
  %v1642 = vunpack.c.h.b16 %v217
  %v1643 = vunpack.c.l.b16 %v218
  %v1644 = vunpack.c.h.b16 %v218
  %v1645 = vunpack.c.l.b16 %v219
  %v1646 = vunpack.c.h.b16 %v219
  %v1647 = vunpack.c.l.b16 %v220
  %v1648 = vunpack.c.h.b16 %v220
  %v1649 = vunpack.c.l.b16 %v221
  %v1650 = vunpack.c.h.b16 %v221
  %v1651 = vunpack.c.l.b16 %v222
  %v1652 = vunpack.c.h.b16 %v222
  %v1653 = vunpack.c.l.b16 %v223
  %v1654 = vunpack.c.h.b16 %v223
  %v1655 = vunpack.c.l.b16 %v224
  %v1656 = vunpack.c.h.b16 %v224
  %v1657 = vunpack.c.l.b16 %v225
  %v1658 = vunpack.c.h.b16 %v225
  %v1659 = vunpack.c.l.b16 %v226
  %v1660 = vunpack.c.h.b16 %v226
  %v1661 = vunpack.c.l.b16 %v227
  %v1662 = vunpack.c.h.b16 %v227
  %v1663 = vunpack.c.l.b16 %v228
  %v1664 = vunpack.c.h.b16 %v228
  %v1665 = vunpack.c.l.b16 %v229
  %v1666 = vunpack.c.h.b16 %v229
  %v1667 = vunpack.c.l.b16 %v230
  %v1668 = vunpack.c.h.b16 %v230
  %v1669 = vunpack.c.l.b16 %v231
  %v1670 = vunpack.c.h.b16 %v231
  %v1671 = vunpack.c.l.b16 %v232
  %v1672 = vunpack.c.h.b16 %v232
  %v1673 = vunpack.c.l.b16 %v233
  %v1674 = vunpack.c.h.b16 %v233
  %v1675 = vunpack.c.l.b16 %v234
  %v1676 = vunpack.c.h.b16 %v234
  %v1677 = vunpack.c.l.b16 %v235
  %v1678 = vunpack.c.h.b16 %v235
  %v1679 = vunpack.c.l.b16 %v236
  %v1680 = vunpack.c.h.b16 %v236
  %v1681 = vunpack.c.l.b16 %v237
  %v1682 = vunpack.c.h.b16 %v237
  %v1683 = vunpack.c.l.b16 %v238
  %v1684 = vunpack.c.h.b16 %v238
  %v1685 = vunpack.c.l.b16 %v239
  %v1686 = vunpack.c.h.b16 %v239
  %v1687 = vunpack.c.l.b16 %v240
  %v1688 = vunpack.c.h.b16 %v240
  %v1689 = vunpack.c.l.b16 %v241
  %v1690 = vunpack.c.h.b16 %v241
  %v1691 = vunpack.c.l.b16 %v242
  %v1692 = vunpack.c.h.b16 %v242
  %v1693 = vunpack.c.l.b16 %v243
  %v1694 = vunpack.c.h.b16 %v243
  %v1695 = vunpack.c.l.b16 %v244
  %v1696 = vunpack.c.h.b16 %v244
  %v1697 = vunpack.c.l.b16 %v245
  %v1698 = vunpack.c.h.b16 %v245
  %v1699 = vunpack.c.l.b16 %v246
  %v1700 = vunpack.c.h.b16 %v246
  %v1701 = vunpack.c.l.b16 %v247
  %v1702 = vunpack.c.h.b16 %v247
  %v1703 = vunpack.c.l.b16 %v248
  %v1704 = vunpack.c.h.b16 %v248
  %v1705 = vunpack.c.l.b16 %v249
  %v1706 = vunpack.c.h.b16 %v249
  %v1707 = vunpack.c.l.b16 %v250
  %v1708 = vunpack.c.h.b16 %v250
  %v1709 = vunpack.c.l.b16 %v251
  %v1710 = vunpack.c.h.b16 %v251
  %v1711 = vunpack.c.l.b16 %v252
  %v1712 = vunpack.c.h.b16 %v252
  %v1713 = vunpack.c.l.b16 %v253
  %v1714 = vunpack.c.h.b16 %v253
  %v1715 = vunpack.c.l.b16 %v254
  %v1716 = vunpack.c.h.b16 %v254
  %v1717 = vunpack.c.l.b16 %v255
  %v1718 = vunpack.c.h.b16 %v255
  %v1719 = vunpack.c.l.b16 %v256
  %v1720 = vunpack.c.h.b16 %v256
  %v1721 = vunpack.c.l.b16 %v257
  %v1722 = vunpack.c.h.b16 %v257
  %v1723 = vunpack.c.l.b16 %v258
  %v1724 = vunpack.c.h.b16 %v258
  %v1725 = vunpack.c.l.b16 %v259
  %v1726 = vunpack.c.h.b16 %v259
  %v1727 = vunpack.c.l.b16 %v260
  %v1728 = vunpack.c.h.b16 %v260
  %v1729 = vunpack.c.l.b16 %v261
  %v1730 = vunpack.c.h.b16 %v261
  %v1731 = vunpack.c.l.b16 %v262
  %v1732 = vunpack.c.h.b16 %v262
  %v1733 = vunpack.c.l.b16 %v263
  %v1734 = vunpack.c.h.b16 %v263
  %v1735 = vunpack.c.l.b16 %v264
  %v1736 = vunpack.c.h.b16 %v264
  %v1737 = vunpack.c.l.b16 %v265
  %v1738 = vunpack.c.h.b16 %v265
  %v1739 = vunpack.c.l.b16 %v266
  %v1740 = vunpack.c.h.b16 %v266
  %v1741 = vunpack.c.l.b16 %v267
  %v1742 = vunpack.c.h.b16 %v267
  %v1743 = vunpack.c.l.b16 %v268
  %v1744 = vunpack.c.h.b16 %v268
  %v1745 = vunpack.c.l.b16 %v269
  %v1746 = vunpack.c.h.b16 %v269
  %v1747 = vunpack.c.l.b16 %v270
  %v1748 = vunpack.c.h.b16 %v270
  %v1749 = vunpack.c.l.b16 %v271
  %v1750 = vunpack.c.h.b16 %v271
  %v1751 = vunpack.c.l.b16 %v272
  %v1752 = vunpack.c.h.b16 %v272
  %v1753 = vunpack.c.l.b16 %v273
  %v1754 = vunpack.c.h.b16 %v273
  %v1755 = vunpack.c.l.b16 %v274
  %v1756 = vunpack.c.h.b16 %v274
  %v1757 = vunpack.c.l.b16 %v275
  %v1758 = vunpack.c.h.b16 %v275
  %v1759 = vunpack.c.l.b16 %v276
  %v1760 = vunpack.c.h.b16 %v276
  %v1761 = vunpack.c.l.b16 %v277
  %v1762 = vunpack.c.h.b16 %v277
  %v1763 = vunpack.c.l.b16 %v278
  %v1764 = vunpack.c.h.b16 %v278
  %v1765 = vunpack.c.l.b16 %v279
  %v1766 = vunpack.c.h.b16 %v279
  %v1767 = vunpack.c.l.b16 %v280
  %v1768 = vunpack.c.h.b16 %v280
  %v1769 = vunpack.c.l.b16 %v281
  %v1770 = vunpack.c.h.b16 %v281
  %v1771 = vunpack.c.l.b16 %v282
  %v1772 = vunpack.c.h.b16 %v282
  %v1773 = vunpack.c.l.b16 %v283
  %v1774 = vunpack.c.h.b16 %v283
  %v1775 = vunpack.c.l.b16 %v284
  %v1776 = vunpack.c.h.b16 %v284
  %v1777 = vunpack.c.l.b16 %v285
  %v1778 = vunpack.c.h.b16 %v285
  %v1779 = vunpack.c.l.b16 %v286
  %v1780 = vunpack.c.h.b16 %v286
  %v1781 = vunpack.c.l.b16 %v287
  %v1782 = vunpack.c.h.b16 %v287
  %v1783 = vunpack.c.l.b16 %v288
  %v1784 = vunpack.c.h.b16 %v288
  %v1785 = vunpack.c.l.b16 %v289
  %v1786 = vunpack.c.h.b16 %v289
  %v1787 = vunpack.c.l.b16 %v290
  %v1788 = vunpack.c.h.b16 %v290
  %v1789 = vunpack.c.l.b16 %v291
  %v1790 = vunpack.c.h.b16 %v291
  %v1791 = vunpack.c.l.b16 %v292
  %v1792 = vunpack.c.h.b16 %v292
  %v1793 = vunpack.c.l.b16 %v293
  %v1794 = vunpack.c.h.b16 %v293
  %v1795 = vunpack.c.l.b16 %v294
  %v1796 = vunpack.c.h.b16 %v294
  %v1797 = vunpack.c.l.b16 %v295
  %v1798 = vunpack.c.h.b16 %v295
  %v1799 = vunpack.c.l.b16 %v296
  %v1800 = vunpack.c.h.b16 %v296
  %v1801 = vunpack.c.l.b16 %v297
  %v1802 = vunpack.c.h.b16 %v297
  %v1803 = vunpack.c.l.b16 %v298
  %v1804 = vunpack.c.h.b16 %v298
  %v1805 = vunpack.c.l.b16 %v299
  %v1806 = vunpack.c.h.b16 %v299
  %v1807 = vunpack.c.l.b16 %v300
  %v1808 = vunpack.c.h.b16 %v300
  %v1809 = vunpack.c.l.b16 %v301
  %v1810 = vunpack.c.h.b16 %v301
  %v1811 = vunpack.c.l.b16 %v302
  %v1812 = vunpack.c.h.b16 %v302
  %v1813 = vunpack.c.l.b16 %v303
  %v1814 = vunpack.c.h.b16 %v303
  %v1815 = vunpack.c.l.b16 %v304
  %v1816 = vunpack.c.h.b16 %v304
  %v1817 = vunpack.c.l.b16 %v305
  %v1818 = vunpack.c.h.b16 %v305
  %v1819 = vunpack.c.l.b16 %v306
  %v1820 = vunpack.c.h.b16 %v306
  %v1821 = vunpack.c.l.b16 %v307
  %v1822 = vunpack.c.h.b16 %v307
  %v1823 = vunpack.c.l.b16 %v308
  %v1824 = vunpack.c.h.b16 %v308
  %v1825 = vunpack.c.l.b16 %v309
  %v1826 = vunpack.c.h.b16 %v309
  %v1827 = vunpack.c.l.b16 %v310
  %v1828 = vunpack.c.h.b16 %v310
  %v1829 = vunpack.c.l.b16 %v311
  %v1830 = vunpack.c.h.b16 %v311
  %v1831 = vunpack.c.l.b16 %v312
  %v1832 = vunpack.c.h.b16 %v312
  %v1833 = vunpack.c.l.b16 %v313
  %v1834 = vunpack.c.h.b16 %v313
  %v1835 = vunpack.c.l.b16 %v314
  %v1836 = vunpack.c.h.b16 %v314
  %v1837 = vunpack.c.l.b16 %v315
  %v1838 = vunpack.c.h.b16 %v315
  %v1839 = vunpack.c.l.b16 %v316
  %v1840 = vunpack.c.h.b16 %v316
  %v1841 = vunpack.c.l.b16 %v317
  %v1842 = vunpack.c.h.b16 %v317
  %v1843 = vunpack.c.l.b16 %v318
  %v1844 = vunpack.c.h.b16 %v318
  %v1845 = vunpack.c.l.b16 %v319
  %v1846 = vunpack.c.h.b16 %v319
  %v1847 = vunpack.c.l.b16 %v320
  %v1848 = vunpack.c.h.b16 %v320
  %v1849 = vunpack.c.l.b16 %v321
  %v1850 = vunpack.c.h.b16 %v321
  %v1851 = vunpack.c.l.b16 %v322
  %v1852 = vunpack.c.h.b16 %v322
  %v1853 = vunpack.c.l.b16 %v323
  %v1854 = vunpack.c.h.b16 %v323
  %v1855 = vunpack.c.l.b16 %v324
  %v1856 = vunpack.c.h.b16 %v324
  %v1857 = vunpack.c.l.b16 %v325
  %v1858 = vunpack.c.h.b16 %v325
  %v1859 = vunpack.c.l.b16 %v326
  %v1860 = vunpack.c.h.b16 %v326
  %v1861 = vunpack.c.l.b16 %v327
  %v1862 = vunpack.c.h.b16 %v327
  %v1863 = vunpack.c.l.b16 %v328
  %v1864 = vunpack.c.h.b16 %v328
  %v1865 = vunpack.c.l.b16 %v329
  %v1866 = vunpack.c.h.b16 %v329
  %v1867 = vunpack.c.l.b16 %v330
  %v1868 = vunpack.c.h.b16 %v330
  %v1869 = vunpack.c.l.b16 %v331
  %v1870 = vunpack.c.h.b16 %v331
  %v1871 = vunpack.c.l.b16 %v332
  %v1872 = vunpack.c.h.b16 %v332
  %v1873 = vunpack.c.l.b16 %v333
  %v1874 = vunpack.c.h.b16 %v333
  %v1875 = vunpack.c.l.b16 %v334
  %v1876 = vunpack.c.h.b16 %v334
  %v1877 = vunpack.c.l.b16 %v335
  %v1878 = vunpack.c.h.b16 %v335
  %v1879 = vunpack.c.l.b16 %v336
  %v1880 = vunpack.c.h.b16 %v336
  %v1881 = vunpack.c.l.b16 %v337
  %v1882 = vunpack.c.h.b16 %v337
  %v1883 = vunpack.c.l.b16 %v338
  %v1884 = vunpack.c.h.b16 %v338
  %v1885 = vunpack.c.l.b16 %v339
  %v1886 = vunpack.c.h.b16 %v339
  %v1887 = vunpack.c.l.b16 %v340
  %v1888 = vunpack.c.h.b16 %v340
  %v1889 = vunpack.c.l.b16 %v341
  %v1890 = vunpack.c.h.b16 %v341
  %v1891 = vunpack.c.l.b16 %v342
  %v1892 = vunpack.c.h.b16 %v342
  %v1893 = vunpack.c.l.b16 %v343
  %v1894 = vunpack.c.h.b16 %v343
  %v1895 = vunpack.c.l.b16 %v344
  %v1896 = vunpack.c.h.b16 %v344
  %v1897 = vunpack.c.l.b16 %v345
  %v1898 = vunpack.c.h.b16 %v345
  %v1899 = vunpack.c.l.b16 %v346
  %v1900 = vunpack.c.h.b16 %v346
  %v1901 = vunpack.c.l.b16 %v347
  %v1902 = vunpack.c.h.b16 %v347
  %v1903 = vunpack.c.l.b16 %v348
  %v1904 = vunpack.c.h.b16 %v348
  %v1905 = vunpack.c.l.b16 %v349
  %v1906 = vunpack.c.h.b16 %v349
  %v1907 = vunpack.c.l.b16 %v350
  %v1908 = vunpack.c.h.b16 %v350
  %v1909 = vunpack.c.l.b16 %v351
  %v1910 = vunpack.c.h.b16 %v351
  %v1911 = vunpack.c.l.b16 %v352
  %v1912 = vunpack.c.h.b16 %v352
  %v1913 = vunpack.c.l.b16 %v353
  %v1914 = vunpack.c.h.b16 %v353
  %v1915 = vunpack.c.l.b16 %v354
  %v1916 = vunpack.c.h.b16 %v354
  %v1917 = vunpack.c.l.b16 %v355
  %v1918 = vunpack.c.h.b16 %v355
  %v1919 = vunpack.c.l.b16 %v356
  %v1920 = vunpack.c.h.b16 %v356
  %v1921 = vunpack.c.l.b16 %v357
  %v1922 = vunpack.c.h.b16 %v357
  %v1923 = vunpack.c.l.b16 %v358
  %v1924 = vunpack.c.h.b16 %v358
  %v1925 = vunpack.c.l.b16 %v359
  %v1926 = vunpack.c.h.b16 %v359
  %v1927 = vunpack.c.l.b16 %v360
  %v1928 = vunpack.c.h.b16 %v360
  %v1929 = vunpack.c.l.b16 %v361
  %v1930 = vunpack.c.h.b16 %v361
  %v1931 = vunpack.c.l.b16 %v362
  %v1932 = vunpack.c.h.b16 %v362
  %v1933 = vunpack.c.l.b16 %v363
  %v1934 = vunpack.c.h.b16 %v363
  %v1935 = vunpack.c.l.b16 %v364
  %v1936 = vunpack.c.h.b16 %v364
  %v1937 = vunpack.c.l.b16 %v365
  %v1938 = vunpack.c.h.b16 %v365
  %v1939 = vunpack.c.l.b16 %v366
  %v1940 = vunpack.c.h.b16 %v366
  %v1941 = vunpack.c.l.b16 %v367
  %v1942 = vunpack.c.h.b16 %v367
  %v1943 = vunpack.c.l.b16 %v368
  %v1944 = vunpack.c.h.b16 %v368
  %v1945 = vunpack.c.l.b16 %v369
  %v1946 = vunpack.c.h.b16 %v369
  %v1947 = vunpack.c.l.b16 %v370
  %v1948 = vunpack.c.h.b16 %v370
  %v1949 = vunpack.c.l.b16 %v371
  %v1950 = vunpack.c.h.b16 %v371
  %v1951 = vunpack.c.l.b16 %v372
  %v1952 = vunpack.c.h.b16 %v372
  %v1953 = vunpack.c.l.b16 %v373
  %v1954 = vunpack.c.h.b16 %v373
  %v1955 = vunpack.c.l.b16 %v374
  %v1956 = vunpack.c.h.b16 %v374
  %v1957 = vunpack.c.l.b16 %v375
  %v1958 = vunpack.c.h.b16 %v375
  %v1959 = vunpack.c.l.b16 %v376
  %v1960 = vunpack.c.h.b16 %v376
  %v1961 = vunpack.c.l.b16 %v377
  %v1962 = vunpack.c.h.b16 %v377
  %v1963 = vunpack.c.l.b16 %v378
  %v1964 = vunpack.c.h.b16 %v378
  %v1965 = vunpack.c.l.b16 %v379
  %v1966 = vunpack.c.h.b16 %v379
  %v1967 = vunpack.c.l.b16 %v380
  %v1968 = vunpack.c.h.b16 %v380
  %v1969 = vunpack.c.l.b16 %v381
  %v1970 = vunpack.c.h.b16 %v381
  %v1971 = vunpack.c.l.b16 %v382
  %v1972 = vunpack.c.h.b16 %v382
  %v1973 = vunpack.c.l.b16 %v383
  %v1974 = vunpack.c.h.b16 %v383
  %v1975 = vunpack.c.l.b16 %v384
  %v1976 = vunpack.c.h.b16 %v384
  %v1977 = vunpack.c.l.b16 %v385
  %v1978 = vunpack.c.h.b16 %v385
  %v1979 = vunpack.c.l.b16 %v386
  %v1980 = vunpack.c.h.b16 %v386
  %v1981 = vunpack.c.l.b16 %v387
  %v1982 = vunpack.c.h.b16 %v387
  %v1983 = vunpack.c.l.b16 %v388
  %v1984 = vunpack.c.h.b16 %v388
  %v1985 = vunpack.c.l.b16 %v389
  %v1986 = vunpack.c.h.b16 %v389
  %v1987 = vunpack.c.l.b16 %v390
  %v1988 = vunpack.c.h.b16 %v390
  %v1989 = vunpack.c.l.b16 %v391
  %v1990 = vunpack.c.h.b16 %v391
  %v1991 = vunpack.c.l.b16 %v392
  %v1992 = vunpack.c.h.b16 %v392
  %v1993 = vunpack.c.l.b16 %v393
  %v1994 = vunpack.c.h.b16 %v393
  %v1995 = vunpack.c.l.b16 %v394
  %v1996 = vunpack.c.h.b16 %v394
  %v1997 = vunpack.c.l.b16 %v395
  %v1998 = vunpack.c.h.b16 %v395
  %v1999 = vunpack.c.l.b16 %v396
  %v2000 = vunpack.c.h.b16 %v396
  %v2001 = vunpack.c.l.b16 %v397
  %v2002 = vunpack.c.h.b16 %v397
  %v2003 = vunpack.c.l.b16 %v398
  %v2004 = vunpack.c.h.b16 %v398
  %v2005 = vunpack.c.l.b16 %v399
  %v2006 = vunpack.c.h.b16 %v399
  %v2007 = vunpack.c.l.b16 %v400
  %v2008 = vunpack.c.h.b16 %v400
  %v2009 = vunpack.c.l.b16 %v401
  %v2010 = vunpack.c.h.b16 %v401
  %v2011 = vunpack.c.l.b16 %v402
  %v2012 = vunpack.c.h.b16 %v402
  %v2013 = vunpack.c.l.b16 %v403
  %v2014 = vunpack.c.h.b16 %v403
  %v2015 = vunpack.c.l.b16 %v404
  %v2016 = vunpack.c.h.b16 %v404
  %v2017 = vunpack.c.l.b16 %v405
  %v2018 = vunpack.c.h.b16 %v405
  %v2019 = vunpack.c.l.b16 %v406
  %v2020 = vunpack.c.h.b16 %v406
  %v2021 = vunpack.c.l.b16 %v407
  %v2022 = vunpack.c.h.b16 %v407
  %v2023 = vunpack.c.l.b16 %v408
  %v2024 = vunpack.c.h.b16 %v408
  %v2025 = vunpack.c.l.b16 %v409
  %v2026 = vunpack.c.h.b16 %v409
  %v2027 = vunpack.c.l.b16 %v410
  %v2028 = vunpack.c.h.b16 %v410
  %v2029 = vunpack.c.l.b16 %v411
  %v2030 = vunpack.c.h.b16 %v411
  %v2031 = vunpack.c.l.b16 %v412
  %v2032 = vunpack.c.h.b16 %v412
  %v2033 = vunpack.c.l.b16 %v413
  %v2034 = vunpack.c.h.b16 %v413
  %v2035 = vunpack.c.l.b16 %v414
  %v2036 = vunpack.c.h.b16 %v414
  %v2037 = vunpack.c.l.b16 %v415
  %v2038 = vunpack.c.h.b16 %v415
  %v2039 = vunpack.c.l.b16 %v416
  %v2040 = vunpack.c.h.b16 %v416
  %v2041 = vunpack.c.l.b16 %v417
  %v2042 = vunpack.c.h.b16 %v417
  %v2043 = vunpack.c.l.b16 %v418
  %v2044 = vunpack.c.h.b16 %v418
  %v2045 = vunpack.c.l.b16 %v419
  %v2046 = vunpack.c.h.b16 %v419
  %v2047 = vunpack.c.l.b16 %v420
  %v2048 = vunpack.c.h.b16 %v420
  %v2049 = vunpack.c.l.b16 %v421
  %v2050 = vunpack.c.h.b16 %v421
  %v2051 = vunpack.c.l.b16 %v422
  %v2052 = vunpack.c.h.b16 %v422
  %v2053 = vunpack.c.l.b16 %v423
  %v2054 = vunpack.c.h.b16 %v423
  %v2055 = vunpack.c.l.b16 %v424
  %v2056 = vunpack.c.h.b16 %v424
  %v2057 = vunpack.c.l.b16 %v425
  %v2058 = vunpack.c.h.b16 %v425
  %v2059 = vunpack.c.l.b16 %v426
  %v2060 = vunpack.c.h.b16 %v426
  %v2061 = vunpack.c.l.b16 %v427
  %v2062 = vunpack.c.h.b16 %v427
  %v2063 = vunpack.c.l.b16 %v428
  %v2064 = vunpack.c.h.b16 %v428
  %v2065 = vunpack.c.l.b16 %v429
  %v2066 = vunpack.c.h.b16 %v429
  %v2067 = vunpack.c.l.b16 %v430
  %v2068 = vunpack.c.h.b16 %v430
  %v2069 = vunpack.c.l.b16 %v431
  %v2070 = vunpack.c.h.b16 %v431
  %v2071 = vunpack.c.l.b16 %v432
  %v2072 = vunpack.c.h.b16 %v432
  %v2073 = vunpack.c.l.b16 %v433
  %v2074 = vunpack.c.h.b16 %v433
  %v2075 = vunpack.c.l.b16 %v434
  %v2076 = vunpack.c.h.b16 %v434
  %v2077 = vunpack.c.l.b16 %v435
  %v2078 = vunpack.c.h.b16 %v435
  %v2079 = vunpack.c.l.b16 %v436
  %v2080 = vunpack.c.h.b16 %v436
  %v2081 = vunpack.c.l.b16 %v437
  %v2082 = vunpack.c.h.b16 %v437
  %v2083 = vunpack.c.l.b16 %v438
  %v2084 = vunpack.c.h.b16 %v438
  %v2085 = vunpack.c.l.b16 %v439
  %v2086 = vunpack.c.h.b16 %v439
  %v2087 = vunpack.c.l.b16 %v440
  %v2088 = vunpack.c.h.b16 %v440
  %v2089 = vunpack.c.l.b16 %v441
  %v2090 = vunpack.c.h.b16 %v441
  %v2091 = vunpack.c.l.b16 %v442
  %v2092 = vunpack.c.h.b16 %v442
  %v2093 = vunpack.c.l.b16 %v443
  %v2094 = vunpack.c.h.b16 %v443
  %v2095 = vunpack.c.l.b16 %v444
  %v2096 = vunpack.c.h.b16 %v444
  %v2097 = vunpack.c.l.b16 %v445
  %v2098 = vunpack.c.h.b16 %v445
  %v2099 = vunpack.c.l.b16 %v446
  %v2100 = vunpack.c.h.b16 %v446
  %v2101 = vunpack.c.l.b16 %v447
  %v2102 = vunpack.c.h.b16 %v447
  %v2103 = vunpack.c.l.b16 %v448
  %v2104 = vunpack.c.h.b16 %v448
  %v2105 = vunpack.c.l.b16 %v449
  %v2106 = vunpack.c.h.b16 %v449
  %v2107 = vunpack.c.l.b16 %v450
  %v2108 = vunpack.c.h.b16 %v450
  %v2109 = vunpack.c.l.b16 %v451
  %v2110 = vunpack.c.h.b16 %v451
  %v2111 = vunpack.c.l.b16 %v452
  %v2112 = vunpack.c.h.b16 %v452
  %v2113 = vunpack.c.l.b16 %v453
  %v2114 = vunpack.c.h.b16 %v453
  %v2115 = vunpack.c.l.b16 %v454
  %v2116 = vunpack.c.h.b16 %v454
  %v2117 = vunpack.c.l.b16 %v455
  %v2118 = vunpack.c.h.b16 %v455
  %v2119 = vunpack.c.l.b16 %v456
  %v2120 = vunpack.c.h.b16 %v456
  %v2121 = vunpack.c.l.b16 %v457
  %v2122 = vunpack.c.h.b16 %v457
  %v2123 = vunpack.c.l.b16 %v458
  %v2124 = vunpack.c.h.b16 %v458
  %v2125 = vunpack.c.l.b16 %v459
  %v2126 = vunpack.c.h.b16 %v459
  %v2127 = vunpack.c.l.b16 %v460
  %v2128 = vunpack.c.h.b16 %v460
  %v2129 = vunpack.c.l.b16 %v461
  %v2130 = vunpack.c.h.b16 %v461
  %v2131 = vunpack.c.l.b16 %v462
  %v2132 = vunpack.c.h.b16 %v462
  %v2133 = vunpack.c.l.b16 %v463
  %v2134 = vunpack.c.h.b16 %v463
  %v2135 = vunpack.c.l.b16 %v464
  %v2136 = vunpack.c.h.b16 %v464
  %v2137 = vunpack.c.l.b16 %v465
  %v2138 = vunpack.c.h.b16 %v465
  %v2139 = vunpack.c.l.b16 %v466
  %v2140 = vunpack.c.h.b16 %v466
  %v2141 = vunpack.c.l.b16 %v467
  %v2142 = vunpack.c.h.b16 %v467
  %v2143 = vunpack.c.l.b16 %v468
  %v2144 = vunpack.c.h.b16 %v468
  %v2145 = vunpack.c.l.b16 %v469
  %v2146 = vunpack.c.h.b16 %v469
  %v2147 = vunpack.c.l.b16 %v470
  %v2148 = vunpack.c.h.b16 %v470
  %v2149 = vunpack.c.l.b16 %v471
  %v2150 = vunpack.c.h.b16 %v471
  %v2151 = vunpack.c.l.b16 %v472
  %v2152 = vunpack.c.h.b16 %v472
  %v2153 = vunpack.c.l.b16 %v473
  %v2154 = vunpack.c.h.b16 %v473
  %v2155 = vunpack.c.l.b16 %v474
  %v2156 = vunpack.c.h.b16 %v474
  %v2157 = vunpack.c.l.b16 %v475
  %v2158 = vunpack.c.h.b16 %v475
  %v2159 = vunpack.c.l.b16 %v476
  %v2160 = vunpack.c.h.b16 %v476
  %v2161 = vunpack.c.l.b16 %v477
  %v2162 = vunpack.c.h.b16 %v477
  %v2163 = vunpack.c.l.b16 %v478
  %v2164 = vunpack.c.h.b16 %v478
  %v2165 = vunpack.c.l.b16 %v479
  %v2166 = vunpack.c.h.b16 %v479
  %v2167 = vunpack.c.l.b16 %v480
  %v2168 = vunpack.c.h.b16 %v480
  %v2169 = vunpack.c.l.b16 %v481
  %v2170 = vunpack.c.h.b16 %v481
  %v2171 = vunpack.c.l.b16 %v482
  %v2172 = vunpack.c.h.b16 %v482
  %v2173 = vunpack.c.l.b16 %v483
  %v2174 = vunpack.c.h.b16 %v483
  %v2175 = vunpack.c.l.b16 %v484
  %v2176 = vunpack.c.h.b16 %v484
  %v2177 = vunpack.c.l.b16 %v485
  %v2178 = vunpack.c.h.b16 %v485
  %v2179 = vunpack.c.l.b16 %v486
  %v2180 = vunpack.c.h.b16 %v486
  %v2181 = vunpack.c.l.b16 %v487
  %v2182 = vunpack.c.h.b16 %v487
  %v2183 = vunpack.c.l.b16 %v488
  %v2184 = vunpack.c.h.b16 %v488
  %v2185 = vunpack.c.l.b16 %v489
  %v2186 = vunpack.c.h.b16 %v489
  %v2187 = vunpack.c.l.b16 %v490
  %v2188 = vunpack.c.h.b16 %v490
  %v2189 = vunpack.c.l.b16 %v491
  %v2190 = vunpack.c.h.b16 %v491
  %v2191 = vunpack.c.l.b16 %v492
  %v2192 = vunpack.c.h.b16 %v492
  %v2193 = vunpack.c.l.b16 %v493
  %v2194 = vunpack.c.h.b16 %v493
  %v2195 = vunpack.c.l.b16 %v494
  %v2196 = vunpack.c.h.b16 %v494
  %v2197 = vunpack.c.l.b16 %v495
  %v2198 = vunpack.c.h.b16 %v495
  %v2199 = vunpack.c.l.b16 %v496
  %v2200 = vunpack.c.h.b16 %v496
  %v2201 = vunpack.c.l.b16 %v497
  %v2202 = vunpack.c.h.b16 %v497
  %v2203 = vunpack.c.l.b16 %v498
  %v2204 = vunpack.c.h.b16 %v498
  %v2205 = vunpack.c.l.b16 %v499
  %v2206 = vunpack.c.h.b16 %v499
  %v2207 = vunpack.c.l.b16 %v500
  %v2208 = vunpack.c.h.b16 %v500
  %v2209 = vunpack.c.l.b16 %v501
  %v2210 = vunpack.c.h.b16 %v501
  %v2211 = vunpack.c.l.b16 %v502
  %v2212 = vunpack.c.h.b16 %v502
  %v2213 = vunpack.c.l.b16 %v503
  %v2214 = vunpack.c.h.b16 %v503
  %v2215 = vunpack.c.l.b16 %v504
  %v2216 = vunpack.c.h.b16 %v504
  %v2217 = vunpack.c.l.b16 %v505
  %v2218 = vunpack.c.h.b16 %v505
  %v2219 = vunpack.c.l.b16 %v506
  %v2220 = vunpack.c.h.b16 %v506
  %v2221 = vunpack.c.l.b16 %v507
  %v2222 = vunpack.c.h.b16 %v507
  %v2223 = vunpack.c.l.b16 %v508
  %v2224 = vunpack.c.h.b16 %v508
  %v2225 = vunpack.c.l.b16 %v509
  %v2226 = vunpack.c.h.b16 %v509
  %v2227 = vunpack.c.l.b16 %v510
  %v2228 = vunpack.c.h.b16 %v510
  %v2229 = vunpack.c.l.b16 %v511
  %v2230 = vunpack.c.h.b16 %v511
  %v2231 = vunpack.c.l.b16 %v512
  %v2232 = vunpack.c.h.b16 %v512
  %v2233 = vunpack.c.l.b16 %v513
  %v2234 = vunpack.c.h.b16 %v513
  %v2235 = vunpack.c.l.b16 %v514
  %v2236 = vunpack.c.h.b16 %v514
  %v2237 = vunpack.c.l.b16 %v515
  %v2238 = vunpack.c.h.b16 %v515
  %v2239 = vunpack.c.l.b16 %v516
  %v2240 = vunpack.c.h.b16 %v516
  %v2241 = vunpack.c.l.b16 %v517
  %v2242 = vunpack.c.h.b16 %v517
  %v2243 = vunpack.c.l.b16 %v518
  %v2244 = vunpack.c.h.b16 %v518
  %v2245 = vunpack.c.l.b16 %v519
  %v2246 = vunpack.c.h.b16 %v519
  %v2247 = vunpack.c.l.b16 %v520
  %v2248 = vunpack.c.h.b16 %v520
  %v2249 = vunpack.c.l.b16 %v521
  %v2250 = vunpack.c.h.b16 %v521
  %v2251 = vunpack.c.l.b16 %v522
  %v2252 = vunpack.c.h.b16 %v522
  %v2253 = vunpack.c.l.b16 %v523
  %v2254 = vunpack.c.h.b16 %v523
  %v2255 = vunpack.c.l.b16 %v524
  %v2256 = vunpack.c.h.b16 %v524
  %v2257 = vunpack.c.l.b16 %v525
  %v2258 = vunpack.c.h.b16 %v525
  %v2259 = vunpack.c.l.b16 %v526
  %v2260 = vunpack.c.h.b16 %v526
  %v2261 = vunpack.c.l.b16 %v527
  %v2262 = vunpack.c.h.b16 %v527
  %v2263 = vunpack.c.l.b16 %v528
  %v2264 = vunpack.c.h.b16 %v528
  %v2265 = vunpack.c.l.b16 %v529
  %v2266 = vunpack.c.h.b16 %v529
  %v2267 = vunpack.c.l.b16 %v530
  %v2268 = vunpack.c.h.b16 %v530
  %v2269 = vunpack.c.l.b16 %v531
  %v2270 = vunpack.c.h.b16 %v531
  %v2271 = vunpack.c.l.b16 %v532
  %v2272 = vunpack.c.h.b16 %v532
  %v2273 = vunpack.c.l.b16 %v533
  %v2274 = vunpack.c.h.b16 %v533
  %v2275 = vunpack.c.l.b16 %v534
  %v2276 = vunpack.c.h.b16 %v534
  %v2277 = vunpack.c.l.b16 %v535
  %v2278 = vunpack.c.h.b16 %v535
  %v2279 = vunpack.c.l.b16 %v536
  %v2280 = vunpack.c.h.b16 %v536
  %v2281 = vunpack.c.l.b16 %v537
  %v2282 = vunpack.c.h.b16 %v537
  %v2283 = vunpack.c.l.b16 %v538
  %v2284 = vunpack.c.h.b16 %v538
  %v2285 = vunpack.c.l.b16 %v539
  %v2286 = vunpack.c.h.b16 %v539
  %v2287 = vunpack.c.l.b16 %v540
  %v2288 = vunpack.c.h.b16 %v540
  %v2289 = vunpack.c.l.b16 %v541
  %v2290 = vunpack.c.h.b16 %v541
  %v2291 = vunpack.c.l.b16 %v542
  %v2292 = vunpack.c.h.b16 %v542
  %v2293 = vunpack.c.l.b16 %v543
  %v2294 = vunpack.c.h.b16 %v543
  %v2295 = vunpack.c.l.b16 %v544
  %v2296 = vunpack.c.h.b16 %v544
  %v2297 = vunpack.c.l.b16 %v545
  %v2298 = vunpack.c.h.b16 %v545
  %v2299 = vunpack.c.l.b16 %v546
  %v2300 = vunpack.c.h.b16 %v546
  %v2301 = vunpack.c.l.b16 %v547
  %v2302 = vunpack.c.h.b16 %v547
  %v2303 = vunpack.c.l.b16 %v548
  %v2304 = vunpack.c.h.b16 %v548
  %v2305 = vunpack.c.l.b16 %v549
  %v2306 = vunpack.c.h.b16 %v549
  %v2307 = vunpack.c.l.b16 %v550
  %v2308 = vunpack.c.h.b16 %v550
  %v2309 = vunpack.c.l.b16 %v551
  %v2310 = vunpack.c.h.b16 %v551
  %v2311 = vunpack.c.l.b16 %v552
  %v2312 = vunpack.c.h.b16 %v552
  %v2313 = vunpack.c.l.b16 %v553
  %v2314 = vunpack.c.h.b16 %v553
  %v2315 = vunpack.c.l.b16 %v554
  %v2316 = vunpack.c.h.b16 %v554
  %v2317 = vunpack.c.l.b16 %v555
  %v2318 = vunpack.c.h.b16 %v555
  %v2319 = vunpack.c.l.b16 %v556
  %v2320 = vunpack.c.h.b16 %v556
  %v2321 = vunpack.c.l.b16 %v557
  %v2322 = vunpack.c.h.b16 %v557
  %v2323 = vunpack.c.l.b16 %v558
  %v2324 = vunpack.c.h.b16 %v558
  %v2325 = vunpack.c.l.b16 %v559
  %v2326 = vunpack.c.h.b16 %v559
  %v2327 = vunpack.c.l.b16 %v560
  %v2328 = vunpack.c.h.b16 %v560
  %v2329 = vunpack.c.l.b16 %v561
  %v2330 = vunpack.c.h.b16 %v561
  %v2331 = vunpack.c.l.b16 %v562
  %v2332 = vunpack.c.h.b16 %v562
  %v2333 = vunpack.c.l.b16 %v563
  %v2334 = vunpack.c.h.b16 %v563
  %v2335 = vunpack.c.l.b16 %v564
  %v2336 = vunpack.c.h.b16 %v564
  %v2337 = vunpack.c.l.b16 %v565
  %v2338 = vunpack.c.h.b16 %v565
  %v2339 = vunpack.c.l.b16 %v566
  %v2340 = vunpack.c.h.b16 %v566
  %v2341 = vunpack.c.l.b16 %v567
  %v2342 = vunpack.c.h.b16 %v567
  %v2343 = vunpack.c.l.b16 %v568
  %v2344 = vunpack.c.h.b16 %v568
  %v2345 = vunpack.c.l.b16 %v569
  %v2346 = vunpack.c.h.b16 %v569
  %v2347 = vunpack.c.l.b16 %v570
  %v2348 = vunpack.c.h.b16 %v570
  %v2349 = vunpack.c.l.b16 %v571
  %v2350 = vunpack.c.h.b16 %v571
  %v2351 = vunpack.c.l.b16 %v572
  %v2352 = vunpack.c.h.b16 %v572
  %v2353 = vunpack.c.l.b16 %v573
  %v2354 = vunpack.c.h.b16 %v573
  %v2355 = vunpack.c.l.b16 %v574
  %v2356 = vunpack.c.h.b16 %v574
  %v2357 = vunpack.c.l.b16 %v575
  %v2358 = vunpack.c.h.b16 %v575
  %v2359 = vunpack.c.l.b16 %v576
  %v2360 = vunpack.c.h.b16 %v576
  %v2361 = vunpack.c.l.b16 %v577
  %v2362 = vunpack.c.h.b16 %v577
  %v2363 = vunpack.c.l.b16 %v578
  %v2364 = vunpack.c.h.b16 %v578
  %v2365 = vunpack.c.l.b16 %v579
  %v2366 = vunpack.c.h.b16 %v579
  %v2367 = vunpack.c.l.b16 %v580
  %v2368 = vunpack.c.h.b16 %v580
  %v2369 = vunpack.c.l.b16 %v581
  %v2370 = vunpack.c.h.b16 %v581
  %v2371 = vunpack.c.l.b16 %v582
  %v2372 = vunpack.c.h.b16 %v582
  %v2373 = vunpack.c.l.b16 %v583
  %v2374 = vunpack.c.h.b16 %v583
  %v2375 = vunpack.c.l.b16 %v584
  %v2376 = vunpack.c.h.b16 %v584
  %v2377 = vunpack.c.l.b16 %v585
  %v2378 = vunpack.c.h.b16 %v585
  %v2379 = vunpack.c.l.b16 %v586
  %v2380 = vunpack.c.h.b16 %v586
  %v2381 = vunpack.c.l.b16 %v587
  %v2382 = vunpack.c.h.b16 %v587
  %v2383 = vunpack.c.l.b16 %v588
  %v2384 = vunpack.c.h.b16 %v588
  %v2385 = vunpack.c.l.b16 %v589
  %v2386 = vunpack.c.h.b16 %v589
  %v2387 = vunpack.c.l.b16 %v590
  %v2388 = vunpack.c.h.b16 %v590
  %v2389 = vunpack.c.l.b16 %v591
  %v2390 = vunpack.c.h.b16 %v591
  %v2391 = vunpack.c.l.b16 %v592
  %v2392 = vunpack.c.h.b16 %v592
  %v2393 = vunpack.c.l.b16 %v593
  %v2394 = vunpack.c.h.b16 %v593
  %v2395 = vunpack.c.l.b16 %v594
  %v2396 = vunpack.c.h.b16 %v594
  %v2397 = vunpack.c.l.b16 %v595
  %v2398 = vunpack.c.h.b16 %v595
  %v2399 = vunpack.c.l.b16 %v596
  %v2400 = vunpack.c.h.b16 %v596
  %v2401 = vunpack.c.l.b16 %v597
  %v2402 = vunpack.c.h.b16 %v597
  %v2403 = vunpack.c.l.b16 %v598
  %v2404 = vunpack.c.h.b16 %v598
  %v2405 = vunpack.c.l.b16 %v599
  %v2406 = vunpack.c.h.b16 %v599
  %v2407 = vunpack.c.l.b16 %v600
  %v2408 = vunpack.c.h.b16 %v600
  %v2409 = vunpack.c.l.b16 %v601
  %v2410 = vunpack.c.h.b16 %v601
  %v2411 = vunpack.c.l.b16 %v602
  %v2412 = vunpack.c.h.b16 %v602
  %v2413 = vunpack.c.l.b16 %v603
  %v2414 = vunpack.c.h.b16 %v603
  %v2415 = vunpack.c.l.b16 %v604
  %v2416 = vunpack.c.h.b16 %v604
  %v2417 = vunpack.c.l.b16 %v605
  %v2418 = vunpack.c.h.b16 %v605
  %v2419 = vpack.c.b16 %v1271, %v1267
  %v2420 = vpack.c.b16 %v1272, %v1268
  %v2421 = vpack.c.b16 %v1273, %v1269
  %v2422 = vpack.c.b16 %v1274, %v1270
  %v2423 = vpack.c.b16 %v1279, %v1275
  %v2424 = vpack.c.b16 %v1280, %v1276
  %v2425 = vpack.c.b16 %v1281, %v1277
  %v2426 = vpack.c.b16 %v1282, %v1278
  %v2427 = vpack.c.b16 %v1287, %v1283
  %v2428 = vpack.c.b16 %v1288, %v1284
  %v2429 = vpack.c.b16 %v1289, %v1285
  %v2430 = vpack.c.b16 %v1290, %v1286
  %v2431 = vpack.c.b16 %v1295, %v1291
  %v2432 = vpack.c.b16 %v1296, %v1292
  %v2433 = vpack.c.b16 %v1297, %v1293
  %v2434 = vpack.c.b16 %v1298, %v1294
  %v2435 = vpack.c.b16 %v1303, %v1299
  %v2436 = vpack.c.b16 %v1304, %v1300
  %v2437 = vpack.c.b16 %v1305, %v1301
  %v2438 = vpack.c.b16 %v1306, %v1302
  %v2439 = vpack.c.b16 %v1311, %v1307
  %v2440 = vpack.c.b16 %v1312, %v1308
  %v2441 = vpack.c.b16 %v1313, %v1309
  %v2442 = vpack.c.b16 %v1314, %v1310
  %v2443 = vpack.c.b16 %v1319, %v1315
  %v2444 = vpack.c.b16 %v1320, %v1316
  %v2445 = vpack.c.b16 %v1321, %v1317
  %v2446 = vpack.c.b16 %v1322, %v1318
  %v2447 = vpack.c.b16 %v1327, %v1323
  %v2448 = vpack.c.b16 %v1328, %v1324
  %v2449 = vpack.c.b16 %v1329, %v1325
  %v2450 = vpack.c.b16 %v1330, %v1326
  %v2451 = vpack.c.b16 %v1335, %v1331
  %v2452 = vpack.c.b16 %v1336, %v1332
  %v2453 = vpack.c.b16 %v1337, %v1333
  %v2454 = vpack.c.b16 %v1338, %v1334
  %v2455 = vpack.c.b16 %v1343, %v1339
  %v2456 = vpack.c.b16 %v1344, %v1340
  %v2457 = vpack.c.b16 %v1345, %v1341
  %v2458 = vpack.c.b16 %v1346, %v1342
  %v2459 = vpack.c.b16 %v1351, %v1347
  %v2460 = vpack.c.b16 %v1352, %v1348
  %v2461 = vpack.c.b16 %v1353, %v1349
  %v2462 = vpack.c.b16 %v1354, %v1350
  %v2463 = vpack.c.b16 %v1359, %v1355
  %v2464 = vpack.c.b16 %v1360, %v1356
  %v2465 = vpack.c.b16 %v1361, %v1357
  %v2466 = vpack.c.b16 %v1362, %v1358
  %v2467 = vpack.c.b16 %v1367, %v1363
  %v2468 = vpack.c.b16 %v1368, %v1364
  %v2469 = vpack.c.b16 %v1369, %v1365
  %v2470 = vpack.c.b16 %v1370, %v1366
  %v2471 = vpack.c.b16 %v1375, %v1371
  %v2472 = vpack.c.b16 %v1376, %v1372
  %v2473 = vpack.c.b16 %v1377, %v1373
  %v2474 = vpack.c.b16 %v1378, %v1374
  %v2475 = vpack.c.b16 %v1383, %v1379
  %v2476 = vpack.c.b16 %v1384, %v1380
  %v2477 = vpack.c.b16 %v1385, %v1381
  %v2478 = vpack.c.b16 %v1386, %v1382
  %v2479 = vpack.c.b16 %v1391, %v1387
  %v2480 = vpack.c.b16 %v1392, %v1388
  %v2481 = vpack.c.b16 %v1393, %v1389
  %v2482 = vpack.c.b16 %v1394, %v1390
  %v2483 = vpack.c.b16 %v1399, %v1395
  %v2484 = vpack.c.b16 %v1400, %v1396
  %v2485 = vpack.c.b16 %v1401, %v1397
  %v2486 = vpack.c.b16 %v1402, %v1398
  %v2487 = vpack.c.b16 %v1407, %v1403
  %v2488 = vpack.c.b16 %v1408, %v1404
  %v2489 = vpack.c.b16 %v1409, %v1405
  %v2490 = vpack.c.b16 %v1410, %v1406
  %v2491 = vpack.c.b16 %v1415, %v1411
  %v2492 = vpack.c.b16 %v1416, %v1412
  %v2493 = vpack.c.b16 %v1417, %v1413
  %v2494 = vpack.c.b16 %v1418, %v1414
  %v2495 = vpack.c.b16 %v1423, %v1419
  %v2496 = vpack.c.b16 %v1424, %v1420
  %v2497 = vpack.c.b16 %v1425, %v1421
  %v2498 = vpack.c.b16 %v1426, %v1422
  %v2499 = vpack.c.b16 %v1431, %v1427
  %v2500 = vpack.c.b16 %v1432, %v1428
  %v2501 = vpack.c.b16 %v1433, %v1429
  %v2502 = vpack.c.b16 %v1434, %v1430
  %v2503 = vpack.c.b16 %v1439, %v1435
  %v2504 = vpack.c.b16 %v1440, %v1436
  %v2505 = vpack.c.b16 %v1441, %v1437
  %v2506 = vpack.c.b16 %v1442, %v1438
  %v2507 = vpack.c.b16 %v1447, %v1443
  %v2508 = vpack.c.b16 %v1448, %v1444
  %v2509 = vpack.c.b16 %v1449, %v1445
  %v2510 = vpack.c.b16 %v1450, %v1446
  %v2511 = vpack.c.b16 %v1455, %v1451
  %v2512 = vpack.c.b16 %v1456, %v1452
  %v2513 = vpack.c.b16 %v1457, %v1453
  %v2514 = vpack.c.b16 %v1458, %v1454
  %v2515 = vpack.c.b16 %v1463, %v1459
  %v2516 = vpack.c.b16 %v1464, %v1460
  %v2517 = vpack.c.b16 %v1465, %v1461
  %v2518 = vpack.c.b16 %v1466, %v1462
  %v2519 = vpack.c.b16 %v1471, %v1467
  %v2520 = vpack.c.b16 %v1472, %v1468
  %v2521 = vpack.c.b16 %v1473, %v1469
  %v2522 = vpack.c.b16 %v1474, %v1470
  %v2523 = vpack.c.b16 %v1479, %v1475
  %v2524 = vpack.c.b16 %v1480, %v1476
  %v2525 = vpack.c.b16 %v1481, %v1477
  %v2526 = vpack.c.b16 %v1482, %v1478
  %v2527 = vpack.c.b16 %v1487, %v1483
  %v2528 = vpack.c.b16 %v1488, %v1484
  %v2529 = vpack.c.b16 %v1489, %v1485
  %v2530 = vpack.c.b16 %v1490, %v1486
  %v2531 = vpack.c.b16 %v1495, %v1491
  %v2532 = vpack.c.b16 %v1496, %v1492
  %v2533 = vpack.c.b16 %v1497, %v1493
  %v2534 = vpack.c.b16 %v1498, %v1494
  %v2535 = vpack.c.b16 %v1503, %v1499
  %v2536 = vpack.c.b16 %v1504, %v1500
  %v2537 = vpack.c.b16 %v1505, %v1501
  %v2538 = vpack.c.b16 %v1506, %v1502
  %v2539 = vpack.c.b16 %v1511, %v1507
  %v2540 = vpack.c.b16 %v1512, %v1508
  %v2541 = vpack.c.b16 %v1513, %v1509
  %v2542 = vpack.c.b16 %v1514, %v1510
  %v2543 = vpack.c.b16 %v1519, %v1515
  %v2544 = vpack.c.b16 %v1520, %v1516
  %v2545 = vpack.c.b16 %v1521, %v1517
  %v2546 = vpack.c.b16 %v1522, %v1518
  %v2547 = vpack.c.b16 %v1527, %v1523
  %v2548 = vpack.c.b16 %v1528, %v1524
  %v2549 = vpack.c.b16 %v1529, %v1525
  %v2550 = vpack.c.b16 %v1530, %v1526
  %v2551 = vpack.c.b16 %v1535, %v1531
  %v2552 = vpack.c.b16 %v1536, %v1532
  %v2553 = vpack.c.b16 %v1537, %v1533
  %v2554 = vpack.c.b16 %v1538, %v1534
  %v2555 = vpack.c.b16 %v1543, %v1539
  %v2556 = vpack.c.b16 %v1544, %v1540
  %v2557 = vpack.c.b16 %v1545, %v1541
  %v2558 = vpack.c.b16 %v1546, %v1542
  %v2559 = vpack.c.b16 %v1551, %v1547
  %v2560 = vpack.c.b16 %v1552, %v1548
  %v2561 = vpack.c.b16 %v1553, %v1549
  %v2562 = vpack.c.b16 %v1554, %v1550
  %v2563 = vpack.c.b16 %v1559, %v1555
  %v2564 = vpack.c.b16 %v1560, %v1556
  %v2565 = vpack.c.b16 %v1561, %v1557
  %v2566 = vpack.c.b16 %v1562, %v1558
  %v2567 = vpack.c.b16 %v1567, %v1563
  %v2568 = vpack.c.b16 %v1568, %v1564
  %v2569 = vpack.c.b16 %v1569, %v1565
  %v2570 = vpack.c.b16 %v1570, %v1566
  %v2571 = vpack.c.b16 %v1575, %v1571
  %v2572 = vpack.c.b16 %v1576, %v1572
  %v2573 = vpack.c.b16 %v1577, %v1573
  %v2574 = vpack.c.b16 %v1578, %v1574
  %v2575 = vpack.c.b16 %v1583, %v1579
  %v2576 = vpack.c.b16 %v1584, %v1580
  %v2577 = vpack.c.b16 %v1585, %v1581
  %v2578 = vpack.c.b16 %v1586, %v1582
  %v2579 = vpack.c.b16 %v1591, %v1587
  %v2580 = vpack.c.b16 %v1592, %v1588
  %v2581 = vpack.c.b16 %v1593, %v1589
  %v2582 = vpack.c.b16 %v1594, %v1590
  %v2583 = vpack.c.b16 %v1599, %v1595
  %v2584 = vpack.c.b16 %v1600, %v1596
  %v2585 = vpack.c.b16 %v1601, %v1597
  %v2586 = vpack.c.b16 %v1602, %v1598
  %v2587 = vpack.c.b16 %v1607, %v1603
  %v2588 = vpack.c.b16 %v1608, %v1604
  %v2589 = vpack.c.b16 %v1609, %v1605
  %v2590 = vpack.c.b16 %v1610, %v1606
  %v2591 = vpack.c.b16 %v1615, %v1611
  %v2592 = vpack.c.b16 %v1616, %v1612
  %v2593 = vpack.c.b16 %v1617, %v1613
  %v2594 = vpack.c.b16 %v1618, %v1614
  %v2595 = vpack.c.b16 %v1623, %v1619
  %v2596 = vpack.c.b16 %v1624, %v1620
  %v2597 = vpack.c.b16 %v1625, %v1621
  %v2598 = vpack.c.b16 %v1626, %v1622
  %v2599 = vpack.c.b16 %v1631, %v1627
  %v2600 = vpack.c.b16 %v1632, %v1628
  %v2601 = vpack.c.b16 %v1633, %v1629
  %v2602 = vpack.c.b16 %v1634, %v1630
  %v2603 = vpack.c.b16 %v1639, %v1635
  %v2604 = vpack.c.b16 %v1640, %v1636
  %v2605 = vpack.c.b16 %v1641, %v1637
  %v2606 = vpack.c.b16 %v1642, %v1638
  %v2607 = vpack.c.b16 %v1647, %v1643
  %v2608 = vpack.c.b16 %v1648, %v1644
  %v2609 = vpack.c.b16 %v1649, %v1645
  %v2610 = vpack.c.b16 %v1650, %v1646
  %v2611 = vpack.c.b16 %v1655, %v1651
  %v2612 = vpack.c.b16 %v1656, %v1652
  %v2613 = vpack.c.b16 %v1657, %v1653
  %v2614 = vpack.c.b16 %v1658, %v1654
  %v2615 = vpack.c.b16 %v1663, %v1659
  %v2616 = vpack.c.b16 %v1664, %v1660
  %v2617 = vpack.c.b16 %v1665, %v1661
  %v2618 = vpack.c.b16 %v1666, %v1662
  %v2619 = vpack.c.b16 %v1671, %v1667
  %v2620 = vpack.c.b16 %v1672, %v1668
  %v2621 = vpack.c.b16 %v1673, %v1669
  %v2622 = vpack.c.b16 %v1674, %v1670
  %v2623 = vpack.c.b16 %v1679, %v1675
  %v2624 = vpack.c.b16 %v1680, %v1676
  %v2625 = vpack.c.b16 %v1681, %v1677
  %v2626 = vpack.c.b16 %v1682, %v1678
  %v2627 = vpack.c.b16 %v1687, %v1683
  %v2628 = vpack.c.b16 %v1688, %v1684
  %v2629 = vpack.c.b16 %v1689, %v1685
  %v2630 = vpack.c.b16 %v1690, %v1686
  %v2631 = vpack.c.b16 %v1695, %v1691
  %v2632 = vpack.c.b16 %v1696, %v1692
  %v2633 = vpack.c.b16 %v1697, %v1693
  %v2634 = vpack.c.b16 %v1698, %v1694
  %v2635 = vpack.c.b16 %v1703, %v1699
  %v2636 = vpack.c.b16 %v1704, %v1700
  %v2637 = vpack.c.b16 %v1705, %v1701
  %v2638 = vpack.c.b16 %v1706, %v1702
  %v2639 = vpack.c.b16 %v1711, %v1707
  %v2640 = vpack.c.b16 %v1712, %v1708
  %v2641 = vpack.c.b16 %v1713, %v1709
  %v2642 = vpack.c.b16 %v1714, %v1710
  %v2643 = vpack.c.b16 %v1719, %v1715
  %v2644 = vpack.c.b16 %v1720, %v1716
  %v2645 = vpack.c.b16 %v1721, %v1717
  %v2646 = vpack.c.b16 %v1722, %v1718
  %v2647 = vpack.c.b16 %v1727, %v1723
  %v2648 = vpack.c.b16 %v1728, %v1724
  %v2649 = vpack.c.b16 %v1729, %v1725
  %v2650 = vpack.c.b16 %v1730, %v1726
  %v2651 = vpack.c.b16 %v1735, %v1731
  %v2652 = vpack.c.b16 %v1736, %v1732
  %v2653 = vpack.c.b16 %v1737, %v1733
  %v2654 = vpack.c.b16 %v1738, %v1734
  %v2655 = vpack.c.b16 %v1743, %v1739
  %v2656 = vpack.c.b16 %v1744, %v1740
  %v2657 = vpack.c.b16 %v1745, %v1741
  %v2658 = vpack.c.b16 %v1746, %v1742
  %v2659 = vpack.c.b16 %v1751, %v1747
  %v2660 = vpack.c.b16 %v1752, %v1748
  %v2661 = vpack.c.b16 %v1753, %v1749
  %v2662 = vpack.c.b16 %v1754, %v1750
  %v2663 = vpack.c.b16 %v1759, %v1755
  %v2664 = vpack.c.b16 %v1760, %v1756
  %v2665 = vpack.c.b16 %v1761, %v1757
  %v2666 = vpack.c.b16 %v1762, %v1758
  %v2667 = vpack.c.b16 %v1767, %v1763
  %v2668 = vpack.c.b16 %v1768, %v1764
  %v2669 = vpack.c.b16 %v1769, %v1765
  %v2670 = vpack.c.b16 %v1770, %v1766
  %v2671 = vpack.c.b16 %v1775, %v1771
  %v2672 = vpack.c.b16 %v1776, %v1772
  %v2673 = vpack.c.b16 %v1777, %v1773
  %v2674 = vpack.c.b16 %v1778, %v1774
  %v2675 = vpack.c.b16 %v1783, %v1779
  %v2676 = vpack.c.b16 %v1784, %v1780
  %v2677 = vpack.c.b16 %v1785, %v1781
  %v2678 = vpack.c.b16 %v1786, %v1782
  %v2679 = vpack.c.b16 %v1791, %v1787
  %v2680 = vpack.c.b16 %v1792, %v1788
  %v2681 = vpack.c.b16 %v1793, %v1789
  %v2682 = vpack.c.b16 %v1794, %v1790
  %v2683 = vpack.c.b16 %v1799, %v1795
  %v2684 = vpack.c.b16 %v1800, %v1796
  %v2685 = vpack.c.b16 %v1801, %v1797
  %v2686 = vpack.c.b16 %v1802, %v1798
  %v2687 = vpack.c.b16 %v1807, %v1803
  %v2688 = vpack.c.b16 %v1808, %v1804
  %v2689 = vpack.c.b16 %v1809, %v1805
  %v2690 = vpack.c.b16 %v1810, %v1806
  %v2691 = vpack.c.b16 %v1815, %v1811
  %v2692 = vpack.c.b16 %v1816, %v1812
  %v2693 = vpack.c.b16 %v1817, %v1813
  %v2694 = vpack.c.b16 %v1818, %v1814
  %v2695 = vpack.c.b16 %v1823, %v1819
  %v2696 = vpack.c.b16 %v1824, %v1820
  %v2697 = vpack.c.b16 %v1825, %v1821
  %v2698 = vpack.c.b16 %v1826, %v1822
  %v2699 = vpack.c.b16 %v1831, %v1827
  %v2700 = vpack.c.b16 %v1832, %v1828
  %v2701 = vpack.c.b16 %v1833, %v1829
  %v2702 = vpack.c.b16 %v1834, %v1830
  %v2703 = vpack.c.b16 %v1839, %v1835
  %v2704 = vpack.c.b16 %v1840, %v1836
  %v2705 = vpack.c.b16 %v1841, %v1837
  %v2706 = vpack.c.b16 %v1842, %v1838
  %v2707 = vpack.c.b16 %v1847, %v1843
  %v2708 = vpack.c.b16 %v1848, %v1844
  %v2709 = vpack.c.b16 %v1849, %v1845
  %v2710 = vpack.c.b16 %v1850, %v1846
  %v2711 = vpack.c.b16 %v1855, %v1851
  %v2712 = vpack.c.b16 %v1856, %v1852
  %v2713 = vpack.c.b16 %v1857, %v1853
  %v2714 = vpack.c.b16 %v1858, %v1854
  %v2715 = vpack.c.b16 %v1863, %v1859
  %v2716 = vpack.c.b16 %v1864, %v1860
  %v2717 = vpack.c.b16 %v1865, %v1861
  %v2718 = vpack.c.b16 %v1866, %v1862
  %v2719 = vpack.c.b16 %v1871, %v1867
  %v2720 = vpack.c.b16 %v1872, %v1868
  %v2721 = vpack.c.b16 %v1873, %v1869
  %v2722 = vpack.c.b16 %v1874, %v1870
  %v2723 = vpack.c.b16 %v1879, %v1875
  %v2724 = vpack.c.b16 %v1880, %v1876
  %v2725 = vpack.c.b16 %v1881, %v1877
  %v2726 = vpack.c.b16 %v1882, %v1878
  %v2727 = vpack.c.b16 %v1887, %v1883
  %v2728 = vpack.c.b16 %v1888, %v1884
  %v2729 = vpack.c.b16 %v1889, %v1885
  %v2730 = vpack.c.b16 %v1890, %v1886
  %v2731 = vpack.c.b16 %v1895, %v1891
  %v2732 = vpack.c.b16 %v1896, %v1892
  %v2733 = vpack.c.b16 %v1897, %v1893
  %v2734 = vpack.c.b16 %v1898, %v1894
  %v2735 = vpack.c.b16 %v1903, %v1899
  %v2736 = vpack.c.b16 %v1904, %v1900
  %v2737 = vpack.c.b16 %v1905, %v1901
  %v2738 = vpack.c.b16 %v1906, %v1902
  %v2739 = vpack.c.b16 %v1911, %v1907
  %v2740 = vpack.c.b16 %v1912, %v1908
  %v2741 = vpack.c.b16 %v1913, %v1909
  %v2742 = vpack.c.b16 %v1914, %v1910
  %v2743 = vpack.c.b16 %v1919, %v1915
  %v2744 = vpack.c.b16 %v1920, %v1916
  %v2745 = vpack.c.b16 %v1921, %v1917
  %v2746 = vpack.c.b16 %v1922, %v1918
  %v2747 = vpack.c.b16 %v1927, %v1923
  %v2748 = vpack.c.b16 %v1928, %v1924
  %v2749 = vpack.c.b16 %v1929, %v1925
  %v2750 = vpack.c.b16 %v1930, %v1926
  %v2751 = vpack.c.b16 %v1935, %v1931
  %v2752 = vpack.c.b16 %v1936, %v1932
  %v2753 = vpack.c.b16 %v1937, %v1933
  %v2754 = vpack.c.b16 %v1938, %v1934
  %v2755 = vpack.c.b16 %v1943, %v1939
  %v2756 = vpack.c.b16 %v1944, %v1940
  %v2757 = vpack.c.b16 %v1945, %v1941
  %v2758 = vpack.c.b16 %v1946, %v1942
  %v2759 = vpack.c.b16 %v1951, %v1947
  %v2760 = vpack.c.b16 %v1952, %v1948
  %v2761 = vpack.c.b16 %v1953, %v1949
  %v2762 = vpack.c.b16 %v1954, %v1950
  %v2763 = vpack.c.b16 %v1959, %v1955
  %v2764 = vpack.c.b16 %v1960, %v1956
  %v2765 = vpack.c.b16 %v1961, %v1957
  %v2766 = vpack.c.b16 %v1962, %v1958
  %v2767 = vpack.c.b16 %v1967, %v1963
  %v2768 = vpack.c.b16 %v1968, %v1964
  %v2769 = vpack.c.b16 %v1969, %v1965
  %v2770 = vpack.c.b16 %v1970, %v1966
  %v2771 = vpack.c.b16 %v1975, %v1971
  %v2772 = vpack.c.b16 %v1976, %v1972
  %v2773 = vpack.c.b16 %v1977, %v1973
  %v2774 = vpack.c.b16 %v1978, %v1974
  %v2775 = vpack.c.b16 %v1983, %v1979
  %v2776 = vpack.c.b16 %v1984, %v1980
  %v2777 = vpack.c.b16 %v1985, %v1981
  %v2778 = vpack.c.b16 %v1986, %v1982
  %v2779 = vpack.c.b16 %v1991, %v1987
  %v2780 = vpack.c.b16 %v1992, %v1988
  %v2781 = vpack.c.b16 %v1993, %v1989
  %v2782 = vpack.c.b16 %v1994, %v1990
  %v2783 = vpack.c.b16 %v1999, %v1995
  %v2784 = vpack.c.b16 %v2000, %v1996
  %v2785 = vpack.c.b16 %v2001, %v1997
  %v2786 = vpack.c.b16 %v2002, %v1998
  %v2787 = vpack.c.b16 %v2007, %v2003
  %v2788 = vpack.c.b16 %v2008, %v2004
  %v2789 = vpack.c.b16 %v2009, %v2005
  %v2790 = vpack.c.b16 %v2010, %v2006
  %v2791 = vpack.c.b16 %v2015, %v2011
  %v2792 = vpack.c.b16 %v2016, %v2012
  %v2793 = vpack.c.b16 %v2017, %v2013
  %v2794 = vpack.c.b16 %v2018, %v2014
  %v2795 = vpack.c.b16 %v2023, %v2019
  %v2796 = vpack.c.b16 %v2024, %v2020
  %v2797 = vpack.c.b16 %v2025, %v2021
  %v2798 = vpack.c.b16 %v2026, %v2022
  %v2799 = vpack.c.b16 %v2031, %v2027
  %v2800 = vpack.c.b16 %v2032, %v2028
  %v2801 = vpack.c.b16 %v2033, %v2029
  %v2802 = vpack.c.b16 %v2034, %v2030
  %v2803 = vpack.c.b16 %v2039, %v2035
  %v2804 = vpack.c.b16 %v2040, %v2036
  %v2805 = vpack.c.b16 %v2041, %v2037
  %v2806 = vpack.c.b16 %v2042, %v2038
  %v2807 = vpack.c.b16 %v2047, %v2043
  %v2808 = vpack.c.b16 %v2048, %v2044
  %v2809 = vpack.c.b16 %v2049, %v2045
  %v2810 = vpack.c.b16 %v2050, %v2046
  %v2811 = vpack.c.b16 %v2055, %v2051
  %v2812 = vpack.c.b16 %v2056, %v2052
  %v2813 = vpack.c.b16 %v2057, %v2053
  %v2814 = vpack.c.b16 %v2058, %v2054
  %v2815 = vpack.c.b16 %v2063, %v2059
  %v2816 = vpack.c.b16 %v2064, %v2060
  %v2817 = vpack.c.b16 %v2065, %v2061
  %v2818 = vpack.c.b16 %v2066, %v2062
  %v2819 = vpack.c.b16 %v2071, %v2067
  %v2820 = vpack.c.b16 %v2072, %v2068
  %v2821 = vpack.c.b16 %v2073, %v2069
  %v2822 = vpack.c.b16 %v2074, %v2070
  %v2823 = vpack.c.b16 %v2079, %v2075
  %v2824 = vpack.c.b16 %v2080, %v2076
  %v2825 = vpack.c.b16 %v2081, %v2077
  %v2826 = vpack.c.b16 %v2082, %v2078
  %v2827 = vpack.c.b16 %v2087, %v2083
  %v2828 = vpack.c.b16 %v2088, %v2084
  %v2829 = vpack.c.b16 %v2089, %v2085
  %v2830 = vpack.c.b16 %v2090, %v2086
  %v2831 = vpack.c.b16 %v2095, %v2091
  %v2832 = vpack.c.b16 %v2096, %v2092
  %v2833 = vpack.c.b16 %v2097, %v2093
  %v2834 = vpack.c.b16 %v2098, %v2094
  %v2835 = vpack.c.b16 %v2103, %v2099
  %v2836 = vpack.c.b16 %v2104, %v2100
  %v2837 = vpack.c.b16 %v2105, %v2101
  %v2838 = vpack.c.b16 %v2106, %v2102
  %v2839 = vpack.c.b16 %v2111, %v2107
  %v2840 = vpack.c.b16 %v2112, %v2108
  %v2841 = vpack.c.b16 %v2113, %v2109
  %v2842 = vpack.c.b16 %v2114, %v2110
  %v2843 = vpack.c.b16 %v2119, %v2115
  %v2844 = vpack.c.b16 %v2120, %v2116
  %v2845 = vpack.c.b16 %v2121, %v2117
  %v2846 = vpack.c.b16 %v2122, %v2118
  %v2847 = vpack.c.b16 %v2127, %v2123
  %v2848 = vpack.c.b16 %v2128, %v2124
  %v2849 = vpack.c.b16 %v2129, %v2125
  %v2850 = vpack.c.b16 %v2130, %v2126
  %v2851 = vpack.c.b16 %v2135, %v2131
  %v2852 = vpack.c.b16 %v2136, %v2132
  %v2853 = vpack.c.b16 %v2137, %v2133
  %v2854 = vpack.c.b16 %v2138, %v2134
  %v2855 = vpack.c.b16 %v2143, %v2139
  %v2856 = vpack.c.b16 %v2144, %v2140
  %v2857 = vpack.c.b16 %v2145, %v2141
  %v2858 = vpack.c.b16 %v2146, %v2142
  %v2859 = vpack.c.b16 %v2151, %v2147
  %v2860 = vpack.c.b16 %v2152, %v2148
  %v2861 = vpack.c.b16 %v2153, %v2149
  %v2862 = vpack.c.b16 %v2154, %v2150
  %v2863 = vpack.c.b16 %v2159, %v2155
  %v2864 = vpack.c.b16 %v2160, %v2156
  %v2865 = vpack.c.b16 %v2161, %v2157
  %v2866 = vpack.c.b16 %v2162, %v2158
  %v2867 = vpack.c.b16 %v2167, %v2163
  %v2868 = vpack.c.b16 %v2168, %v2164
  %v2869 = vpack.c.b16 %v2169, %v2165
  %v2870 = vpack.c.b16 %v2170, %v2166
  %v2871 = vpack.c.b16 %v2175, %v2171
  %v2872 = vpack.c.b16 %v2176, %v2172
  %v2873 = vpack.c.b16 %v2177, %v2173
  %v2874 = vpack.c.b16 %v2178, %v2174
  %v2875 = vpack.c.b16 %v2183, %v2179
  %v2876 = vpack.c.b16 %v2184, %v2180
  %v2877 = vpack.c.b16 %v2185, %v2181
  %v2878 = vpack.c.b16 %v2186, %v2182
  %v2879 = vpack.c.b16 %v2191, %v2187
  %v2880 = vpack.c.b16 %v2192, %v2188
  %v2881 = vpack.c.b16 %v2193, %v2189
  %v2882 = vpack.c.b16 %v2194, %v2190
  %v2883 = vpack.c.b16 %v2199, %v2195
  %v2884 = vpack.c.b16 %v2200, %v2196
  %v2885 = vpack.c.b16 %v2201, %v2197
  %v2886 = vpack.c.b16 %v2202, %v2198
  %v2887 = vpack.c.b16 %v2207, %v2203
  %v2888 = vpack.c.b16 %v2208, %v2204
  %v2889 = vpack.c.b16 %v2209, %v2205
  %v2890 = vpack.c.b16 %v2210, %v2206
  %v2891 = vpack.c.b16 %v2215, %v2211
  %v2892 = vpack.c.b16 %v2216, %v2212
  %v2893 = vpack.c.b16 %v2217, %v2213
  %v2894 = vpack.c.b16 %v2218, %v2214
  %v2895 = vpack.c.b16 %v2223, %v2219
  %v2896 = vpack.c.b16 %v2224, %v2220
  %v2897 = vpack.c.b16 %v2225, %v2221
  %v2898 = vpack.c.b16 %v2226, %v2222
  %v2899 = vpack.c.b16 %v2231, %v2227
  %v2900 = vpack.c.b16 %v2232, %v2228
  %v2901 = vpack.c.b16 %v2233, %v2229
  %v2902 = vpack.c.b16 %v2234, %v2230
  %v2903 = vpack.c.b16 %v2239, %v2235
  %v2904 = vpack.c.b16 %v2240, %v2236
  %v2905 = vpack.c.b16 %v2241, %v2237
  %v2906 = vpack.c.b16 %v2242, %v2238
  %v2907 = vpack.c.b16 %v2247, %v2243
  %v2908 = vpack.c.b16 %v2248, %v2244
  %v2909 = vpack.c.b16 %v2249, %v2245
  %v2910 = vpack.c.b16 %v2250, %v2246
  %v2911 = vpack.c.b16 %v2255, %v2251
  %v2912 = vpack.c.b16 %v2256, %v2252
  %v2913 = vpack.c.b16 %v2257, %v2253
  %v2914 = vpack.c.b16 %v2258, %v2254
  %v2915 = vpack.c.b16 %v2263, %v2259
  %v2916 = vpack.c.b16 %v2264, %v2260
  %v2917 = vpack.c.b16 %v2265, %v2261
  %v2918 = vpack.c.b16 %v2266, %v2262
  %v2919 = vpack.c.b16 %v2271, %v2267
  %v2920 = vpack.c.b16 %v2272, %v2268
  %v2921 = vpack.c.b16 %v2273, %v2269
  %v2922 = vpack.c.b16 %v2274, %v2270
  %v2923 = vpack.c.b16 %v2279, %v2275
  %v2924 = vpack.c.b16 %v2280, %v2276
  %v2925 = vpack.c.b16 %v2281, %v2277
  %v2926 = vpack.c.b16 %v2282, %v2278
  %v2927 = vpack.c.b16 %v2287, %v2283
  %v2928 = vpack.c.b16 %v2288, %v2284
  %v2929 = vpack.c.b16 %v2289, %v2285
  %v2930 = vpack.c.b16 %v2290, %v2286
  %v2931 = vpack.c.b16 %v2295, %v2291
  %v2932 = vpack.c.b16 %v2296, %v2292
  %v2933 = vpack.c.b16 %v2297, %v2293
  %v2934 = vpack.c.b16 %v2298, %v2294
  %v2935 = vpack.c.b16 %v2303, %v2299
  %v2936 = vpack.c.b16 %v2304, %v2300
  %v2937 = vpack.c.b16 %v2305, %v2301
  %v2938 = vpack.c.b16 %v2306, %v2302
  %v2939 = vpack.c.b16 %v2311, %v2307
  %v2940 = vpack.c.b16 %v2312, %v2308
  %v2941 = vpack.c.b16 %v2313, %v2309
  %v2942 = vpack.c.b16 %v2314, %v2310
  %v2943 = vpack.c.b16 %v2319, %v2315
  %v2944 = vpack.c.b16 %v2320, %v2316
  %v2945 = vpack.c.b16 %v2321, %v2317
  %v2946 = vpack.c.b16 %v2322, %v2318
  %v2947 = vpack.c.b16 %v2327, %v2323
  %v2948 = vpack.c.b16 %v2328, %v2324
  %v2949 = vpack.c.b16 %v2329, %v2325
  %v2950 = vpack.c.b16 %v2330, %v2326
  %v2951 = vpack.c.b16 %v2335, %v2331
  %v2952 = vpack.c.b16 %v2336, %v2332
  %v2953 = vpack.c.b16 %v2337, %v2333
  %v2954 = vpack.c.b16 %v2338, %v2334
  %v2955 = vpack.c.b16 %v2343, %v2339
  %v2956 = vpack.c.b16 %v2344, %v2340
  %v2957 = vpack.c.b16 %v2345, %v2341
  %v2958 = vpack.c.b16 %v2346, %v2342
  %v2959 = vpack.c.b16 %v2351, %v2347
  %v2960 = vpack.c.b16 %v2352, %v2348
  %v2961 = vpack.c.b16 %v2353, %v2349
  %v2962 = vpack.c.b16 %v2354, %v2350
  %v2963 = vpack.c.b16 %v2359, %v2355
  %v2964 = vpack.c.b16 %v2360, %v2356
  %v2965 = vpack.c.b16 %v2361, %v2357
  %v2966 = vpack.c.b16 %v2362, %v2358
  %v2967 = vpack.c.b16 %v2367, %v2363
  %v2968 = vpack.c.b16 %v2368, %v2364
  %v2969 = vpack.c.b16 %v2369, %v2365
  %v2970 = vpack.c.b16 %v2370, %v2366
  %v2971 = vpack.c.b16 %v2375, %v2371
  %v2972 = vpack.c.b16 %v2376, %v2372
  %v2973 = vpack.c.b16 %v2377, %v2373
  %v2974 = vpack.c.b16 %v2378, %v2374
  %v2975 = vpack.c.b16 %v2383, %v2379
  %v2976 = vpack.c.b16 %v2384, %v2380
  %v2977 = vpack.c.b16 %v2385, %v2381
  %v2978 = vpack.c.b16 %v2386, %v2382
  %v2979 = vpack.c.b16 %v2391, %v2387
  %v2980 = vpack.c.b16 %v2392, %v2388
  %v2981 = vpack.c.b16 %v2393, %v2389
  %v2982 = vpack.c.b16 %v2394, %v2390
  %v2983 = vpack.c.b16 %v2399, %v2395
  %v2984 = vpack.c.b16 %v2400, %v2396
  %v2985 = vpack.c.b16 %v2401, %v2397
  %v2986 = vpack.c.b16 %v2402, %v2398
  %v2987 = vpack.c.b16 %v2407, %v2403
  %v2988 = vpack.c.b16 %v2408, %v2404
  %v2989 = vpack.c.b16 %v2409, %v2405
  %v2990 = vpack.c.b16 %v2410, %v2406
  %v2991 = vpack.c.b16 %v2415, %v2411
  %v2992 = vpack.c.b16 %v2416, %v2412
  %v2993 = vpack.c.b16 %v2417, %v2413
  %v2994 = vpack.c.b16 %v2418, %v2414
  %3571 = vmatprep.subr.bf16.mxu0 %v2448
  %3572 = vmatpush1.bf16.msra.mxu0 %v2447
  %3573 = vmatprep.subr.bf16.mxu0 %v2444
  %3574 = vmatpush1.bf16.msra.mxu0 %v2443
  %3575 = vmatprep.subr.bf16.mxu0 %v2440
  %3576 = vmatpush1.bf16.msra.mxu0 %v2439
  %3577 = vmatprep.subr.bf16.mxu0 %v2436
  %3578 = vmatpush1.bf16.msra.mxu0 %v2435
  %3579 = vmatprep.subr.bf16.mxu0 %v2432
  %3580 = vmatpush1.bf16.msra.mxu0 %v2431
  %3581 = vmatprep.subr.bf16.mxu0 %v2428
  %3582 = vmatpush1.bf16.msra.mxu0 %v2427
  %3583 = vmatprep.subr.bf16.mxu0 %v2424
  %3584 = vmatpush1.bf16.msra.mxu0 %v2423
  %3585 = vmatprep.subr.bf16.mxu0 %v2420
  %3586 = vmatpush1.bf16.msra.mxu0 %v2419
  %3587 = vmatprep.subr.bf16.mxu0 %v2480
  %3588 = vmatpush2.bf16.msra.mxu0 %v2479
  %3589 = vmatprep.subr.bf16.mxu0 %v2476
  %3590 = vmatpush2.bf16.msra.mxu0 %v2475
  %3591 = vmatprep.subr.bf16.mxu0 %v2472
  %3592 = vmatpush2.bf16.msra.mxu0 %v2471
  %3593 = vmatprep.subr.bf16.mxu0 %v2468
  %3594 = vmatpush2.bf16.msra.mxu0 %v2467
  %3595 = vmatprep.subr.bf16.mxu0 %v2464
  %3596 = vmatpush2.bf16.msra.mxu0 %v2463
  %3597 = vmatprep.subr.bf16.mxu0 %v2460
  %3598 = vmatpush2.bf16.msra.mxu0 %v2459
  %3599 = vmatprep.subr.bf16.mxu0 %v2456
  %3600 = vmatpush2.bf16.msra.mxu0 %v2455
  %3601 = vmatprep.subr.bf16.mxu0 %v2452
  %3602 = vmatpush2.bf16.msra.mxu0 %v2451
  %3603 = vmatprep.mubr.bf16.mxu0 %v656
  %3604 = vmatmul.mubr.bf16.gmra.mxu0 %v655
  %v3605 = vpop.f32.mrf.mxu0
  %v3606 = vadd.f32 %v611, %v3605
  %v3607 = vpop.f32.mrf.mxu0
  %v3608 = vadd.f32 %v615, %v3607
  %v3609 = vpop.f32.mrf.mxu0
  %v3610 = vpop.f32.mrf.mxu0
  %3611 = vdwg.mxu0
  %3612 = vmatprep.subr.bf16.mxu0 %v2512
  %3613 = vmatpush1.bf16.msra.mxu0 %v2511
  %3614 = vmatprep.subr.bf16.mxu0 %v2508
  %3615 = vmatpush1.bf16.msra.mxu0 %v2507
  %3616 = vmatprep.subr.bf16.mxu0 %v2504
  %3617 = vmatpush1.bf16.msra.mxu0 %v2503
  %3618 = vmatprep.subr.bf16.mxu0 %v2500
  %3619 = vmatpush1.bf16.msra.mxu0 %v2499
  %3620 = vmatprep.subr.bf16.mxu0 %v2496
  %3621 = vmatpush1.bf16.msra.mxu0 %v2495
  %3622 = vmatprep.subr.bf16.mxu0 %v2492
  %3623 = vmatpush1.bf16.msra.mxu0 %v2491
  %3624 = vmatprep.subr.bf16.mxu0 %v2488
  %3625 = vmatpush1.bf16.msra.mxu0 %v2487
  %3626 = vmatprep.subr.bf16.mxu0 %v2484
  %3627 = vmatpush1.bf16.msra.mxu0 %v2483
  %3628 = vmatprep.subr.bf16.mxu0 %v2544
  %3629 = vmatpush2.bf16.msra.mxu0 %v2543
  %3630 = vmatprep.subr.bf16.mxu0 %v2540
  %3631 = vmatpush2.bf16.msra.mxu0 %v2539
  %3632 = vmatprep.subr.bf16.mxu0 %v2536
  %3633 = vmatpush2.bf16.msra.mxu0 %v2535
  %3634 = vmatprep.subr.bf16.mxu0 %v2532
  %3635 = vmatpush2.bf16.msra.mxu0 %v2531
  %3636 = vmatprep.subr.bf16.mxu0 %v2528
  %3637 = vmatpush2.bf16.msra.mxu0 %v2527
  %3638 = vmatprep.subr.bf16.mxu0 %v2524
  %3639 = vmatpush2.bf16.msra.mxu0 %v2523
  %3640 = vmatprep.subr.bf16.mxu0 %v2520
  %3641 = vmatpush2.bf16.msra.mxu0 %v2519
  %3642 = vmatprep.subr.bf16.mxu0 %v2516
  %3643 = vmatpush2.bf16.msra.mxu0 %v2515
  %3644 = vmatprep.mubr.bf16.mxu0 %v658
  %3645 = vmatmul.mubr.bf16.gmra.mxu0 %v657
  %v3646 = vpop.f32.mrf.mxu0
  %v3647 = vadd.f32 %v3606, %v3646
  %v3648 = vpop.f32.mrf.mxu0
  %v3649 = vadd.f32 %v3608, %v3648
  %v3650 = vpop.f32.mrf.mxu0
  %v3651 = vpop.f32.mrf.mxu0
  %3652 = vdwg.mxu0
  %3653 = vmatprep.subr.bf16.mxu0 %v2576
  %3654 = vmatpush1.bf16.msra.mxu0 %v2575
  %3655 = vmatprep.subr.bf16.mxu0 %v2572
  %3656 = vmatpush1.bf16.msra.mxu0 %v2571
  %3657 = vmatprep.subr.bf16.mxu0 %v2568
  %3658 = vmatpush1.bf16.msra.mxu0 %v2567
  %3659 = vmatprep.subr.bf16.mxu0 %v2564
  %3660 = vmatpush1.bf16.msra.mxu0 %v2563
  %3661 = vmatprep.subr.bf16.mxu0 %v2560
  %3662 = vmatpush1.bf16.msra.mxu0 %v2559
  %3663 = vmatprep.subr.bf16.mxu0 %v2556
  %3664 = vmatpush1.bf16.msra.mxu0 %v2555
  %3665 = vmatprep.subr.bf16.mxu0 %v2552
  %3666 = vmatpush1.bf16.msra.mxu0 %v2551
  %3667 = vmatprep.subr.bf16.mxu0 %v2548
  %3668 = vmatpush1.bf16.msra.mxu0 %v2547
  %3669 = vmatprep.subr.bf16.mxu0 %v2608
  %3670 = vmatpush2.bf16.msra.mxu0 %v2607
  %3671 = vmatprep.subr.bf16.mxu0 %v2604
  %3672 = vmatpush2.bf16.msra.mxu0 %v2603
  %3673 = vmatprep.subr.bf16.mxu0 %v2600
  %3674 = vmatpush2.bf16.msra.mxu0 %v2599
  %3675 = vmatprep.subr.bf16.mxu0 %v2596
  %3676 = vmatpush2.bf16.msra.mxu0 %v2595
  %3677 = vmatprep.subr.bf16.mxu0 %v2592
  %3678 = vmatpush2.bf16.msra.mxu0 %v2591
  %3679 = vmatprep.subr.bf16.mxu0 %v2588
  %3680 = vmatpush2.bf16.msra.mxu0 %v2587
  %3681 = vmatprep.subr.bf16.mxu0 %v2584
  %3682 = vmatpush2.bf16.msra.mxu0 %v2583
  %3683 = vmatprep.subr.bf16.mxu0 %v2580
  %3684 = vmatpush2.bf16.msra.mxu0 %v2579
  %3685 = vmatprep.mubr.bf16.mxu0 %v660
  %3686 = vmatmul.mubr.bf16.gmra.mxu0 %v659
  %v3687 = vpop.f32.mrf.mxu0
  %v3688 = vadd.f32 %v3647, %v3687
  %v3689 = vpop.f32.mrf.mxu0
  %v3690 = vadd.f32 %v3649, %v3689
  %v3691 = vpop.f32.mrf.mxu0
  %v3692 = vpop.f32.mrf.mxu0
  %3693 = vdwg.mxu0
  %3694 = vmatprep.subr.bf16.mxu0 %v2640
  %3695 = vmatpush1.bf16.msra.mxu0 %v2639
  %3696 = vmatprep.subr.bf16.mxu0 %v2636
  %3697 = vmatpush1.bf16.msra.mxu0 %v2635
  %3698 = vmatprep.subr.bf16.mxu0 %v2632
  %3699 = vmatpush1.bf16.msra.mxu0 %v2631
  %3700 = vmatprep.subr.bf16.mxu0 %v2628
  %3701 = vmatpush1.bf16.msra.mxu0 %v2627
  %3702 = vmatprep.subr.bf16.mxu0 %v2624
  %3703 = vmatpush1.bf16.msra.mxu0 %v2623
  %3704 = vmatprep.subr.bf16.mxu0 %v2620
  %3705 = vmatpush1.bf16.msra.mxu0 %v2619
  %3706 = vmatprep.subr.bf16.mxu0 %v2616
  %3707 = vmatpush1.bf16.msra.mxu0 %v2615
  %3708 = vmatprep.subr.bf16.mxu0 %v2612
  %3709 = vmatpush1.bf16.msra.mxu0 %v2611
  %3710 = vmatprep.subr.bf16.mxu0 %v2672
  %3711 = vmatpush2.bf16.msra.mxu0 %v2671
  %3712 = vmatprep.subr.bf16.mxu0 %v2668
  %3713 = vmatpush2.bf16.msra.mxu0 %v2667
  %3714 = vmatprep.subr.bf16.mxu0 %v2664
  %3715 = vmatpush2.bf16.msra.mxu0 %v2663
  %3716 = vmatprep.subr.bf16.mxu0 %v2660
  %3717 = vmatpush2.bf16.msra.mxu0 %v2659
  %3718 = vmatprep.subr.bf16.mxu0 %v2656
  %3719 = vmatpush2.bf16.msra.mxu0 %v2655
  %3720 = vmatprep.subr.bf16.mxu0 %v2652
  %3721 = vmatpush2.bf16.msra.mxu0 %v2651
  %3722 = vmatprep.subr.bf16.mxu0 %v2648
  %3723 = vmatpush2.bf16.msra.mxu0 %v2647
  %3724 = vmatprep.subr.bf16.mxu0 %v2644
  %3725 = vmatpush2.bf16.msra.mxu0 %v2643
  %3726 = vmatprep.mubr.bf16.mxu0 %v662
  %3727 = vmatmul.mubr.bf16.gmra.mxu0 %v661
  %v3728 = vpop.f32.mrf.mxu0
  %v3729 = vadd.f32 %v3688, %v3728
  %v3730 = vpop.f32.mrf.mxu0
  %v3731 = vadd.f32 %v3690, %v3730
  %v3732 = vpop.f32.mrf.mxu0
  %v3733 = vpop.f32.mrf.mxu0
  %3734 = vdwg.mxu0
  %3735 = vmatprep.subr.bf16.mxu0 %v2704
  %3736 = vmatpush1.bf16.msra.mxu0 %v2703
  %3737 = vmatprep.subr.bf16.mxu0 %v2700
  %3738 = vmatpush1.bf16.msra.mxu0 %v2699
  %3739 = vmatprep.subr.bf16.mxu0 %v2696
  %3740 = vmatpush1.bf16.msra.mxu0 %v2695
  %3741 = vmatprep.subr.bf16.mxu0 %v2692
  %3742 = vmatpush1.bf16.msra.mxu0 %v2691
  %3743 = vmatprep.subr.bf16.mxu0 %v2688
  %3744 = vmatpush1.bf16.msra.mxu0 %v2687
  %3745 = vmatprep.subr.bf16.mxu0 %v2684
  %3746 = vmatpush1.bf16.msra.mxu0 %v2683
  %3747 = vmatprep.subr.bf16.mxu0 %v2680
  %3748 = vmatpush1.bf16.msra.mxu0 %v2679
  %3749 = vmatprep.subr.bf16.mxu0 %v2676
  %3750 = vmatpush1.bf16.msra.mxu0 %v2675
  %3751 = vmatprep.subr.bf16.mxu0 %v2736
  %3752 = vmatpush2.bf16.msra.mxu0 %v2735
  %3753 = vmatprep.subr.bf16.mxu0 %v2732
  %3754 = vmatpush2.bf16.msra.mxu0 %v2731
  %3755 = vmatprep.subr.bf16.mxu0 %v2728
  %3756 = vmatpush2.bf16.msra.mxu0 %v2727
  %3757 = vmatprep.subr.bf16.mxu0 %v2724
  %3758 = vmatpush2.bf16.msra.mxu0 %v2723
  %3759 = vmatprep.subr.bf16.mxu0 %v2720
  %3760 = vmatpush2.bf16.msra.mxu0 %v2719
  %3761 = vmatprep.subr.bf16.mxu0 %v2716
  %3762 = vmatpush2.bf16.msra.mxu0 %v2715
  %3763 = vmatprep.subr.bf16.mxu0 %v2712
  %3764 = vmatpush2.bf16.msra.mxu0 %v2711
  %3765 = vmatprep.subr.bf16.mxu0 %v2708
  %3766 = vmatpush2.bf16.msra.mxu0 %v2707
  %3767 = vmatprep.mubr.bf16.mxu0 %v664
  %3768 = vmatmul.mubr.bf16.gmra.mxu0 %v663
  %v3769 = vpop.f32.mrf.mxu0
  %v3770 = vadd.f32 %v3729, %v3769
  %v3771 = vpop.f32.mrf.mxu0
  %v3772 = vadd.f32 %v3731, %v3771
  %v3773 = vpop.f32.mrf.mxu0
  %v3774 = vpop.f32.mrf.mxu0
  %3775 = vdwg.mxu0
  %3776 = vmatprep.subr.bf16.mxu0 %v2768
  %3777 = vmatpush1.bf16.msra.mxu0 %v2767
  %3778 = vmatprep.subr.bf16.mxu0 %v2764
  %3779 = vmatpush1.bf16.msra.mxu0 %v2763
  %3780 = vmatprep.subr.bf16.mxu0 %v2760
  %3781 = vmatpush1.bf16.msra.mxu0 %v2759
  %3782 = vmatprep.subr.bf16.mxu0 %v2756
  %3783 = vmatpush1.bf16.msra.mxu0 %v2755
  %3784 = vmatprep.subr.bf16.mxu0 %v2752
  %3785 = vmatpush1.bf16.msra.mxu0 %v2751
  %3786 = vmatprep.subr.bf16.mxu0 %v2748
  %3787 = vmatpush1.bf16.msra.mxu0 %v2747
  %3788 = vmatprep.subr.bf16.mxu0 %v2744
  %3789 = vmatpush1.bf16.msra.mxu0 %v2743
  %3790 = vmatprep.subr.bf16.mxu0 %v2740
  %3791 = vmatpush1.bf16.msra.mxu0 %v2739
  %3792 = vmatprep.subr.bf16.mxu0 %v2800
  %3793 = vmatpush2.bf16.msra.mxu0 %v2799
  %3794 = vmatprep.subr.bf16.mxu0 %v2796
  %3795 = vmatpush2.bf16.msra.mxu0 %v2795
  %3796 = vmatprep.subr.bf16.mxu0 %v2792
  %3797 = vmatpush2.bf16.msra.mxu0 %v2791
  %3798 = vmatprep.subr.bf16.mxu0 %v2788
  %3799 = vmatpush2.bf16.msra.mxu0 %v2787
  %3800 = vmatprep.subr.bf16.mxu0 %v2784
  %3801 = vmatpush2.bf16.msra.mxu0 %v2783
  %3802 = vmatprep.subr.bf16.mxu0 %v2780
  %3803 = vmatpush2.bf16.msra.mxu0 %v2779
  %3804 = vmatprep.subr.bf16.mxu0 %v2776
  %3805 = vmatpush2.bf16.msra.mxu0 %v2775
  %3806 = vmatprep.subr.bf16.mxu0 %v2772
  %3807 = vmatpush2.bf16.msra.mxu0 %v2771
  %3808 = vmatprep.mubr.bf16.mxu0 %v666
  %3809 = vmatmul.mubr.bf16.gmra.mxu0 %v665
  %v3810 = vpop.f32.mrf.mxu0
  %v3811 = vadd.f32 %v3770, %v3810
  %v3812 = vpop.f32.mrf.mxu0
  %v3813 = vadd.f32 %v3772, %v3812
  %v3814 = vpop.f32.mrf.mxu0
  %v3815 = vpop.f32.mrf.mxu0
  %3816 = vdwg.mxu0
  %3817 = vmatprep.subr.bf16.mxu0 %v2832
  %3818 = vmatpush1.bf16.msra.mxu0 %v2831
  %3819 = vmatprep.subr.bf16.mxu0 %v2828
  %3820 = vmatpush1.bf16.msra.mxu0 %v2827
  %3821 = vmatprep.subr.bf16.mxu0 %v2824
  %3822 = vmatpush1.bf16.msra.mxu0 %v2823
  %3823 = vmatprep.subr.bf16.mxu0 %v2820
  %3824 = vmatpush1.bf16.msra.mxu0 %v2819
  %3825 = vmatprep.subr.bf16.mxu0 %v2816
  %3826 = vmatpush1.bf16.msra.mxu0 %v2815
  %3827 = vmatprep.subr.bf16.mxu0 %v2812
  %3828 = vmatpush1.bf16.msra.mxu0 %v2811
  %3829 = vmatprep.subr.bf16.mxu0 %v2808
  %3830 = vmatpush1.bf16.msra.mxu0 %v2807
  %3831 = vmatprep.subr.bf16.mxu0 %v2804
  %3832 = vmatpush1.bf16.msra.mxu0 %v2803
  %3833 = vmatprep.subr.bf16.mxu0 %v2864
  %3834 = vmatpush2.bf16.msra.mxu0 %v2863
  %3835 = vmatprep.subr.bf16.mxu0 %v2860
  %3836 = vmatpush2.bf16.msra.mxu0 %v2859
  %3837 = vmatprep.subr.bf16.mxu0 %v2856
  %3838 = vmatpush2.bf16.msra.mxu0 %v2855
  %3839 = vmatprep.subr.bf16.mxu0 %v2852
  %3840 = vmatpush2.bf16.msra.mxu0 %v2851
  %3841 = vmatprep.subr.bf16.mxu0 %v2848
  %3842 = vmatpush2.bf16.msra.mxu0 %v2847
  %3843 = vmatprep.subr.bf16.mxu0 %v2844
  %3844 = vmatpush2.bf16.msra.mxu0 %v2843
  %3845 = vmatprep.subr.bf16.mxu0 %v2840
  %3846 = vmatpush2.bf16.msra.mxu0 %v2839
  %3847 = vmatprep.subr.bf16.mxu0 %v2836
  %3848 = vmatpush2.bf16.msra.mxu0 %v2835
  %3849 = vmatprep.mubr.bf16.mxu0 %v668
  %3850 = vmatmul.mubr.bf16.gmra.mxu0 %v667
  %v3851 = vpop.f32.mrf.mxu0
  %v3852 = vadd.f32 %v3811, %v3851
  %v3853 = vpop.f32.mrf.mxu0
  %v3854 = vadd.f32 %v3813, %v3853
  %v3855 = vpop.f32.mrf.mxu0
  %v3856 = vpop.f32.mrf.mxu0
  %3857 = vdwg.mxu0
  %3858 = vmatprep.subr.bf16.mxu0 %v2896
  %3859 = vmatpush1.bf16.msra.mxu0 %v2895
  %3860 = vmatprep.subr.bf16.mxu0 %v2892
  %3861 = vmatpush1.bf16.msra.mxu0 %v2891
  %3862 = vmatprep.subr.bf16.mxu0 %v2888
  %3863 = vmatpush1.bf16.msra.mxu0 %v2887
  %3864 = vmatprep.subr.bf16.mxu0 %v2884
  %3865 = vmatpush1.bf16.msra.mxu0 %v2883
  %3866 = vmatprep.subr.bf16.mxu0 %v2880
  %3867 = vmatpush1.bf16.msra.mxu0 %v2879
  %3868 = vmatprep.subr.bf16.mxu0 %v2876
  %3869 = vmatpush1.bf16.msra.mxu0 %v2875
  %3870 = vmatprep.subr.bf16.mxu0 %v2872
  %3871 = vmatpush1.bf16.msra.mxu0 %v2871
  %3872 = vmatprep.subr.bf16.mxu0 %v2868
  %3873 = vmatpush1.bf16.msra.mxu0 %v2867
  %3874 = vmatprep.subr.bf16.mxu0 %v2928
  %3875 = vmatpush2.bf16.msra.mxu0 %v2927
  %3876 = vmatprep.subr.bf16.mxu0 %v2924
  %3877 = vmatpush2.bf16.msra.mxu0 %v2923
  %3878 = vmatprep.subr.bf16.mxu0 %v2920
  %3879 = vmatpush2.bf16.msra.mxu0 %v2919
  %3880 = vmatprep.subr.bf16.mxu0 %v2916
  %3881 = vmatpush2.bf16.msra.mxu0 %v2915
  %3882 = vmatprep.subr.bf16.mxu0 %v2912
  %3883 = vmatpush2.bf16.msra.mxu0 %v2911
  %3884 = vmatprep.subr.bf16.mxu0 %v2908
  %3885 = vmatpush2.bf16.msra.mxu0 %v2907
  %3886 = vmatprep.subr.bf16.mxu0 %v2904
  %3887 = vmatpush2.bf16.msra.mxu0 %v2903
  %3888 = vmatprep.subr.bf16.mxu0 %v2900
  %3889 = vmatpush2.bf16.msra.mxu0 %v2899
  %3890 = vmatprep.mubr.bf16.mxu0 %v670
  %3891 = vmatmul.mubr.bf16.gmra.mxu0 %v669
  %v3892 = vpop.f32.mrf.mxu0
  %v3893 = vadd.f32 %v3852, %v3892
  %v3894 = vpop.f32.mrf.mxu0
  %v3895 = vadd.f32 %v3854, %v3894
  %v3896 = vpop.f32.mrf.mxu0
  %v3897 = vpop.f32.mrf.mxu0
  %3898 = vdwg.mxu0
  %3899 = vmatprep.subr.bf16.mxu0 %v2960
  %3900 = vmatpush1.bf16.msra.mxu0 %v2959
  %3901 = vmatprep.subr.bf16.mxu0 %v2956
  %3902 = vmatpush1.bf16.msra.mxu0 %v2955
  %3903 = vmatprep.subr.bf16.mxu0 %v2952
  %3904 = vmatpush1.bf16.msra.mxu0 %v2951
  %3905 = vmatprep.subr.bf16.mxu0 %v2948
  %3906 = vmatpush1.bf16.msra.mxu0 %v2947
  %3907 = vmatprep.subr.bf16.mxu0 %v2944
  %3908 = vmatpush1.bf16.msra.mxu0 %v2943
  %3909 = vmatprep.subr.bf16.mxu0 %v2940
  %3910 = vmatpush1.bf16.msra.mxu0 %v2939
  %3911 = vmatprep.subr.bf16.mxu0 %v2936
  %3912 = vmatpush1.bf16.msra.mxu0 %v2935
  %3913 = vmatprep.subr.bf16.mxu0 %v2932
  %3914 = vmatpush1.bf16.msra.mxu0 %v2931
  %3915 = vmatprep.subr.bf16.mxu0 %v2992
  %3916 = vmatpush2.bf16.msra.mxu0 %v2991
  %3917 = vmatprep.subr.bf16.mxu0 %v2988
  %3918 = vmatpush2.bf16.msra.mxu0 %v2987
  %3919 = vmatprep.subr.bf16.mxu0 %v2984
  %3920 = vmatpush2.bf16.msra.mxu0 %v2983
  %3921 = vmatprep.subr.bf16.mxu0 %v2980
  %3922 = vmatpush2.bf16.msra.mxu0 %v2979
  %3923 = vmatprep.subr.bf16.mxu0 %v2976
  %3924 = vmatpush2.bf16.msra.mxu0 %v2975
  %3925 = vmatprep.subr.bf16.mxu0 %v2972
  %3926 = vmatpush2.bf16.msra.mxu0 %v2971
  %3927 = vmatprep.subr.bf16.mxu0 %v2968
  %3928 = vmatpush2.bf16.msra.mxu0 %v2967
  %3929 = vmatprep.subr.bf16.mxu0 %v2964
  %3930 = vmatpush2.bf16.msra.mxu0 %v2963
  %3931 = vmatprep.mubr.bf16.mxu0 %v672
  %3932 = vmatmul.mubr.bf16.gmra.mxu0 %v671
  %v3933 = vpop.f32.mrf.mxu0
  %v3934 = vadd.f32 %v3893, %v3933
  %v3935 = vpop.f32.mrf.mxu0
  %v3936 = vadd.f32 %v3895, %v3935
  %v3937 = vpop.f32.mrf.mxu0
  %v3938 = vpop.f32.mrf.mxu0
  %3939 = vdwg.mxu0
  %3940 = vmatprep.subr.bf16.mxu0 %v2450
  %3941 = vmatpush1.bf16.msra.mxu0 %v2449
  %3942 = vmatprep.subr.bf16.mxu0 %v2446
  %3943 = vmatpush1.bf16.msra.mxu0 %v2445
  %3944 = vmatprep.subr.bf16.mxu0 %v2442
  %3945 = vmatpush1.bf16.msra.mxu0 %v2441
  %3946 = vmatprep.subr.bf16.mxu0 %v2438
  %3947 = vmatpush1.bf16.msra.mxu0 %v2437
  %3948 = vmatprep.subr.bf16.mxu0 %v2434
  %3949 = vmatpush1.bf16.msra.mxu0 %v2433
  %3950 = vmatprep.subr.bf16.mxu0 %v2430
  %3951 = vmatpush1.bf16.msra.mxu0 %v2429
  %3952 = vmatprep.subr.bf16.mxu0 %v2426
  %3953 = vmatpush1.bf16.msra.mxu0 %v2425
  %3954 = vmatprep.subr.bf16.mxu0 %v2422
  %3955 = vmatpush1.bf16.msra.mxu0 %v2421
  %3956 = vmatprep.subr.bf16.mxu0 %v2482
  %3957 = vmatpush2.bf16.msra.mxu0 %v2481
  %3958 = vmatprep.subr.bf16.mxu0 %v2478
  %3959 = vmatpush2.bf16.msra.mxu0 %v2477
  %3960 = vmatprep.subr.bf16.mxu0 %v2474
  %3961 = vmatpush2.bf16.msra.mxu0 %v2473
  %3962 = vmatprep.subr.bf16.mxu0 %v2470
  %3963 = vmatpush2.bf16.msra.mxu0 %v2469
  %3964 = vmatprep.subr.bf16.mxu0 %v2466
  %3965 = vmatpush2.bf16.msra.mxu0 %v2465
  %3966 = vmatprep.subr.bf16.mxu0 %v2462
  %3967 = vmatpush2.bf16.msra.mxu0 %v2461
  %3968 = vmatprep.subr.bf16.mxu0 %v2458
  %3969 = vmatpush2.bf16.msra.mxu0 %v2457
  %3970 = vmatprep.subr.bf16.mxu0 %v2454
  %3971 = vmatpush2.bf16.msra.mxu0 %v2453
  %3972 = vmatprep.mubr.bf16.mxu0 %v656
  %3973 = vmatmul.mubr.bf16.gmra.mxu0 %v655
  %v3974 = vpop.f32.mrf.mxu0
  %v3975 = vadd.f32 %v619, %v3974
  %v3976 = vpop.f32.mrf.mxu0
  %v3977 = vadd.f32 %v623, %v3976
  %v3978 = vpop.f32.mrf.mxu0
  %v3979 = vpop.f32.mrf.mxu0
  %3980 = vdwg.mxu0
  %3981 = vmatprep.subr.bf16.mxu0 %v2514
  %3982 = vmatpush1.bf16.msra.mxu0 %v2513
  %3983 = vmatprep.subr.bf16.mxu0 %v2510
  %3984 = vmatpush1.bf16.msra.mxu0 %v2509
  %3985 = vmatprep.subr.bf16.mxu0 %v2506
  %3986 = vmatpush1.bf16.msra.mxu0 %v2505
  %3987 = vmatprep.subr.bf16.mxu0 %v2502
  %3988 = vmatpush1.bf16.msra.mxu0 %v2501
  %3989 = vmatprep.subr.bf16.mxu0 %v2498
  %3990 = vmatpush1.bf16.msra.mxu0 %v2497
  %3991 = vmatprep.subr.bf16.mxu0 %v2494
  %3992 = vmatpush1.bf16.msra.mxu0 %v2493
  %3993 = vmatprep.subr.bf16.mxu0 %v2490
  %3994 = vmatpush1.bf16.msra.mxu0 %v2489
  %3995 = vmatprep.subr.bf16.mxu0 %v2486
  %3996 = vmatpush1.bf16.msra.mxu0 %v2485
  %3997 = vmatprep.subr.bf16.mxu0 %v2546
  %3998 = vmatpush2.bf16.msra.mxu0 %v2545
  %3999 = vmatprep.subr.bf16.mxu0 %v2542
  %4000 = vmatpush2.bf16.msra.mxu0 %v2541
  %4001 = vmatprep.subr.bf16.mxu0 %v2538
  %4002 = vmatpush2.bf16.msra.mxu0 %v2537
  %4003 = vmatprep.subr.bf16.mxu0 %v2534
  %4004 = vmatpush2.bf16.msra.mxu0 %v2533
  %4005 = vmatprep.subr.bf16.mxu0 %v2530
  %4006 = vmatpush2.bf16.msra.mxu0 %v2529
  %4007 = vmatprep.subr.bf16.mxu0 %v2526
  %4008 = vmatpush2.bf16.msra.mxu0 %v2525
  %4009 = vmatprep.subr.bf16.mxu0 %v2522
  %4010 = vmatpush2.bf16.msra.mxu0 %v2521
  %4011 = vmatprep.subr.bf16.mxu0 %v2518
  %4012 = vmatpush2.bf16.msra.mxu0 %v2517
  %4013 = vmatprep.mubr.bf16.mxu0 %v658
  %4014 = vmatmul.mubr.bf16.gmra.mxu0 %v657
  %v4015 = vpop.f32.mrf.mxu0
  %v4016 = vadd.f32 %v3975, %v4015
  %v4017 = vpop.f32.mrf.mxu0
  %v4018 = vadd.f32 %v3977, %v4017
  %v4019 = vpop.f32.mrf.mxu0
  %v4020 = vpop.f32.mrf.mxu0
  %4021 = vdwg.mxu0
  %4022 = vmatprep.subr.bf16.mxu0 %v2578
  %4023 = vmatpush1.bf16.msra.mxu0 %v2577
  %4024 = vmatprep.subr.bf16.mxu0 %v2574
  %4025 = vmatpush1.bf16.msra.mxu0 %v2573
  %4026 = vmatprep.subr.bf16.mxu0 %v2570
  %4027 = vmatpush1.bf16.msra.mxu0 %v2569
  %4028 = vmatprep.subr.bf16.mxu0 %v2566
  %4029 = vmatpush1.bf16.msra.mxu0 %v2565
  %4030 = vmatprep.subr.bf16.mxu0 %v2562
  %4031 = vmatpush1.bf16.msra.mxu0 %v2561
  %4032 = vmatprep.subr.bf16.mxu0 %v2558
  %4033 = vmatpush1.bf16.msra.mxu0 %v2557
  %4034 = vmatprep.subr.bf16.mxu0 %v2554
  %4035 = vmatpush1.bf16.msra.mxu0 %v2553
  %4036 = vmatprep.subr.bf16.mxu0 %v2550
  %4037 = vmatpush1.bf16.msra.mxu0 %v2549
  %4038 = vmatprep.subr.bf16.mxu0 %v2610
  %4039 = vmatpush2.bf16.msra.mxu0 %v2609
  %4040 = vmatprep.subr.bf16.mxu0 %v2606
  %4041 = vmatpush2.bf16.msra.mxu0 %v2605
  %4042 = vmatprep.subr.bf16.mxu0 %v2602
  %4043 = vmatpush2.bf16.msra.mxu0 %v2601
  %4044 = vmatprep.subr.bf16.mxu0 %v2598
  %4045 = vmatpush2.bf16.msra.mxu0 %v2597
  %4046 = vmatprep.subr.bf16.mxu0 %v2594
  %4047 = vmatpush2.bf16.msra.mxu0 %v2593
  %4048 = vmatprep.subr.bf16.mxu0 %v2590
  %4049 = vmatpush2.bf16.msra.mxu0 %v2589
  %4050 = vmatprep.subr.bf16.mxu0 %v2586
  %4051 = vmatpush2.bf16.msra.mxu0 %v2585
  %4052 = vmatprep.subr.bf16.mxu0 %v2582
  %4053 = vmatpush2.bf16.msra.mxu0 %v2581
  %4054 = vmatprep.mubr.bf16.mxu0 %v660
  %4055 = vmatmul.mubr.bf16.gmra.mxu0 %v659
  %v4056 = vpop.f32.mrf.mxu0
  %v4057 = vadd.f32 %v4016, %v4056
  %v4058 = vpop.f32.mrf.mxu0
  %v4059 = vadd.f32 %v4018, %v4058
  %v4060 = vpop.f32.mrf.mxu0
  %v4061 = vpop.f32.mrf.mxu0
  %4062 = vdwg.mxu0
  %4063 = vmatprep.subr.bf16.mxu0 %v2642
  %4064 = vmatpush1.bf16.msra.mxu0 %v2641
  %4065 = vmatprep.subr.bf16.mxu0 %v2638
  %4066 = vmatpush1.bf16.msra.mxu0 %v2637
  %4067 = vmatprep.subr.bf16.mxu0 %v2634
  %4068 = vmatpush1.bf16.msra.mxu0 %v2633
  %4069 = vmatprep.subr.bf16.mxu0 %v2630
  %4070 = vmatpush1.bf16.msra.mxu0 %v2629
  %4071 = vmatprep.subr.bf16.mxu0 %v2626
  %4072 = vmatpush1.bf16.msra.mxu0 %v2625
  %4073 = vmatprep.subr.bf16.mxu0 %v2622
  %4074 = vmatpush1.bf16.msra.mxu0 %v2621
  %4075 = vmatprep.subr.bf16.mxu0 %v2618
  %4076 = vmatpush1.bf16.msra.mxu0 %v2617
  %4077 = vmatprep.subr.bf16.mxu0 %v2614
  %4078 = vmatpush1.bf16.msra.mxu0 %v2613
  %4079 = vmatprep.subr.bf16.mxu0 %v2674
  %4080 = vmatpush2.bf16.msra.mxu0 %v2673
  %4081 = vmatprep.subr.bf16.mxu0 %v2670
  %4082 = vmatpush2.bf16.msra.mxu0 %v2669
  %4083 = vmatprep.subr.bf16.mxu0 %v2666
  %4084 = vmatpush2.bf16.msra.mxu0 %v2665
  %4085 = vmatprep.subr.bf16.mxu0 %v2662
  %4086 = vmatpush2.bf16.msra.mxu0 %v2661
  %4087 = vmatprep.subr.bf16.mxu0 %v2658
  %4088 = vmatpush2.bf16.msra.mxu0 %v2657
  %4089 = vmatprep.subr.bf16.mxu0 %v2654
  %4090 = vmatpush2.bf16.msra.mxu0 %v2653
  %4091 = vmatprep.subr.bf16.mxu0 %v2650
  %4092 = vmatpush2.bf16.msra.mxu0 %v2649
  %4093 = vmatprep.subr.bf16.mxu0 %v2646
  %4094 = vmatpush2.bf16.msra.mxu0 %v2645
  %4095 = vmatprep.mubr.bf16.mxu0 %v662
  %4096 = vmatmul.mubr.bf16.gmra.mxu0 %v661
  %v4097 = vpop.f32.mrf.mxu0
  %v4098 = vadd.f32 %v4057, %v4097
  %v4099 = vpop.f32.mrf.mxu0
  %v4100 = vadd.f32 %v4059, %v4099
  %v4101 = vpop.f32.mrf.mxu0
  %v4102 = vpop.f32.mrf.mxu0
  %4103 = vdwg.mxu0
  %4104 = vmatprep.subr.bf16.mxu0 %v2706
  %4105 = vmatpush1.bf16.msra.mxu0 %v2705
  %4106 = vmatprep.subr.bf16.mxu0 %v2702
  %4107 = vmatpush1.bf16.msra.mxu0 %v2701
  %4108 = vmatprep.subr.bf16.mxu0 %v2698
  %4109 = vmatpush1.bf16.msra.mxu0 %v2697
  %4110 = vmatprep.subr.bf16.mxu0 %v2694
  %4111 = vmatpush1.bf16.msra.mxu0 %v2693
  %4112 = vmatprep.subr.bf16.mxu0 %v2690
  %4113 = vmatpush1.bf16.msra.mxu0 %v2689
  %4114 = vmatprep.subr.bf16.mxu0 %v2686
  %4115 = vmatpush1.bf16.msra.mxu0 %v2685
  %4116 = vmatprep.subr.bf16.mxu0 %v2682
  %4117 = vmatpush1.bf16.msra.mxu0 %v2681
  %4118 = vmatprep.subr.bf16.mxu0 %v2678
  %4119 = vmatpush1.bf16.msra.mxu0 %v2677
  %4120 = vmatprep.subr.bf16.mxu0 %v2738
  %4121 = vmatpush2.bf16.msra.mxu0 %v2737
  %4122 = vmatprep.subr.bf16.mxu0 %v2734
  %4123 = vmatpush2.bf16.msra.mxu0 %v2733
  %4124 = vmatprep.subr.bf16.mxu0 %v2730
  %4125 = vmatpush2.bf16.msra.mxu0 %v2729
  %4126 = vmatprep.subr.bf16.mxu0 %v2726
  %4127 = vmatpush2.bf16.msra.mxu0 %v2725
  %4128 = vmatprep.subr.bf16.mxu0 %v2722
  %4129 = vmatpush2.bf16.msra.mxu0 %v2721
  %4130 = vmatprep.subr.bf16.mxu0 %v2718
  %4131 = vmatpush2.bf16.msra.mxu0 %v2717
  %4132 = vmatprep.subr.bf16.mxu0 %v2714
  %4133 = vmatpush2.bf16.msra.mxu0 %v2713
  %4134 = vmatprep.subr.bf16.mxu0 %v2710
  %4135 = vmatpush2.bf16.msra.mxu0 %v2709
  %4136 = vmatprep.mubr.bf16.mxu0 %v664
  %4137 = vmatmul.mubr.bf16.gmra.mxu0 %v663
  %v4138 = vpop.f32.mrf.mxu0
  %v4139 = vadd.f32 %v4098, %v4138
  %v4140 = vpop.f32.mrf.mxu0
  %v4141 = vadd.f32 %v4100, %v4140
  %v4142 = vpop.f32.mrf.mxu0
  %v4143 = vpop.f32.mrf.mxu0
  %4144 = vdwg.mxu0
  %4145 = vmatprep.subr.bf16.mxu0 %v2770
  %4146 = vmatpush1.bf16.msra.mxu0 %v2769
  %4147 = vmatprep.subr.bf16.mxu0 %v2766
  %4148 = vmatpush1.bf16.msra.mxu0 %v2765
  %4149 = vmatprep.subr.bf16.mxu0 %v2762
  %4150 = vmatpush1.bf16.msra.mxu0 %v2761
  %4151 = vmatprep.subr.bf16.mxu0 %v2758
  %4152 = vmatpush1.bf16.msra.mxu0 %v2757
  %4153 = vmatprep.subr.bf16.mxu0 %v2754
  %4154 = vmatpush1.bf16.msra.mxu0 %v2753
  %4155 = vmatprep.subr.bf16.mxu0 %v2750
  %4156 = vmatpush1.bf16.msra.mxu0 %v2749
  %4157 = vmatprep.subr.bf16.mxu0 %v2746
  %4158 = vmatpush1.bf16.msra.mxu0 %v2745
  %4159 = vmatprep.subr.bf16.mxu0 %v2742
  %4160 = vmatpush1.bf16.msra.mxu0 %v2741
  %4161 = vmatprep.subr.bf16.mxu0 %v2802
  %4162 = vmatpush2.bf16.msra.mxu0 %v2801
  %4163 = vmatprep.subr.bf16.mxu0 %v2798
  %4164 = vmatpush2.bf16.msra.mxu0 %v2797
  %4165 = vmatprep.subr.bf16.mxu0 %v2794
  %4166 = vmatpush2.bf16.msra.mxu0 %v2793
  %4167 = vmatprep.subr.bf16.mxu0 %v2790
  %4168 = vmatpush2.bf16.msra.mxu0 %v2789
  %4169 = vmatprep.subr.bf16.mxu0 %v2786
  %4170 = vmatpush2.bf16.msra.mxu0 %v2785
  %4171 = vmatprep.subr.bf16.mxu0 %v2782
  %4172 = vmatpush2.bf16.msra.mxu0 %v2781
  %4173 = vmatprep.subr.bf16.mxu0 %v2778
  %4174 = vmatpush2.bf16.msra.mxu0 %v2777
  %4175 = vmatprep.subr.bf16.mxu0 %v2774
  %4176 = vmatpush2.bf16.msra.mxu0 %v2773
  %4177 = vmatprep.mubr.bf16.mxu0 %v666
  %4178 = vmatmul.mubr.bf16.gmra.mxu0 %v665
  %v4179 = vpop.f32.mrf.mxu0
  %v4180 = vadd.f32 %v4139, %v4179
  %v4181 = vpop.f32.mrf.mxu0
  %v4182 = vadd.f32 %v4141, %v4181
  %v4183 = vpop.f32.mrf.mxu0
  %v4184 = vpop.f32.mrf.mxu0
  %4185 = vdwg.mxu0
  %4186 = vmatprep.subr.bf16.mxu0 %v2834
  %4187 = vmatpush1.bf16.msra.mxu0 %v2833
  %4188 = vmatprep.subr.bf16.mxu0 %v2830
  %4189 = vmatpush1.bf16.msra.mxu0 %v2829
  %4190 = vmatprep.subr.bf16.mxu0 %v2826
  %4191 = vmatpush1.bf16.msra.mxu0 %v2825
  %4192 = vmatprep.subr.bf16.mxu0 %v2822
  %4193 = vmatpush1.bf16.msra.mxu0 %v2821
  %4194 = vmatprep.subr.bf16.mxu0 %v2818
  %4195 = vmatpush1.bf16.msra.mxu0 %v2817
  %4196 = vmatprep.subr.bf16.mxu0 %v2814
  %4197 = vmatpush1.bf16.msra.mxu0 %v2813
  %4198 = vmatprep.subr.bf16.mxu0 %v2810
  %4199 = vmatpush1.bf16.msra.mxu0 %v2809
  %4200 = vmatprep.subr.bf16.mxu0 %v2806
  %4201 = vmatpush1.bf16.msra.mxu0 %v2805
  %4202 = vmatprep.subr.bf16.mxu0 %v2866
  %4203 = vmatpush2.bf16.msra.mxu0 %v2865
  %4204 = vmatprep.subr.bf16.mxu0 %v2862
  %4205 = vmatpush2.bf16.msra.mxu0 %v2861
  %4206 = vmatprep.subr.bf16.mxu0 %v2858
  %4207 = vmatpush2.bf16.msra.mxu0 %v2857
  %4208 = vmatprep.subr.bf16.mxu0 %v2854
  %4209 = vmatpush2.bf16.msra.mxu0 %v2853
  %4210 = vmatprep.subr.bf16.mxu0 %v2850
  %4211 = vmatpush2.bf16.msra.mxu0 %v2849
  %4212 = vmatprep.subr.bf16.mxu0 %v2846
  %4213 = vmatpush2.bf16.msra.mxu0 %v2845
  %4214 = vmatprep.subr.bf16.mxu0 %v2842
  %4215 = vmatpush2.bf16.msra.mxu0 %v2841
  %4216 = vmatprep.subr.bf16.mxu0 %v2838
  %4217 = vmatpush2.bf16.msra.mxu0 %v2837
  %4218 = vmatprep.mubr.bf16.mxu0 %v668
  %4219 = vmatmul.mubr.bf16.gmra.mxu0 %v667
  %v4220 = vpop.f32.mrf.mxu0
  %v4221 = vadd.f32 %v4180, %v4220
  %v4222 = vpop.f32.mrf.mxu0
  %v4223 = vadd.f32 %v4182, %v4222
  %v4224 = vpop.f32.mrf.mxu0
  %v4225 = vpop.f32.mrf.mxu0
  %4226 = vdwg.mxu0
  %4227 = vmatprep.subr.bf16.mxu0 %v2898
  %4228 = vmatpush1.bf16.msra.mxu0 %v2897
  %4229 = vmatprep.subr.bf16.mxu0 %v2894
  %4230 = vmatpush1.bf16.msra.mxu0 %v2893
  %4231 = vmatprep.subr.bf16.mxu0 %v2890
  %4232 = vmatpush1.bf16.msra.mxu0 %v2889
  %4233 = vmatprep.subr.bf16.mxu0 %v2886
  %4234 = vmatpush1.bf16.msra.mxu0 %v2885
  %4235 = vmatprep.subr.bf16.mxu0 %v2882
  %4236 = vmatpush1.bf16.msra.mxu0 %v2881
  %4237 = vmatprep.subr.bf16.mxu0 %v2878
  %4238 = vmatpush1.bf16.msra.mxu0 %v2877
  %4239 = vmatprep.subr.bf16.mxu0 %v2874
  %4240 = vmatpush1.bf16.msra.mxu0 %v2873
  %4241 = vmatprep.subr.bf16.mxu0 %v2870
  %4242 = vmatpush1.bf16.msra.mxu0 %v2869
  %4243 = vmatprep.subr.bf16.mxu0 %v2930
  %4244 = vmatpush2.bf16.msra.mxu0 %v2929
  %4245 = vmatprep.subr.bf16.mxu0 %v2926
  %4246 = vmatpush2.bf16.msra.mxu0 %v2925
  %4247 = vmatprep.subr.bf16.mxu0 %v2922
  %4248 = vmatpush2.bf16.msra.mxu0 %v2921
  %4249 = vmatprep.subr.bf16.mxu0 %v2918
  %4250 = vmatpush2.bf16.msra.mxu0 %v2917
  %4251 = vmatprep.subr.bf16.mxu0 %v2914
  %4252 = vmatpush2.bf16.msra.mxu0 %v2913
  %4253 = vmatprep.subr.bf16.mxu0 %v2910
  %4254 = vmatpush2.bf16.msra.mxu0 %v2909
  %4255 = vmatprep.subr.bf16.mxu0 %v2906
  %4256 = vmatpush2.bf16.msra.mxu0 %v2905
  %4257 = vmatprep.subr.bf16.mxu0 %v2902
  %4258 = vmatpush2.bf16.msra.mxu0 %v2901
  %4259 = vmatprep.mubr.bf16.mxu0 %v670
  %4260 = vmatmul.mubr.bf16.gmra.mxu0 %v669
  %v4261 = vpop.f32.mrf.mxu0
  %v4262 = vadd.f32 %v4221, %v4261
  %v4263 = vpop.f32.mrf.mxu0
  %v4264 = vadd.f32 %v4223, %v4263
  %v4265 = vpop.f32.mrf.mxu0
  %v4266 = vpop.f32.mrf.mxu0
  %4267 = vdwg.mxu0
  %4268 = vmatprep.subr.bf16.mxu0 %v2962
  %4269 = vmatpush1.bf16.msra.mxu0 %v2961
  %4270 = vmatprep.subr.bf16.mxu0 %v2958
  %4271 = vmatpush1.bf16.msra.mxu0 %v2957
  %4272 = vmatprep.subr.bf16.mxu0 %v2954
  %4273 = vmatpush1.bf16.msra.mxu0 %v2953
  %4274 = vmatprep.subr.bf16.mxu0 %v2950
  %4275 = vmatpush1.bf16.msra.mxu0 %v2949
  %4276 = vmatprep.subr.bf16.mxu0 %v2946
  %4277 = vmatpush1.bf16.msra.mxu0 %v2945
  %4278 = vmatprep.subr.bf16.mxu0 %v2942
  %4279 = vmatpush1.bf16.msra.mxu0 %v2941
  %4280 = vmatprep.subr.bf16.mxu0 %v2938
  %4281 = vmatpush1.bf16.msra.mxu0 %v2937
  %4282 = vmatprep.subr.bf16.mxu0 %v2934
  %4283 = vmatpush1.bf16.msra.mxu0 %v2933
  %4284 = vmatprep.subr.bf16.mxu0 %v2994
  %4285 = vmatpush2.bf16.msra.mxu0 %v2993
  %4286 = vmatprep.subr.bf16.mxu0 %v2990
  %4287 = vmatpush2.bf16.msra.mxu0 %v2989
  %4288 = vmatprep.subr.bf16.mxu0 %v2986
  %4289 = vmatpush2.bf16.msra.mxu0 %v2985
  %4290 = vmatprep.subr.bf16.mxu0 %v2982
  %4291 = vmatpush2.bf16.msra.mxu0 %v2981
  %4292 = vmatprep.subr.bf16.mxu0 %v2978
  %4293 = vmatpush2.bf16.msra.mxu0 %v2977
  %4294 = vmatprep.subr.bf16.mxu0 %v2974
  %4295 = vmatpush2.bf16.msra.mxu0 %v2973
  %4296 = vmatprep.subr.bf16.mxu0 %v2970
  %4297 = vmatpush2.bf16.msra.mxu0 %v2969
  %4298 = vmatprep.subr.bf16.mxu0 %v2966
  %4299 = vmatpush2.bf16.msra.mxu0 %v2965
  %4300 = vmatprep.mubr.bf16.mxu0 %v672
  %4301 = vmatmul.mubr.bf16.gmra.mxu0 %v671
  %v4302 = vpop.f32.mrf.mxu0
  %v4303 = vadd.f32 %v4262, %v4302
  %v4304 = vpop.f32.mrf.mxu0
  %v4305 = vadd.f32 %v4264, %v4304
  %v4306 = vpop.f32.mrf.mxu0
  %v4307 = vpop.f32.mrf.mxu0
  %4308 = vdwg.mxu0
  %v4309 = vmax.f32 %v3934, 0.0
  %v4310 = vmax.f32 %v3936, 0.0
  %v4311 = vmax.f32 %v4303, 0.0
  %v4312 = vmax.f32 %v4305, 0.0
  %v4313 = vpack.c.bf16 %v4309, %v4309
  %v4314 = vpack.c.bf16 %v4310, %v4310
  %v4315 = vpack.c.bf16 %v4311, %v4311
  %v4316 = vpack.c.bf16 %v4312, %v4312
  %v4317 = vld [vmem:[%s3] sm:$0xf]
  %v4318 = vld [vmem:[%s3 + $0x4] sm:$0xf]
  %v4319 = vld [vmem:[%s3 + $0x8] sm:$0xf]
  %v4320 = vld [vmem:[%s3 + $0xc] sm:$0xf]
  %v4321 = vld [vmem:[%s3 + $0x10] sm:$0xf]
  %v4322 = vld [vmem:[%s3 + $0x14] sm:$0xf]
  %v4323 = vld [vmem:[%s3 + $0x18] sm:$0xf]
  %v4324 = vld [vmem:[%s3 + $0x1c] sm:$0xf]
  %v4325 = vld [vmem:[%s3 + $0x20] sm:$0xf]
  %v4326 = vld [vmem:[%s3 + $0x24] sm:$0xf]
  %v4327 = vld [vmem:[%s3 + $0x28] sm:$0xf]
  %v4328 = vld [vmem:[%s3 + $0x2c] sm:$0xf]
  %v4329 = vld [vmem:[%s3 + $0x30] sm:$0xf]
  %v4330 = vld [vmem:[%s3 + $0x34] sm:$0xf]
  %v4331 = vld [vmem:[%s3 + $0x38] sm:$0xf]
  %v4332 = vld [vmem:[%s3 + $0x3c] sm:$0xf]
  %v4333 = vld [vmem:[%s3 + $0x40] sm:$0xf]
  %v4334 = vld [vmem:[%s3 + $0x44] sm:$0xf]
  %v4335 = vld [vmem:[%s3 + $0x48] sm:$0xf]
  %v4336 = vld [vmem:[%s3 + $0x4c] sm:$0xf]
  %v4337 = vld [vmem:[%s3 + $0x50] sm:$0xf]
  %v4338 = vld [vmem:[%s3 + $0x54] sm:$0xf]
  %v4339 = vld [vmem:[%s3 + $0x58] sm:$0xf]
  %v4340 = vld [vmem:[%s3 + $0x5c] sm:$0xf]
  %v4341 = vld [vmem:[%s3 + $0x60] sm:$0xf]
  %v4342 = vld [vmem:[%s3 + $0x64] sm:$0xf]
  %v4343 = vld [vmem:[%s3 + $0x68] sm:$0xf]
  %v4344 = vld [vmem:[%s3 + $0x6c] sm:$0xf]
  %v4345 = vld [vmem:[%s3 + $0x70] sm:$0xf]
  %v4346 = vld [vmem:[%s3 + $0x74] sm:$0xf]
  %v4347 = vld [vmem:[%s3 + $0x78] sm:$0xf]
  %v4348 = vld [vmem:[%s3 + $0x7c] sm:$0xf]
  %v4349 = vld [vmem:[%s3 + $0x80] sm:$0xf]
  %v4350 = vld [vmem:[%s3 + $0x84] sm:$0xf]
  %v4351 = vld [vmem:[%s3 + $0x88] sm:$0xf]
  %v4352 = vld [vmem:[%s3 + $0x8c] sm:$0xf]
  %v4353 = vld [vmem:[%s3 + $0x90] sm:$0xf]
  %v4354 = vld [vmem:[%s3 + $0x94] sm:$0xf]
  %v4355 = vld [vmem:[%s3 + $0x98] sm:$0xf]
  %v4356 = vld [vmem:[%s3 + $0x9c] sm:$0xf]
  %v4357 = vld [vmem:[%s3 + $0xa0] sm:$0xf]
  %v4358 = vld [vmem:[%s3 + $0xa4] sm:$0xf]
  %v4359 = vld [vmem:[%s3 + $0xa8] sm:$0xf]
  %v4360 = vld [vmem:[%s3 + $0xac] sm:$0xf]
  %v4361 = vld [vmem:[%s3 + $0xb0] sm:$0xf]
  %v4362 = vld [vmem:[%s3 + $0xb4] sm:$0xf]
  %v4363 = vld [vmem:[%s3 + $0xb8] sm:$0xf]
  %v4364 = vld [vmem:[%s3 + $0xbc] sm:$0xf]
  %v4365 = vld [vmem:[%s3 + $0xc0] sm:$0xf]
  %v4366 = vld [vmem:[%s3 + $0xc4] sm:$0xf]
  %v4367 = vld [vmem:[%s3 + $0xc8] sm:$0xf]
  %v4368 = vld [vmem:[%s3 + $0xcc] sm:$0xf]
  %v4369 = vld [vmem:[%s3 + $0xd0] sm:$0xf]
  %v4370 = vld [vmem:[%s3 + $0xd4] sm:$0xf]
  %v4371 = vld [vmem:[%s3 + $0xd8] sm:$0xf]
  %v4372 = vld [vmem:[%s3 + $0xdc] sm:$0xf]
  %v4373 = vld [vmem:[%s3 + $0xe0] sm:$0xf]
  %v4374 = vld [vmem:[%s3 + $0xe4] sm:$0xf]
  %v4375 = vld [vmem:[%s3 + $0xe8] sm:$0xf]
  %v4376 = vld [vmem:[%s3 + $0xec] sm:$0xf]
  %v4377 = vld [vmem:[%s3 + $0xf0] sm:$0xf]
  %v4378 = vld [vmem:[%s3 + $0xf4] sm:$0xf]
  %v4379 = vld [vmem:[%s3 + $0xf8] sm:$0xf]
  %v4380 = vld [vmem:[%s3 + $0xfc] sm:$0xf]
  %v4381 = vld [vmem:[%s4] sm:$0x1]
  %v4383 = vlaneseq
  %v4384 = vshrl.u32 %v4383, 7
  %v4385 = vsub.s32 0, %v4384
  %v4386 = vrot.slane %v4381, %v4385
  %v4452 = vunpack.c.l.b16 %v4317
  %v4453 = vunpack.c.l.b16 %v4318
  %v4454 = vunpack.c.l.b16 %v4319
  %v4455 = vunpack.c.l.b16 %v4320
  %v4456 = vunpack.c.l.b16 %v4321
  %v4457 = vunpack.c.l.b16 %v4322
  %v4458 = vunpack.c.l.b16 %v4323
  %v4459 = vunpack.c.l.b16 %v4324
  %v4460 = vunpack.c.l.b16 %v4325
  %v4461 = vunpack.c.l.b16 %v4326
  %v4462 = vunpack.c.l.b16 %v4327
  %v4463 = vunpack.c.l.b16 %v4328
  %v4464 = vunpack.c.l.b16 %v4329
  %v4465 = vunpack.c.l.b16 %v4330
  %v4466 = vunpack.c.l.b16 %v4331
  %v4467 = vunpack.c.l.b16 %v4332
  %v4468 = vunpack.c.l.b16 %v4333
  %v4469 = vunpack.c.l.b16 %v4334
  %v4470 = vunpack.c.l.b16 %v4335
  %v4471 = vunpack.c.l.b16 %v4336
  %v4472 = vunpack.c.l.b16 %v4337
  %v4473 = vunpack.c.l.b16 %v4338
  %v4474 = vunpack.c.l.b16 %v4339
  %v4475 = vunpack.c.l.b16 %v4340
  %v4476 = vunpack.c.l.b16 %v4341
  %v4477 = vunpack.c.l.b16 %v4342
  %v4478 = vunpack.c.l.b16 %v4343
  %v4479 = vunpack.c.l.b16 %v4344
  %v4480 = vunpack.c.l.b16 %v4345
  %v4481 = vunpack.c.l.b16 %v4346
  %v4482 = vunpack.c.l.b16 %v4347
  %v4483 = vunpack.c.l.b16 %v4348
  %v4484 = vunpack.c.l.b16 %v4349
  %v4485 = vunpack.c.l.b16 %v4350
  %v4486 = vunpack.c.l.b16 %v4351
  %v4487 = vunpack.c.l.b16 %v4352
  %v4488 = vunpack.c.l.b16 %v4353
  %v4489 = vunpack.c.l.b16 %v4354
  %v4490 = vunpack.c.l.b16 %v4355
  %v4491 = vunpack.c.l.b16 %v4356
  %v4492 = vunpack.c.l.b16 %v4357
  %v4493 = vunpack.c.l.b16 %v4358
  %v4494 = vunpack.c.l.b16 %v4359
  %v4495 = vunpack.c.l.b16 %v4360
  %v4496 = vunpack.c.l.b16 %v4361
  %v4497 = vunpack.c.l.b16 %v4362
  %v4498 = vunpack.c.l.b16 %v4363
  %v4499 = vunpack.c.l.b16 %v4364
  %v4500 = vunpack.c.l.b16 %v4365
  %v4501 = vunpack.c.l.b16 %v4366
  %v4502 = vunpack.c.l.b16 %v4367
  %v4503 = vunpack.c.l.b16 %v4368
  %v4504 = vunpack.c.l.b16 %v4369
  %v4505 = vunpack.c.l.b16 %v4370
  %v4506 = vunpack.c.l.b16 %v4371
  %v4507 = vunpack.c.l.b16 %v4372
  %v4508 = vunpack.c.l.b16 %v4373
  %v4509 = vunpack.c.l.b16 %v4374
  %v4510 = vunpack.c.l.b16 %v4375
  %v4511 = vunpack.c.l.b16 %v4376
  %v4512 = vunpack.c.l.b16 %v4377
  %v4513 = vunpack.c.l.b16 %v4378
  %v4514 = vunpack.c.l.b16 %v4379
  %v4515 = vunpack.c.l.b16 %v4380
  %v4516 = vpack.c.b16 %v4453, %v4452
  %v4517 = vpack.c.b16 %v4455, %v4454
  %v4518 = vpack.c.b16 %v4457, %v4456
  %v4519 = vpack.c.b16 %v4459, %v4458
  %v4520 = vpack.c.b16 %v4461, %v4460
  %v4521 = vpack.c.b16 %v4463, %v4462
  %v4522 = vpack.c.b16 %v4465, %v4464
  %v4523 = vpack.c.b16 %v4467, %v4466
  %v4524 = vpack.c.b16 %v4469, %v4468
  %v4525 = vpack.c.b16 %v4471, %v4470
  %v4526 = vpack.c.b16 %v4473, %v4472
  %v4527 = vpack.c.b16 %v4475, %v4474
  %v4528 = vpack.c.b16 %v4477, %v4476
  %v4529 = vpack.c.b16 %v4479, %v4478
  %v4530 = vpack.c.b16 %v4481, %v4480
  %v4531 = vpack.c.b16 %v4483, %v4482
  %v4532 = vpack.c.b16 %v4485, %v4484
  %v4533 = vpack.c.b16 %v4487, %v4486
  %v4534 = vpack.c.b16 %v4489, %v4488
  %v4535 = vpack.c.b16 %v4491, %v4490
  %v4536 = vpack.c.b16 %v4493, %v4492
  %v4537 = vpack.c.b16 %v4495, %v4494
  %v4538 = vpack.c.b16 %v4497, %v4496
  %v4539 = vpack.c.b16 %v4499, %v4498
  %v4540 = vpack.c.b16 %v4501, %v4500
  %v4541 = vpack.c.b16 %v4503, %v4502
  %v4542 = vpack.c.b16 %v4505, %v4504
  %v4543 = vpack.c.b16 %v4507, %v4506
  %v4544 = vpack.c.b16 %v4509, %v4508
  %v4545 = vpack.c.b16 %v4511, %v4510
  %v4546 = vpack.c.b16 %v4513, %v4512
  %v4547 = vpack.c.b16 %v4515, %v4514
  %4580 = vmatprep.subr.bf16.mxu0 0
  %4581 = vmatpush1.bf16.msra.mxu0 %v4523
  %4582 = vmatprep.subr.bf16.mxu0 0
  %4583 = vmatpush1.bf16.msra.mxu0 %v4522
  %4584 = vmatprep.subr.bf16.mxu0 0
  %4585 = vmatpush1.bf16.msra.mxu0 %v4521
  %4586 = vmatprep.subr.bf16.mxu0 0
  %4587 = vmatpush1.bf16.msra.mxu0 %v4520
  %4588 = vmatprep.subr.bf16.mxu0 0
  %4589 = vmatpush1.bf16.msra.mxu0 %v4519
  %4590 = vmatprep.subr.bf16.mxu0 0
  %4591 = vmatpush1.bf16.msra.mxu0 %v4518
  %4592 = vmatprep.subr.bf16.mxu0 0
  %4593 = vmatpush1.bf16.msra.mxu0 %v4517
  %4594 = vmatprep.subr.bf16.mxu0 0
  %4595 = vmatpush1.bf16.msra.mxu0 %v4516
  %4596 = vmatprep.subr.bf16.mxu0 0
  %4597 = vmatpush2.bf16.msra.mxu0 %v4531
  %4598 = vmatprep.subr.bf16.mxu0 0
  %4599 = vmatpush2.bf16.msra.mxu0 %v4530
  %4600 = vmatprep.subr.bf16.mxu0 0
  %4601 = vmatpush2.bf16.msra.mxu0 %v4529
  %4602 = vmatprep.subr.bf16.mxu0 0
  %4603 = vmatpush2.bf16.msra.mxu0 %v4528
  %4604 = vmatprep.subr.bf16.mxu0 0
  %4605 = vmatpush2.bf16.msra.mxu0 %v4527
  %4606 = vmatprep.subr.bf16.mxu0 0
  %4607 = vmatpush2.bf16.msra.mxu0 %v4526
  %4608 = vmatprep.subr.bf16.mxu0 0
  %4609 = vmatpush2.bf16.msra.mxu0 %v4525
  %4610 = vmatprep.subr.bf16.mxu0 0
  %4611 = vmatpush2.bf16.msra.mxu0 %v4524
  %4612 = vmatprep.mubr.bf16.mxu0 %v4314
  %4613 = vmatmul.mubr.bf16.gmra.mxu0 %v4313
  %v4614 = vpop.f32.mrf.mxu0
  %v4615 = vadd.f32 %v4386, %v4614
  %v4616 = vpop.f32.mrf.mxu0
  %v4617 = vpop.f32.mrf.mxu0
  %v4618 = vpop.f32.mrf.mxu0
  %4619 = vdwg.mxu0
  %4620 = vmatprep.subr.bf16.mxu0 0
  %4621 = vmatpush1.bf16.msra.mxu0 %v4539
  %4622 = vmatprep.subr.bf16.mxu0 0
  %4623 = vmatpush1.bf16.msra.mxu0 %v4538
  %4624 = vmatprep.subr.bf16.mxu0 0
  %4625 = vmatpush1.bf16.msra.mxu0 %v4537
  %4626 = vmatprep.subr.bf16.mxu0 0
  %4627 = vmatpush1.bf16.msra.mxu0 %v4536
  %4628 = vmatprep.subr.bf16.mxu0 0
  %4629 = vmatpush1.bf16.msra.mxu0 %v4535
  %4630 = vmatprep.subr.bf16.mxu0 0
  %4631 = vmatpush1.bf16.msra.mxu0 %v4534
  %4632 = vmatprep.subr.bf16.mxu0 0
  %4633 = vmatpush1.bf16.msra.mxu0 %v4533
  %4634 = vmatprep.subr.bf16.mxu0 0
  %4635 = vmatpush1.bf16.msra.mxu0 %v4532
  %4636 = vmatprep.subr.bf16.mxu0 0
  %4637 = vmatpush2.bf16.msra.mxu0 %v4547
  %4638 = vmatprep.subr.bf16.mxu0 0
  %4639 = vmatpush2.bf16.msra.mxu0 %v4546
  %4640 = vmatprep.subr.bf16.mxu0 0
  %4641 = vmatpush2.bf16.msra.mxu0 %v4545
  %4642 = vmatprep.subr.bf16.mxu0 0
  %4643 = vmatpush2.bf16.msra.mxu0 %v4544
  %4644 = vmatprep.subr.bf16.mxu0 0
  %4645 = vmatpush2.bf16.msra.mxu0 %v4543
  %4646 = vmatprep.subr.bf16.mxu0 0
  %4647 = vmatpush2.bf16.msra.mxu0 %v4542
  %4648 = vmatprep.subr.bf16.mxu0 0
  %4649 = vmatpush2.bf16.msra.mxu0 %v4541
  %4650 = vmatprep.subr.bf16.mxu0 0
  %4651 = vmatpush2.bf16.msra.mxu0 %v4540
  %4652 = vmatprep.mubr.bf16.mxu0 %v4316
  %4653 = vmatmul.mubr.bf16.gmra.mxu0 %v4315
  %v4654 = vpop.f32.mrf.mxu0
  %v4655 = vadd.f32 %v4615, %v4654
  %v4656 = vpop.f32.mrf.mxu0
  %v4657 = vpop.f32.mrf.mxu0
  %v4658 = vpop.f32.mrf.mxu0
  %4659 = vdwg.mxu0
  %4660 = vst [vmem:[%s5] sm:$0xff] %v4655
  // Predicated region
  $region22: #{dqn_forward.5} parent=0 // pred_check
    _
  $region23: #{dqn_forward.5} parent=0 // pred_check_branch
    %4662 = sbr.rel (0) target = $region25
  $region24: #{dqn_forward.5} parent=0 // pred_region
    _
  $region25: #{dqn_forward.5} parent=0 // pred_fallthru
    _
  // Predicated region
  $region26: #{dqn_forward.5} parent=0 // pred_check
    _
  $region27: #{dqn_forward.5} parent=0 // pred_check_branch
    %4664 = sbr.rel (0) target = $region29
  $region28: #{dqn_forward.5} parent=0 // pred_region
    _
  $region29: #{dqn_forward.5} parent=0 // pred_fallthru
    _

// kernel: dqn_forward.4
$region0: #{dqn_forward.4}
  #allocation0 [shape = 'u32[]', space=smem, size = 0x4, offset = 0x4, fixed_abs, tag = 'smem constant byte address 0x4 - core index']
  #allocation1 [shape = 'u32[144,128]{1,0:T(1,128)}', space=vmem, size = 0x12000, scoped, tag = 'internal scratch']
  #allocation2 [shape = 'f32[64,2048]{1,0:T(8,128)}', space=vmem, size = 0x80000, scoped, tag = 'scratch operand']
  #allocation3 [shape = 'f32[64,128]{1,0:T(8,128)}', space=vmem, size = 0x8000, scoped, tag = 'scratch operand']
  #allocation4 [shape = 'f32[48,1152]{1,0:T(8,128)}', space=vmem, size = 0x36000, scoped, tag = 'scratch operand']
  %s0 = inlined_call_operand.vmem [shape: bf16[2,20,8,512], index: 0, kind: input, shape index: {}]
  %s1 = inlined_call_operand.vmem [shape: bf16[2048,128], index: 1, kind: input, shape index: {}]
  %s2 = inlined_call_operand.vmem [shape: f32[1,128], index: 2, kind: input, shape index: {}]
  %s3 = inlined_call_operand.vmem [shape: bf16[1152,128], index: 3, kind: input, shape index: {}]
  %s4 = inlined_call_operand.vmem [shape: f32[1,128], index: 4, kind: input, shape index: {}]
  %s5 = inlined_call_operand.vmem [shape: bf16[2,48,128], index: 5, kind: output, shape index: {}]
  %s6 = sld [smem:[#allocation0]]
  $region53: #{dqn_forward.4} parent=0
    _
  %s8 = ssub.s32 1, %s6
  %s9 = scalar_select 0, %s8, %s6
  loop: start=0, step=1, limit=4
  $region2: #{dqn_forward.4} parent=0 // loop_pre_header
    _
  $region3: #{dqn_forward.4} parent=0 // loop_header
    %s11 = sphi 0, %s15
    %p12 = scmp.ge.s32.totalorder %s11, 4
    %s21 = sphi 0, %s23
    %s24 = sphi 0, %s21
    %s25 = sphi 0, %s24
    %s41 = sphi 0, %s25
    %s45 = sphi 0, %s45
    %s47 = sphi 0, %s45
    %s48 = sphi 0, %s47
    %s62 = sphi 0, %s48
    %s66 = sphi 0, %s66
    %s68 = sphi 0, %s66
    %s69 = sphi 0, %s68
    %s83 = sphi 0, %s69
    %s87 = sphi 0, %s87
    %s89 = sphi 0, %s87
    %s90 = sphi 0, %s89
    %s104 = sphi 0, %s90
    %s108 = sphi 0, %s108
    %s110 = sphi 0, %s108
    %s111 = sphi 0, %s110
    %s125 = sphi 0, %s111
    %s131 = sphi 0, %s133
    %s134 = sphi 0, %s131
    %s135 = sphi 0, %s134
    %s151 = sphi 0, %s135
  $region4: #{dqn_forward.4} parent=0 // loop_header_branch
    %14 = sbr.rel (%p12) target = $region8
  $region5: #{dqn_forward.4} parent=0 // loop_body
    %s16 = ssub.s32 %s11, 1
    %s17 = ssub.s32 %s11, 2
    %s18 = sadd.s32 %s11, 1
    %s19 = ssub.s32 %s11, %s18
    %p20 = scmp.eq.s32.totalorder %s19, 0
    %s22 = sadd.s32 %s21, 1
    %s23 = scalar_select %p20, %s21, %s22
    %p26 = pneg %p20
    %p27 = scmp.eq.s32.totalorder %s11, 1
    %p28 = por %p26, %p27
    %p29 = scmp.ne.s32.totalorder %s21, %s24
    %p30 = scmp.eq.s32.totalorder %s11, 0
    %p31 = por %p29, %p30
    %p32 = scmp.ne.s32.totalorder %s21, %s24
    %p33 = scmp.eq.s32.totalorder %s16, 1
    %p34 = por %p32, %p33
    %p35 = scmp.ne.s32.totalorder %s24, %s25
    %p36 = scmp.eq.s32.totalorder %s16, 0
    %p37 = por %p35, %p36
    %p38 = scmp.ne.s32.totalorder %s24, %s25
    %p39 = scmp.eq.s32.totalorder %s17, 1
    %p40 = por %p38, %p39
    %p42 = scmp.ne.s32.totalorder %s25, %s41
    %p43 = scmp.eq.s32.totalorder %s17, 0
    %p44 = por %p42, %p43
    %s46 = sadd.s32 %s45, 1
    %p49 = scmp.eq.s32.totalorder %s11, 1
    %p50 = scmp.ne.s32.totalorder %s45, %s47
    %p51 = scmp.eq.s32.totalorder %s11, 0
    %p52 = por %p50, %p51
    %p53 = scmp.ne.s32.totalorder %s45, %s47
    %p54 = scmp.eq.s32.totalorder %s16, 1
    %p55 = por %p53, %p54
    %p56 = scmp.ne.s32.totalorder %s47, %s48
    %p57 = scmp.eq.s32.totalorder %s16, 0
    %p58 = por %p56, %p57
    %p59 = scmp.ne.s32.totalorder %s47, %s48
    %p60 = scmp.eq.s32.totalorder %s17, 1
    %p61 = por %p59, %p60
    %p63 = scmp.ne.s32.totalorder %s48, %s62
    %p64 = scmp.eq.s32.totalorder %s17, 0
    %p65 = por %p63, %p64
    %s67 = sadd.s32 %s66, 1
    %p70 = scmp.eq.s32.totalorder %s11, 1
    %p71 = scmp.ne.s32.totalorder %s66, %s68
    %p72 = scmp.eq.s32.totalorder %s11, 0
    %p73 = por %p71, %p72
    %p74 = scmp.ne.s32.totalorder %s66, %s68
    %p75 = scmp.eq.s32.totalorder %s16, 1
    %p76 = por %p74, %p75
    %p77 = scmp.ne.s32.totalorder %s68, %s69
    %p78 = scmp.eq.s32.totalorder %s16, 0
    %p79 = por %p77, %p78
    %p80 = scmp.ne.s32.totalorder %s68, %s69
    %p81 = scmp.eq.s32.totalorder %s17, 1
    %p82 = por %p80, %p81
    %p84 = scmp.ne.s32.totalorder %s69, %s83
    %p85 = scmp.eq.s32.totalorder %s17, 0
    %p86 = por %p84, %p85
    %s88 = sadd.s32 %s87, 1
    %p91 = scmp.eq.s32.totalorder %s11, 1
    %p92 = scmp.ne.s32.totalorder %s87, %s89
    %p93 = scmp.eq.s32.totalorder %s11, 0
    %p94 = por %p92, %p93
    %p95 = scmp.ne.s32.totalorder %s87, %s89
    %p96 = scmp.eq.s32.totalorder %s16, 1
    %p97 = por %p95, %p96
    %p98 = scmp.ne.s32.totalorder %s89, %s90
    %p99 = scmp.eq.s32.totalorder %s16, 0
    %p100 = por %p98, %p99
    %p101 = scmp.ne.s32.totalorder %s89, %s90
    %p102 = scmp.eq.s32.totalorder %s17, 1
    %p103 = por %p101, %p102
    %p105 = scmp.ne.s32.totalorder %s90, %s104
    %p106 = scmp.eq.s32.totalorder %s17, 0
    %p107 = por %p105, %p106
    %s109 = sadd.s32 %s108, 1
    %p112 = scmp.eq.s32.totalorder %s11, 1
    %p113 = scmp.ne.s32.totalorder %s108, %s110
    %p114 = scmp.eq.s32.totalorder %s11, 0
    %p115 = por %p113, %p114
    %p116 = scmp.ne.s32.totalorder %s108, %s110
    %p117 = scmp.eq.s32.totalorder %s16, 1
    %p118 = por %p116, %p117
    %p119 = scmp.ne.s32.totalorder %s110, %s111
    %p120 = scmp.eq.s32.totalorder %s16, 0
    %p121 = por %p119, %p120
    %p122 = scmp.ne.s32.totalorder %s110, %s111
    %p123 = scmp.eq.s32.totalorder %s17, 1
    %p124 = por %p122, %p123
    %p126 = scmp.ne.s32.totalorder %s111, %s125
    %p127 = scmp.eq.s32.totalorder %s17, 0
    %p128 = por %p126, %p127
    %s129 = ssub.s32 %s11, %s18
    %p130 = scmp.eq.s32.totalorder %s129, 0
    %s132 = sadd.s32 %s131, 1
    %s133 = scalar_select %p130, %s131, %s132
    %p136 = pneg %p130
    %p137 = scmp.eq.s32.totalorder %s11, 1
    %p138 = por %p136, %p137
    %p139 = scmp.ne.s32.totalorder %s131, %s134
    %p140 = scmp.eq.s32.totalorder %s11, 0
    %p141 = por %p139, %p140
    %p142 = scmp.ne.s32.totalorder %s131, %s134
    %p143 = scmp.eq.s32.totalorder %s16, 1
    %p144 = por %p142, %p143
    %p145 = scmp.ne.s32.totalorder %s134, %s135
    %p146 = scmp.eq.s32.totalorder %s16, 0
    %p147 = por %p145, %p146
    %p148 = scmp.ne.s32.totalorder %s134, %s135
    %p149 = scmp.eq.s32.totalorder %s17, 1
    %p150 = por %p148, %p149
    %p152 = scmp.ne.s32.totalorder %s135, %s151
    %p153 = scmp.eq.s32.totalorder %s17, 0
    %p154 = por %p152, %p153
    %p155 = scmp.le.s32.totalorder 1, %s11
    %p156 = scmp.lt.s32.totalorder %s11, 3
    %p157 = pnand %p155, %p156
    %p158 = pneg %p157
    // Predicated region
    $region9: #{dqn_forward.4} parent=5 // pred_check
      _
    $region10: #{dqn_forward.4} parent=5 // pred_check_branch
      %160 = sbr.rel (%p157) target = $region12
    $region11: #{dqn_forward.4} parent=5 // pred_region
      %s161 = ssub.s32 %s11, 1
      // Predicated region
      $region13: #{dqn_forward.4} parent=11 // pred_check
        %p162 = pneg %p58
      $region14: #{dqn_forward.4} parent=11 // pred_check_branch
        %164 = sbr.rel (%p162) target = $region16
      $region15: #{dqn_forward.4} parent=11 // pred_region
        _
      $region16: #{dqn_forward.4} parent=11 // pred_fallthru
        _
      // Predicated region
      $region17: #{dqn_forward.4} parent=11 // pred_check
        %p165 = pneg %p79
      $region18: #{dqn_forward.4} parent=11 // pred_check_branch
        %167 = sbr.rel (%p165) target = $region20
      $region19: #{dqn_forward.4} parent=11 // pred_region
        _
      $region20: #{dqn_forward.4} parent=11 // pred_fallthru
        _
      // Predicated region
      $region21: #{dqn_forward.4} parent=11 // pred_check
        %p168 = pneg %p100
      $region22: #{dqn_forward.4} parent=11 // pred_check_branch
        %170 = sbr.rel (%p168) target = $region24
      $region23: #{dqn_forward.4} parent=11 // pred_region
        _
      $region24: #{dqn_forward.4} parent=11 // pred_fallthru
        _
      // Predicated region
      $region25: #{dqn_forward.4} parent=11 // pred_check
        %p171 = pneg %p121
      $region26: #{dqn_forward.4} parent=11 // pred_check_branch
        %173 = sbr.rel (%p171) target = $region28
      $region27: #{dqn_forward.4} parent=11 // pred_region
        _
      $region28: #{dqn_forward.4} parent=11 // pred_fallthru
        _
    $region12: #{dqn_forward.4} parent=5 // pred_fallthru
      _
    %p174 = scmp.lt.s32.totalorder %s11, 2
    // Predicated region
    $region29: #{dqn_forward.4} parent=5 // pred_check
      %p175 = pneg %p174
    $region30: #{dqn_forward.4} parent=5 // pred_check_branch
      %177 = sbr.rel (%p175) target = $region32
    $region31: #{dqn_forward.4} parent=5 // pred_region
      // Predicated region
      $region33: #{dqn_forward.4} parent=31 // pred_check
        %p178 = pneg %p31
      $region34: #{dqn_forward.4} parent=31 // pred_check_branch
        %180 = sbr.rel (%p178) target = $region36
      $region35: #{dqn_forward.4} parent=31 // pred_region
        %p181 = scmp.lt.s32.totalorder %s11, 1
        %s182 = scalar_select %p181, %s11, 1
        %s183 = smul.addr %s182, 80
        %s184 = smul.addr %s183, 4
        %s185 = scalar_lea.vmem %s0, %s184
      $region36: #{dqn_forward.4} parent=31 // pred_fallthru
        _
    $region32: #{dqn_forward.4} parent=5 // pred_fallthru
      _
    %p186 = scmp.le.s32.totalorder 1, %s11
    %p187 = scmp.lt.s32.totalorder %s11, 3
    %p188 = pnand %p186, %p187
    %p189 = pneg %p188
    // Predicated region
    $region37: #{dqn_forward.4} parent=5 // pred_check
      _
    $region38: #{dqn_forward.4} parent=5 // pred_check_branch
      %191 = sbr.rel (%p188) target = $region40
    $region39: #{dqn_forward.4} parent=5 // pred_region
      %s192 = ssub.s32 %s11, 1
      %p193 = scmp.lt.s32.totalorder %s16, 1
      %s194 = scalar_select %p193, %s16, 1
      %s195 = smul.addr %s194, 80
      %s196 = smul.addr %s195, 4
      %s197 = scalar_lea.vmem %s0, %s196
      %p198 = pneg %p37
      %p199 = pneg %p34
      %p200 = pneg %p58
      %p201 = pneg %p55
      %p202 = pneg %p79
      %p203 = pneg %p76
      %p204 = pneg %p100
      %p205 = pneg %p97
      %p206 = pneg %p121
      %p207 = pneg %p118
      %p208 = pneg %p147
      %p209 = pneg %p144
      %p210 = scmp.lt.s32.totalorder %s16, 1
      %s211 = scalar_select %p210, %s16, 1
      %s212 = smul.addr %s211, 6
      %s213 = smul.addr %s212, 4
      %s214 = scalar_lea.vmem %s5, %s213
      %p215 = scmp.lt.s32.totalorder %s16, 1
      %s216 = scalar_select %p215, %s16, 1
      %s217 = smul.addr %s216, 80
      %s218 = smul.addr %s217, 4
      %s219 = scalar_lea.vmem %s0, %s218
      %p220 = scmp.lt.s32.totalorder %s16, 1
      %s221 = scalar_select %p220, %s16, 1
      %s222 = smul.addr %s221, 6
      %s223 = smul.addr %s222, 4
      %s224 = scalar_lea.vmem %s5, %s223
      %v226 = vld [vmem:[%s219] sm:$0xff]
      %v227 = vld [vmem:[%s219 + $0x8] sm:$0xff]
      %v228 = vunpack.c.l.bf16 %v226
      %v229 = vunpack.c.h.bf16 %v226
      %v230 = vunpack.c.l.bf16 %v227
      %v231 = vunpack.c.h.bf16 %v227
      %232 = vst [vmem:[#allocation2] sm:$0xff] %v228
      %233 = vst [vmem:[#allocation2 + $0x8] sm:$0xff] %v229
      %234 = vst [vmem:[#allocation2 + $0x10] sm:$0xff] %v230
      %235 = vst [vmem:[#allocation2 + $0x18] sm:$0xff] %v231
      %s236 = scalar_lea.vmem %s219, 16
      %v237 = vld [vmem:[%s236] sm:$0xff]
      %v238 = vld [vmem:[%s236 + $0x8] sm:$0xff]
      %v239 = vunpack.c.l.bf16 %v237
      %v240 = vunpack.c.h.bf16 %v237
      %v241 = vunpack.c.l.bf16 %v238
      %v242 = vunpack.c.h.bf16 %v238
      %243 = vst [vmem:[#allocation2 + $0x80] sm:$0xff] %v239
      %244 = vst [vmem:[#allocation2 + $0x88] sm:$0xff] %v240
      %245 = vst [vmem:[#allocation2 + $0x90] sm:$0xff] %v241
      %246 = vst [vmem:[#allocation2 + $0x98] sm:$0xff] %v242
      %s247 = scalar_lea.vmem %s219, 32
      %v248 = vld [vmem:[%s247] sm:$0xff]
      %v249 = vld [vmem:[%s247 + $0x8] sm:$0xff]
      %v250 = vunpack.c.l.bf16 %v248
      %v251 = vunpack.c.h.bf16 %v248
      %v252 = vunpack.c.l.bf16 %v249
      %v253 = vunpack.c.h.bf16 %v249
      %254 = vst [vmem:[#allocation2 + $0x100] sm:$0xff] %v250
      %255 = vst [vmem:[#allocation2 + $0x108] sm:$0xff] %v251
      %256 = vst [vmem:[#allocation2 + $0x110] sm:$0xff] %v252
      %257 = vst [vmem:[#allocation2 + $0x118] sm:$0xff] %v253
      %s258 = scalar_lea.vmem %s219, 48
      %v259 = vld [vmem:[%s258] sm:$0xff]
      %v260 = vld [vmem:[%s258 + $0x8] sm:$0xff]
      %v261 = vunpack.c.l.bf16 %v259
      %v262 = vunpack.c.h.bf16 %v259
      %v263 = vunpack.c.l.bf16 %v260
      %v264 = vunpack.c.h.bf16 %v260
      %265 = vst [vmem:[#allocation2 + $0x180] sm:$0xff] %v261
      %266 = vst [vmem:[#allocation2 + $0x188] sm:$0xff] %v262
      %267 = vst [vmem:[#allocation2 + $0x190] sm:$0xff] %v263
      %268 = vst [vmem:[#allocation2 + $0x198] sm:$0xff] %v264
      %s269 = scalar_lea.vmem %s219, 64
      %v270 = vld [vmem:[%s269] sm:$0xff]
      %v271 = vld [vmem:[%s269 + $0x8] sm:$0xff]
      %v272 = vunpack.c.l.bf16 %v270
      %v273 = vunpack.c.h.bf16 %v270
      %v274 = vunpack.c.l.bf16 %v271
      %v275 = vunpack.c.h.bf16 %v271
      %276 = vst [vmem:[#allocation2 + $0x200] sm:$0xff] %v272
      %277 = vst [vmem:[#allocation2 + $0x208] sm:$0xff] %v273
      %278 = vst [vmem:[#allocation2 + $0x210] sm:$0xff] %v274
      %279 = vst [vmem:[#allocation2 + $0x218] sm:$0xff] %v275
      %s280 = scalar_lea.vmem %s219, 80
      %v281 = vld [vmem:[%s280] sm:$0xff]
      %v282 = vld [vmem:[%s280 + $0x8] sm:$0xff]
      %v283 = vunpack.c.l.bf16 %v281
      %v284 = vunpack.c.h.bf16 %v281
      %v285 = vunpack.c.l.bf16 %v282
      %v286 = vunpack.c.h.bf16 %v282
      %287 = vst [vmem:[#allocation2 + $0x280] sm:$0xff] %v283
      %288 = vst [vmem:[#allocation2 + $0x288] sm:$0xff] %v284
      %289 = vst [vmem:[#allocation2 + $0x290] sm:$0xff] %v285
      %290 = vst [vmem:[#allocation2 + $0x298] sm:$0xff] %v286
      %s291 = scalar_lea.vmem %s219, 96
      %v292 = vld [vmem:[%s291] sm:$0xff]
      %v293 = vld [vmem:[%s291 + $0x8] sm:$0xff]
      %v294 = vunpack.c.l.bf16 %v292
      %v295 = vunpack.c.h.bf16 %v292
      %v296 = vunpack.c.l.bf16 %v293
      %v297 = vunpack.c.h.bf16 %v293
      %298 = vst [vmem:[#allocation2 + $0x300] sm:$0xff] %v294
      %299 = vst [vmem:[#allocation2 + $0x308] sm:$0xff] %v295
      %300 = vst [vmem:[#allocation2 + $0x310] sm:$0xff] %v296
      %301 = vst [vmem:[#allocation2 + $0x318] sm:$0xff] %v297
      %s302 = scalar_lea.vmem %s219, 112
      %v303 = vld [vmem:[%s302] sm:$0xff]
      %v304 = vld [vmem:[%s302 + $0x8] sm:$0xff]
      %v305 = vunpack.c.l.bf16 %v303
      %v306 = vunpack.c.h.bf16 %v303
      %v307 = vunpack.c.l.bf16 %v304
      %v308 = vunpack.c.h.bf16 %v304
      %309 = vst [vmem:[#allocation2 + $0x380] sm:$0xff] %v305
      %310 = vst [vmem:[#allocation2 + $0x388] sm:$0xff] %v306
      %311 = vst [vmem:[#allocation2 + $0x390] sm:$0xff] %v307
      %312 = vst [vmem:[#allocation2 + $0x398] sm:$0xff] %v308
      %s313 = scalar_lea.vmem %s219, 160
      %v314 = vld [vmem:[%s313] sm:$0xff]
      %v315 = vld [vmem:[%s313 + $0x8] sm:$0xff]
      %v316 = vunpack.c.l.bf16 %v314
      %v317 = vunpack.c.h.bf16 %v314
      %v318 = vunpack.c.l.bf16 %v315
      %v319 = vunpack.c.h.bf16 %v315
      %320 = vst [vmem:[#allocation2 + $0x20] sm:$0xff] %v316
      %321 = vst [vmem:[#allocation2 + $0x28] sm:$0xff] %v317
      %322 = vst [vmem:[#allocation2 + $0x30] sm:$0xff] %v318
      %323 = vst [vmem:[#allocation2 + $0x38] sm:$0xff] %v319
      %s324 = scalar_lea.vmem %s219, 176
      %v325 = vld [vmem:[%s324] sm:$0xff]
      %v326 = vld [vmem:[%s324 + $0x8] sm:$0xff]
      %v327 = vunpack.c.l.bf16 %v325
      %v328 = vunpack.c.h.bf16 %v325
      %v329 = vunpack.c.l.bf16 %v326
      %v330 = vunpack.c.h.bf16 %v326
      %331 = vst [vmem:[#allocation2 + $0xa0] sm:$0xff] %v327
      %332 = vst [vmem:[#allocation2 + $0xa8] sm:$0xff] %v328
      %333 = vst [vmem:[#allocation2 + $0xb0] sm:$0xff] %v329
      %334 = vst [vmem:[#allocation2 + $0xb8] sm:$0xff] %v330
      %s335 = scalar_lea.vmem %s219, 192
      %v336 = vld [vmem:[%s335] sm:$0xff]
      %v337 = vld [vmem:[%s335 + $0x8] sm:$0xff]
      %v338 = vunpack.c.l.bf16 %v336
      %v339 = vunpack.c.h.bf16 %v336
      %v340 = vunpack.c.l.bf16 %v337
      %v341 = vunpack.c.h.bf16 %v337
      %342 = vst [vmem:[#allocation2 + $0x120] sm:$0xff] %v338
      %343 = vst [vmem:[#allocation2 + $0x128] sm:$0xff] %v339
      %344 = vst [vmem:[#allocation2 + $0x130] sm:$0xff] %v340
      %345 = vst [vmem:[#allocation2 + $0x138] sm:$0xff] %v341
      %s346 = scalar_lea.vmem %s219, 208
      %v347 = vld [vmem:[%s346] sm:$0xff]
      %v348 = vld [vmem:[%s346 + $0x8] sm:$0xff]
      %v349 = vunpack.c.l.bf16 %v347
      %v350 = vunpack.c.h.bf16 %v347
      %v351 = vunpack.c.l.bf16 %v348
      %v352 = vunpack.c.h.bf16 %v348
      %353 = vst [vmem:[#allocation2 + $0x1a0] sm:$0xff] %v349
      %354 = vst [vmem:[#allocation2 + $0x1a8] sm:$0xff] %v350
      %355 = vst [vmem:[#allocation2 + $0x1b0] sm:$0xff] %v351
      %356 = vst [vmem:[#allocation2 + $0x1b8] sm:$0xff] %v352
      %s357 = scalar_lea.vmem %s219, 224
      %v358 = vld [vmem:[%s357] sm:$0xff]
      %v359 = vld [vmem:[%s357 + $0x8] sm:$0xff]
      %v360 = vunpack.c.l.bf16 %v358
      %v361 = vunpack.c.h.bf16 %v358
      %v362 = vunpack.c.l.bf16 %v359
      %v363 = vunpack.c.h.bf16 %v359
      %364 = vst [vmem:[#allocation2 + $0x220] sm:$0xff] %v360
      %365 = vst [vmem:[#allocation2 + $0x228] sm:$0xff] %v361
      %366 = vst [vmem:[#allocation2 + $0x230] sm:$0xff] %v362
      %367 = vst [vmem:[#allocation2 + $0x238] sm:$0xff] %v363
      %s368 = scalar_lea.vmem %s219, 240
      %v369 = vld [vmem:[%s368] sm:$0xff]
      %v370 = vld [vmem:[%s368 + $0x8] sm:$0xff]
      %v371 = vunpack.c.l.bf16 %v369
      %v372 = vunpack.c.h.bf16 %v369
      %v373 = vunpack.c.l.bf16 %v370
      %v374 = vunpack.c.h.bf16 %v370
      %375 = vst [vmem:[#allocation2 + $0x2a0] sm:$0xff] %v371
      %376 = vst [vmem:[#allocation2 + $0x2a8] sm:$0xff] %v372
      %377 = vst [vmem:[#allocation2 + $0x2b0] sm:$0xff] %v373
      %378 = vst [vmem:[#allocation2 + $0x2b8] sm:$0xff] %v374
      %s379 = scalar_lea.vmem %s219, 256
      %v380 = vld [vmem:[%s379] sm:$0xff]
      %v381 = vld [vmem:[%s379 + $0x8] sm:$0xff]
      %v382 = vunpack.c.l.bf16 %v380
      %v383 = vunpack.c.h.bf16 %v380
      %v384 = vunpack.c.l.bf16 %v381
      %v385 = vunpack.c.h.bf16 %v381
      %386 = vst [vmem:[#allocation2 + $0x320] sm:$0xff] %v382
      %387 = vst [vmem:[#allocation2 + $0x328] sm:$0xff] %v383
      %388 = vst [vmem:[#allocation2 + $0x330] sm:$0xff] %v384
      %389 = vst [vmem:[#allocation2 + $0x338] sm:$0xff] %v385
      %s390 = scalar_lea.vmem %s219, 272
      %v391 = vld [vmem:[%s390] sm:$0xff]
      %v392 = vld [vmem:[%s390 + $0x8] sm:$0xff]
      %v393 = vunpack.c.l.bf16 %v391
      %v394 = vunpack.c.h.bf16 %v391
      %v395 = vunpack.c.l.bf16 %v392
      %v396 = vunpack.c.h.bf16 %v392
      %397 = vst [vmem:[#allocation2 + $0x3a0] sm:$0xff] %v393
      %398 = vst [vmem:[#allocation2 + $0x3a8] sm:$0xff] %v394
      %399 = vst [vmem:[#allocation2 + $0x3b0] sm:$0xff] %v395
      %400 = vst [vmem:[#allocation2 + $0x3b8] sm:$0xff] %v396
      %v401 = vld [vmem:[%s236] sm:$0xff]
      %v402 = vld [vmem:[%s236 + $0x8] sm:$0xff]
      %v403 = vunpack.c.l.bf16 %v401
      %v404 = vunpack.c.h.bf16 %v401
      %v405 = vunpack.c.l.bf16 %v402
      %v406 = vunpack.c.h.bf16 %v402
      %407 = vst [vmem:[#allocation2 + $0x40] sm:$0xff] %v403
      %408 = vst [vmem:[#allocation2 + $0x48] sm:$0xff] %v404
      %409 = vst [vmem:[#allocation2 + $0x50] sm:$0xff] %v405
      %410 = vst [vmem:[#allocation2 + $0x58] sm:$0xff] %v406
      %v411 = vld [vmem:[%s247] sm:$0xff]
      %v412 = vld [vmem:[%s247 + $0x8] sm:$0xff]
      %v413 = vunpack.c.l.bf16 %v411
      %v414 = vunpack.c.h.bf16 %v411
      %v415 = vunpack.c.l.bf16 %v412
      %v416 = vunpack.c.h.bf16 %v412
      %417 = vst [vmem:[#allocation2 + $0xc0] sm:$0xff] %v413
      %418 = vst [vmem:[#allocation2 + $0xc8] sm:$0xff] %v414
      %419 = vst [vmem:[#allocation2 + $0xd0] sm:$0xff] %v415
      %420 = vst [vmem:[#allocation2 + $0xd8] sm:$0xff] %v416
      %v421 = vld [vmem:[%s258] sm:$0xff]
      %v422 = vld [vmem:[%s258 + $0x8] sm:$0xff]
      %v423 = vunpack.c.l.bf16 %v421
      %v424 = vunpack.c.h.bf16 %v421
      %v425 = vunpack.c.l.bf16 %v422
      %v426 = vunpack.c.h.bf16 %v422
      %427 = vst [vmem:[#allocation2 + $0x140] sm:$0xff] %v423
      %428 = vst [vmem:[#allocation2 + $0x148] sm:$0xff] %v424
      %429 = vst [vmem:[#allocation2 + $0x150] sm:$0xff] %v425
      %430 = vst [vmem:[#allocation2 + $0x158] sm:$0xff] %v426
      %v431 = vld [vmem:[%s269] sm:$0xff]
      %v432 = vld [vmem:[%s269 + $0x8] sm:$0xff]
      %v433 = vunpack.c.l.bf16 %v431
      %v434 = vunpack.c.h.bf16 %v431
      %v435 = vunpack.c.l.bf16 %v432
      %v436 = vunpack.c.h.bf16 %v432
      %437 = vst [vmem:[#allocation2 + $0x1c0] sm:$0xff] %v433
      %438 = vst [vmem:[#allocation2 + $0x1c8] sm:$0xff] %v434
      %439 = vst [vmem:[#allocation2 + $0x1d0] sm:$0xff] %v435
      %440 = vst [vmem:[#allocation2 + $0x1d8] sm:$0xff] %v436
      %v441 = vld [vmem:[%s280] sm:$0xff]
      %v442 = vld [vmem:[%s280 + $0x8] sm:$0xff]
      %v443 = vunpack.c.l.bf16 %v441
      %v444 = vunpack.c.h.bf16 %v441
      %v445 = vunpack.c.l.bf16 %v442
      %v446 = vunpack.c.h.bf16 %v442
      %447 = vst [vmem:[#allocation2 + $0x240] sm:$0xff] %v443
      %448 = vst [vmem:[#allocation2 + $0x248] sm:$0xff] %v444
      %449 = vst [vmem:[#allocation2 + $0x250] sm:$0xff] %v445
      %450 = vst [vmem:[#allocation2 + $0x258] sm:$0xff] %v446
      %v451 = vld [vmem:[%s291] sm:$0xff]
      %v452 = vld [vmem:[%s291 + $0x8] sm:$0xff]
      %v453 = vunpack.c.l.bf16 %v451
      %v454 = vunpack.c.h.bf16 %v451
      %v455 = vunpack.c.l.bf16 %v452
      %v456 = vunpack.c.h.bf16 %v452
      %457 = vst [vmem:[#allocation2 + $0x2c0] sm:$0xff] %v453
      %458 = vst [vmem:[#allocation2 + $0x2c8] sm:$0xff] %v454
      %459 = vst [vmem:[#allocation2 + $0x2d0] sm:$0xff] %v455
      %460 = vst [vmem:[#allocation2 + $0x2d8] sm:$0xff] %v456
      %v461 = vld [vmem:[%s302] sm:$0xff]
      %v462 = vld [vmem:[%s302 + $0x8] sm:$0xff]
      %v463 = vunpack.c.l.bf16 %v461
      %v464 = vunpack.c.h.bf16 %v461
      %v465 = vunpack.c.l.bf16 %v462
      %v466 = vunpack.c.h.bf16 %v462
      %467 = vst [vmem:[#allocation2 + $0x340] sm:$0xff] %v463
      %468 = vst [vmem:[#allocation2 + $0x348] sm:$0xff] %v464
      %469 = vst [vmem:[#allocation2 + $0x350] sm:$0xff] %v465
      %470 = vst [vmem:[#allocation2 + $0x358] sm:$0xff] %v466
      %s471 = scalar_lea.vmem %s219, 128
      %v472 = vld [vmem:[%s471] sm:$0xff]
      %v473 = vld [vmem:[%s471 + $0x8] sm:$0xff]
      %v474 = vunpack.c.l.bf16 %v472
      %v475 = vunpack.c.h.bf16 %v472
      %v476 = vunpack.c.l.bf16 %v473
      %v477 = vunpack.c.h.bf16 %v473
      %478 = vst [vmem:[#allocation2 + $0x3c0] sm:$0xff] %v474
      %479 = vst [vmem:[#allocation2 + $0x3c8] sm:$0xff] %v475
      %480 = vst [vmem:[#allocation2 + $0x3d0] sm:$0xff] %v476
      %481 = vst [vmem:[#allocation2 + $0x3d8] sm:$0xff] %v477
      %v482 = vld [vmem:[%s324] sm:$0xff]
      %v483 = vld [vmem:[%s324 + $0x8] sm:$0xff]
      %v484 = vunpack.c.l.bf16 %v482
      %v485 = vunpack.c.h.bf16 %v482
      %v486 = vunpack.c.l.bf16 %v483
      %v487 = vunpack.c.h.bf16 %v483
      %488 = vst [vmem:[#allocation2 + $0x60] sm:$0xff] %v484
      %489 = vst [vmem:[#allocation2 + $0x68] sm:$0xff] %v485
      %490 = vst [vmem:[#allocation2 + $0x70] sm:$0xff] %v486
      %491 = vst [vmem:[#allocation2 + $0x78] sm:$0xff] %v487
      %v492 = vld [vmem:[%s335] sm:$0xff]
      %v493 = vld [vmem:[%s335 + $0x8] sm:$0xff]
      %v494 = vunpack.c.l.bf16 %v492
      %v495 = vunpack.c.h.bf16 %v492
      %v496 = vunpack.c.l.bf16 %v493
      %v497 = vunpack.c.h.bf16 %v493
      %498 = vst [vmem:[#allocation2 + $0xe0] sm:$0xff] %v494
      %499 = vst [vmem:[#allocation2 + $0xe8] sm:$0xff] %v495
      %500 = vst [vmem:[#allocation2 + $0xf0] sm:$0xff] %v496
      %501 = vst [vmem:[#allocation2 + $0xf8] sm:$0xff] %v497
      %v502 = vld [vmem:[%s346] sm:$0xff]
      %v503 = vld [vmem:[%s346 + $0x8] sm:$0xff]
      %v504 = vunpack.c.l.bf16 %v502
      %v505 = vunpack.c.h.bf16 %v502
      %v506 = vunpack.c.l.bf16 %v503
      %v507 = vunpack.c.h.bf16 %v503
      %508 = vst [vmem:[#allocation2 + $0x160] sm:$0xff] %v504
      %509 = vst [vmem:[#allocation2 + $0x168] sm:$0xff] %v505
      %510 = vst [vmem:[#allocation2 + $0x170] sm:$0xff] %v506
      %511 = vst [vmem:[#allocation2 + $0x178] sm:$0xff] %v507
      %v512 = vld [vmem:[%s357] sm:$0xff]
      %v513 = vld [vmem:[%s357 + $0x8] sm:$0xff]
      %v514 = vunpack.c.l.bf16 %v512
      %v515 = vunpack.c.h.bf16 %v512
      %v516 = vunpack.c.l.bf16 %v513
      %v517 = vunpack.c.h.bf16 %v513
      %518 = vst [vmem:[#allocation2 + $0x1e0] sm:$0xff] %v514
      %519 = vst [vmem:[#allocation2 + $0x1e8] sm:$0xff] %v515
      %520 = vst [vmem:[#allocation2 + $0x1f0] sm:$0xff] %v516
      %521 = vst [vmem:[#allocation2 + $0x1f8] sm:$0xff] %v517
      %v522 = vld [vmem:[%s368] sm:$0xff]
      %v523 = vld [vmem:[%s368 + $0x8] sm:$0xff]
      %v524 = vunpack.c.l.bf16 %v522
      %v525 = vunpack.c.h.bf16 %v522
      %v526 = vunpack.c.l.bf16 %v523
      %v527 = vunpack.c.h.bf16 %v523
      %528 = vst [vmem:[#allocation2 + $0x260] sm:$0xff] %v524
      %529 = vst [vmem:[#allocation2 + $0x268] sm:$0xff] %v525
      %530 = vst [vmem:[#allocation2 + $0x270] sm:$0xff] %v526
      %531 = vst [vmem:[#allocation2 + $0x278] sm:$0xff] %v527
      %v532 = vld [vmem:[%s379] sm:$0xff]
      %v533 = vld [vmem:[%s379 + $0x8] sm:$0xff]
      %v534 = vunpack.c.l.bf16 %v532
      %v535 = vunpack.c.h.bf16 %v532
      %v536 = vunpack.c.l.bf16 %v533
      %v537 = vunpack.c.h.bf16 %v533
      %538 = vst [vmem:[#allocation2 + $0x2e0] sm:$0xff] %v534
      %539 = vst [vmem:[#allocation2 + $0x2e8] sm:$0xff] %v535
      %540 = vst [vmem:[#allocation2 + $0x2f0] sm:$0xff] %v536
      %541 = vst [vmem:[#allocation2 + $0x2f8] sm:$0xff] %v537
      %v542 = vld [vmem:[%s390] sm:$0xff]
      %v543 = vld [vmem:[%s390 + $0x8] sm:$0xff]
      %v544 = vunpack.c.l.bf16 %v542
      %v545 = vunpack.c.h.bf16 %v542
      %v546 = vunpack.c.l.bf16 %v543
      %v547 = vunpack.c.h.bf16 %v543
      %548 = vst [vmem:[#allocation2 + $0x360] sm:$0xff] %v544
      %549 = vst [vmem:[#allocation2 + $0x368] sm:$0xff] %v545
      %550 = vst [vmem:[#allocation2 + $0x370] sm:$0xff] %v546
      %551 = vst [vmem:[#allocation2 + $0x378] sm:$0xff] %v547
      %s552 = scalar_lea.vmem %s219, 288
      %v553 = vld [vmem:[%s552] sm:$0xff]
      %v554 = vld [vmem:[%s552 + $0x8] sm:$0xff]
      %v555 = vunpack.c.l.bf16 %v553
      %v556 = vunpack.c.h.bf16 %v553
      %v557 = vunpack.c.l.bf16 %v554
      %v558 = vunpack.c.h.bf16 %v554
      %559 = vst [vmem:[#allocation2 + $0x3e0] sm:$0xff] %v555
      %560 = vst [vmem:[#allocation2 + $0x3e8] sm:$0xff] %v556
      %561 = vst [vmem:[#allocation2 + $0x3f0] sm:$0xff] %v557
      %562 = vst [vmem:[#allocation2 + $0x3f8] sm:$0xff] %v558
      %v563 = vld [vmem:[#allocation2] sm:$0xff]
      %v564 = vld [vmem:[#allocation2 + $0x8] sm:$0xff]
      %v565 = vld [vmem:[#allocation2 + $0x10] sm:$0xff]
      %v566 = vld [vmem:[#allocation2 + $0x18] sm:$0xff]
      %v567 = vld [vmem:[#allocation2 + $0x20] sm:$0xff]
      %v568 = vld [vmem:[#allocation2 + $0x28] sm:$0xff]
      %v569 = vld [vmem:[#allocation2 + $0x30] sm:$0xff]
      %v570 = vld [vmem:[#allocation2 + $0x38] sm:$0xff]
      %v571 = vld [vmem:[#allocation2 + $0x40] sm:$0xff]
      %v572 = vld [vmem:[#allocation2 + $0x48] sm:$0xff]
      %v573 = vld [vmem:[#allocation2 + $0x50] sm:$0xff]
      %v574 = vld [vmem:[#allocation2 + $0x58] sm:$0xff]
      %v575 = vld [vmem:[#allocation2 + $0x60] sm:$0xff]
      %v576 = vld [vmem:[#allocation2 + $0x68] sm:$0xff]
      %v577 = vld [vmem:[#allocation2 + $0x70] sm:$0xff]
      %v578 = vld [vmem:[#allocation2 + $0x78] sm:$0xff]
      %v579 = vld [vmem:[#allocation2 + $0x80] sm:$0xff]
      %v580 = vld [vmem:[#allocation2 + $0x88] sm:$0xff]
      %v581 = vld [vmem:[#allocation2 + $0x90] sm:$0xff]
      %v582 = vld [vmem:[#allocation2 + $0x98] sm:$0xff]
      %v583 = vld [vmem:[#allocation2 + $0xa0] sm:$0xff]
      %v584 = vld [vmem:[#allocation2 + $0xa8] sm:$0xff]
      %v585 = vld [vmem:[#allocation2 + $0xb0] sm:$0xff]
      %v586 = vld [vmem:[#allocation2 + $0xb8] sm:$0xff]
      %v587 = vld [vmem:[#allocation2 + $0xc0] sm:$0xff]
      %v588 = vld [vmem:[#allocation2 + $0xc8] sm:$0xff]
      %v589 = vld [vmem:[#allocation2 + $0xd0] sm:$0xff]
      %v590 = vld [vmem:[#allocation2 + $0xd8] sm:$0xff]
      %v591 = vld [vmem:[#allocation2 + $0xe0] sm:$0xff]
      %v592 = vld [vmem:[#allocation2 + $0xe8] sm:$0xff]
      %v593 = vld [vmem:[#allocation2 + $0xf0] sm:$0xff]
      %v594 = vld [vmem:[#allocation2 + $0xf8] sm:$0xff]
      %v595 = vld [vmem:[#allocation2 + $0x100] sm:$0xff]
      %v596 = vld [vmem:[#allocation2 + $0x108] sm:$0xff]
      %v597 = vld [vmem:[#allocation2 + $0x110] sm:$0xff]
      %v598 = vld [vmem:[#allocation2 + $0x118] sm:$0xff]
      %v599 = vld [vmem:[#allocation2 + $0x120] sm:$0xff]
      %v600 = vld [vmem:[#allocation2 + $0x128] sm:$0xff]
      %v601 = vld [vmem:[#allocation2 + $0x130] sm:$0xff]
      %v602 = vld [vmem:[#allocation2 + $0x138] sm:$0xff]
      %v603 = vld [vmem:[#allocation2 + $0x140] sm:$0xff]
      %v604 = vld [vmem:[#allocation2 + $0x148] sm:$0xff]
      %v605 = vld [vmem:[#allocation2 + $0x150] sm:$0xff]
      %v606 = vld [vmem:[#allocation2 + $0x158] sm:$0xff]
      %v607 = vld [vmem:[#allocation2 + $0x160] sm:$0xff]
      %v608 = vld [vmem:[#allocation2 + $0x168] sm:$0xff]
      %v609 = vld [vmem:[#allocation2 + $0x170] sm:$0xff]
      %v610 = vld [vmem:[#allocation2 + $0x178] sm:$0xff]
      %v611 = vld [vmem:[#allocation2 + $0x180] sm:$0xff]
      %v612 = vld [vmem:[#allocation2 + $0x188] sm:$0xff]
      %v613 = vld [vmem:[#allocation2 + $0x190] sm:$0xff]
      %v614 = vld [vmem:[#allocation2 + $0x198] sm:$0xff]
      %v615 = vld [vmem:[#allocation2 + $0x1a0] sm:$0xff]
      %v616 = vld [vmem:[#allocation2 + $0x1a8] sm:$0xff]
      %v617 = vld [vmem:[#allocation2 + $0x1b0] sm:$0xff]
      %v618 = vld [vmem:[#allocation2 + $0x1b8] sm:$0xff]
      %v619 = vld [vmem:[#allocation2 + $0x1c0] sm:$0xff]
      %v620 = vld [vmem:[#allocation2 + $0x1c8] sm:$0xff]
      %v621 = vld [vmem:[#allocation2 + $0x1d0] sm:$0xff]
      %v622 = vld [vmem:[#allocation2 + $0x1d8] sm:$0xff]
      %v623 = vld [vmem:[#allocation2 + $0x1e0] sm:$0xff]
      %v624 = vld [vmem:[#allocation2 + $0x1e8] sm:$0xff]
      %v625 = vld [vmem:[#allocation2 + $0x1f0] sm:$0xff]
      %v626 = vld [vmem:[#allocation2 + $0x1f8] sm:$0xff]
      %v627 = vld [vmem:[#allocation2 + $0x200] sm:$0xff]
      %v628 = vld [vmem:[#allocation2 + $0x208] sm:$0xff]
      %v629 = vld [vmem:[#allocation2 + $0x210] sm:$0xff]
      %v630 = vld [vmem:[#allocation2 + $0x218] sm:$0xff]
      %v631 = vld [vmem:[#allocation2 + $0x220] sm:$0xff]
      %v632 = vld [vmem:[#allocation2 + $0x228] sm:$0xff]
      %v633 = vld [vmem:[#allocation2 + $0x230] sm:$0xff]
      %v634 = vld [vmem:[#allocation2 + $0x238] sm:$0xff]
      %v635 = vld [vmem:[#allocation2 + $0x240] sm:$0xff]
      %v636 = vld [vmem:[#allocation2 + $0x248] sm:$0xff]
      %v637 = vld [vmem:[#allocation2 + $0x250] sm:$0xff]
      %v638 = vld [vmem:[#allocation2 + $0x258] sm:$0xff]
      %v639 = vld [vmem:[#allocation2 + $0x260] sm:$0xff]
      %v640 = vld [vmem:[#allocation2 + $0x268] sm:$0xff]
      %v641 = vld [vmem:[#allocation2 + $0x270] sm:$0xff]
      %v642 = vld [vmem:[#allocation2 + $0x278] sm:$0xff]
      %v643 = vld [vmem:[#allocation2 + $0x280] sm:$0xff]
      %v644 = vld [vmem:[#allocation2 + $0x288] sm:$0xff]
      %v645 = vld [vmem:[#allocation2 + $0x290] sm:$0xff]
      %v646 = vld [vmem:[#allocation2 + $0x298] sm:$0xff]
      %v647 = vld [vmem:[#allocation2 + $0x2a0] sm:$0xff]
      %v648 = vld [vmem:[#allocation2 + $0x2a8] sm:$0xff]
      %v649 = vld [vmem:[#allocation2 + $0x2b0] sm:$0xff]
      %v650 = vld [vmem:[#allocation2 + $0x2b8] sm:$0xff]
      %v651 = vld [vmem:[#allocation2 + $0x2c0] sm:$0xff]
      %v652 = vld [vmem:[#allocation2 + $0x2c8] sm:$0xff]
      %v653 = vld [vmem:[#allocation2 + $0x2d0] sm:$0xff]
      %v654 = vld [vmem:[#allocation2 + $0x2d8] sm:$0xff]
      %v655 = vld [vmem:[#allocation2 + $0x2e0] sm:$0xff]
      %v656 = vld [vmem:[#allocation2 + $0x2e8] sm:$0xff]
      %v657 = vld [vmem:[#allocation2 + $0x2f0] sm:$0xff]
      %v658 = vld [vmem:[#allocation2 + $0x2f8] sm:$0xff]
      %v659 = vld [vmem:[#allocation2 + $0x300] sm:$0xff]
      %v660 = vld [vmem:[#allocation2 + $0x308] sm:$0xff]
      %v661 = vld [vmem:[#allocation2 + $0x310] sm:$0xff]
      %v662 = vld [vmem:[#allocation2 + $0x318] sm:$0xff]
      %v663 = vld [vmem:[#allocation2 + $0x320] sm:$0xff]
      %v664 = vld [vmem:[#allocation2 + $0x328] sm:$0xff]
      %v665 = vld [vmem:[#allocation2 + $0x330] sm:$0xff]
      %v666 = vld [vmem:[#allocation2 + $0x338] sm:$0xff]
      %v667 = vld [vmem:[#allocation2 + $0x340] sm:$0xff]
      %v668 = vld [vmem:[#allocation2 + $0x348] sm:$0xff]
      %v669 = vld [vmem:[#allocation2 + $0x350] sm:$0xff]
      %v670 = vld [vmem:[#allocation2 + $0x358] sm:$0xff]
      %v671 = vld [vmem:[#allocation2 + $0x360] sm:$0xff]
      %v672 = vld [vmem:[#allocation2 + $0x368] sm:$0xff]
      %v673 = vld [vmem:[#allocation2 + $0x370] sm:$0xff]
      %v674 = vld [vmem:[#allocation2 + $0x378] sm:$0xff]
      %v675 = vld [vmem:[#allocation2 + $0x380] sm:$0xff]
      %v676 = vld [vmem:[#allocation2 + $0x388] sm:$0xff]
      %v677 = vld [vmem:[#allocation2 + $0x390] sm:$0xff]
      %v678 = vld [vmem:[#allocation2 + $0x398] sm:$0xff]
      %v679 = vld [vmem:[#allocation2 + $0x3a0] sm:$0xff]
      %v680 = vld [vmem:[#allocation2 + $0x3a8] sm:$0xff]
      %v681 = vld [vmem:[#allocation2 + $0x3b0] sm:$0xff]
      %v682 = vld [vmem:[#allocation2 + $0x3b8] sm:$0xff]
      %v683 = vld [vmem:[#allocation2 + $0x3c0] sm:$0xff]
      %v684 = vld [vmem:[#allocation2 + $0x3c8] sm:$0xff]
      %v685 = vld [vmem:[#allocation2 + $0x3d0] sm:$0xff]
      %v686 = vld [vmem:[#allocation2 + $0x3d8] sm:$0xff]
      %v687 = vld [vmem:[#allocation2 + $0x3e0] sm:$0xff]
      %v688 = vld [vmem:[#allocation2 + $0x3e8] sm:$0xff]
      %v689 = vld [vmem:[#allocation2 + $0x3f0] sm:$0xff]
      %v690 = vld [vmem:[#allocation2 + $0x3f8] sm:$0xff]
      %v691 = vpack.c.bf16 %v579, %v563
      %v692 = vpack.c.bf16 %v580, %v564
      %v693 = vpack.c.bf16 %v581, %v565
      %v694 = vpack.c.bf16 %v582, %v566
      %v695 = vpack.c.bf16 %v583, %v567
      %v696 = vpack.c.bf16 %v584, %v568
      %v697 = vpack.c.bf16 %v585, %v569
      %v698 = vpack.c.bf16 %v586, %v570
      %v699 = vpack.c.bf16 %v587, %v571
      %v700 = vpack.c.bf16 %v588, %v572
      %v701 = vpack.c.bf16 %v589, %v573
      %v702 = vpack.c.bf16 %v590, %v574
      %v703 = vpack.c.bf16 %v591, %v575
      %v704 = vpack.c.bf16 %v592, %v576
      %v705 = vpack.c.bf16 %v593, %v577
      %v706 = vpack.c.bf16 %v594, %v578
      %v707 = vpack.c.bf16 %v611, %v595
      %v708 = vpack.c.bf16 %v612, %v596
      %v709 = vpack.c.bf16 %v613, %v597
      %v710 = vpack.c.bf16 %v614, %v598
      %v711 = vpack.c.bf16 %v615, %v599
      %v712 = vpack.c.bf16 %v616, %v600
      %v713 = vpack.c.bf16 %v617, %v601
      %v714 = vpack.c.bf16 %v618, %v602
      %v715 = vpack.c.bf16 %v619, %v603
      %v716 = vpack.c.bf16 %v620, %v604
      %v717 = vpack.c.bf16 %v621, %v605
      %v718 = vpack.c.bf16 %v622, %v606
      %v719 = vpack.c.bf16 %v623, %v607
      %v720 = vpack.c.bf16 %v624, %v608
      %v721 = vpack.c.bf16 %v625, %v609
      %v722 = vpack.c.bf16 %v626, %v610
      %v723 = vpack.c.bf16 %v643, %v627
      %v724 = vpack.c.bf16 %v644, %v628
      %v725 = vpack.c.bf16 %v645, %v629
      %v726 = vpack.c.bf16 %v646, %v630
      %v727 = vpack.c.bf16 %v647, %v631
      %v728 = vpack.c.bf16 %v648, %v632
      %v729 = vpack.c.bf16 %v649, %v633
      %v730 = vpack.c.bf16 %v650, %v634
      %v731 = vpack.c.bf16 %v651, %v635
      %v732 = vpack.c.bf16 %v652, %v636
      %v733 = vpack.c.bf16 %v653, %v637
      %v734 = vpack.c.bf16 %v654, %v638
      %v735 = vpack.c.bf16 %v655, %v639
      %v736 = vpack.c.bf16 %v656, %v640
      %v737 = vpack.c.bf16 %v657, %v641
      %v738 = vpack.c.bf16 %v658, %v642
      %v739 = vpack.c.bf16 %v675, %v659
      %v740 = vpack.c.bf16 %v676, %v660
      %v741 = vpack.c.bf16 %v677, %v661
      %v742 = vpack.c.bf16 %v678, %v662
      %v743 = vpack.c.bf16 %v679, %v663
      %v744 = vpack.c.bf16 %v680, %v664
      %v745 = vpack.c.bf16 %v681, %v665
      %v746 = vpack.c.bf16 %v682, %v666
      %v747 = vpack.c.bf16 %v683, %v667
      %v748 = vpack.c.bf16 %v684, %v668
      %v749 = vpack.c.bf16 %v685, %v669
      %v750 = vpack.c.bf16 %v686, %v670
      %v751 = vpack.c.bf16 %v687, %v671
      %v752 = vpack.c.bf16 %v688, %v672
      %v753 = vpack.c.bf16 %v689, %v673
      %v754 = vpack.c.bf16 %v690, %v674
      %v755 = vld [vmem:[%s1] sm:$0xf]
      %v756 = vld [vmem:[%s1 + $0x4] sm:$0xf]
      %v757 = vld [vmem:[%s1 + $0x8] sm:$0xf]
      %v758 = vld [vmem:[%s1 + $0xc] sm:$0xf]
      %v759 = vld [vmem:[%s1 + $0x10] sm:$0xf]
      %v760 = vld [vmem:[%s1 + $0x14] sm:$0xf]
      %v761 = vld [vmem:[%s1 + $0x18] sm:$0xf]
      %v762 = vld [vmem:[%s1 + $0x1c] sm:$0xf]
      %v763 = vld [vmem:[%s1 + $0x20] sm:$0xf]
      %v764 = vld [vmem:[%s1 + $0x24] sm:$0xf]
      %v765 = vld [vmem:[%s1 + $0x28] sm:$0xf]
      %v766 = vld [vmem:[%s1 + $0x2c] sm:$0xf]
      %v767 = vld [vmem:[%s1 + $0x30] sm:$0xf]
      %v768 = vld [vmem:[%s1 + $0x34] sm:$0xf]
      %v769 = vld [vmem:[%s1 + $0x38] sm:$0xf]
      %v770 = vld [vmem:[%s1 + $0x3c] sm:$0xf]
      %v771 = vld [vmem:[%s1 + $0x40] sm:$0xf]
      %v772 = vld [vmem:[%s1 + $0x44] sm:$0xf]
      %v773 = vld [vmem:[%s1 + $0x48] sm:$0xf]
      %v774 = vld [vmem:[%s1 + $0x4c] sm:$0xf]
      %v775 = vld [vmem:[%s1 + $0x50] sm:$0xf]
      %v776 = vld [vmem:[%s1 + $0x54] sm:$0xf]
      %v777 = vld [vmem:[%s1 + $0x58] sm:$0xf]
      %v778 = vld [vmem:[%s1 + $0x5c] sm:$0xf]
      %v779 = vld [vmem:[%s1 + $0x60] sm:$0xf]
      %v780 = vld [vmem:[%s1 + $0x64] sm:$0xf]
      %v781 = vld [vmem:[%s1 + $0x68] sm:$0xf]
      %v782 = vld [vmem:[%s1 + $0x6c] sm:$0xf]
      %v783 = vld [vmem:[%s1 + $0x70] sm:$0xf]
      %v784 = vld [vmem:[%s1 + $0x74] sm:$0xf]
      %v785 = vld [vmem:[%s1 + $0x78] sm:$0xf]
      %v786 = vld [vmem:[%s1 + $0x7c] sm:$0xf]
      %v787 = vld [vmem:[%s1 + $0x80] sm:$0xf]
      %v788 = vld [vmem:[%s1 + $0x84] sm:$0xf]
      %v789 = vld [vmem:[%s1 + $0x88] sm:$0xf]
      %v790 = vld [vmem:[%s1 + $0x8c] sm:$0xf]
      %v791 = vld [vmem:[%s1 + $0x90] sm:$0xf]
      %v792 = vld [vmem:[%s1 + $0x94] sm:$0xf]
      %v793 = vld [vmem:[%s1 + $0x98] sm:$0xf]
      %v794 = vld [vmem:[%s1 + $0x9c] sm:$0xf]
      %v795 = vld [vmem:[%s1 + $0xa0] sm:$0xf]
      %v796 = vld [vmem:[%s1 + $0xa4] sm:$0xf]
      %v797 = vld [vmem:[%s1 + $0xa8] sm:$0xf]
      %v798 = vld [vmem:[%s1 + $0xac] sm:$0xf]
      %v799 = vld [vmem:[%s1 + $0xb0] sm:$0xf]
      %v800 = vld [vmem:[%s1 + $0xb4] sm:$0xf]
      %v801 = vld [vmem:[%s1 + $0xb8] sm:$0xf]
      %v802 = vld [vmem:[%s1 + $0xbc] sm:$0xf]
      %v803 = vld [vmem:[%s1 + $0xc0] sm:$0xf]
      %v804 = vld [vmem:[%s1 + $0xc4] sm:$0xf]
      %v805 = vld [vmem:[%s1 + $0xc8] sm:$0xf]
      %v806 = vld [vmem:[%s1 + $0xcc] sm:$0xf]
      %v807 = vld [vmem:[%s1 + $0xd0] sm:$0xf]
      %v808 = vld [vmem:[%s1 + $0xd4] sm:$0xf]
      %v809 = vld [vmem:[%s1 + $0xd8] sm:$0xf]
      %v810 = vld [vmem:[%s1 + $0xdc] sm:$0xf]
      %v811 = vld [vmem:[%s1 + $0xe0] sm:$0xf]
      %v812 = vld [vmem:[%s1 + $0xe4] sm:$0xf]
      %v813 = vld [vmem:[%s1 + $0xe8] sm:$0xf]
      %v814 = vld [vmem:[%s1 + $0xec] sm:$0xf]
      %v815 = vld [vmem:[%s1 + $0xf0] sm:$0xf]
      %v816 = vld [vmem:[%s1 + $0xf4] sm:$0xf]
      %v817 = vld [vmem:[%s1 + $0xf8] sm:$0xf]
      %v818 = vld [vmem:[%s1 + $0xfc] sm:$0xf]
      %v819 = vld [vmem:[%s1 + $0x100] sm:$0xf]
      %v820 = vld [vmem:[%s1 + $0x104] sm:$0xf]
      %v821 = vld [vmem:[%s1 + $0x108] sm:$0xf]
      %v822 = vld [vmem:[%s1 + $0x10c] sm:$0xf]
      %v823 = vld [vmem:[%s1 + $0x110] sm:$0xf]
      %v824 = vld [vmem:[%s1 + $0x114] sm:$0xf]
      %v825 = vld [vmem:[%s1 + $0x118] sm:$0xf]
      %v826 = vld [vmem:[%s1 + $0x11c] sm:$0xf]
      %v827 = vld [vmem:[%s1 + $0x120] sm:$0xf]
      %v828 = vld [vmem:[%s1 + $0x124] sm:$0xf]
      %v829 = vld [vmem:[%s1 + $0x128] sm:$0xf]
      %v830 = vld [vmem:[%s1 + $0x12c] sm:$0xf]
      %v831 = vld [vmem:[%s1 + $0x130] sm:$0xf]
      %v832 = vld [vmem:[%s1 + $0x134] sm:$0xf]
      %v833 = vld [vmem:[%s1 + $0x138] sm:$0xf]
      %v834 = vld [vmem:[%s1 + $0x13c] sm:$0xf]
      %v835 = vld [vmem:[%s1 + $0x140] sm:$0xf]
      %v836 = vld [vmem:[%s1 + $0x144] sm:$0xf]
      %v837 = vld [vmem:[%s1 + $0x148] sm:$0xf]
      %v838 = vld [vmem:[%s1 + $0x14c] sm:$0xf]
      %v839 = vld [vmem:[%s1 + $0x150] sm:$0xf]
      %v840 = vld [vmem:[%s1 + $0x154] sm:$0xf]
      %v841 = vld [vmem:[%s1 + $0x158] sm:$0xf]
      %v842 = vld [vmem:[%s1 + $0x15c] sm:$0xf]
      %v843 = vld [vmem:[%s1 + $0x160] sm:$0xf]
      %v844 = vld [vmem:[%s1 + $0x164] sm:$0xf]
      %v845 = vld [vmem:[%s1 + $0x168] sm:$0xf]
      %v846 = vld [vmem:[%s1 + $0x16c] sm:$0xf]
      %v847 = vld [vmem:[%s1 + $0x170] sm:$0xf]
      %v848 = vld [vmem:[%s1 + $0x174] sm:$0xf]
      %v849 = vld [vmem:[%s1 + $0x178] sm:$0xf]
      %v850 = vld [vmem:[%s1 + $0x17c] sm:$0xf]
      %v851 = vld [vmem:[%s1 + $0x180] sm:$0xf]
      %v852 = vld [vmem:[%s1 + $0x184] sm:$0xf]
      %v853 = vld [vmem:[%s1 + $0x188] sm:$0xf]
      %v854 = vld [vmem:[%s1 + $0x18c] sm:$0xf]
      %v855 = vld [vmem:[%s1 + $0x190] sm:$0xf]
      %v856 = vld [vmem:[%s1 + $0x194] sm:$0xf]
      %v857 = vld [vmem:[%s1 + $0x198] sm:$0xf]
      %v858 = vld [vmem:[%s1 + $0x19c] sm:$0xf]
      %v859 = vld [vmem:[%s1 + $0x1a0] sm:$0xf]
      %v860 = vld [vmem:[%s1 + $0x1a4] sm:$0xf]
      %v861 = vld [vmem:[%s1 + $0x1a8] sm:$0xf]
      %v862 = vld [vmem:[%s1 + $0x1ac] sm:$0xf]
      %v863 = vld [vmem:[%s1 + $0x1b0] sm:$0xf]
      %v864 = vld [vmem:[%s1 + $0x1b4] sm:$0xf]
      %v865 = vld [vmem:[%s1 + $0x1b8] sm:$0xf]
      %v866 = vld [vmem:[%s1 + $0x1bc] sm:$0xf]
      %v867 = vld [vmem:[%s1 + $0x1c0] sm:$0xf]
      %v868 = vld [vmem:[%s1 + $0x1c4] sm:$0xf]
      %v869 = vld [vmem:[%s1 + $0x1c8] sm:$0xf]
      %v870 = vld [vmem:[%s1 + $0x1cc] sm:$0xf]
      %v871 = vld [vmem:[%s1 + $0x1d0] sm:$0xf]
      %v872 = vld [vmem:[%s1 + $0x1d4] sm:$0xf]
      %v873 = vld [vmem:[%s1 + $0x1d8] sm:$0xf]
      %v874 = vld [vmem:[%s1 + $0x1dc] sm:$0xf]
      %v875 = vld [vmem:[%s1 + $0x1e0] sm:$0xf]
      %v876 = vld [vmem:[%s1 + $0x1e4] sm:$0xf]
      %v877 = vld [vmem:[%s1 + $0x1e8] sm:$0xf]
      %v878 = vld [vmem:[%s1 + $0x1ec] sm:$0xf]
      %v879 = vld [vmem:[%s1 + $0x1f0] sm:$0xf]
      %v880 = vld [vmem:[%s1 + $0x1f4] sm:$0xf]
      %v881 = vld [vmem:[%s1 + $0x1f8] sm:$0xf]
      %v882 = vld [vmem:[%s1 + $0x1fc] sm:$0xf]
      %v883 = vld [vmem:[%s1 + $0x200] sm:$0xf]
      %v884 = vld [vmem:[%s1 + $0x204] sm:$0xf]
      %v885 = vld [vmem:[%s1 + $0x208] sm:$0xf]
      %v886 = vld [vmem:[%s1 + $0x20c] sm:$0xf]
      %v887 = vld [vmem:[%s1 + $0x210] sm:$0xf]
      %v888 = vld [vmem:[%s1 + $0x214] sm:$0xf]
      %v889 = vld [vmem:[%s1 + $0x218] sm:$0xf]
      %v890 = vld [vmem:[%s1 + $0x21c] sm:$0xf]
      %v891 = vld [vmem:[%s1 + $0x220] sm:$0xf]
      %v892 = vld [vmem:[%s1 + $0x224] sm:$0xf]
      %v893 = vld [vmem:[%s1 + $0x228] sm:$0xf]
      %v894 = vld [vmem:[%s1 + $0x22c] sm:$0xf]
      %v895 = vld [vmem:[%s1 + $0x230] sm:$0xf]
      %v896 = vld [vmem:[%s1 + $0x234] sm:$0xf]
      %v897 = vld [vmem:[%s1 + $0x238] sm:$0xf]
      %v898 = vld [vmem:[%s1 + $0x23c] sm:$0xf]
      %v899 = vld [vmem:[%s1 + $0x240] sm:$0xf]
      %v900 = vld [vmem:[%s1 + $0x244] sm:$0xf]
      %v901 = vld [vmem:[%s1 + $0x248] sm:$0xf]
      %v902 = vld [vmem:[%s1 + $0x24c] sm:$0xf]
      %v903 = vld [vmem:[%s1 + $0x250] sm:$0xf]
      %v904 = vld [vmem:[%s1 + $0x254] sm:$0xf]
      %v905 = vld [vmem:[%s1 + $0x258] sm:$0xf]
      %v906 = vld [vmem:[%s1 + $0x25c] sm:$0xf]
      %v907 = vld [vmem:[%s1 + $0x260] sm:$0xf]
      %v908 = vld [vmem:[%s1 + $0x264] sm:$0xf]
      %v909 = vld [vmem:[%s1 + $0x268] sm:$0xf]
      %v910 = vld [vmem:[%s1 + $0x26c] sm:$0xf]
      %v911 = vld [vmem:[%s1 + $0x270] sm:$0xf]
      %v912 = vld [vmem:[%s1 + $0x274] sm:$0xf]
      %v913 = vld [vmem:[%s1 + $0x278] sm:$0xf]
      %v914 = vld [vmem:[%s1 + $0x27c] sm:$0xf]
      %v915 = vld [vmem:[%s1 + $0x280] sm:$0xf]
      %v916 = vld [vmem:[%s1 + $0x284] sm:$0xf]
      %v917 = vld [vmem:[%s1 + $0x288] sm:$0xf]
      %v918 = vld [vmem:[%s1 + $0x28c] sm:$0xf]
      %v919 = vld [vmem:[%s1 + $0x290] sm:$0xf]
      %v920 = vld [vmem:[%s1 + $0x294] sm:$0xf]
      %v921 = vld [vmem:[%s1 + $0x298] sm:$0xf]
      %v922 = vld [vmem:[%s1 + $0x29c] sm:$0xf]
      %v923 = vld [vmem:[%s1 + $0x2a0] sm:$0xf]
      %v924 = vld [vmem:[%s1 + $0x2a4] sm:$0xf]
      %v925 = vld [vmem:[%s1 + $0x2a8] sm:$0xf]
      %v926 = vld [vmem:[%s1 + $0x2ac] sm:$0xf]
      %v927 = vld [vmem:[%s1 + $0x2b0] sm:$0xf]
      %v928 = vld [vmem:[%s1 + $0x2b4] sm:$0xf]
      %v929 = vld [vmem:[%s1 + $0x2b8] sm:$0xf]
      %v930 = vld [vmem:[%s1 + $0x2bc] sm:$0xf]
      %v931 = vld [vmem:[%s1 + $0x2c0] sm:$0xf]
      %v932 = vld [vmem:[%s1 + $0x2c4] sm:$0xf]
      %v933 = vld [vmem:[%s1 + $0x2c8] sm:$0xf]
      %v934 = vld [vmem:[%s1 + $0x2cc] sm:$0xf]
      %v935 = vld [vmem:[%s1 + $0x2d0] sm:$0xf]
      %v936 = vld [vmem:[%s1 + $0x2d4] sm:$0xf]
      %v937 = vld [vmem:[%s1 + $0x2d8] sm:$0xf]
      %v938 = vld [vmem:[%s1 + $0x2dc] sm:$0xf]
      %v939 = vld [vmem:[%s1 + $0x2e0] sm:$0xf]
      %v940 = vld [vmem:[%s1 + $0x2e4] sm:$0xf]
      %v941 = vld [vmem:[%s1 + $0x2e8] sm:$0xf]
      %v942 = vld [vmem:[%s1 + $0x2ec] sm:$0xf]
      %v943 = vld [vmem:[%s1 + $0x2f0] sm:$0xf]
      %v944 = vld [vmem:[%s1 + $0x2f4] sm:$0xf]
      %v945 = vld [vmem:[%s1 + $0x2f8] sm:$0xf]
      %v946 = vld [vmem:[%s1 + $0x2fc] sm:$0xf]
      %v947 = vld [vmem:[%s1 + $0x300] sm:$0xf]
      %v948 = vld [vmem:[%s1 + $0x304] sm:$0xf]
      %v949 = vld [vmem:[%s1 + $0x308] sm:$0xf]
      %v950 = vld [vmem:[%s1 + $0x30c] sm:$0xf]
      %v951 = vld [vmem:[%s1 + $0x310] sm:$0xf]
      %v952 = vld [vmem:[%s1 + $0x314] sm:$0xf]
      %v953 = vld [vmem:[%s1 + $0x318] sm:$0xf]
      %v954 = vld [vmem:[%s1 + $0x31c] sm:$0xf]
      %v955 = vld [vmem:[%s1 + $0x320] sm:$0xf]
      %v956 = vld [vmem:[%s1 + $0x324] sm:$0xf]
      %v957 = vld [vmem:[%s1 + $0x328] sm:$0xf]
      %v958 = vld [vmem:[%s1 + $0x32c] sm:$0xf]
      %v959 = vld [vmem:[%s1 + $0x330] sm:$0xf]
      %v960 = vld [vmem:[%s1 + $0x334] sm:$0xf]
      %v961 = vld [vmem:[%s1 + $0x338] sm:$0xf]
      %v962 = vld [vmem:[%s1 + $0x33c] sm:$0xf]
      %v963 = vld [vmem:[%s1 + $0x340] sm:$0xf]
      %v964 = vld [vmem:[%s1 + $0x344] sm:$0xf]
      %v965 = vld [vmem:[%s1 + $0x348] sm:$0xf]
      %v966 = vld [vmem:[%s1 + $0x34c] sm:$0xf]
      %v967 = vld [vmem:[%s1 + $0x350] sm:$0xf]
      %v968 = vld [vmem:[%s1 + $0x354] sm:$0xf]
      %v969 = vld [vmem:[%s1 + $0x358] sm:$0xf]
      %v970 = vld [vmem:[%s1 + $0x35c] sm:$0xf]
      %v971 = vld [vmem:[%s1 + $0x360] sm:$0xf]
      %v972 = vld [vmem:[%s1 + $0x364] sm:$0xf]
      %v973 = vld [vmem:[%s1 + $0x368] sm:$0xf]
      %v974 = vld [vmem:[%s1 + $0x36c] sm:$0xf]
      %v975 = vld [vmem:[%s1 + $0x370] sm:$0xf]
      %v976 = vld [vmem:[%s1 + $0x374] sm:$0xf]
      %v977 = vld [vmem:[%s1 + $0x378] sm:$0xf]
      %v978 = vld [vmem:[%s1 + $0x37c] sm:$0xf]
      %v979 = vld [vmem:[%s1 + $0x380] sm:$0xf]
      %v980 = vld [vmem:[%s1 + $0x384] sm:$0xf]
      %v981 = vld [vmem:[%s1 + $0x388] sm:$0xf]
      %v982 = vld [vmem:[%s1 + $0x38c] sm:$0xf]
      %v983 = vld [vmem:[%s1 + $0x390] sm:$0xf]
      %v984 = vld [vmem:[%s1 + $0x394] sm:$0xf]
      %v985 = vld [vmem:[%s1 + $0x398] sm:$0xf]
      %v986 = vld [vmem:[%s1 + $0x39c] sm:$0xf]
      %v987 = vld [vmem:[%s1 + $0x3a0] sm:$0xf]
      %v988 = vld [vmem:[%s1 + $0x3a4] sm:$0xf]
      %v989 = vld [vmem:[%s1 + $0x3a8] sm:$0xf]
      %v990 = vld [vmem:[%s1 + $0x3ac] sm:$0xf]
      %v991 = vld [vmem:[%s1 + $0x3b0] sm:$0xf]
      %v992 = vld [vmem:[%s1 + $0x3b4] sm:$0xf]
      %v993 = vld [vmem:[%s1 + $0x3b8] sm:$0xf]
      %v994 = vld [vmem:[%s1 + $0x3bc] sm:$0xf]
      %v995 = vld [vmem:[%s1 + $0x3c0] sm:$0xf]
      %v996 = vld [vmem:[%s1 + $0x3c4] sm:$0xf]
      %v997 = vld [vmem:[%s1 + $0x3c8] sm:$0xf]
      %v998 = vld [vmem:[%s1 + $0x3cc] sm:$0xf]
      %v999 = vld [vmem:[%s1 + $0x3d0] sm:$0xf]
      %v1000 = vld [vmem:[%s1 + $0x3d4] sm:$0xf]
      %v1001 = vld [vmem:[%s1 + $0x3d8] sm:$0xf]
      %v1002 = vld [vmem:[%s1 + $0x3dc] sm:$0xf]
      %v1003 = vld [vmem:[%s1 + $0x3e0] sm:$0xf]
      %v1004 = vld [vmem:[%s1 + $0x3e4] sm:$0xf]
      %v1005 = vld [vmem:[%s1 + $0x3e8] sm:$0xf]
      %v1006 = vld [vmem:[%s1 + $0x3ec] sm:$0xf]
      %v1007 = vld [vmem:[%s1 + $0x3f0] sm:$0xf]
      %v1008 = vld [vmem:[%s1 + $0x3f4] sm:$0xf]
      %v1009 = vld [vmem:[%s1 + $0x3f8] sm:$0xf]
      %v1010 = vld [vmem:[%s1 + $0x3fc] sm:$0xf]
      %v1011 = vld [vmem:[%s2] sm:$0x1]
      %v1013 = vlaneseq
      %v1014 = vshrl.u32 %v1013, 7
      %v1015 = vsub.s32 0, %v1014
      %v1016 = vrot.slane %v1011, %v1015
      %v1274 = vunpack.c.l.b16 %v755
      %v1275 = vunpack.c.l.b16 %v756
      %v1276 = vunpack.c.l.b16 %v757
      %v1277 = vunpack.c.l.b16 %v758
      %v1278 = vunpack.c.l.b16 %v759
      %v1279 = vunpack.c.l.b16 %v760
      %v1280 = vunpack.c.l.b16 %v761
      %v1281 = vunpack.c.l.b16 %v762
      %v1282 = vunpack.c.l.b16 %v763
      %v1283 = vunpack.c.l.b16 %v764
      %v1284 = vunpack.c.l.b16 %v765
      %v1285 = vunpack.c.l.b16 %v766
      %v1286 = vunpack.c.l.b16 %v767
      %v1287 = vunpack.c.l.b16 %v768
      %v1288 = vunpack.c.l.b16 %v769
      %v1289 = vunpack.c.l.b16 %v770
      %v1290 = vunpack.c.l.b16 %v771
      %v1291 = vunpack.c.l.b16 %v772
      %v1292 = vunpack.c.l.b16 %v773
      %v1293 = vunpack.c.l.b16 %v774
      %v1294 = vunpack.c.l.b16 %v775
      %v1295 = vunpack.c.l.b16 %v776
      %v1296 = vunpack.c.l.b16 %v777
      %v1297 = vunpack.c.l.b16 %v778
      %v1298 = vunpack.c.l.b16 %v779
      %v1299 = vunpack.c.l.b16 %v780
      %v1300 = vunpack.c.l.b16 %v781
      %v1301 = vunpack.c.l.b16 %v782
      %v1302 = vunpack.c.l.b16 %v783
      %v1303 = vunpack.c.l.b16 %v784
      %v1304 = vunpack.c.l.b16 %v785
      %v1305 = vunpack.c.l.b16 %v786
      %v1306 = vunpack.c.l.b16 %v787
      %v1307 = vunpack.c.l.b16 %v788
      %v1308 = vunpack.c.l.b16 %v789
      %v1309 = vunpack.c.l.b16 %v790
      %v1310 = vunpack.c.l.b16 %v791
      %v1311 = vunpack.c.l.b16 %v792
      %v1312 = vunpack.c.l.b16 %v793
      %v1313 = vunpack.c.l.b16 %v794
      %v1314 = vunpack.c.l.b16 %v795
      %v1315 = vunpack.c.l.b16 %v796
      %v1316 = vunpack.c.l.b16 %v797
      %v1317 = vunpack.c.l.b16 %v798
      %v1318 = vunpack.c.l.b16 %v799
      %v1319 = vunpack.c.l.b16 %v800
      %v1320 = vunpack.c.l.b16 %v801
      %v1321 = vunpack.c.l.b16 %v802
      %v1322 = vunpack.c.l.b16 %v803
      %v1323 = vunpack.c.l.b16 %v804
      %v1324 = vunpack.c.l.b16 %v805
      %v1325 = vunpack.c.l.b16 %v806
      %v1326 = vunpack.c.l.b16 %v807
      %v1327 = vunpack.c.l.b16 %v808
      %v1328 = vunpack.c.l.b16 %v809
      %v1329 = vunpack.c.l.b16 %v810
      %v1330 = vunpack.c.l.b16 %v811
      %v1331 = vunpack.c.l.b16 %v812
      %v1332 = vunpack.c.l.b16 %v813
      %v1333 = vunpack.c.l.b16 %v814
      %v1334 = vunpack.c.l.b16 %v815
      %v1335 = vunpack.c.l.b16 %v816
      %v1336 = vunpack.c.l.b16 %v817
      %v1337 = vunpack.c.l.b16 %v818
      %v1338 = vunpack.c.l.b16 %v819
      %v1339 = vunpack.c.l.b16 %v820
      %v1340 = vunpack.c.l.b16 %v821
      %v1341 = vunpack.c.l.b16 %v822
      %v1342 = vunpack.c.l.b16 %v823
      %v1343 = vunpack.c.l.b16 %v824
      %v1344 = vunpack.c.l.b16 %v825
      %v1345 = vunpack.c.l.b16 %v826
      %v1346 = vunpack.c.l.b16 %v827
      %v1347 = vunpack.c.l.b16 %v828
      %v1348 = vunpack.c.l.b16 %v829
      %v1349 = vunpack.c.l.b16 %v830
      %v1350 = vunpack.c.l.b16 %v831
      %v1351 = vunpack.c.l.b16 %v832
      %v1352 = vunpack.c.l.b16 %v833
      %v1353 = vunpack.c.l.b16 %v834
      %v1354 = vunpack.c.l.b16 %v835
      %v1355 = vunpack.c.l.b16 %v836
      %v1356 = vunpack.c.l.b16 %v837
      %v1357 = vunpack.c.l.b16 %v838
      %v1358 = vunpack.c.l.b16 %v839
      %v1359 = vunpack.c.l.b16 %v840
      %v1360 = vunpack.c.l.b16 %v841
      %v1361 = vunpack.c.l.b16 %v842
      %v1362 = vunpack.c.l.b16 %v843
      %v1363 = vunpack.c.l.b16 %v844
      %v1364 = vunpack.c.l.b16 %v845
      %v1365 = vunpack.c.l.b16 %v846
      %v1366 = vunpack.c.l.b16 %v847
      %v1367 = vunpack.c.l.b16 %v848
      %v1368 = vunpack.c.l.b16 %v849
      %v1369 = vunpack.c.l.b16 %v850
      %v1370 = vunpack.c.l.b16 %v851
      %v1371 = vunpack.c.l.b16 %v852
      %v1372 = vunpack.c.l.b16 %v853
      %v1373 = vunpack.c.l.b16 %v854
      %v1374 = vunpack.c.l.b16 %v855
      %v1375 = vunpack.c.l.b16 %v856
      %v1376 = vunpack.c.l.b16 %v857
      %v1377 = vunpack.c.l.b16 %v858
      %v1378 = vunpack.c.l.b16 %v859
      %v1379 = vunpack.c.l.b16 %v860
      %v1380 = vunpack.c.l.b16 %v861
      %v1381 = vunpack.c.l.b16 %v862
      %v1382 = vunpack.c.l.b16 %v863
      %v1383 = vunpack.c.l.b16 %v864
      %v1384 = vunpack.c.l.b16 %v865
      %v1385 = vunpack.c.l.b16 %v866
      %v1386 = vunpack.c.l.b16 %v867
      %v1387 = vunpack.c.l.b16 %v868
      %v1388 = vunpack.c.l.b16 %v869
      %v1389 = vunpack.c.l.b16 %v870
      %v1390 = vunpack.c.l.b16 %v871
      %v1391 = vunpack.c.l.b16 %v872
      %v1392 = vunpack.c.l.b16 %v873
      %v1393 = vunpack.c.l.b16 %v874
      %v1394 = vunpack.c.l.b16 %v875
      %v1395 = vunpack.c.l.b16 %v876
      %v1396 = vunpack.c.l.b16 %v877
      %v1397 = vunpack.c.l.b16 %v878
      %v1398 = vunpack.c.l.b16 %v879
      %v1399 = vunpack.c.l.b16 %v880
      %v1400 = vunpack.c.l.b16 %v881
      %v1401 = vunpack.c.l.b16 %v882
      %v1402 = vunpack.c.l.b16 %v883
      %v1403 = vunpack.c.l.b16 %v884
      %v1404 = vunpack.c.l.b16 %v885
      %v1405 = vunpack.c.l.b16 %v886
      %v1406 = vunpack.c.l.b16 %v887
      %v1407 = vunpack.c.l.b16 %v888
      %v1408 = vunpack.c.l.b16 %v889
      %v1409 = vunpack.c.l.b16 %v890
      %v1410 = vunpack.c.l.b16 %v891
      %v1411 = vunpack.c.l.b16 %v892
      %v1412 = vunpack.c.l.b16 %v893
      %v1413 = vunpack.c.l.b16 %v894
      %v1414 = vunpack.c.l.b16 %v895
      %v1415 = vunpack.c.l.b16 %v896
      %v1416 = vunpack.c.l.b16 %v897
      %v1417 = vunpack.c.l.b16 %v898
      %v1418 = vunpack.c.l.b16 %v899
      %v1419 = vunpack.c.l.b16 %v900
      %v1420 = vunpack.c.l.b16 %v901
      %v1421 = vunpack.c.l.b16 %v902
      %v1422 = vunpack.c.l.b16 %v903
      %v1423 = vunpack.c.l.b16 %v904
      %v1424 = vunpack.c.l.b16 %v905
      %v1425 = vunpack.c.l.b16 %v906
      %v1426 = vunpack.c.l.b16 %v907
      %v1427 = vunpack.c.l.b16 %v908
      %v1428 = vunpack.c.l.b16 %v909
      %v1429 = vunpack.c.l.b16 %v910
      %v1430 = vunpack.c.l.b16 %v911
      %v1431 = vunpack.c.l.b16 %v912
      %v1432 = vunpack.c.l.b16 %v913
      %v1433 = vunpack.c.l.b16 %v914
      %v1434 = vunpack.c.l.b16 %v915
      %v1435 = vunpack.c.l.b16 %v916
      %v1436 = vunpack.c.l.b16 %v917
      %v1437 = vunpack.c.l.b16 %v918
      %v1438 = vunpack.c.l.b16 %v919
      %v1439 = vunpack.c.l.b16 %v920
      %v1440 = vunpack.c.l.b16 %v921
      %v1441 = vunpack.c.l.b16 %v922
      %v1442 = vunpack.c.l.b16 %v923
      %v1443 = vunpack.c.l.b16 %v924
      %v1444 = vunpack.c.l.b16 %v925
      %v1445 = vunpack.c.l.b16 %v926
      %v1446 = vunpack.c.l.b16 %v927
      %v1447 = vunpack.c.l.b16 %v928
      %v1448 = vunpack.c.l.b16 %v929
      %v1449 = vunpack.c.l.b16 %v930
      %v1450 = vunpack.c.l.b16 %v931
      %v1451 = vunpack.c.l.b16 %v932
      %v1452 = vunpack.c.l.b16 %v933
      %v1453 = vunpack.c.l.b16 %v934
      %v1454 = vunpack.c.l.b16 %v935
      %v1455 = vunpack.c.l.b16 %v936
      %v1456 = vunpack.c.l.b16 %v937
      %v1457 = vunpack.c.l.b16 %v938
      %v1458 = vunpack.c.l.b16 %v939
      %v1459 = vunpack.c.l.b16 %v940
      %v1460 = vunpack.c.l.b16 %v941
      %v1461 = vunpack.c.l.b16 %v942
      %v1462 = vunpack.c.l.b16 %v943
      %v1463 = vunpack.c.l.b16 %v944
      %v1464 = vunpack.c.l.b16 %v945
      %v1465 = vunpack.c.l.b16 %v946
      %v1466 = vunpack.c.l.b16 %v947
      %v1467 = vunpack.c.l.b16 %v948
      %v1468 = vunpack.c.l.b16 %v949
      %v1469 = vunpack.c.l.b16 %v950
      %v1470 = vunpack.c.l.b16 %v951
      %v1471 = vunpack.c.l.b16 %v952
      %v1472 = vunpack.c.l.b16 %v953
      %v1473 = vunpack.c.l.b16 %v954
      %v1474 = vunpack.c.l.b16 %v955
      %v1475 = vunpack.c.l.b16 %v956
      %v1476 = vunpack.c.l.b16 %v957
      %v1477 = vunpack.c.l.b16 %v958
      %v1478 = vunpack.c.l.b16 %v959
      %v1479 = vunpack.c.l.b16 %v960
      %v1480 = vunpack.c.l.b16 %v961
      %v1481 = vunpack.c.l.b16 %v962
      %v1482 = vunpack.c.l.b16 %v963
      %v1483 = vunpack.c.l.b16 %v964
      %v1484 = vunpack.c.l.b16 %v965
      %v1485 = vunpack.c.l.b16 %v966
      %v1486 = vunpack.c.l.b16 %v967
      %v1487 = vunpack.c.l.b16 %v968
      %v1488 = vunpack.c.l.b16 %v969
      %v1489 = vunpack.c.l.b16 %v970
      %v1490 = vunpack.c.l.b16 %v971
      %v1491 = vunpack.c.l.b16 %v972
      %v1492 = vunpack.c.l.b16 %v973
      %v1493 = vunpack.c.l.b16 %v974
      %v1494 = vunpack.c.l.b16 %v975
      %v1495 = vunpack.c.l.b16 %v976
      %v1496 = vunpack.c.l.b16 %v977
      %v1497 = vunpack.c.l.b16 %v978
      %v1498 = vunpack.c.l.b16 %v979
      %v1499 = vunpack.c.l.b16 %v980
      %v1500 = vunpack.c.l.b16 %v981
      %v1501 = vunpack.c.l.b16 %v982
      %v1502 = vunpack.c.l.b16 %v983
      %v1503 = vunpack.c.l.b16 %v984
      %v1504 = vunpack.c.l.b16 %v985
      %v1505 = vunpack.c.l.b16 %v986
      %v1506 = vunpack.c.l.b16 %v987
      %v1507 = vunpack.c.l.b16 %v988
      %v1508 = vunpack.c.l.b16 %v989
      %v1509 = vunpack.c.l.b16 %v990
      %v1510 = vunpack.c.l.b16 %v991
      %v1511 = vunpack.c.l.b16 %v992
      %v1512 = vunpack.c.l.b16 %v993
      %v1513 = vunpack.c.l.b16 %v994
      %v1514 = vunpack.c.l.b16 %v995
      %v1515 = vunpack.c.l.b16 %v996
      %v1516 = vunpack.c.l.b16 %v997
      %v1517 = vunpack.c.l.b16 %v998
      %v1518 = vunpack.c.l.b16 %v999
      %v1519 = vunpack.c.l.b16 %v1000
      %v1520 = vunpack.c.l.b16 %v1001
      %v1521 = vunpack.c.l.b16 %v1002
      %v1522 = vunpack.c.l.b16 %v1003
      %v1523 = vunpack.c.l.b16 %v1004
      %v1524 = vunpack.c.l.b16 %v1005
      %v1525 = vunpack.c.l.b16 %v1006
      %v1526 = vunpack.c.l.b16 %v1007
      %v1527 = vunpack.c.l.b16 %v1008
      %v1528 = vunpack.c.l.b16 %v1009
      %v1529 = vunpack.c.l.b16 %v1010
      %v1530 = vpack.c.b16 %v1275, %v1274
      %v1531 = vpack.c.b16 %v1277, %v1276
      %v1532 = vpack.c.b16 %v1279, %v1278
      %v1533 = vpack.c.b16 %v1281, %v1280
      %v1534 = vpack.c.b16 %v1283, %v1282
      %v1535 = vpack.c.b16 %v1285, %v1284
      %v1536 = vpack.c.b16 %v1287, %v1286
      %v1537 = vpack.c.b16 %v1289, %v1288
      %v1538 = vpack.c.b16 %v1291, %v1290
      %v1539 = vpack.c.b16 %v1293, %v1292
      %v1540 = vpack.c.b16 %v1295, %v1294
      %v1541 = vpack.c.b16 %v1297, %v1296
      %v1542 = vpack.c.b16 %v1299, %v1298
      %v1543 = vpack.c.b16 %v1301, %v1300
      %v1544 = vpack.c.b16 %v1303, %v1302
      %v1545 = vpack.c.b16 %v1305, %v1304
      %v1546 = vpack.c.b16 %v1307, %v1306
      %v1547 = vpack.c.b16 %v1309, %v1308
      %v1548 = vpack.c.b16 %v1311, %v1310
      %v1549 = vpack.c.b16 %v1313, %v1312
      %v1550 = vpack.c.b16 %v1315, %v1314
      %v1551 = vpack.c.b16 %v1317, %v1316
      %v1552 = vpack.c.b16 %v1319, %v1318
      %v1553 = vpack.c.b16 %v1321, %v1320
      %v1554 = vpack.c.b16 %v1323, %v1322
      %v1555 = vpack.c.b16 %v1325, %v1324
      %v1556 = vpack.c.b16 %v1327, %v1326
      %v1557 = vpack.c.b16 %v1329, %v1328
      %v1558 = vpack.c.b16 %v1331, %v1330
      %v1559 = vpack.c.b16 %v1333, %v1332
      %v1560 = vpack.c.b16 %v1335, %v1334
      %v1561 = vpack.c.b16 %v1337, %v1336
      %v1562 = vpack.c.b16 %v1339, %v1338
      %v1563 = vpack.c.b16 %v1341, %v1340
      %v1564 = vpack.c.b16 %v1343, %v1342
      %v1565 = vpack.c.b16 %v1345, %v1344
      %v1566 = vpack.c.b16 %v1347, %v1346
      %v1567 = vpack.c.b16 %v1349, %v1348
      %v1568 = vpack.c.b16 %v1351, %v1350
      %v1569 = vpack.c.b16 %v1353, %v1352
      %v1570 = vpack.c.b16 %v1355, %v1354
      %v1571 = vpack.c.b16 %v1357, %v1356
      %v1572 = vpack.c.b16 %v1359, %v1358
      %v1573 = vpack.c.b16 %v1361, %v1360
      %v1574 = vpack.c.b16 %v1363, %v1362
      %v1575 = vpack.c.b16 %v1365, %v1364
      %v1576 = vpack.c.b16 %v1367, %v1366
      %v1577 = vpack.c.b16 %v1369, %v1368
      %v1578 = vpack.c.b16 %v1371, %v1370
      %v1579 = vpack.c.b16 %v1373, %v1372
      %v1580 = vpack.c.b16 %v1375, %v1374
      %v1581 = vpack.c.b16 %v1377, %v1376
      %v1582 = vpack.c.b16 %v1379, %v1378
      %v1583 = vpack.c.b16 %v1381, %v1380
      %v1584 = vpack.c.b16 %v1383, %v1382
      %v1585 = vpack.c.b16 %v1385, %v1384
      %v1586 = vpack.c.b16 %v1387, %v1386
      %v1587 = vpack.c.b16 %v1389, %v1388
      %v1588 = vpack.c.b16 %v1391, %v1390
      %v1589 = vpack.c.b16 %v1393, %v1392
      %v1590 = vpack.c.b16 %v1395, %v1394
      %v1591 = vpack.c.b16 %v1397, %v1396
      %v1592 = vpack.c.b16 %v1399, %v1398
      %v1593 = vpack.c.b16 %v1401, %v1400
      %v1594 = vpack.c.b16 %v1403, %v1402
      %v1595 = vpack.c.b16 %v1405, %v1404
      %v1596 = vpack.c.b16 %v1407, %v1406
      %v1597 = vpack.c.b16 %v1409, %v1408
      %v1598 = vpack.c.b16 %v1411, %v1410
      %v1599 = vpack.c.b16 %v1413, %v1412
      %v1600 = vpack.c.b16 %v1415, %v1414
      %v1601 = vpack.c.b16 %v1417, %v1416
      %v1602 = vpack.c.b16 %v1419, %v1418
      %v1603 = vpack.c.b16 %v1421, %v1420
      %v1604 = vpack.c.b16 %v1423, %v1422
      %v1605 = vpack.c.b16 %v1425, %v1424
      %v1606 = vpack.c.b16 %v1427, %v1426
      %v1607 = vpack.c.b16 %v1429, %v1428
      %v1608 = vpack.c.b16 %v1431, %v1430
      %v1609 = vpack.c.b16 %v1433, %v1432
      %v1610 = vpack.c.b16 %v1435, %v1434
      %v1611 = vpack.c.b16 %v1437, %v1436
      %v1612 = vpack.c.b16 %v1439, %v1438
      %v1613 = vpack.c.b16 %v1441, %v1440
      %v1614 = vpack.c.b16 %v1443, %v1442
      %v1615 = vpack.c.b16 %v1445, %v1444
      %v1616 = vpack.c.b16 %v1447, %v1446
      %v1617 = vpack.c.b16 %v1449, %v1448
      %v1618 = vpack.c.b16 %v1451, %v1450
      %v1619 = vpack.c.b16 %v1453, %v1452
      %v1620 = vpack.c.b16 %v1455, %v1454
      %v1621 = vpack.c.b16 %v1457, %v1456
      %v1622 = vpack.c.b16 %v1459, %v1458
      %v1623 = vpack.c.b16 %v1461, %v1460
      %v1624 = vpack.c.b16 %v1463, %v1462
      %v1625 = vpack.c.b16 %v1465, %v1464
      %v1626 = vpack.c.b16 %v1467, %v1466
      %v1627 = vpack.c.b16 %v1469, %v1468
      %v1628 = vpack.c.b16 %v1471, %v1470
      %v1629 = vpack.c.b16 %v1473, %v1472
      %v1630 = vpack.c.b16 %v1475, %v1474
      %v1631 = vpack.c.b16 %v1477, %v1476
      %v1632 = vpack.c.b16 %v1479, %v1478
      %v1633 = vpack.c.b16 %v1481, %v1480
      %v1634 = vpack.c.b16 %v1483, %v1482
      %v1635 = vpack.c.b16 %v1485, %v1484
      %v1636 = vpack.c.b16 %v1487, %v1486
      %v1637 = vpack.c.b16 %v1489, %v1488
      %v1638 = vpack.c.b16 %v1491, %v1490
      %v1639 = vpack.c.b16 %v1493, %v1492
      %v1640 = vpack.c.b16 %v1495, %v1494
      %v1641 = vpack.c.b16 %v1497, %v1496
      %v1642 = vpack.c.b16 %v1499, %v1498
      %v1643 = vpack.c.b16 %v1501, %v1500
      %v1644 = vpack.c.b16 %v1503, %v1502
      %v1645 = vpack.c.b16 %v1505, %v1504
      %v1646 = vpack.c.b16 %v1507, %v1506
      %v1647 = vpack.c.b16 %v1509, %v1508
      %v1648 = vpack.c.b16 %v1511, %v1510
      %v1649 = vpack.c.b16 %v1513, %v1512
      %v1650 = vpack.c.b16 %v1515, %v1514
      %v1651 = vpack.c.b16 %v1517, %v1516
      %v1652 = vpack.c.b16 %v1519, %v1518
      %v1653 = vpack.c.b16 %v1521, %v1520
      %v1654 = vpack.c.b16 %v1523, %v1522
      %v1655 = vpack.c.b16 %v1525, %v1524
      %v1656 = vpack.c.b16 %v1527, %v1526
      %v1657 = vpack.c.b16 %v1529, %v1528
      %1786 = vmatprep.subr.bf16.mxu0 0
      %1787 = vmatpush1.bf16.msra.mxu0 %v1537
      %1788 = vmatprep.subr.bf16.mxu0 0
      %1789 = vmatpush1.bf16.msra.mxu0 %v1536
      %1790 = vmatprep.subr.bf16.mxu0 0
      %1791 = vmatpush1.bf16.msra.mxu0 %v1535
      %1792 = vmatprep.subr.bf16.mxu0 0
      %1793 = vmatpush1.bf16.msra.mxu0 %v1534
      %1794 = vmatprep.subr.bf16.mxu0 0
      %1795 = vmatpush1.bf16.msra.mxu0 %v1533
      %1796 = vmatprep.subr.bf16.mxu0 0
      %1797 = vmatpush1.bf16.msra.mxu0 %v1532
      %1798 = vmatprep.subr.bf16.mxu0 0
      %1799 = vmatpush1.bf16.msra.mxu0 %v1531
      %1800 = vmatprep.subr.bf16.mxu0 0
      %1801 = vmatpush1.bf16.msra.mxu0 %v1530
      %1802 = vmatprep.subr.bf16.mxu0 0
      %1803 = vmatpush2.bf16.msra.mxu0 %v1545
      %1804 = vmatprep.subr.bf16.mxu0 0
      %1805 = vmatpush2.bf16.msra.mxu0 %v1544
      %1806 = vmatprep.subr.bf16.mxu0 0
      %1807 = vmatpush2.bf16.msra.mxu0 %v1543
      %1808 = vmatprep.subr.bf16.mxu0 0
      %1809 = vmatpush2.bf16.msra.mxu0 %v1542
      %1810 = vmatprep.subr.bf16.mxu0 0
      %1811 = vmatpush2.bf16.msra.mxu0 %v1541
      %1812 = vmatprep.subr.bf16.mxu0 0
      %1813 = vmatpush2.bf16.msra.mxu0 %v1540
      %1814 = vmatprep.subr.bf16.mxu0 0
      %1815 = vmatpush2.bf16.msra.mxu0 %v1539
      %1816 = vmatprep.subr.bf16.mxu0 0
      %1817 = vmatpush2.bf16.msra.mxu0 %v1538
      %1818 = vmatprep.mubr.bf16.mxu0 %v692
      %1819 = vmatmul.mubr.bf16.gmra.mxu0 %v691
      %v1820 = vpop.f32.mrf.mxu0
      %v1821 = vadd.f32 %v1016, %v1820
      %v1822 = vpop.f32.mrf.mxu0
      %v1823 = vpop.f32.mrf.mxu0
      %v1824 = vadd.f32 %v1016, %v1823
      %v1825 = vpop.f32.mrf.mxu0
      %1826 = vmatprep.mubr.bf16.mxu0 %v708
      %1827 = vmatmul.mubr.bf16.gmra.mxu0 %v707
      %v1828 = vpop.f32.mrf.mxu0
      %v1829 = vadd.f32 %v1016, %v1828
      %v1830 = vpop.f32.mrf.mxu0
      %v1831 = vpop.f32.mrf.mxu0
      %v1832 = vadd.f32 %v1016, %v1831
      %v1833 = vpop.f32.mrf.mxu0
      %1834 = vmatprep.mubr.bf16.mxu0 %v724
      %1835 = vmatmul.mubr.bf16.gmra.mxu0 %v723
      %v1836 = vpop.f32.mrf.mxu0
      %v1837 = vadd.f32 %v1016, %v1836
      %v1838 = vpop.f32.mrf.mxu0
      %v1839 = vpop.f32.mrf.mxu0
      %v1840 = vadd.f32 %v1016, %v1839
      %v1841 = vpop.f32.mrf.mxu0
      %1842 = vmatprep.mubr.bf16.mxu0 %v740
      %1843 = vmatmul.mubr.bf16.gmra.mxu0 %v739
      %v1844 = vpop.f32.mrf.mxu0
      %v1845 = vadd.f32 %v1016, %v1844
      %v1846 = vpop.f32.mrf.mxu0
      %v1847 = vpop.f32.mrf.mxu0
      %v1848 = vadd.f32 %v1016, %v1847
      %v1849 = vpop.f32.mrf.mxu0
      %1850 = vdwg.mxu0
      %1851 = vmatprep.subr.bf16.mxu0 0
      %1852 = vmatpush1.bf16.msra.mxu0 %v1553
      %1853 = vmatprep.subr.bf16.mxu0 0
      %1854 = vmatpush1.bf16.msra.mxu0 %v1552
      %1855 = vmatprep.subr.bf16.mxu0 0
      %1856 = vmatpush1.bf16.msra.mxu0 %v1551
      %1857 = vmatprep.subr.bf16.mxu0 0
      %1858 = vmatpush1.bf16.msra.mxu0 %v1550
      %1859 = vmatprep.subr.bf16.mxu0 0
      %1860 = vmatpush1.bf16.msra.mxu0 %v1549
      %1861 = vmatprep.subr.bf16.mxu0 0
      %1862 = vmatpush1.bf16.msra.mxu0 %v1548
      %1863 = vmatprep.subr.bf16.mxu0 0
      %1864 = vmatpush1.bf16.msra.mxu0 %v1547
      %1865 = vmatprep.subr.bf16.mxu0 0
      %1866 = vmatpush1.bf16.msra.mxu0 %v1546
      %1867 = vmatprep.subr.bf16.mxu0 0
      %1868 = vmatpush2.bf16.msra.mxu0 %v1561
      %1869 = vmatprep.subr.bf16.mxu0 0
      %1870 = vmatpush2.bf16.msra.mxu0 %v1560
      %1871 = vmatprep.subr.bf16.mxu0 0
      %1872 = vmatpush2.bf16.msra.mxu0 %v1559
      %1873 = vmatprep.subr.bf16.mxu0 0
      %1874 = vmatpush2.bf16.msra.mxu0 %v1558
      %1875 = vmatprep.subr.bf16.mxu0 0
      %1876 = vmatpush2.bf16.msra.mxu0 %v1557
      %1877 = vmatprep.subr.bf16.mxu0 0
      %1878 = vmatpush2.bf16.msra.mxu0 %v1556
      %1879 = vmatprep.subr.bf16.mxu0 0
      %1880 = vmatpush2.bf16.msra.mxu0 %v1555
      %1881 = vmatprep.subr.bf16.mxu0 0
      %1882 = vmatpush2.bf16.msra.mxu0 %v1554
      %1883 = vmatprep.mubr.bf16.mxu0 %v694
      %1884 = vmatmul.mubr.bf16.gmra.mxu0 %v693
      %v1885 = vpop.f32.mrf.mxu0
      %v1886 = vadd.f32 %v1821, %v1885
      %v1887 = vpop.f32.mrf.mxu0
      %v1888 = vpop.f32.mrf.mxu0
      %v1889 = vadd.f32 %v1824, %v1888
      %v1890 = vpop.f32.mrf.mxu0
      %1891 = vmatprep.mubr.bf16.mxu0 %v710
      %1892 = vmatmul.mubr.bf16.gmra.mxu0 %v709
      %v1893 = vpop.f32.mrf.mxu0
      %v1894 = vadd.f32 %v1829, %v1893
      %v1895 = vpop.f32.mrf.mxu0
      %v1896 = vpop.f32.mrf.mxu0
      %v1897 = vadd.f32 %v1832, %v1896
      %v1898 = vpop.f32.mrf.mxu0
      %1899 = vmatprep.mubr.bf16.mxu0 %v726
      %1900 = vmatmul.mubr.bf16.gmra.mxu0 %v725
      %v1901 = vpop.f32.mrf.mxu0
      %v1902 = vadd.f32 %v1837, %v1901
      %v1903 = vpop.f32.mrf.mxu0
      %v1904 = vpop.f32.mrf.mxu0
      %v1905 = vadd.f32 %v1840, %v1904
      %v1906 = vpop.f32.mrf.mxu0
      %1907 = vmatprep.mubr.bf16.mxu0 %v742
      %1908 = vmatmul.mubr.bf16.gmra.mxu0 %v741
      %v1909 = vpop.f32.mrf.mxu0
      %v1910 = vadd.f32 %v1845, %v1909
      %v1911 = vpop.f32.mrf.mxu0
      %v1912 = vpop.f32.mrf.mxu0
      %v1913 = vadd.f32 %v1848, %v1912
      %v1914 = vpop.f32.mrf.mxu0
      %1915 = vdwg.mxu0
      %1916 = vmatprep.subr.bf16.mxu0 0
      %1917 = vmatpush1.bf16.msra.mxu0 %v1569
      %1918 = vmatprep.subr.bf16.mxu0 0
      %1919 = vmatpush1.bf16.msra.mxu0 %v1568
      %1920 = vmatprep.subr.bf16.mxu0 0
      %1921 = vmatpush1.bf16.msra.mxu0 %v1567
      %1922 = vmatprep.subr.bf16.mxu0 0
      %1923 = vmatpush1.bf16.msra.mxu0 %v1566
      %1924 = vmatprep.subr.bf16.mxu0 0
      %1925 = vmatpush1.bf16.msra.mxu0 %v1565
      %1926 = vmatprep.subr.bf16.mxu0 0
      %1927 = vmatpush1.bf16.msra.mxu0 %v1564
      %1928 = vmatprep.subr.bf16.mxu0 0
      %1929 = vmatpush1.bf16.msra.mxu0 %v1563
      %1930 = vmatprep.subr.bf16.mxu0 0
      %1931 = vmatpush1.bf16.msra.mxu0 %v1562
      %1932 = vmatprep.subr.bf16.mxu0 0
      %1933 = vmatpush2.bf16.msra.mxu0 %v1577
      %1934 = vmatprep.subr.bf16.mxu0 0
      %1935 = vmatpush2.bf16.msra.mxu0 %v1576
      %1936 = vmatprep.subr.bf16.mxu0 0
      %1937 = vmatpush2.bf16.msra.mxu0 %v1575
      %1938 = vmatprep.subr.bf16.mxu0 0
      %1939 = vmatpush2.bf16.msra.mxu0 %v1574
      %1940 = vmatprep.subr.bf16.mxu0 0
      %1941 = vmatpush2.bf16.msra.mxu0 %v1573
      %1942 = vmatprep.subr.bf16.mxu0 0
      %1943 = vmatpush2.bf16.msra.mxu0 %v1572
      %1944 = vmatprep.subr.bf16.mxu0 0
      %1945 = vmatpush2.bf16.msra.mxu0 %v1571
      %1946 = vmatprep.subr.bf16.mxu0 0
      %1947 = vmatpush2.bf16.msra.mxu0 %v1570
      %1948 = vmatprep.mubr.bf16.mxu0 %v696
      %1949 = vmatmul.mubr.bf16.gmra.mxu0 %v695
      %v1950 = vpop.f32.mrf.mxu0
      %v1951 = vadd.f32 %v1886, %v1950
      %v1952 = vpop.f32.mrf.mxu0
      %v1953 = vpop.f32.mrf.mxu0
      %v1954 = vadd.f32 %v1889, %v1953
      %v1955 = vpop.f32.mrf.mxu0
      %1956 = vmatprep.mubr.bf16.mxu0 %v712
      %1957 = vmatmul.mubr.bf16.gmra.mxu0 %v711
      %v1958 = vpop.f32.mrf.mxu0
      %v1959 = vadd.f32 %v1894, %v1958
      %v1960 = vpop.f32.mrf.mxu0
      %v1961 = vpop.f32.mrf.mxu0
      %v1962 = vadd.f32 %v1897, %v1961
      %v1963 = vpop.f32.mrf.mxu0
      %1964 = vmatprep.mubr.bf16.mxu0 %v728
      %1965 = vmatmul.mubr.bf16.gmra.mxu0 %v727
      %v1966 = vpop.f32.mrf.mxu0
      %v1967 = vadd.f32 %v1902, %v1966
      %v1968 = vpop.f32.mrf.mxu0
      %v1969 = vpop.f32.mrf.mxu0
      %v1970 = vadd.f32 %v1905, %v1969
      %v1971 = vpop.f32.mrf.mxu0
      %1972 = vmatprep.mubr.bf16.mxu0 %v744
      %1973 = vmatmul.mubr.bf16.gmra.mxu0 %v743
      %v1974 = vpop.f32.mrf.mxu0
      %v1975 = vadd.f32 %v1910, %v1974
      %v1976 = vpop.f32.mrf.mxu0
      %v1977 = vpop.f32.mrf.mxu0
      %v1978 = vadd.f32 %v1913, %v1977
      %v1979 = vpop.f32.mrf.mxu0
      %1980 = vdwg.mxu0
      %1981 = vmatprep.subr.bf16.mxu0 0
      %1982 = vmatpush1.bf16.msra.mxu0 %v1585
      %1983 = vmatprep.subr.bf16.mxu0 0
      %1984 = vmatpush1.bf16.msra.mxu0 %v1584
      %1985 = vmatprep.subr.bf16.mxu0 0
      %1986 = vmatpush1.bf16.msra.mxu0 %v1583
      %1987 = vmatprep.subr.bf16.mxu0 0
      %1988 = vmatpush1.bf16.msra.mxu0 %v1582
      %1989 = vmatprep.subr.bf16.mxu0 0
      %1990 = vmatpush1.bf16.msra.mxu0 %v1581
      %1991 = vmatprep.subr.bf16.mxu0 0
      %1992 = vmatpush1.bf16.msra.mxu0 %v1580
      %1993 = vmatprep.subr.bf16.mxu0 0
      %1994 = vmatpush1.bf16.msra.mxu0 %v1579
      %1995 = vmatprep.subr.bf16.mxu0 0
      %1996 = vmatpush1.bf16.msra.mxu0 %v1578
      %1997 = vmatprep.subr.bf16.mxu0 0
      %1998 = vmatpush2.bf16.msra.mxu0 %v1593
      %1999 = vmatprep.subr.bf16.mxu0 0
      %2000 = vmatpush2.bf16.msra.mxu0 %v1592
      %2001 = vmatprep.subr.bf16.mxu0 0
      %2002 = vmatpush2.bf16.msra.mxu0 %v1591
      %2003 = vmatprep.subr.bf16.mxu0 0
      %2004 = vmatpush2.bf16.msra.mxu0 %v1590
      %2005 = vmatprep.subr.bf16.mxu0 0
      %2006 = vmatpush2.bf16.msra.mxu0 %v1589
      %2007 = vmatprep.subr.bf16.mxu0 0
      %2008 = vmatpush2.bf16.msra.mxu0 %v1588
      %2009 = vmatprep.subr.bf16.mxu0 0
      %2010 = vmatpush2.bf16.msra.mxu0 %v1587
      %2011 = vmatprep.subr.bf16.mxu0 0
      %2012 = vmatpush2.bf16.msra.mxu0 %v1586
      %2013 = vmatprep.mubr.bf16.mxu0 %v698
      %2014 = vmatmul.mubr.bf16.gmra.mxu0 %v697
      %v2015 = vpop.f32.mrf.mxu0
      %v2016 = vadd.f32 %v1951, %v2015
      %v2017 = vpop.f32.mrf.mxu0
      %v2018 = vpop.f32.mrf.mxu0
      %v2019 = vadd.f32 %v1954, %v2018
      %v2020 = vpop.f32.mrf.mxu0
      %2021 = vmatprep.mubr.bf16.mxu0 %v714
      %2022 = vmatmul.mubr.bf16.gmra.mxu0 %v713
      %v2023 = vpop.f32.mrf.mxu0
      %v2024 = vadd.f32 %v1959, %v2023
      %v2025 = vpop.f32.mrf.mxu0
      %v2026 = vpop.f32.mrf.mxu0
      %v2027 = vadd.f32 %v1962, %v2026
      %v2028 = vpop.f32.mrf.mxu0
      %2029 = vmatprep.mubr.bf16.mxu0 %v730
      %2030 = vmatmul.mubr.bf16.gmra.mxu0 %v729
      %v2031 = vpop.f32.mrf.mxu0
      %v2032 = vadd.f32 %v1967, %v2031
      %v2033 = vpop.f32.mrf.mxu0
      %v2034 = vpop.f32.mrf.mxu0
      %v2035 = vadd.f32 %v1970, %v2034
      %v2036 = vpop.f32.mrf.mxu0
      %2037 = vmatprep.mubr.bf16.mxu0 %v746
      %2038 = vmatmul.mubr.bf16.gmra.mxu0 %v745
      %v2039 = vpop.f32.mrf.mxu0
      %v2040 = vadd.f32 %v1975, %v2039
      %v2041 = vpop.f32.mrf.mxu0
      %v2042 = vpop.f32.mrf.mxu0
      %v2043 = vadd.f32 %v1978, %v2042
      %v2044 = vpop.f32.mrf.mxu0
      %2045 = vdwg.mxu0
      %2046 = vmatprep.subr.bf16.mxu0 0
      %2047 = vmatpush1.bf16.msra.mxu0 %v1601
      %2048 = vmatprep.subr.bf16.mxu0 0
      %2049 = vmatpush1.bf16.msra.mxu0 %v1600
      %2050 = vmatprep.subr.bf16.mxu0 0
      %2051 = vmatpush1.bf16.msra.mxu0 %v1599
      %2052 = vmatprep.subr.bf16.mxu0 0
      %2053 = vmatpush1.bf16.msra.mxu0 %v1598
      %2054 = vmatprep.subr.bf16.mxu0 0
      %2055 = vmatpush1.bf16.msra.mxu0 %v1597
      %2056 = vmatprep.subr.bf16.mxu0 0
      %2057 = vmatpush1.bf16.msra.mxu0 %v1596
      %2058 = vmatprep.subr.bf16.mxu0 0
      %2059 = vmatpush1.bf16.msra.mxu0 %v1595
      %2060 = vmatprep.subr.bf16.mxu0 0
      %2061 = vmatpush1.bf16.msra.mxu0 %v1594
      %2062 = vmatprep.subr.bf16.mxu0 0
      %2063 = vmatpush2.bf16.msra.mxu0 %v1609
      %2064 = vmatprep.subr.bf16.mxu0 0
      %2065 = vmatpush2.bf16.msra.mxu0 %v1608
      %2066 = vmatprep.subr.bf16.mxu0 0
      %2067 = vmatpush2.bf16.msra.mxu0 %v1607
      %2068 = vmatprep.subr.bf16.mxu0 0
      %2069 = vmatpush2.bf16.msra.mxu0 %v1606
      %2070 = vmatprep.subr.bf16.mxu0 0
      %2071 = vmatpush2.bf16.msra.mxu0 %v1605
      %2072 = vmatprep.subr.bf16.mxu0 0
      %2073 = vmatpush2.bf16.msra.mxu0 %v1604
      %2074 = vmatprep.subr.bf16.mxu0 0
      %2075 = vmatpush2.bf16.msra.mxu0 %v1603
      %2076 = vmatprep.subr.bf16.mxu0 0
      %2077 = vmatpush2.bf16.msra.mxu0 %v1602
      %2078 = vmatprep.mubr.bf16.mxu0 %v700
      %2079 = vmatmul.mubr.bf16.gmra.mxu0 %v699
      %v2080 = vpop.f32.mrf.mxu0
      %v2081 = vadd.f32 %v2016, %v2080
      %v2082 = vpop.f32.mrf.mxu0
      %v2083 = vpop.f32.mrf.mxu0
      %v2084 = vadd.f32 %v2019, %v2083
      %v2085 = vpop.f32.mrf.mxu0
      %2086 = vmatprep.mubr.bf16.mxu0 %v716
      %2087 = vmatmul.mubr.bf16.gmra.mxu0 %v715
      %v2088 = vpop.f32.mrf.mxu0
      %v2089 = vadd.f32 %v2024, %v2088
      %v2090 = vpop.f32.mrf.mxu0
      %v2091 = vpop.f32.mrf.mxu0
      %v2092 = vadd.f32 %v2027, %v2091
      %v2093 = vpop.f32.mrf.mxu0
      %2094 = vmatprep.mubr.bf16.mxu0 %v732
      %2095 = vmatmul.mubr.bf16.gmra.mxu0 %v731
      %v2096 = vpop.f32.mrf.mxu0
      %v2097 = vadd.f32 %v2032, %v2096
      %v2098 = vpop.f32.mrf.mxu0
      %v2099 = vpop.f32.mrf.mxu0
      %v2100 = vadd.f32 %v2035, %v2099
      %v2101 = vpop.f32.mrf.mxu0
      %2102 = vmatprep.mubr.bf16.mxu0 %v748
      %2103 = vmatmul.mubr.bf16.gmra.mxu0 %v747
      %v2104 = vpop.f32.mrf.mxu0
      %v2105 = vadd.f32 %v2040, %v2104
      %v2106 = vpop.f32.mrf.mxu0
      %v2107 = vpop.f32.mrf.mxu0
      %v2108 = vadd.f32 %v2043, %v2107
      %v2109 = vpop.f32.mrf.mxu0
      %2110 = vdwg.mxu0
      %2111 = vmatprep.subr.bf16.mxu0 0
      %2112 = vmatpush1.bf16.msra.mxu0 %v1617
      %2113 = vmatprep.subr.bf16.mxu0 0
      %2114 = vmatpush1.bf16.msra.mxu0 %v1616
      %2115 = vmatprep.subr.bf16.mxu0 0
      %2116 = vmatpush1.bf16.msra.mxu0 %v1615
      %2117 = vmatprep.subr.bf16.mxu0 0
      %2118 = vmatpush1.bf16.msra.mxu0 %v1614
      %2119 = vmatprep.subr.bf16.mxu0 0
      %2120 = vmatpush1.bf16.msra.mxu0 %v1613
      %2121 = vmatprep.subr.bf16.mxu0 0
      %2122 = vmatpush1.bf16.msra.mxu0 %v1612
      %2123 = vmatprep.subr.bf16.mxu0 0
      %2124 = vmatpush1.bf16.msra.mxu0 %v1611
      %2125 = vmatprep.subr.bf16.mxu0 0
      %2126 = vmatpush1.bf16.msra.mxu0 %v1610
      %2127 = vmatprep.subr.bf16.mxu0 0
      %2128 = vmatpush2.bf16.msra.mxu0 %v1625
      %2129 = vmatprep.subr.bf16.mxu0 0
      %2130 = vmatpush2.bf16.msra.mxu0 %v1624
      %2131 = vmatprep.subr.bf16.mxu0 0
      %2132 = vmatpush2.bf16.msra.mxu0 %v1623
      %2133 = vmatprep.subr.bf16.mxu0 0
      %2134 = vmatpush2.bf16.msra.mxu0 %v1622
      %2135 = vmatprep.subr.bf16.mxu0 0
      %2136 = vmatpush2.bf16.msra.mxu0 %v1621
      %2137 = vmatprep.subr.bf16.mxu0 0
      %2138 = vmatpush2.bf16.msra.mxu0 %v1620
      %2139 = vmatprep.subr.bf16.mxu0 0
      %2140 = vmatpush2.bf16.msra.mxu0 %v1619
      %2141 = vmatprep.subr.bf16.mxu0 0
      %2142 = vmatpush2.bf16.msra.mxu0 %v1618
      %2143 = vmatprep.mubr.bf16.mxu0 %v702
      %2144 = vmatmul.mubr.bf16.gmra.mxu0 %v701
      %v2145 = vpop.f32.mrf.mxu0
      %v2146 = vadd.f32 %v2081, %v2145
      %v2147 = vpop.f32.mrf.mxu0
      %v2148 = vpop.f32.mrf.mxu0
      %v2149 = vadd.f32 %v2084, %v2148
      %v2150 = vpop.f32.mrf.mxu0
      %2151 = vmatprep.mubr.bf16.mxu0 %v718
      %2152 = vmatmul.mubr.bf16.gmra.mxu0 %v717
      %v2153 = vpop.f32.mrf.mxu0
      %v2154 = vadd.f32 %v2089, %v2153
      %v2155 = vpop.f32.mrf.mxu0
      %v2156 = vpop.f32.mrf.mxu0
      %v2157 = vadd.f32 %v2092, %v2156
      %v2158 = vpop.f32.mrf.mxu0
      %2159 = vmatprep.mubr.bf16.mxu0 %v734
      %2160 = vmatmul.mubr.bf16.gmra.mxu0 %v733
      %v2161 = vpop.f32.mrf.mxu0
      %v2162 = vadd.f32 %v2097, %v2161
      %v2163 = vpop.f32.mrf.mxu0
      %v2164 = vpop.f32.mrf.mxu0
      %v2165 = vadd.f32 %v2100, %v2164
      %v2166 = vpop.f32.mrf.mxu0
      %2167 = vmatprep.mubr.bf16.mxu0 %v750
      %2168 = vmatmul.mubr.bf16.gmra.mxu0 %v749
      %v2169 = vpop.f32.mrf.mxu0
      %v2170 = vadd.f32 %v2105, %v2169
      %v2171 = vpop.f32.mrf.mxu0
      %v2172 = vpop.f32.mrf.mxu0
      %v2173 = vadd.f32 %v2108, %v2172
      %v2174 = vpop.f32.mrf.mxu0
      %2175 = vdwg.mxu0
      %2176 = vmatprep.subr.bf16.mxu0 0
      %2177 = vmatpush1.bf16.msra.mxu0 %v1633
      %2178 = vmatprep.subr.bf16.mxu0 0
      %2179 = vmatpush1.bf16.msra.mxu0 %v1632
      %2180 = vmatprep.subr.bf16.mxu0 0
      %2181 = vmatpush1.bf16.msra.mxu0 %v1631
      %2182 = vmatprep.subr.bf16.mxu0 0
      %2183 = vmatpush1.bf16.msra.mxu0 %v1630
      %2184 = vmatprep.subr.bf16.mxu0 0
      %2185 = vmatpush1.bf16.msra.mxu0 %v1629
      %2186 = vmatprep.subr.bf16.mxu0 0
      %2187 = vmatpush1.bf16.msra.mxu0 %v1628
      %2188 = vmatprep.subr.bf16.mxu0 0
      %2189 = vmatpush1.bf16.msra.mxu0 %v1627
      %2190 = vmatprep.subr.bf16.mxu0 0
      %2191 = vmatpush1.bf16.msra.mxu0 %v1626
      %2192 = vmatprep.subr.bf16.mxu0 0
      %2193 = vmatpush2.bf16.msra.mxu0 %v1641
      %2194 = vmatprep.subr.bf16.mxu0 0
      %2195 = vmatpush2.bf16.msra.mxu0 %v1640
      %2196 = vmatprep.subr.bf16.mxu0 0
      %2197 = vmatpush2.bf16.msra.mxu0 %v1639
      %2198 = vmatprep.subr.bf16.mxu0 0
      %2199 = vmatpush2.bf16.msra.mxu0 %v1638
      %2200 = vmatprep.subr.bf16.mxu0 0
      %2201 = vmatpush2.bf16.msra.mxu0 %v1637
      %2202 = vmatprep.subr.bf16.mxu0 0
      %2203 = vmatpush2.bf16.msra.mxu0 %v1636
      %2204 = vmatprep.subr.bf16.mxu0 0
      %2205 = vmatpush2.bf16.msra.mxu0 %v1635
      %2206 = vmatprep.subr.bf16.mxu0 0
      %2207 = vmatpush2.bf16.msra.mxu0 %v1634
      %2208 = vmatprep.mubr.bf16.mxu0 %v704
      %2209 = vmatmul.mubr.bf16.gmra.mxu0 %v703
      %v2210 = vpop.f32.mrf.mxu0
      %v2211 = vadd.f32 %v2146, %v2210
      %v2212 = vpop.f32.mrf.mxu0
      %v2213 = vpop.f32.mrf.mxu0
      %v2214 = vadd.f32 %v2149, %v2213
      %v2215 = vpop.f32.mrf.mxu0
      %2216 = vmatprep.mubr.bf16.mxu0 %v720
      %2217 = vmatmul.mubr.bf16.gmra.mxu0 %v719
      %v2218 = vpop.f32.mrf.mxu0
      %v2219 = vadd.f32 %v2154, %v2218
      %v2220 = vpop.f32.mrf.mxu0
      %v2221 = vpop.f32.mrf.mxu0
      %v2222 = vadd.f32 %v2157, %v2221
      %v2223 = vpop.f32.mrf.mxu0
      %2224 = vmatprep.mubr.bf16.mxu0 %v736
      %2225 = vmatmul.mubr.bf16.gmra.mxu0 %v735
      %v2226 = vpop.f32.mrf.mxu0
      %v2227 = vadd.f32 %v2162, %v2226
      %v2228 = vpop.f32.mrf.mxu0
      %v2229 = vpop.f32.mrf.mxu0
      %v2230 = vadd.f32 %v2165, %v2229
      %v2231 = vpop.f32.mrf.mxu0
      %2232 = vmatprep.mubr.bf16.mxu0 %v752
      %2233 = vmatmul.mubr.bf16.gmra.mxu0 %v751
      %v2234 = vpop.f32.mrf.mxu0
      %v2235 = vadd.f32 %v2170, %v2234
      %v2236 = vpop.f32.mrf.mxu0
      %v2237 = vpop.f32.mrf.mxu0
      %v2238 = vadd.f32 %v2173, %v2237
      %v2239 = vpop.f32.mrf.mxu0
      %2240 = vdwg.mxu0
      %2241 = vmatprep.subr.bf16.mxu0 0
      %2242 = vmatpush1.bf16.msra.mxu0 %v1649
      %2243 = vmatprep.subr.bf16.mxu0 0
      %2244 = vmatpush1.bf16.msra.mxu0 %v1648
      %2245 = vmatprep.subr.bf16.mxu0 0
      %2246 = vmatpush1.bf16.msra.mxu0 %v1647
      %2247 = vmatprep.subr.bf16.mxu0 0
      %2248 = vmatpush1.bf16.msra.mxu0 %v1646
      %2249 = vmatprep.subr.bf16.mxu0 0
      %2250 = vmatpush1.bf16.msra.mxu0 %v1645
      %2251 = vmatprep.subr.bf16.mxu0 0
      %2252 = vmatpush1.bf16.msra.mxu0 %v1644
      %2253 = vmatprep.subr.bf16.mxu0 0
      %2254 = vmatpush1.bf16.msra.mxu0 %v1643
      %2255 = vmatprep.subr.bf16.mxu0 0
      %2256 = vmatpush1.bf16.msra.mxu0 %v1642
      %2257 = vmatprep.subr.bf16.mxu0 0
      %2258 = vmatpush2.bf16.msra.mxu0 %v1657
      %2259 = vmatprep.subr.bf16.mxu0 0
      %2260 = vmatpush2.bf16.msra.mxu0 %v1656
      %2261 = vmatprep.subr.bf16.mxu0 0
      %2262 = vmatpush2.bf16.msra.mxu0 %v1655
      %2263 = vmatprep.subr.bf16.mxu0 0
      %2264 = vmatpush2.bf16.msra.mxu0 %v1654
      %2265 = vmatprep.subr.bf16.mxu0 0
      %2266 = vmatpush2.bf16.msra.mxu0 %v1653
      %2267 = vmatprep.subr.bf16.mxu0 0
      %2268 = vmatpush2.bf16.msra.mxu0 %v1652
      %2269 = vmatprep.subr.bf16.mxu0 0
      %2270 = vmatpush2.bf16.msra.mxu0 %v1651
      %2271 = vmatprep.subr.bf16.mxu0 0
      %2272 = vmatpush2.bf16.msra.mxu0 %v1650
      %2273 = vmatprep.mubr.bf16.mxu0 %v706
      %2274 = vmatmul.mubr.bf16.gmra.mxu0 %v705
      %v2275 = vpop.f32.mrf.mxu0
      %v2276 = vadd.f32 %v2211, %v2275
      %v2277 = vpop.f32.mrf.mxu0
      %v2278 = vpop.f32.mrf.mxu0
      %v2279 = vadd.f32 %v2214, %v2278
      %v2280 = vpop.f32.mrf.mxu0
      %2281 = vmatprep.mubr.bf16.mxu0 %v722
      %2282 = vmatmul.mubr.bf16.gmra.mxu0 %v721
      %v2283 = vpop.f32.mrf.mxu0
      %v2284 = vadd.f32 %v2219, %v2283
      %v2285 = vpop.f32.mrf.mxu0
      %v2286 = vpop.f32.mrf.mxu0
      %v2287 = vadd.f32 %v2222, %v2286
      %v2288 = vpop.f32.mrf.mxu0
      %2289 = vmatprep.mubr.bf16.mxu0 %v738
      %2290 = vmatmul.mubr.bf16.gmra.mxu0 %v737
      %v2291 = vpop.f32.mrf.mxu0
      %v2292 = vadd.f32 %v2227, %v2291
      %v2293 = vpop.f32.mrf.mxu0
      %v2294 = vpop.f32.mrf.mxu0
      %v2295 = vadd.f32 %v2230, %v2294
      %v2296 = vpop.f32.mrf.mxu0
      %2297 = vmatprep.mubr.bf16.mxu0 %v754
      %2298 = vmatmul.mubr.bf16.gmra.mxu0 %v753
      %v2299 = vpop.f32.mrf.mxu0
      %v2300 = vadd.f32 %v2235, %v2299
      %v2301 = vpop.f32.mrf.mxu0
      %v2302 = vpop.f32.mrf.mxu0
      %v2303 = vadd.f32 %v2238, %v2302
      %v2304 = vpop.f32.mrf.mxu0
      %2305 = vdwg.mxu0
      %v2306 = vmax.f32 %v2276, 0.0
      %v2307 = vmax.f32 %v2279, 0.0
      %v2308 = vmax.f32 %v2284, 0.0
      %v2309 = vmax.f32 %v2287, 0.0
      %v2310 = vmax.f32 %v2292, 0.0
      %v2311 = vmax.f32 %v2295, 0.0
      %v2312 = vmax.f32 %v2300, 0.0
      %v2313 = vmax.f32 %v2303, 0.0
      %2314 = vst [vmem:[#allocation3] sm:$0xff] %v2306
      %2315 = vst [vmem:[#allocation3 + $0x8] sm:$0xff] %v2307
      %2316 = vst [vmem:[#allocation3 + $0x10] sm:$0xff] %v2308
      %2317 = vst [vmem:[#allocation3 + $0x18] sm:$0xff] %v2309
      %2318 = vst [vmem:[#allocation3 + $0x20] sm:$0xff] %v2310
      %2319 = vst [vmem:[#allocation3 + $0x28] sm:$0xff] %v2311
      %2320 = vst [vmem:[#allocation3 + $0x30] sm:$0xff] %v2312
      %2321 = vst [vmem:[#allocation3 + $0x38] sm:$0xff] %v2313
      %2322 = vst [vmem:[#allocation4] sm:$0xff] 0.0
      %2323 = vst [vmem:[#allocation4 + $0x8] sm:$0xff] 0.0
      %2324 = vst [vmem:[#allocation4 + $0x10] sm:$0xff] 0.0
      %2325 = vst [vmem:[#allocation4 + $0x18] sm:$0xff] 0.0
      %2326 = vst [vmem:[#allocation4 + $0x20] sm:$0xff] 0.0
      %2327 = vst [vmem:[#allocation4 + $0x28] sm:$0xff] 0.0
      %2328 = vst [vmem:[#allocation4 + $0x30] sm:$0xff] 0.0
      %2329 = vst [vmem:[#allocation4 + $0x38] sm:$0xff] 0.0
      %2330 = vst [vmem:[#allocation4 + $0x40] sm:$0xff] 0.0
      %2331 = vst [vmem:[#allocation4 + $0x48] sm:$0xff] 0.0
      %2332 = vst [vmem:[#allocation4 + $0x50] sm:$0xff] 0.0
      %2333 = vst [vmem:[#allocation4 + $0x58] sm:$0xff] 0.0
      %2334 = vst [vmem:[#allocation4 + $0x60] sm:$0xff] 0.0
      %2335 = vst [vmem:[#allocation4 + $0x68] sm:$0xff] 0.0
      %2336 = vst [vmem:[#allocation4 + $0x70] sm:$0xff] 0.0
      %2337 = vst [vmem:[#allocation4 + $0x78] sm:$0xff] 0.0
      %2338 = vst [vmem:[#allocation4 + $0x80] sm:$0xff] 0.0
      %2339 = vst [vmem:[#allocation4 + $0x88] sm:$0xff] 0.0
      %2340 = vst [vmem:[#allocation4 + $0x90] sm:$0xff] 0.0
      %2341 = vst [vmem:[#allocation4 + $0x98] sm:$0xff] 0.0
      %2342 = vst [vmem:[#allocation4 + $0xa0] sm:$0xff] 0.0
      %2343 = vst [vmem:[#allocation4 + $0xa8] sm:$0xff] 0.0
      %2344 = vst [vmem:[#allocation4 + $0xb0] sm:$0xff] 0.0
      %2345 = vst [vmem:[#allocation4 + $0xb8] sm:$0xff] 0.0
      %2346 = vst [vmem:[#allocation4 + $0xc0] sm:$0xff] 0.0
      %2347 = vst [vmem:[#allocation4 + $0xc8] sm:$0xff] 0.0
      %2348 = vst [vmem:[#allocation4 + $0xd0] sm:$0xff] 0.0
      %2349 = vst [vmem:[#allocation4 + $0xd8] sm:$0xff] 0.0
      %2350 = vst [vmem:[#allocation4 + $0xe0] sm:$0xff] 0.0
      %2351 = vst [vmem:[#allocation4 + $0xe8] sm:$0xff] 0.0
      %2352 = vst [vmem:[#allocation4 + $0xf0] sm:$0xff] 0.0
      %2353 = vst [vmem:[#allocation4 + $0xf8] sm:$0xff] 0.0
      %2354 = vst [vmem:[#allocation4 + $0x100] sm:$0xff] 0.0
      %2355 = vst [vmem:[#allocation4 + $0x108] sm:$0xff] 0.0
      %2356 = vst [vmem:[#allocation4 + $0x110] sm:$0xff] 0.0
      %2357 = vst [vmem:[#allocation4 + $0x118] sm:$0xff] 0.0
      %2358 = vst [vmem:[#allocation4 + $0x120] sm:$0xff] 0.0
      %2359 = vst [vmem:[#allocation4 + $0x128] sm:$0xff] 0.0
      %2360 = vst [vmem:[#allocation4 + $0x130] sm:$0xff] 0.0
      %2361 = vst [vmem:[#allocation4 + $0x138] sm:$0xff] 0.0
      %2362 = vst [vmem:[#allocation4 + $0x140] sm:$0xff] 0.0
      %2363 = vst [vmem:[#allocation4 + $0x148] sm:$0xff] 0.0
      %2364 = vst [vmem:[#allocation4 + $0x150] sm:$0xff] 0.0
      %2365 = vst [vmem:[#allocation4 + $0x158] sm:$0xff] 0.0
      %2366 = vst [vmem:[#allocation4 + $0x160] sm:$0xff] 0.0
      %2367 = vst [vmem:[#allocation4 + $0x168] sm:$0xff] 0.0
      %2368 = vst [vmem:[#allocation4 + $0x170] sm:$0xff] 0.0
      %2369 = vst [vmem:[#allocation4 + $0x178] sm:$0xff] 0.0
      %2370 = vst [vmem:[#allocation4 + $0x180] sm:$0xff] 0.0
      %2371 = vst [vmem:[#allocation4 + $0x188] sm:$0xff] 0.0
      %2372 = vst [vmem:[#allocation4 + $0x190] sm:$0xff] 0.0
      %2373 = vst [vmem:[#allocation4 + $0x198] sm:$0xff] 0.0
      %2374 = vst [vmem:[#allocation4 + $0x1a0] sm:$0xff] 0.0
      %2375 = vst [vmem:[#allocation4 + $0x1a8] sm:$0xff] 0.0
      %v2376 = vld [vmem:[#allocation3] sm:$0x3f]
      %2377 = vst [vmem:[#allocation4] sm:$0x3f] %v2376
      %v2378 = vld [vmem:[#allocation3 + $0x8] sm:$0x3f]
      %2379 = vst [vmem:[#allocation4 + $0x48] sm:$0x3f] %v2378
      %v2380 = vld [vmem:[#allocation3 + $0x10] sm:$0x3f]
      %2381 = vst [vmem:[#allocation4 + $0x90] sm:$0x3f] %v2380
      %v2382 = vld [vmem:[#allocation3 + $0x18] sm:$0x3f]
      %2383 = vst [vmem:[#allocation4 + $0xd8] sm:$0x3f] %v2382
      %v2384 = vld [vmem:[#allocation3 + $0x20] sm:$0x3f]
      %2385 = vst [vmem:[#allocation4 + $0x120] sm:$0x3f] %v2384
      %v2386 = vld [vmem:[#allocation3 + $0x28] sm:$0x3f]
      %2387 = vst [vmem:[#allocation4 + $0x168] sm:$0x3f] %v2386
      %v2388 = vld [vmem:[#allocation3 + $0x1] sm:$0x3f]
      %2389 = vst [vmem:[#allocation4 + $0x8] sm:$0x3f] %v2388
      %v2390 = vld [vmem:[#allocation3 + $0x9] sm:$0x3f]
      %2391 = vst [vmem:[#allocation4 + $0x50] sm:$0x3f] %v2390
      %v2392 = vld [vmem:[#allocation3 + $0x11] sm:$0x3f]
      %2393 = vst [vmem:[#allocation4 + $0x98] sm:$0x3f] %v2392
      %v2394 = vld [vmem:[#allocation3 + $0x19] sm:$0x3f]
      %2395 = vst [vmem:[#allocation4 + $0xe0] sm:$0x3f] %v2394
      %v2396 = vld [vmem:[#allocation3 + $0x21] sm:$0x3f]
      %2397 = vst [vmem:[#allocation4 + $0x128] sm:$0x3f] %v2396
      %v2398 = vld [vmem:[#allocation3 + $0x29] sm:$0x3f]
      %2399 = vst [vmem:[#allocation4 + $0x170] sm:$0x3f] %v2398
      %v2400 = vld [vmem:[#allocation3 + $0x2] sm:$0x3f]
      %2401 = vst [vmem:[#allocation4 + $0x10] sm:$0x3f] %v2400
      %v2402 = vld [vmem:[#allocation3 + $0xa] sm:$0x3f]
      %2403 = vst [vmem:[#allocation4 + $0x58] sm:$0x3f] %v2402
      %v2404 = vld [vmem:[#allocation3 + $0x12] sm:$0x3f]
      %2405 = vst [vmem:[#allocation4 + $0xa0] sm:$0x3f] %v2404
      %v2406 = vld [vmem:[#allocation3 + $0x1a] sm:$0x3f]
      %2407 = vst [vmem:[#allocation4 + $0xe8] sm:$0x3f] %v2406
      %v2408 = vld [vmem:[#allocation3 + $0x22] sm:$0x3f]
      %2409 = vst [vmem:[#allocation4 + $0x130] sm:$0x3f] %v2408
      %v2410 = vld [vmem:[#allocation3 + $0x2a] sm:$0x3f]
      %2411 = vst [vmem:[#allocation4 + $0x178] sm:$0x3f] %v2410
      %v2412 = vld [vmem:[#allocation3 + $0x8] sm:$0x3f]
      %2413 = vst [vmem:[#allocation4 + $0x18] sm:$0x3f] %v2412
      %v2414 = vld [vmem:[#allocation3 + $0x10] sm:$0x3f]
      %2415 = vst [vmem:[#allocation4 + $0x60] sm:$0x3f] %v2414
      %v2416 = vld [vmem:[#allocation3 + $0x18] sm:$0x3f]
      %2417 = vst [vmem:[#allocation4 + $0xa8] sm:$0x3f] %v2416
      %v2418 = vld [vmem:[#allocation3 + $0x20] sm:$0x3f]
      %2419 = vst [vmem:[#allocation4 + $0xf0] sm:$0x3f] %v2418
      %v2420 = vld [vmem:[#allocation3 + $0x28] sm:$0x3f]
      %2421 = vst [vmem:[#allocation4 + $0x138] sm:$0x3f] %v2420
      %v2422 = vld [vmem:[#allocation3 + $0x30] sm:$0x3f]
      %2423 = vst [vmem:[#allocation4 + $0x180] sm:$0x3f] %v2422
      %v2424 = vld [vmem:[#allocation3 + $0x9] sm:$0x3f]
      %2425 = vst [vmem:[#allocation4 + $0x20] sm:$0x3f] %v2424
      %v2426 = vld [vmem:[#allocation3 + $0x11] sm:$0x3f]
      %2427 = vst [vmem:[#allocation4 + $0x68] sm:$0x3f] %v2426
      %v2428 = vld [vmem:[#allocation3 + $0x19] sm:$0x3f]
      %2429 = vst [vmem:[#allocation4 + $0xb0] sm:$0x3f] %v2428
      %v2430 = vld [vmem:[#allocation3 + $0x21] sm:$0x3f]
      %2431 = vst [vmem:[#allocation4 + $0xf8] sm:$0x3f] %v2430
      %v2432 = vld [vmem:[#allocation3 + $0x29] sm:$0x3f]
      %2433 = vst [vmem:[#allocation4 + $0x140] sm:$0x3f] %v2432
      %v2434 = vld [vmem:[#allocation3 + $0x31] sm:$0x3f]
      %2435 = vst [vmem:[#allocation4 + $0x188] sm:$0x3f] %v2434
      %v2436 = vld [vmem:[#allocation3 + $0xa] sm:$0x3f]
      %2437 = vst [vmem:[#allocation4 + $0x28] sm:$0x3f] %v2436
      %v2438 = vld [vmem:[#allocation3 + $0x12] sm:$0x3f]
      %2439 = vst [vmem:[#allocation4 + $0x70] sm:$0x3f] %v2438
      %v2440 = vld [vmem:[#allocation3 + $0x1a] sm:$0x3f]
      %2441 = vst [vmem:[#allocation4 + $0xb8] sm:$0x3f] %v2440
      %v2442 = vld [vmem:[#allocation3 + $0x22] sm:$0x3f]
      %2443 = vst [vmem:[#allocation4 + $0x100] sm:$0x3f] %v2442
      %v2444 = vld [vmem:[#allocation3 + $0x2a] sm:$0x3f]
      %2445 = vst [vmem:[#allocation4 + $0x148] sm:$0x3f] %v2444
      %v2446 = vld [vmem:[#allocation3 + $0x32] sm:$0x3f]
      %2447 = vst [vmem:[#allocation4 + $0x190] sm:$0x3f] %v2446
      %v2448 = vld [vmem:[#allocation3 + $0x10] sm:$0x3f]
      %2449 = vst [vmem:[#allocation4 + $0x30] sm:$0x3f] %v2448
      %v2450 = vld [vmem:[#allocation3 + $0x18] sm:$0x3f]
      %2451 = vst [vmem:[#allocation4 + $0x78] sm:$0x3f] %v2450
      %v2452 = vld [vmem:[#allocation3 + $0x20] sm:$0x3f]
      %2453 = vst [vmem:[#allocation4 + $0xc0] sm:$0x3f] %v2452
      %v2454 = vld [vmem:[#allocation3 + $0x28] sm:$0x3f]
      %2455 = vst [vmem:[#allocation4 + $0x108] sm:$0x3f] %v2454
      %v2456 = vld [vmem:[#allocation3 + $0x30] sm:$0x3f]
      %2457 = vst [vmem:[#allocation4 + $0x150] sm:$0x3f] %v2456
      %v2458 = vld [vmem:[#allocation3 + $0x38] sm:$0x3f]
      %2459 = vst [vmem:[#allocation4 + $0x198] sm:$0x3f] %v2458
      %v2460 = vld [vmem:[#allocation3 + $0x11] sm:$0x3f]
      %2461 = vst [vmem:[#allocation4 + $0x38] sm:$0x3f] %v2460
      %v2462 = vld [vmem:[#allocation3 + $0x19] sm:$0x3f]
      %2463 = vst [vmem:[#allocation4 + $0x80] sm:$0x3f] %v2462
      %v2464 = vld [vmem:[#allocation3 + $0x21] sm:$0x3f]
      %2465 = vst [vmem:[#allocation4 + $0xc8] sm:$0x3f] %v2464
      %v2466 = vld [vmem:[#allocation3 + $0x29] sm:$0x3f]
      %2467 = vst [vmem:[#allocation4 + $0x110] sm:$0x3f] %v2466
      %v2468 = vld [vmem:[#allocation3 + $0x31] sm:$0x3f]
      %2469 = vst [vmem:[#allocation4 + $0x158] sm:$0x3f] %v2468
      %v2470 = vld [vmem:[#allocation3 + $0x39] sm:$0x3f]
      %2471 = vst [vmem:[#allocation4 + $0x1a0] sm:$0x3f] %v2470
      %v2472 = vld [vmem:[#allocation3 + $0x12] sm:$0x3f]
      %2473 = vst [vmem:[#allocation4 + $0x40] sm:$0x3f] %v2472
      %v2474 = vld [vmem:[#allocation3 + $0x1a] sm:$0x3f]
      %2475 = vst [vmem:[#allocation4 + $0x88] sm:$0x3f] %v2474
      %v2476 = vld [vmem:[#allocation3 + $0x22] sm:$0x3f]
      %2477 = vst [vmem:[#allocation4 + $0xd0] sm:$0x3f] %v2476
      %v2478 = vld [vmem:[#allocation3 + $0x2a] sm:$0x3f]
      %2479 = vst [vmem:[#allocation4 + $0x118] sm:$0x3f] %v2478
      %v2480 = vld [vmem:[#allocation3 + $0x32] sm:$0x3f]
      %2481 = vst [vmem:[#allocation4 + $0x160] sm:$0x3f] %v2480
      %v2482 = vld [vmem:[#allocation3 + $0x3a] sm:$0x3f]
      %2483 = vst [vmem:[#allocation4 + $0x1a8] sm:$0x3f] %v2482
      %v2484 = vld [vmem:[#allocation4] sm:$0xff]
      %v2485 = vld [vmem:[#allocation4 + $0x8] sm:$0xff]
      %v2486 = vld [vmem:[#allocation4 + $0x10] sm:$0xff]
      %v2487 = vld [vmem:[#allocation4 + $0x18] sm:$0xff]
      %v2488 = vld [vmem:[#allocation4 + $0x20] sm:$0xff]
      %v2489 = vld [vmem:[#allocation4 + $0x28] sm:$0xff]
      %v2490 = vld [vmem:[#allocation4 + $0x30] sm:$0xff]
      %v2491 = vld [vmem:[#allocation4 + $0x38] sm:$0xff]
      %v2492 = vld [vmem:[#allocation4 + $0x40] sm:$0xff]
      %v2493 = vld [vmem:[#allocation4 + $0x48] sm:$0xff]
      %v2494 = vld [vmem:[#allocation4 + $0x50] sm:$0xff]
      %v2495 = vld [vmem:[#allocation4 + $0x58] sm:$0xff]
      %v2496 = vld [vmem:[#allocation4 + $0x60] sm:$0xff]
      %v2497 = vld [vmem:[#allocation4 + $0x68] sm:$0xff]
      %v2498 = vld [vmem:[#allocation4 + $0x70] sm:$0xff]
      %v2499 = vld [vmem:[#allocation4 + $0x78] sm:$0xff]
      %v2500 = vld [vmem:[#allocation4 + $0x80] sm:$0xff]
      %v2501 = vld [vmem:[#allocation4 + $0x88] sm:$0xff]
      %v2502 = vld [vmem:[#allocation4 + $0x90] sm:$0xff]
      %v2503 = vld [vmem:[#allocation4 + $0x98] sm:$0xff]
      %v2504 = vld [vmem:[#allocation4 + $0xa0] sm:$0xff]
      %v2505 = vld [vmem:[#allocation4 + $0xa8] sm:$0xff]
      %v2506 = vld [vmem:[#allocation4 + $0xb0] sm:$0xff]
      %v2507 = vld [vmem:[#allocation4 + $0xb8] sm:$0xff]
      %v2508 = vld [vmem:[#allocation4 + $0xc0] sm:$0xff]
      %v2509 = vld [vmem:[#allocation4 + $0xc8] sm:$0xff]
      %v2510 = vld [vmem:[#allocation4 + $0xd0] sm:$0xff]
      %v2511 = vld [vmem:[#allocation4 + $0xd8] sm:$0xff]
      %v2512 = vld [vmem:[#allocation4 + $0xe0] sm:$0xff]
      %v2513 = vld [vmem:[#allocation4 + $0xe8] sm:$0xff]
      %v2514 = vld [vmem:[#allocation4 + $0xf0] sm:$0xff]
      %v2515 = vld [vmem:[#allocation4 + $0xf8] sm:$0xff]
      %v2516 = vld [vmem:[#allocation4 + $0x100] sm:$0xff]
      %v2517 = vld [vmem:[#allocation4 + $0x108] sm:$0xff]
      %v2518 = vld [vmem:[#allocation4 + $0x110] sm:$0xff]
      %v2519 = vld [vmem:[#allocation4 + $0x118] sm:$0xff]
      %v2520 = vld [vmem:[#allocation4 + $0x120] sm:$0xff]
      %v2521 = vld [vmem:[#allocation4 + $0x128] sm:$0xff]
      %v2522 = vld [vmem:[#allocation4 + $0x130] sm:$0xff]
      %v2523 = vld [vmem:[#allocation4 + $0x138] sm:$0xff]
      %v2524 = vld [vmem:[#allocation4 + $0x140] sm:$0xff]
      %v2525 = vld [vmem:[#allocation4 + $0x148] sm:$0xff]
      %v2526 = vld [vmem:[#allocation4 + $0x150] sm:$0xff]
      %v2527 = vld [vmem:[#allocation4 + $0x158] sm:$0xff]
      %v2528 = vld [vmem:[#allocation4 + $0x160] sm:$0xff]
      %v2529 = vld [vmem:[#allocation4 + $0x168] sm:$0xff]
      %v2530 = vld [vmem:[#allocation4 + $0x170] sm:$0xff]
      %v2531 = vld [vmem:[#allocation4 + $0x178] sm:$0xff]
      %v2532 = vld [vmem:[#allocation4 + $0x180] sm:$0xff]
      %v2533 = vld [vmem:[#allocation4 + $0x188] sm:$0xff]
      %v2534 = vld [vmem:[#allocation4 + $0x190] sm:$0xff]
      %v2535 = vld [vmem:[#allocation4 + $0x198] sm:$0xff]
      %v2536 = vld [vmem:[#allocation4 + $0x1a0] sm:$0xff]
      %v2537 = vld [vmem:[#allocation4 + $0x1a8] sm:$0xff]
      %v2538 = vpack.c.bf16 %v2493, %v2484
      %v2539 = vpack.c.bf16 %v2494, %v2485
      %v2540 = vpack.c.bf16 %v2495, %v2486
      %v2541 = vpack.c.bf16 %v2496, %v2487
      %v2542 = vpack.c.bf16 %v2497, %v2488
      %v2543 = vpack.c.bf16 %v2498, %v2489
      %v2544 = vpack.c.bf16 %v2499, %v2490
      %v2545 = vpack.c.bf16 %v2500, %v2491
      %v2546 = vpack.c.bf16 %v2501, %v2492
      %v2547 = vpack.c.bf16 %v2511, %v2502
      %v2548 = vpack.c.bf16 %v2512, %v2503
      %v2549 = vpack.c.bf16 %v2513, %v2504
      %v2550 = vpack.c.bf16 %v2514, %v2505
      %v2551 = vpack.c.bf16 %v2515, %v2506
      %v2552 = vpack.c.bf16 %v2516, %v2507
      %v2553 = vpack.c.bf16 %v2517, %v2508
      %v2554 = vpack.c.bf16 %v2518, %v2509
      %v2555 = vpack.c.bf16 %v2519, %v2510
      %v2556 = vpack.c.bf16 %v2529, %v2520
      %v2557 = vpack.c.bf16 %v2530, %v2521
      %v2558 = vpack.c.bf16 %v2531, %v2522
      %v2559 = vpack.c.bf16 %v2532, %v2523
      %v2560 = vpack.c.bf16 %v2533, %v2524
      %v2561 = vpack.c.bf16 %v2534, %v2525
      %v2562 = vpack.c.bf16 %v2535, %v2526
      %v2563 = vpack.c.bf16 %v2536, %v2527
      %v2564 = vpack.c.bf16 %v2537, %v2528
      %v2565 = vld [vmem:[%s3] sm:$0xf]
      %v2566 = vld [vmem:[%s3 + $0x4] sm:$0xf]
      %v2567 = vld [vmem:[%s3 + $0x8] sm:$0xf]
      %v2568 = vld [vmem:[%s3 + $0xc] sm:$0xf]
      %v2569 = vld [vmem:[%s3 + $0x10] sm:$0xf]
      %v2570 = vld [vmem:[%s3 + $0x14] sm:$0xf]
      %v2571 = vld [vmem:[%s3 + $0x18] sm:$0xf]
      %v2572 = vld [vmem:[%s3 + $0x1c] sm:$0xf]
      %v2573 = vld [vmem:[%s3 + $0x20] sm:$0xf]
      %v2574 = vld [vmem:[%s3 + $0x24] sm:$0xf]
      %v2575 = vld [vmem:[%s3 + $0x28] sm:$0xf]
      %v2576 = vld [vmem:[%s3 + $0x2c] sm:$0xf]
      %v2577 = vld [vmem:[%s3 + $0x30] sm:$0xf]
      %v2578 = vld [vmem:[%s3 + $0x34] sm:$0xf]
      %v2579 = vld [vmem:[%s3 + $0x38] sm:$0xf]
      %v2580 = vld [vmem:[%s3 + $0x3c] sm:$0xf]
      %v2581 = vld [vmem:[%s3 + $0x40] sm:$0xf]
      %v2582 = vld [vmem:[%s3 + $0x44] sm:$0xf]
      %v2583 = vld [vmem:[%s3 + $0x48] sm:$0xf]
      %v2584 = vld [vmem:[%s3 + $0x4c] sm:$0xf]
      %v2585 = vld [vmem:[%s3 + $0x50] sm:$0xf]
      %v2586 = vld [vmem:[%s3 + $0x54] sm:$0xf]
      %v2587 = vld [vmem:[%s3 + $0x58] sm:$0xf]
      %v2588 = vld [vmem:[%s3 + $0x5c] sm:$0xf]
      %v2589 = vld [vmem:[%s3 + $0x60] sm:$0xf]
      %v2590 = vld [vmem:[%s3 + $0x64] sm:$0xf]
      %v2591 = vld [vmem:[%s3 + $0x68] sm:$0xf]
      %v2592 = vld [vmem:[%s3 + $0x6c] sm:$0xf]
      %v2593 = vld [vmem:[%s3 + $0x70] sm:$0xf]
      %v2594 = vld [vmem:[%s3 + $0x74] sm:$0xf]
      %v2595 = vld [vmem:[%s3 + $0x78] sm:$0xf]
      %v2596 = vld [vmem:[%s3 + $0x7c] sm:$0xf]
      %v2597 = vld [vmem:[%s3 + $0x80] sm:$0xf]
      %v2598 = vld [vmem:[%s3 + $0x84] sm:$0xf]
      %v2599 = vld [vmem:[%s3 + $0x88] sm:$0xf]
      %v2600 = vld [vmem:[%s3 + $0x8c] sm:$0xf]
      %v2601 = vld [vmem:[%s3 + $0x90] sm:$0xf]
      %v2602 = vld [vmem:[%s3 + $0x94] sm:$0xf]
      %v2603 = vld [vmem:[%s3 + $0x98] sm:$0xf]
      %v2604 = vld [vmem:[%s3 + $0x9c] sm:$0xf]
      %v2605 = vld [vmem:[%s3 + $0xa0] sm:$0xf]
      %v2606 = vld [vmem:[%s3 + $0xa4] sm:$0xf]
      %v2607 = vld [vmem:[%s3 + $0xa8] sm:$0xf]
      %v2608 = vld [vmem:[%s3 + $0xac] sm:$0xf]
      %v2609 = vld [vmem:[%s3 + $0xb0] sm:$0xf]
      %v2610 = vld [vmem:[%s3 + $0xb4] sm:$0xf]
      %v2611 = vld [vmem:[%s3 + $0xb8] sm:$0xf]
      %v2612 = vld [vmem:[%s3 + $0xbc] sm:$0xf]
      %v2613 = vld [vmem:[%s3 + $0xc0] sm:$0xf]
      %v2614 = vld [vmem:[%s3 + $0xc4] sm:$0xf]
      %v2615 = vld [vmem:[%s3 + $0xc8] sm:$0xf]
      %v2616 = vld [vmem:[%s3 + $0xcc] sm:$0xf]
      %v2617 = vld [vmem:[%s3 + $0xd0] sm:$0xf]
      %v2618 = vld [vmem:[%s3 + $0xd4] sm:$0xf]
      %v2619 = vld [vmem:[%s3 + $0xd8] sm:$0xf]
      %v2620 = vld [vmem:[%s3 + $0xdc] sm:$0xf]
      %v2621 = vld [vmem:[%s3 + $0xe0] sm:$0xf]
      %v2622 = vld [vmem:[%s3 + $0xe4] sm:$0xf]
      %v2623 = vld [vmem:[%s3 + $0xe8] sm:$0xf]
      %v2624 = vld [vmem:[%s3 + $0xec] sm:$0xf]
      %v2625 = vld [vmem:[%s3 + $0xf0] sm:$0xf]
      %v2626 = vld [vmem:[%s3 + $0xf4] sm:$0xf]
      %v2627 = vld [vmem:[%s3 + $0xf8] sm:$0xf]
      %v2628 = vld [vmem:[%s3 + $0xfc] sm:$0xf]
      %v2629 = vld [vmem:[%s3 + $0x100] sm:$0xf]
      %v2630 = vld [vmem:[%s3 + $0x104] sm:$0xf]
      %v2631 = vld [vmem:[%s3 + $0x108] sm:$0xf]
      %v2632 = vld [vmem:[%s3 + $0x10c] sm:$0xf]
      %v2633 = vld [vmem:[%s3 + $0x110] sm:$0xf]
      %v2634 = vld [vmem:[%s3 + $0x114] sm:$0xf]
      %v2635 = vld [vmem:[%s3 + $0x118] sm:$0xf]
      %v2636 = vld [vmem:[%s3 + $0x11c] sm:$0xf]
      %v2637 = vld [vmem:[%s3 + $0x120] sm:$0xf]
      %v2638 = vld [vmem:[%s3 + $0x124] sm:$0xf]
      %v2639 = vld [vmem:[%s3 + $0x128] sm:$0xf]
      %v2640 = vld [vmem:[%s3 + $0x12c] sm:$0xf]
      %v2641 = vld [vmem:[%s3 + $0x130] sm:$0xf]
      %v2642 = vld [vmem:[%s3 + $0x134] sm:$0xf]
      %v2643 = vld [vmem:[%s3 + $0x138] sm:$0xf]
      %v2644 = vld [vmem:[%s3 + $0x13c] sm:$0xf]
      %v2645 = vld [vmem:[%s3 + $0x140] sm:$0xf]
      %v2646 = vld [vmem:[%s3 + $0x144] sm:$0xf]
      %v2647 = vld [vmem:[%s3 + $0x148] sm:$0xf]
      %v2648 = vld [vmem:[%s3 + $0x14c] sm:$0xf]
      %v2649 = vld [vmem:[%s3 + $0x150] sm:$0xf]
      %v2650 = vld [vmem:[%s3 + $0x154] sm:$0xf]
      %v2651 = vld [vmem:[%s3 + $0x158] sm:$0xf]
      %v2652 = vld [vmem:[%s3 + $0x15c] sm:$0xf]
      %v2653 = vld [vmem:[%s3 + $0x160] sm:$0xf]
      %v2654 = vld [vmem:[%s3 + $0x164] sm:$0xf]
      %v2655 = vld [vmem:[%s3 + $0x168] sm:$0xf]
      %v2656 = vld [vmem:[%s3 + $0x16c] sm:$0xf]
      %v2657 = vld [vmem:[%s3 + $0x170] sm:$0xf]
      %v2658 = vld [vmem:[%s3 + $0x174] sm:$0xf]
      %v2659 = vld [vmem:[%s3 + $0x178] sm:$0xf]
      %v2660 = vld [vmem:[%s3 + $0x17c] sm:$0xf]
      %v2661 = vld [vmem:[%s3 + $0x180] sm:$0xf]
      %v2662 = vld [vmem:[%s3 + $0x184] sm:$0xf]
      %v2663 = vld [vmem:[%s3 + $0x188] sm:$0xf]
      %v2664 = vld [vmem:[%s3 + $0x18c] sm:$0xf]
      %v2665 = vld [vmem:[%s3 + $0x190] sm:$0xf]
      %v2666 = vld [vmem:[%s3 + $0x194] sm:$0xf]
      %v2667 = vld [vmem:[%s3 + $0x198] sm:$0xf]
      %v2668 = vld [vmem:[%s3 + $0x19c] sm:$0xf]
      %v2669 = vld [vmem:[%s3 + $0x1a0] sm:$0xf]
      %v2670 = vld [vmem:[%s3 + $0x1a4] sm:$0xf]
      %v2671 = vld [vmem:[%s3 + $0x1a8] sm:$0xf]
      %v2672 = vld [vmem:[%s3 + $0x1ac] sm:$0xf]
      %v2673 = vld [vmem:[%s3 + $0x1b0] sm:$0xf]
      %v2674 = vld [vmem:[%s3 + $0x1b4] sm:$0xf]
      %v2675 = vld [vmem:[%s3 + $0x1b8] sm:$0xf]
      %v2676 = vld [vmem:[%s3 + $0x1bc] sm:$0xf]
      %v2677 = vld [vmem:[%s3 + $0x1c0] sm:$0xf]
      %v2678 = vld [vmem:[%s3 + $0x1c4] sm:$0xf]
      %v2679 = vld [vmem:[%s3 + $0x1c8] sm:$0xf]
      %v2680 = vld [vmem:[%s3 + $0x1cc] sm:$0xf]
      %v2681 = vld [vmem:[%s3 + $0x1d0] sm:$0xf]
      %v2682 = vld [vmem:[%s3 + $0x1d4] sm:$0xf]
      %v2683 = vld [vmem:[%s3 + $0x1d8] sm:$0xf]
      %v2684 = vld [vmem:[%s3 + $0x1dc] sm:$0xf]
      %v2685 = vld [vmem:[%s3 + $0x1e0] sm:$0xf]
      %v2686 = vld [vmem:[%s3 + $0x1e4] sm:$0xf]
      %v2687 = vld [vmem:[%s3 + $0x1e8] sm:$0xf]
      %v2688 = vld [vmem:[%s3 + $0x1ec] sm:$0xf]
      %v2689 = vld [vmem:[%s3 + $0x1f0] sm:$0xf]
      %v2690 = vld [vmem:[%s3 + $0x1f4] sm:$0xf]
      %v2691 = vld [vmem:[%s3 + $0x1f8] sm:$0xf]
      %v2692 = vld [vmem:[%s3 + $0x1fc] sm:$0xf]
      %v2693 = vld [vmem:[%s3 + $0x200] sm:$0xf]
      %v2694 = vld [vmem:[%s3 + $0x204] sm:$0xf]
      %v2695 = vld [vmem:[%s3 + $0x208] sm:$0xf]
      %v2696 = vld [vmem:[%s3 + $0x20c] sm:$0xf]
      %v2697 = vld [vmem:[%s3 + $0x210] sm:$0xf]
      %v2698 = vld [vmem:[%s3 + $0x214] sm:$0xf]
      %v2699 = vld [vmem:[%s3 + $0x218] sm:$0xf]
      %v2700 = vld [vmem:[%s3 + $0x21c] sm:$0xf]
      %v2701 = vld [vmem:[%s3 + $0x220] sm:$0xf]
      %v2702 = vld [vmem:[%s3 + $0x224] sm:$0xf]
      %v2703 = vld [vmem:[%s3 + $0x228] sm:$0xf]
      %v2704 = vld [vmem:[%s3 + $0x22c] sm:$0xf]
      %v2705 = vld [vmem:[%s3 + $0x230] sm:$0xf]
      %v2706 = vld [vmem:[%s3 + $0x234] sm:$0xf]
      %v2707 = vld [vmem:[%s3 + $0x238] sm:$0xf]
      %v2708 = vld [vmem:[%s3 + $0x23c] sm:$0xf]
      %v2709 = vld [vmem:[%s4] sm:$0x1]
      %v2711 = vlaneseq
      %v2712 = vshrl.u32 %v2711, 7
      %v2713 = vsub.s32 0, %v2712
      %v2714 = vrot.slane %v2709, %v2713
      %v2860 = vunpack.c.l.b16 %v2565
      %v2861 = vunpack.c.l.b16 %v2566
      %v2862 = vunpack.c.l.b16 %v2567
      %v2863 = vunpack.c.l.b16 %v2568
      %v2864 = vunpack.c.l.b16 %v2569
      %v2865 = vunpack.c.l.b16 %v2570
      %v2866 = vunpack.c.l.b16 %v2571
      %v2867 = vunpack.c.l.b16 %v2572
      %v2868 = vunpack.c.l.b16 %v2573
      %v2869 = vunpack.c.l.b16 %v2574
      %v2870 = vunpack.c.l.b16 %v2575
      %v2871 = vunpack.c.l.b16 %v2576
      %v2872 = vunpack.c.l.b16 %v2577
      %v2873 = vunpack.c.l.b16 %v2578
      %v2874 = vunpack.c.l.b16 %v2579
      %v2875 = vunpack.c.l.b16 %v2580
      %v2876 = vunpack.c.l.b16 %v2581
      %v2877 = vunpack.c.l.b16 %v2582
      %v2878 = vunpack.c.l.b16 %v2583
      %v2879 = vunpack.c.l.b16 %v2584
      %v2880 = vunpack.c.l.b16 %v2585
      %v2881 = vunpack.c.l.b16 %v2586
      %v2882 = vunpack.c.l.b16 %v2587
      %v2883 = vunpack.c.l.b16 %v2588
      %v2884 = vunpack.c.l.b16 %v2589
      %v2885 = vunpack.c.l.b16 %v2590
      %v2886 = vunpack.c.l.b16 %v2591
      %v2887 = vunpack.c.l.b16 %v2592
      %v2888 = vunpack.c.l.b16 %v2593
      %v2889 = vunpack.c.l.b16 %v2594
      %v2890 = vunpack.c.l.b16 %v2595
      %v2891 = vunpack.c.l.b16 %v2596
      %v2892 = vunpack.c.l.b16 %v2597
      %v2893 = vunpack.c.l.b16 %v2598
      %v2894 = vunpack.c.l.b16 %v2599
      %v2895 = vunpack.c.l.b16 %v2600
      %v2896 = vunpack.c.l.b16 %v2601
      %v2897 = vunpack.c.l.b16 %v2602
      %v2898 = vunpack.c.l.b16 %v2603
      %v2899 = vunpack.c.l.b16 %v2604
      %v2900 = vunpack.c.l.b16 %v2605
      %v2901 = vunpack.c.l.b16 %v2606
      %v2902 = vunpack.c.l.b16 %v2607
      %v2903 = vunpack.c.l.b16 %v2608
      %v2904 = vunpack.c.l.b16 %v2609
      %v2905 = vunpack.c.l.b16 %v2610
      %v2906 = vunpack.c.l.b16 %v2611
      %v2907 = vunpack.c.l.b16 %v2612
      %v2908 = vunpack.c.l.b16 %v2613
      %v2909 = vunpack.c.l.b16 %v2614
      %v2910 = vunpack.c.l.b16 %v2615
      %v2911 = vunpack.c.l.b16 %v2616
      %v2912 = vunpack.c.l.b16 %v2617
      %v2913 = vunpack.c.l.b16 %v2618
      %v2914 = vunpack.c.l.b16 %v2619
      %v2915 = vunpack.c.l.b16 %v2620
      %v2916 = vunpack.c.l.b16 %v2621
      %v2917 = vunpack.c.l.b16 %v2622
      %v2918 = vunpack.c.l.b16 %v2623
      %v2919 = vunpack.c.l.b16 %v2624
      %v2920 = vunpack.c.l.b16 %v2625
      %v2921 = vunpack.c.l.b16 %v2626
      %v2922 = vunpack.c.l.b16 %v2627
      %v2923 = vunpack.c.l.b16 %v2628
      %v2924 = vunpack.c.l.b16 %v2629
      %v2925 = vunpack.c.l.b16 %v2630
      %v2926 = vunpack.c.l.b16 %v2631
      %v2927 = vunpack.c.l.b16 %v2632
      %v2928 = vunpack.c.l.b16 %v2633
      %v2929 = vunpack.c.l.b16 %v2634
      %v2930 = vunpack.c.l.b16 %v2635
      %v2931 = vunpack.c.l.b16 %v2636
      %v2932 = vunpack.c.l.b16 %v2637
      %v2933 = vunpack.c.l.b16 %v2638
      %v2934 = vunpack.c.l.b16 %v2639
      %v2935 = vunpack.c.l.b16 %v2640
      %v2936 = vunpack.c.l.b16 %v2641
      %v2937 = vunpack.c.l.b16 %v2642
      %v2938 = vunpack.c.l.b16 %v2643
      %v2939 = vunpack.c.l.b16 %v2644
      %v2940 = vunpack.c.l.b16 %v2645
      %v2941 = vunpack.c.l.b16 %v2646
      %v2942 = vunpack.c.l.b16 %v2647
      %v2943 = vunpack.c.l.b16 %v2648
      %v2944 = vunpack.c.l.b16 %v2649
      %v2945 = vunpack.c.l.b16 %v2650
      %v2946 = vunpack.c.l.b16 %v2651
      %v2947 = vunpack.c.l.b16 %v2652
      %v2948 = vunpack.c.l.b16 %v2653
      %v2949 = vunpack.c.l.b16 %v2654
      %v2950 = vunpack.c.l.b16 %v2655
      %v2951 = vunpack.c.l.b16 %v2656
      %v2952 = vunpack.c.l.b16 %v2657
      %v2953 = vunpack.c.l.b16 %v2658
      %v2954 = vunpack.c.l.b16 %v2659
      %v2955 = vunpack.c.l.b16 %v2660
      %v2956 = vunpack.c.l.b16 %v2661
      %v2957 = vunpack.c.l.b16 %v2662
      %v2958 = vunpack.c.l.b16 %v2663
      %v2959 = vunpack.c.l.b16 %v2664
      %v2960 = vunpack.c.l.b16 %v2665
      %v2961 = vunpack.c.l.b16 %v2666
      %v2962 = vunpack.c.l.b16 %v2667
      %v2963 = vunpack.c.l.b16 %v2668
      %v2964 = vunpack.c.l.b16 %v2669
      %v2965 = vunpack.c.l.b16 %v2670
      %v2966 = vunpack.c.l.b16 %v2671
      %v2967 = vunpack.c.l.b16 %v2672
      %v2968 = vunpack.c.l.b16 %v2673
      %v2969 = vunpack.c.l.b16 %v2674
      %v2970 = vunpack.c.l.b16 %v2675
      %v2971 = vunpack.c.l.b16 %v2676
      %v2972 = vunpack.c.l.b16 %v2677
      %v2973 = vunpack.c.l.b16 %v2678
      %v2974 = vunpack.c.l.b16 %v2679
      %v2975 = vunpack.c.l.b16 %v2680
      %v2976 = vunpack.c.l.b16 %v2681
      %v2977 = vunpack.c.l.b16 %v2682
      %v2978 = vunpack.c.l.b16 %v2683
      %v2979 = vunpack.c.l.b16 %v2684
      %v2980 = vunpack.c.l.b16 %v2685
      %v2981 = vunpack.c.l.b16 %v2686
      %v2982 = vunpack.c.l.b16 %v2687
      %v2983 = vunpack.c.l.b16 %v2688
      %v2984 = vunpack.c.l.b16 %v2689
      %v2985 = vunpack.c.l.b16 %v2690
      %v2986 = vunpack.c.l.b16 %v2691
      %v2987 = vunpack.c.l.b16 %v2692
      %v2988 = vunpack.c.l.b16 %v2693
      %v2989 = vunpack.c.l.b16 %v2694
      %v2990 = vunpack.c.l.b16 %v2695
      %v2991 = vunpack.c.l.b16 %v2696
      %v2992 = vunpack.c.l.b16 %v2697
      %v2993 = vunpack.c.l.b16 %v2698
      %v2994 = vunpack.c.l.b16 %v2699
      %v2995 = vunpack.c.l.b16 %v2700
      %v2996 = vunpack.c.l.b16 %v2701
      %v2997 = vunpack.c.l.b16 %v2702
      %v2998 = vunpack.c.l.b16 %v2703
      %v2999 = vunpack.c.l.b16 %v2704
      %v3000 = vunpack.c.l.b16 %v2705
      %v3001 = vunpack.c.l.b16 %v2706
      %v3002 = vunpack.c.l.b16 %v2707
      %v3003 = vunpack.c.l.b16 %v2708
      %v3004 = vpack.c.b16 %v2861, %v2860
      %v3005 = vpack.c.b16 %v2863, %v2862
      %v3006 = vpack.c.b16 %v2865, %v2864
      %v3007 = vpack.c.b16 %v2867, %v2866
      %v3008 = vpack.c.b16 %v2869, %v2868
      %v3009 = vpack.c.b16 %v2871, %v2870
      %v3010 = vpack.c.b16 %v2873, %v2872
      %v3011 = vpack.c.b16 %v2875, %v2874
      %v3012 = vpack.c.b16 %v2877, %v2876
      %v3013 = vpack.c.b16 %v2879, %v2878
      %v3014 = vpack.c.b16 %v2881, %v2880
      %v3015 = vpack.c.b16 %v2883, %v2882
      %v3016 = vpack.c.b16 %v2885, %v2884
      %v3017 = vpack.c.b16 %v2887, %v2886
      %v3018 = vpack.c.b16 %v2889, %v2888
      %v3019 = vpack.c.b16 %v2891, %v2890
      %v3020 = vpack.c.b16 %v2893, %v2892
      %v3021 = vpack.c.b16 %v2895, %v2894
      %v3022 = vpack.c.b16 %v2897, %v2896
      %v3023 = vpack.c.b16 %v2899, %v2898
      %v3024 = vpack.c.b16 %v2901, %v2900
      %v3025 = vpack.c.b16 %v2903, %v2902
      %v3026 = vpack.c.b16 %v2905, %v2904
      %v3027 = vpack.c.b16 %v2907, %v2906
      %v3028 = vpack.c.b16 %v2909, %v2908
      %v3029 = vpack.c.b16 %v2911, %v2910
      %v3030 = vpack.c.b16 %v2913, %v2912
      %v3031 = vpack.c.b16 %v2915, %v2914
      %v3032 = vpack.c.b16 %v2917, %v2916
      %v3033 = vpack.c.b16 %v2919, %v2918
      %v3034 = vpack.c.b16 %v2921, %v2920
      %v3035 = vpack.c.b16 %v2923, %v2922
      %v3036 = vpack.c.b16 %v2925, %v2924
      %v3037 = vpack.c.b16 %v2927, %v2926
      %v3038 = vpack.c.b16 %v2929, %v2928
      %v3039 = vpack.c.b16 %v2931, %v2930
      %v3040 = vpack.c.b16 %v2933, %v2932
      %v3041 = vpack.c.b16 %v2935, %v2934
      %v3042 = vpack.c.b16 %v2937, %v2936
      %v3043 = vpack.c.b16 %v2939, %v2938
      %v3044 = vpack.c.b16 %v2941, %v2940
      %v3045 = vpack.c.b16 %v2943, %v2942
      %v3046 = vpack.c.b16 %v2945, %v2944
      %v3047 = vpack.c.b16 %v2947, %v2946
      %v3048 = vpack.c.b16 %v2949, %v2948
      %v3049 = vpack.c.b16 %v2951, %v2950
      %v3050 = vpack.c.b16 %v2953, %v2952
      %v3051 = vpack.c.b16 %v2955, %v2954
      %v3052 = vpack.c.b16 %v2957, %v2956
      %v3053 = vpack.c.b16 %v2959, %v2958
      %v3054 = vpack.c.b16 %v2961, %v2960
      %v3055 = vpack.c.b16 %v2963, %v2962
      %v3056 = vpack.c.b16 %v2965, %v2964
      %v3057 = vpack.c.b16 %v2967, %v2966
      %v3058 = vpack.c.b16 %v2969, %v2968
      %v3059 = vpack.c.b16 %v2971, %v2970
      %v3060 = vpack.c.b16 %v2973, %v2972
      %v3061 = vpack.c.b16 %v2975, %v2974
      %v3062 = vpack.c.b16 %v2977, %v2976
      %v3063 = vpack.c.b16 %v2979, %v2978
      %v3064 = vpack.c.b16 %v2981, %v2980
      %v3065 = vpack.c.b16 %v2983, %v2982
      %v3066 = vpack.c.b16 %v2985, %v2984
      %v3067 = vpack.c.b16 %v2987, %v2986
      %v3068 = vpack.c.b16 %v2989, %v2988
      %v3069 = vpack.c.b16 %v2991, %v2990
      %v3070 = vpack.c.b16 %v2993, %v2992
      %v3071 = vpack.c.b16 %v2995, %v2994
      %v3072 = vpack.c.b16 %v2997, %v2996
      %v3073 = vpack.c.b16 %v2999, %v2998
      %v3074 = vpack.c.b16 %v3001, %v3000
      %v3075 = vpack.c.b16 %v3003, %v3002
      %3148 = vmatprep.subr.bf16.mxu0 0
      %3149 = vmatpush1.bf16.msra.mxu0 %v3011
      %3150 = vmatprep.subr.bf16.mxu0 0
      %3151 = vmatpush1.bf16.msra.mxu0 %v3010
      %3152 = vmatprep.subr.bf16.mxu0 0
      %3153 = vmatpush1.bf16.msra.mxu0 %v3009
      %3154 = vmatprep.subr.bf16.mxu0 0
      %3155 = vmatpush1.bf16.msra.mxu0 %v3008
      %3156 = vmatprep.subr.bf16.mxu0 0
      %3157 = vmatpush1.bf16.msra.mxu0 %v3007
      %3158 = vmatprep.subr.bf16.mxu0 0
      %3159 = vmatpush1.bf16.msra.mxu0 %v3006
      %3160 = vmatprep.subr.bf16.mxu0 0
      %3161 = vmatpush1.bf16.msra.mxu0 %v3005
      %3162 = vmatprep.subr.bf16.mxu0 0
      %3163 = vmatpush1.bf16.msra.mxu0 %v3004
      %3164 = vmatprep.subr.bf16.mxu0 0
      %3165 = vmatpush2.bf16.msra.mxu0 %v3019
      %3166 = vmatprep.subr.bf16.mxu0 0
      %3167 = vmatpush2.bf16.msra.mxu0 %v3018
      %3168 = vmatprep.subr.bf16.mxu0 0
      %3169 = vmatpush2.bf16.msra.mxu0 %v3017
      %3170 = vmatprep.subr.bf16.mxu0 0
      %3171 = vmatpush2.bf16.msra.mxu0 %v3016
      %3172 = vmatprep.subr.bf16.mxu0 0
      %3173 = vmatpush2.bf16.msra.mxu0 %v3015
      %3174 = vmatprep.subr.bf16.mxu0 0
      %3175 = vmatpush2.bf16.msra.mxu0 %v3014
      %3176 = vmatprep.subr.bf16.mxu0 0
      %3177 = vmatpush2.bf16.msra.mxu0 %v3013
      %3178 = vmatprep.subr.bf16.mxu0 0
      %3179 = vmatpush2.bf16.msra.mxu0 %v3012
      %3180 = vmatprep.mubr.bf16.mxu0 %v2539
      %3181 = vmatmul.mubr.bf16.gmra.mxu0 %v2538
      %v3182 = vpop.f32.mrf.mxu0
      %v3183 = vadd.f32 %v2714, %v3182
      %v3184 = vpop.f32.mrf.mxu0
      %v3185 = vpop.f32.mrf.mxu0
      %v3186 = vadd.f32 %v2714, %v3185
      %v3187 = vpop.f32.mrf.mxu0
      %3188 = vmatprep.mubr.bf16.mxu0 %v2548
      %3189 = vmatmul.mubr.bf16.gmra.mxu0 %v2547
      %v3190 = vpop.f32.mrf.mxu0
      %v3191 = vadd.f32 %v2714, %v3190
      %v3192 = vpop.f32.mrf.mxu0
      %v3193 = vpop.f32.mrf.mxu0
      %v3194 = vadd.f32 %v2714, %v3193
      %v3195 = vpop.f32.mrf.mxu0
      %3196 = vmatprep.mubr.bf16.mxu0 %v2557
      %3197 = vmatmul.mubr.bf16.gmra.mxu0 %v2556
      %v3198 = vpop.f32.mrf.mxu0
      %v3199 = vadd.f32 %v2714, %v3198
      %v3200 = vpop.f32.mrf.mxu0
      %v3201 = vpop.f32.mrf.mxu0
      %v3202 = vadd.f32 %v2714, %v3201
      %v3203 = vpop.f32.mrf.mxu0
      %3204 = vdwg.mxu0
      %3205 = vmatprep.subr.bf16.mxu0 0
      %3206 = vmatpush1.bf16.msra.mxu0 %v3027
      %3207 = vmatprep.subr.bf16.mxu0 0
      %3208 = vmatpush1.bf16.msra.mxu0 %v3026
      %3209 = vmatprep.subr.bf16.mxu0 0
      %3210 = vmatpush1.bf16.msra.mxu0 %v3025
      %3211 = vmatprep.subr.bf16.mxu0 0
      %3212 = vmatpush1.bf16.msra.mxu0 %v3024
      %3213 = vmatprep.subr.bf16.mxu0 0
      %3214 = vmatpush1.bf16.msra.mxu0 %v3023
      %3215 = vmatprep.subr.bf16.mxu0 0
      %3216 = vmatpush1.bf16.msra.mxu0 %v3022
      %3217 = vmatprep.subr.bf16.mxu0 0
      %3218 = vmatpush1.bf16.msra.mxu0 %v3021
      %3219 = vmatprep.subr.bf16.mxu0 0
      %3220 = vmatpush1.bf16.msra.mxu0 %v3020
      %3221 = vmatprep.subr.bf16.mxu0 0
      %3222 = vmatpush2.bf16.msra.mxu0 %v3035
      %3223 = vmatprep.subr.bf16.mxu0 0
      %3224 = vmatpush2.bf16.msra.mxu0 %v3034
      %3225 = vmatprep.subr.bf16.mxu0 0
      %3226 = vmatpush2.bf16.msra.mxu0 %v3033
      %3227 = vmatprep.subr.bf16.mxu0 0
      %3228 = vmatpush2.bf16.msra.mxu0 %v3032
      %3229 = vmatprep.subr.bf16.mxu0 0
      %3230 = vmatpush2.bf16.msra.mxu0 %v3031
      %3231 = vmatprep.subr.bf16.mxu0 0
      %3232 = vmatpush2.bf16.msra.mxu0 %v3030
      %3233 = vmatprep.subr.bf16.mxu0 0
      %3234 = vmatpush2.bf16.msra.mxu0 %v3029
      %3235 = vmatprep.subr.bf16.mxu0 0
      %3236 = vmatpush2.bf16.msra.mxu0 %v3028
      %3237 = vmatprep.mubr.bf16.mxu0 %v2541
      %3238 = vmatmul.mubr.bf16.gmra.mxu0 %v2540
      %v3239 = vpop.f32.mrf.mxu0
      %v3240 = vadd.f32 %v3183, %v3239
      %v3241 = vpop.f32.mrf.mxu0
      %v3242 = vpop.f32.mrf.mxu0
      %v3243 = vadd.f32 %v3186, %v3242
      %v3244 = vpop.f32.mrf.mxu0
      %3245 = vmatprep.mubr.bf16.mxu0 %v2550
      %3246 = vmatmul.mubr.bf16.gmra.mxu0 %v2549
      %v3247 = vpop.f32.mrf.mxu0
      %v3248 = vadd.f32 %v3191, %v3247
      %v3249 = vpop.f32.mrf.mxu0
      %v3250 = vpop.f32.mrf.mxu0
      %v3251 = vadd.f32 %v3194, %v3250
      %v3252 = vpop.f32.mrf.mxu0
      %3253 = vmatprep.mubr.bf16.mxu0 %v2559
      %3254 = vmatmul.mubr.bf16.gmra.mxu0 %v2558
      %v3255 = vpop.f32.mrf.mxu0
      %v3256 = vadd.f32 %v3199, %v3255
      %v3257 = vpop.f32.mrf.mxu0
      %v3258 = vpop.f32.mrf.mxu0
      %v3259 = vadd.f32 %v3202, %v3258
      %v3260 = vpop.f32.mrf.mxu0
      %3261 = vdwg.mxu0
      %3262 = vmatprep.subr.bf16.mxu0 0
      %3263 = vmatpush1.bf16.msra.mxu0 %v3043
      %3264 = vmatprep.subr.bf16.mxu0 0
      %3265 = vmatpush1.bf16.msra.mxu0 %v3042
      %3266 = vmatprep.subr.bf16.mxu0 0
      %3267 = vmatpush1.bf16.msra.mxu0 %v3041
      %3268 = vmatprep.subr.bf16.mxu0 0
      %3269 = vmatpush1.bf16.msra.mxu0 %v3040
      %3270 = vmatprep.subr.bf16.mxu0 0
      %3271 = vmatpush1.bf16.msra.mxu0 %v3039
      %3272 = vmatprep.subr.bf16.mxu0 0
      %3273 = vmatpush1.bf16.msra.mxu0 %v3038
      %3274 = vmatprep.subr.bf16.mxu0 0
      %3275 = vmatpush1.bf16.msra.mxu0 %v3037
      %3276 = vmatprep.subr.bf16.mxu0 0
      %3277 = vmatpush1.bf16.msra.mxu0 %v3036
      %3278 = vmatprep.subr.bf16.mxu0 0
      %3279 = vmatpush2.bf16.msra.mxu0 %v3051
      %3280 = vmatprep.subr.bf16.mxu0 0
      %3281 = vmatpush2.bf16.msra.mxu0 %v3050
      %3282 = vmatprep.subr.bf16.mxu0 0
      %3283 = vmatpush2.bf16.msra.mxu0 %v3049
      %3284 = vmatprep.subr.bf16.mxu0 0
      %3285 = vmatpush2.bf16.msra.mxu0 %v3048
      %3286 = vmatprep.subr.bf16.mxu0 0
      %3287 = vmatpush2.bf16.msra.mxu0 %v3047
      %3288 = vmatprep.subr.bf16.mxu0 0
      %3289 = vmatpush2.bf16.msra.mxu0 %v3046
      %3290 = vmatprep.subr.bf16.mxu0 0
      %3291 = vmatpush2.bf16.msra.mxu0 %v3045
      %3292 = vmatprep.subr.bf16.mxu0 0
      %3293 = vmatpush2.bf16.msra.mxu0 %v3044
      %3294 = vmatprep.mubr.bf16.mxu0 %v2543
      %3295 = vmatmul.mubr.bf16.gmra.mxu0 %v2542
      %v3296 = vpop.f32.mrf.mxu0
      %v3297 = vadd.f32 %v3240, %v3296
      %v3298 = vpop.f32.mrf.mxu0
      %v3299 = vpop.f32.mrf.mxu0
      %v3300 = vadd.f32 %v3243, %v3299
      %v3301 = vpop.f32.mrf.mxu0
      %3302 = vmatprep.mubr.bf16.mxu0 %v2552
      %3303 = vmatmul.mubr.bf16.gmra.mxu0 %v2551
      %v3304 = vpop.f32.mrf.mxu0
      %v3305 = vadd.f32 %v3248, %v3304
      %v3306 = vpop.f32.mrf.mxu0
      %v3307 = vpop.f32.mrf.mxu0
      %v3308 = vadd.f32 %v3251, %v3307
      %v3309 = vpop.f32.mrf.mxu0
      %3310 = vmatprep.mubr.bf16.mxu0 %v2561
      %3311 = vmatmul.mubr.bf16.gmra.mxu0 %v2560
      %v3312 = vpop.f32.mrf.mxu0
      %v3313 = vadd.f32 %v3256, %v3312
      %v3314 = vpop.f32.mrf.mxu0
      %v3315 = vpop.f32.mrf.mxu0
      %v3316 = vadd.f32 %v3259, %v3315
      %v3317 = vpop.f32.mrf.mxu0
      %3318 = vdwg.mxu0
      %3319 = vmatprep.subr.bf16.mxu0 0
      %3320 = vmatpush1.bf16.msra.mxu0 %v3059
      %3321 = vmatprep.subr.bf16.mxu0 0
      %3322 = vmatpush1.bf16.msra.mxu0 %v3058
      %3323 = vmatprep.subr.bf16.mxu0 0
      %3324 = vmatpush1.bf16.msra.mxu0 %v3057
      %3325 = vmatprep.subr.bf16.mxu0 0
      %3326 = vmatpush1.bf16.msra.mxu0 %v3056
      %3327 = vmatprep.subr.bf16.mxu0 0
      %3328 = vmatpush1.bf16.msra.mxu0 %v3055
      %3329 = vmatprep.subr.bf16.mxu0 0
      %3330 = vmatpush1.bf16.msra.mxu0 %v3054
      %3331 = vmatprep.subr.bf16.mxu0 0
      %3332 = vmatpush1.bf16.msra.mxu0 %v3053
      %3333 = vmatprep.subr.bf16.mxu0 0
      %3334 = vmatpush1.bf16.msra.mxu0 %v3052
      %3335 = vmatprep.subr.bf16.mxu0 0
      %3336 = vmatpush2.bf16.msra.mxu0 %v3067
      %3337 = vmatprep.subr.bf16.mxu0 0
      %3338 = vmatpush2.bf16.msra.mxu0 %v3066
      %3339 = vmatprep.subr.bf16.mxu0 0
      %3340 = vmatpush2.bf16.msra.mxu0 %v3065
      %3341 = vmatprep.subr.bf16.mxu0 0
      %3342 = vmatpush2.bf16.msra.mxu0 %v3064
      %3343 = vmatprep.subr.bf16.mxu0 0
      %3344 = vmatpush2.bf16.msra.mxu0 %v3063
      %3345 = vmatprep.subr.bf16.mxu0 0
      %3346 = vmatpush2.bf16.msra.mxu0 %v3062
      %3347 = vmatprep.subr.bf16.mxu0 0
      %3348 = vmatpush2.bf16.msra.mxu0 %v3061
      %3349 = vmatprep.subr.bf16.mxu0 0
      %3350 = vmatpush2.bf16.msra.mxu0 %v3060
      %3351 = vmatprep.mubr.bf16.mxu0 %v2545
      %3352 = vmatmul.mubr.bf16.gmra.mxu0 %v2544
      %v3353 = vpop.f32.mrf.mxu0
      %v3354 = vadd.f32 %v3297, %v3353
      %v3355 = vpop.f32.mrf.mxu0
      %v3356 = vpop.f32.mrf.mxu0
      %v3357 = vadd.f32 %v3300, %v3356
      %v3358 = vpop.f32.mrf.mxu0
      %3359 = vmatprep.mubr.bf16.mxu0 %v2554
      %3360 = vmatmul.mubr.bf16.gmra.mxu0 %v2553
      %v3361 = vpop.f32.mrf.mxu0
      %v3362 = vadd.f32 %v3305, %v3361
      %v3363 = vpop.f32.mrf.mxu0
      %v3364 = vpop.f32.mrf.mxu0
      %v3365 = vadd.f32 %v3308, %v3364
      %v3366 = vpop.f32.mrf.mxu0
      %3367 = vmatprep.mubr.bf16.mxu0 %v2563
      %3368 = vmatmul.mubr.bf16.gmra.mxu0 %v2562
      %v3369 = vpop.f32.mrf.mxu0
      %v3370 = vadd.f32 %v3313, %v3369
      %v3371 = vpop.f32.mrf.mxu0
      %v3372 = vpop.f32.mrf.mxu0
      %v3373 = vadd.f32 %v3316, %v3372
      %v3374 = vpop.f32.mrf.mxu0
      %3375 = vdwg.mxu0
      %3376 = vmatprep.subr.bf16.mxu0 0
      %3377 = vmatpush1.bf16.msra.mxu0 %v3075
      %3378 = vmatprep.subr.bf16.mxu0 0
      %3379 = vmatpush1.bf16.msra.mxu0 %v3074
      %3380 = vmatprep.subr.bf16.mxu0 0
      %3381 = vmatpush1.bf16.msra.mxu0 %v3073
      %3382 = vmatprep.subr.bf16.mxu0 0
      %3383 = vmatpush1.bf16.msra.mxu0 %v3072
      %3384 = vmatprep.subr.bf16.mxu0 0
      %3385 = vmatpush1.bf16.msra.mxu0 %v3071
      %3386 = vmatprep.subr.bf16.mxu0 0
      %3387 = vmatpush1.bf16.msra.mxu0 %v3070
      %3388 = vmatprep.subr.bf16.mxu0 0
      %3389 = vmatpush1.bf16.msra.mxu0 %v3069
      %3390 = vmatprep.subr.bf16.mxu0 0
      %3391 = vmatpush1.bf16.msra.mxu0 %v3068
      %3392 = vmatprep.subr.bf16.mxu0 0
      %3393 = vmatpush2.bf16.msra.mxu0 0
      %3394 = vmatprep.subr.bf16.mxu0 0
      %3395 = vmatpush2.bf16.msra.mxu0 0
      %3396 = vmatprep.subr.bf16.mxu0 0
      %3397 = vmatpush2.bf16.msra.mxu0 0
      %3398 = vmatprep.subr.bf16.mxu0 0
      %3399 = vmatpush2.bf16.msra.mxu0 0
      %3400 = vmatprep.subr.bf16.mxu0 0
      %3401 = vmatpush2.bf16.msra.mxu0 0
      %3402 = vmatprep.subr.bf16.mxu0 0
      %3403 = vmatpush2.bf16.msra.mxu0 0
      %3404 = vmatprep.subr.bf16.mxu0 0
      %3405 = vmatpush2.bf16.msra.mxu0 0
      %3406 = vmatprep.subr.bf16.mxu0 0
      %3407 = vmatpush2.bf16.msra.mxu0 0
      %3408 = vmatprep.mubr.bf16.mxu0 0
      %3409 = vmatmul.mubr.bf16.gmra.mxu0 %v2546
      %v3410 = vpop.f32.mrf.mxu0
      %v3411 = vadd.f32 %v3354, %v3410
      %v3412 = vpop.f32.mrf.mxu0
      %v3413 = vpop.f32.mrf.mxu0
      %v3414 = vadd.f32 %v3357, %v3413
      %v3415 = vpop.f32.mrf.mxu0
      %3416 = vmatprep.mubr.bf16.mxu0 0
      %3417 = vmatmul.mubr.bf16.gmra.mxu0 %v2555
      %v3418 = vpop.f32.mrf.mxu0
      %v3419 = vadd.f32 %v3362, %v3418
      %v3420 = vpop.f32.mrf.mxu0
      %v3421 = vpop.f32.mrf.mxu0
      %v3422 = vadd.f32 %v3365, %v3421
      %v3423 = vpop.f32.mrf.mxu0
      %3424 = vmatprep.mubr.bf16.mxu0 0
      %3425 = vmatmul.mubr.bf16.gmra.mxu0 %v2564
      %v3426 = vpop.f32.mrf.mxu0
      %v3427 = vadd.f32 %v3370, %v3426
      %v3428 = vpop.f32.mrf.mxu0
      %v3429 = vpop.f32.mrf.mxu0
      %v3430 = vadd.f32 %v3373, %v3429
      %v3431 = vpop.f32.mrf.mxu0
      %3432 = vdwg.mxu0
      %v3433 = vmax.f32 %v3411, 0.0
      %v3434 = vmax.f32 %v3414, 0.0
      %v3435 = vmax.f32 %v3419, 0.0
      %v3436 = vmax.f32 %v3422, 0.0
      %v3437 = vmax.f32 %v3427, 0.0
      %v3438 = vmax.f32 %v3430, 0.0
      %v3439 = vpack.c.bf16 %v3434, %v3433
      %v3440 = vpack.c.bf16 %v3436, %v3435
      %v3441 = vpack.c.bf16 %v3438, %v3437
      %v3445 = vunpack.c.l.b16 %v3439
      %v3446 = vunpack.c.h.b16 %v3439
      %v3447 = vunpack.c.l.b16 %v3440
      %v3448 = vunpack.c.h.b16 %v3440
      %v3449 = vunpack.c.l.b16 %v3441
      %v3450 = vunpack.c.h.b16 %v3441
      %v3451 = vpack.c.b16 %v3445, %v3445
      %v3452 = vpack.c.b16 %v3446, %v3446
      %v3453 = vpack.c.b16 %v3447, %v3447
      %v3454 = vpack.c.b16 %v3448, %v3448
      %v3455 = vpack.c.b16 %v3449, %v3449
      %v3456 = vpack.c.b16 %v3450, %v3450
      %3463 = vst [vmem:[%s224] sm:$0xf] %v3451
      %3464 = vst [vmem:[%s224 + $0x4] sm:$0xf] %v3452
      %3465 = vst [vmem:[%s224 + $0x8] sm:$0xf] %v3453
      %3466 = vst [vmem:[%s224 + $0xc] sm:$0xf] %v3454
      %3467 = vst [vmem:[%s224 + $0x10] sm:$0xf] %v3455
      %3468 = vst [vmem:[%s224 + $0x14] sm:$0xf] %v3456
      %p3469 = scmp.lt.s32.totalorder %s16, 1
      %s3470 = scalar_select %p3469, %s16, 1
      %s3471 = smul.addr %s3470, 6
      %s3472 = smul.addr %s3471, 4
      %s3473 = scalar_lea.vmem %s5, %s3472
      // Predicated region
      $region41: #{dqn_forward.4} parent=39 // pred_check
        %p3474 = pneg %p144
      $region42: #{dqn_forward.4} parent=39 // pred_check_branch
        %3476 = sbr.rel (%p3474) target = $region44
      $region43: #{dqn_forward.4} parent=39 // pred_region
        _
      $region44: #{dqn_forward.4} parent=39 // pred_fallthru
        _
    $region40: #{dqn_forward.4} parent=5 // pred_fallthru
      _
    %p3477 = scmp.le.s32.totalorder 2, %s11
    // Predicated region
    $region45: #{dqn_forward.4} parent=5 // pred_check
      %p3478 = pneg %p3477
    $region46: #{dqn_forward.4} parent=5 // pred_check_branch
      %3480 = sbr.rel (%p3478) target = $region48
    $region47: #{dqn_forward.4} parent=5 // pred_region
      %s3481 = ssub.s32 %s11, 2
      // Predicated region
      $region49: #{dqn_forward.4} parent=47 // pred_check
        %p3482 = pneg %p150
      $region50: #{dqn_forward.4} parent=47 // pred_check_branch
        %3484 = sbr.rel (%p3482) target = $region52
      $region51: #{dqn_forward.4} parent=47 // pred_region
        %p3485 = scmp.lt.s32.totalorder %s17, 1
        %s3486 = scalar_select %p3485, %s17, 1
        %s3487 = smul.addr %s3486, 6
        %s3488 = smul.addr %s3487, 4
        %s3489 = scalar_lea.vmem %s5, %s3488
      $region52: #{dqn_forward.4} parent=47 // pred_fallthru
        _
    $region48: #{dqn_forward.4} parent=5 // pred_fallthru
      _
  $region6: #{dqn_forward.4} parent=0 // loop_footer
    %s15 = sadd.s32 1, %s11
  $region7: #{dqn_forward.4} parent=0 // loop_footer_branch
    %10 = sbr.rel target = $region3
  $region8: #{dqn_forward.4} parent=0 // loop_exit
    _

</llo_original>
